<compile_context>
chip_gen: v5e
topology: v5e:2x2
jax: 0.10.0
libtpu: 0.0.40
codegen_flags: <defaults>
</compile_context>

<pallas_src>
import jax
import jax.numpy as jnp
from jax import lax
from jax.experimental import pallas as pl
from jax.experimental.pallas import tpu as pltpu


def _round_up(x: int, m: int) -> int:
    return (x + m - 1) // m * m


def _linear_kernel(x_ref, w_ref, b_ref, o_ref):
    # x: (tm, K) bf16, w: (tn, K) bf16 (PyTorch (out, in) layout), b: (1, tn) f32.
    # Single-shot: whole K contraction in one MXU call, f32 accumulation.
    acc = lax.dot_general(
        x_ref[...],
        w_ref[...],
        dimension_numbers=(((1,), (1,)), ((), ())),  # x @ w.T, no copy of w
        preferred_element_type=jnp.float32,
    )
    o_ref[...] = (acc + b_ref[...]).astype(o_ref.dtype)


def pallas_linear(x, weight, bias, *, tn_cap=1024, tm_cap=512):
    """out = x @ weight.T + bias  (PyTorch nn.Linear semantics).

    x: (M, K) activations, weight: (N, K), bias: (N,).
    Casts x/weight to bf16 (f32 accumulation inside); output keeps x.dtype.
    Zero-padding of M/N/K is exact for a matmul; the result is sliced back.
    """
    out_dtype = x.dtype
    M, K = x.shape
    N, K2 = weight.shape
    assert K == K2 and bias.shape == (N,)

    # bf16 halves the HBM weight stream (the dominant cost on all generations).
    x = x.astype(jnp.bfloat16)
    w = weight.astype(jnp.bfloat16)
    b = bias.astype(jnp.float32).reshape(1, N)

    SUB = 16  # bf16 sublane packing
    Mp = _round_up(M, SUB)
    Kp = _round_up(K, 128)

    # HBM-bound on the weight stream: keep tm == (small) padded batch, collapse
    # K entirely, tile only N (capped so bf16 weight tiles double-buffer within
    # v7x's 64 MiB VMEM and so large heads split across megacore TCs).
    tm = min(Mp, _round_up(tm_cap, SUB))
    Mp = _round_up(Mp, tm)
    tn = min(_round_up(N, 128), tn_cap)
    Np = _round_up(N, tn)

    if (Mp, Kp) != (M, K):
        x = jnp.pad(x, ((0, Mp - M), (0, Kp - K)))
    if (Np, Kp) != (N, K):
        w = jnp.pad(w, ((0, Np - N), (0, Kp - K)))
    if Np != N:
        b = jnp.pad(b, ((0, 0), (0, Np - N)))

    grid = (Mp // tm, Np // tn)
    out_isize = jnp.dtype(out_dtype).itemsize
    cost = pl.CostEstimate(
        flops=2 * Mp * Kp * Np,
        transcendentals=0,
        bytes_accessed=(Mp * Kp + Np * Kp) * 2 + Np * 4 + Mp * Np * out_isize,
    )

    out = pl.pallas_call(
        _linear_kernel,
        out_shape=jax.ShapeDtypeStruct((Mp, Np), out_dtype),
        grid_spec=pltpu.PrefetchScalarGridSpec(
            num_scalar_prefetch=0,
            grid=grid,
            in_specs=[
                pl.BlockSpec((tm, Kp), lambda i, j: (i, 0)),
                pl.BlockSpec((tn, Kp), lambda i, j: (j, 0)),
                pl.BlockSpec((1, tn), lambda i, j: (0, j)),
            ],
            out_specs=pl.BlockSpec((tm, tn), lambda i, j: (i, j)),
        ),
        compiler_params=pltpu.CompilerParams(
            dimension_semantics=("parallel", "parallel"),
        ),
        cost_estimate=cost,
    )(x, w, b)

    if (Mp, Np) != (M, N):
        out = out[:M, :N]
    return out


def linear_classifier_resnet(x, weight, bias):
    """Forward of LinearClassifierResNet: Flatten -> Linear(2048, n_label)."""
    B = x.shape[0]
    # Flatten: metadata-only row-major view of a contiguous NCHW tensor ->
    # free jnp.reshape in the wrapper, no Pallas kernel / HBM traffic needed.
    feat = jnp.reshape(x, (B, -1))
    return pallas_linear(feat, weight, bias)


if __name__ == "__main__":
    key = jax.random.PRNGKey(0)
    k_x, k_w = jax.random.split(key)

    B, n_channels, n_label = 8, 2048, 1000
    # ResNet global-avg-pooled features: (B, 2048, 1, 1) -> flatten -> 2048.
    x = jax.random.normal(k_x, (B, n_channels, 1, 1), dtype=jnp.float32)
    # initilize(): weight ~ N(0, 0.01), bias = 0.
    weight = 0.01 * jax.random.normal(k_w, (n_label, n_channels), jnp.float32)
    bias = jnp.zeros((n_label,), jnp.float32)

    out = linear_classifier_resnet(x, weight, bias)
    jax.block_until_ready(out)

    # Reference with the same bf16-input / f32-accumulate numerics.
    feat = x.reshape(B, -1)
    ref = (
        jnp.dot(
            feat.astype(jnp.bfloat16),
            weight.astype(jnp.bfloat16).T,
            preferred_element_type=jnp.float32,
        )
        + bias
    )

    assert out.shape == (B, n_label), out.shape
    assert out.dtype == x.dtype, out.dtype
    assert jnp.allclose(out, ref, rtol=1e-2, atol=1e-2), (
        float(jnp.max(jnp.abs(out - ref)))
    )

    print("KERNEL_OK")
</pallas_src>

<mosaic_0001>
module attributes {stable_mosaic.version = 11 : i64} {
  func.func @_linear_kernel(%arg0: i32, %arg1: i32, %arg2: memref<16x2048xbf16, #tpu.memory_space<vmem>>, %arg3: memref<1024x2048xbf16, #tpu.memory_space<vmem>>, %arg4: memref<1x1024xf32, #tpu.memory_space<vmem>>, %arg5: memref<16x1024xf32, #tpu.memory_space<vmem>>) attributes {dimension_semantics = [#tpu.dimension_semantics<parallel>, #tpu.dimension_semantics<parallel>], iteration_bounds = array<i64: 1, 1>, scalar_prefetch = 0 : i64, scratch_operands = 0 : i64, tpu.core_type = #tpu.core_type<tc>, window_params = [{transform_indices = @transform_0, window_bounds = array<i64: 16, 2048>}, {transform_indices = @transform_1, window_bounds = array<i64: 1024, 2048>}, {transform_indices = @transform_2, window_bounds = array<i64: 1, 1024>}, {transform_indices = @transform_3, window_bounds = array<i64: 16, 1024>}]} {
    %c0 = arith.constant 0 : index
    %c0_0 = arith.constant 0 : index
    %0 = vector.load %arg2[%c0, %c0_0] : memref<16x2048xbf16, #tpu.memory_space<vmem>>, vector<16x2048xbf16>
    %c0_1 = arith.constant 0 : index
    %c0_2 = arith.constant 0 : index
    %1 = vector.load %arg3[%c0_1, %c0_2] : memref<1024x2048xbf16, #tpu.memory_space<vmem>>, vector<1024x2048xbf16>
    %cst = arith.constant dense<0.000000e+00> : vector<16x1024xf32>
    %2 = tpu.matmul %0, %1, %cst {dimension_numbers = #tpu.dot_dimension_numbers<[1], [1], [0], [0], [0, 0, 1, 0], [], []>} : vector<16x2048xbf16>, vector<1024x2048xbf16>, vector<16x1024xf32> -> vector<16x1024xf32>
    %c0_3 = arith.constant 0 : index
    %c0_4 = arith.constant 0 : index
    %3 = vector.load %arg4[%c0_3, %c0_4] : memref<1x1024xf32, #tpu.memory_space<vmem>>, vector<1x1024xf32>
    %4 = vector.broadcast %3 : vector<1x1024xf32> to vector<16x1024xf32>
    %5 = arith.addf %2, %4 : vector<16x1024xf32>
    %c0_5 = arith.constant 0 : index
    %c0_6 = arith.constant 0 : index
    %6 = vector.load %arg5[%c0_5, %c0_6] : memref<16x1024xf32, #tpu.memory_space<vmem>>, vector<16x1024xf32>
    tpu.vector_store %arg5[%c0_5, %c0_6], %5 {strides = array<i32>} : memref<16x1024xf32, #tpu.memory_space<vmem>>, vector<16x1024xf32>,
    return
  }
  func.func @transform_0(%arg0: i32, %arg1: i32) -> (i32, i32) {
    %c0_i32 = arith.constant 0 : i32
    %c0_i32_0 = arith.constant 0 : i32
    return %arg0, %c0_i32 : i32, i32
  }
  func.func @transform_1(%arg0: i32, %arg1: i32) -> (i32, i32) {
    %c0_i32 = arith.constant 0 : i32
    %c0_i32_0 = arith.constant 0 : i32
    return %arg1, %c0_i32 : i32, i32
  }
  func.func @transform_2(%arg0: i32, %arg1: i32) -> (i32, i32) {
    %c0_i32 = arith.constant 0 : i32
    %c0_i32_0 = arith.constant 0 : i32
    return %c0_i32, %arg1 : i32, i32
  }
  func.func @transform_3(%arg0: i32, %arg1: i32) -> (i32, i32) {
    %c0_i32 = arith.constant 0 : i32
    return %arg0, %arg1 : i32, i32
  }
}

</mosaic_0001>

<llo_original>
// kernel: tpu_custom_call.1
$region0: #{tpu_custom_call.1}
  #allocation0 [shape = 'u32[]', space=smem, size = 0x4, offset = 0x4, fixed_abs, tag = 'smem constant byte address 0x4 - core index']
  #allocation1 [shape = 'u32[72,128]{1,0:T(1,128)}', space=vmem, size = 0x9000, scoped, tag = 'internal scratch']
  %s0 = inlined_call_operand.hbm [shape: bf16[16,2048], index: 0, kind: input, shape index: {}]
  %s1 = inlined_call_operand.hbm [shape: bf16[1024,2048], index: 1, kind: input, shape index: {}]
  %s2 = inlined_call_operand.hbm [shape: f32[1,1024], index: 2, kind: input, shape index: {}]
  %s3 = inlined_call_operand.hbm [shape: f32[16,1024], index: 3, kind: output, shape index: {}]
  %s4 = sld [smem:[#allocation0]]
  $region34: #{tpu_custom_call.1} parent=0
    _
  %s6 = ssub.s32 1, %s4
  %s7 = scalar_select 0, %s6, %s4
  $region1: #{tpu_custom_call.1} parent=0
    #allocation2 [shape = 'u8[65536]{0}', space=vmem, size = 0x10000, scoped, tag = 'input window, operand 0, single buffered']
    #allocation3 [shape = 's32[1]{0}', space=sflag, size = 0x4, scoped, tag = 'scoped memory for tpu_custom_call.1']
    #allocation4 [shape = 's32[1]{0}', space=sflag, size = 0x4, scoped, tag = 'scoped memory for tpu_custom_call.1']
    #allocation5 [shape = 'u8[4194304]{0}', space=vmem, size = 0x400000, scoped, tag = 'input window, operand 1, single buffered']
    #allocation6 [shape = 's32[1]{0}', space=sflag, size = 0x4, scoped, tag = 'scoped memory for tpu_custom_call.1']
    #allocation7 [shape = 'u8[4096]{0}', space=vmem, size = 0x1000, scoped, tag = 'input window, operand 2, single buffered']
    #allocation8 [shape = 'u8[65536]{0}', space=vmem, size = 0x10000, scoped, tag = 'output window, operand 0, single buffered']
    %8 = vsyncpa [#allocation3], 0
    %9 = vsyncpa [#allocation6], 0
    %10 = vsyncpa [#allocation4], 0
    // Predicated region
    $region2: #{tpu_custom_call.1} parent=1 // pred_check
      _
    $region3: #{tpu_custom_call.1} parent=1 // pred_check_branch
      %12 = sbr.rel (0) target = $region5
    $region4: #{tpu_custom_call.1} parent=1 // pred_region
      %14 = vsyncadd [#allocation3], 0
      %s15 = sshll.u32 %s0, 4
      %s16 = int_to_ptr.hbm [resolvable:$true] %s15
      %s17 = sshll.u32 [#allocation2], 4
      %s18 = int_to_ptr.vmem [resolvable:$true] %s17
      %23 = dma.hbm_to_vmem [thread:$0]  %s16, 2048, %s18, [#allocation3], 1024, 1024, 64
    $region5: #{tpu_custom_call.1} parent=1 // pred_fallthru
      _
    // Predicated region
    $region6: #{tpu_custom_call.1} parent=1 // pred_check
      _
    $region7: #{tpu_custom_call.1} parent=1 // pred_check_branch
      %25 = sbr.rel (0) target = $region9
    $region8: #{tpu_custom_call.1} parent=1 // pred_region
      %27 = vsyncadd [#allocation6], 0
      %s28 = sshll.u32 %s1, 4
      %s29 = int_to_ptr.hbm [resolvable:$true] %s28
      %s30 = sshll.u32 [#allocation5], 4
      %s31 = int_to_ptr.vmem [resolvable:$true] %s30
      %36 = dma.hbm_to_vmem [thread:$0]  %s29, 131072, %s31, [#allocation6], 1024, 1024, 64
    $region9: #{tpu_custom_call.1} parent=1 // pred_fallthru
      _
    // Predicated region
    $region10: #{tpu_custom_call.1} parent=1 // pred_check
      _
    $region11: #{tpu_custom_call.1} parent=1 // pred_check_branch
      %38 = sbr.rel (0) target = $region13
    $region12: #{tpu_custom_call.1} parent=1 // pred_region
      %40 = vsyncadd [#allocation6], 0
      %s42 = sshll.u32 %s2, 4
      %s43 = int_to_ptr.hbm [resolvable:$true] %s42
      %s44 = sshll.u32 [#allocation7], 4
      %s45 = int_to_ptr.vmem [resolvable:$true] %s44
      %47 = dma.hbm_to_vmem [thread:$0]  %s43, 128, %s45, [#allocation6]
    $region13: #{tpu_custom_call.1} parent=1 // pred_fallthru
      _
    // Predicated region
    $region14: #{tpu_custom_call.1} parent=1 // pred_check
      _
    $region15: #{tpu_custom_call.1} parent=1 // pred_check_branch
      %49 = sbr.rel (0) target = $region17
    $region16: #{tpu_custom_call.1} parent=1 // pred_region
      %51 = dma.done [#allocation3], 2048
    $region17: #{tpu_custom_call.1} parent=1 // pred_fallthru
      _
    // Predicated region
    $region18: #{tpu_custom_call.1} parent=1 // pred_check
      _
    $region19: #{tpu_custom_call.1} parent=1 // pred_check_branch
      %53 = sbr.rel (0) target = $region21
    $region20: #{tpu_custom_call.1} parent=1 // pred_region
      %55 = dma.done [#allocation6], 131072
    $region21: #{tpu_custom_call.1} parent=1 // pred_fallthru
      _
    // Predicated region
    $region22: #{tpu_custom_call.1} parent=1 // pred_check
      _
    $region23: #{tpu_custom_call.1} parent=1 // pred_check_branch
      %57 = sbr.rel (0) target = $region25
    $region24: #{tpu_custom_call.1} parent=1 // pred_region
      %59 = dma.done [#allocation6], 128
    $region25: #{tpu_custom_call.1} parent=1 // pred_fallthru
      _
    %v60 = vld [vmem:[#allocation2] sm:$0xff]
    %v61 = vld [vmem:[#allocation2 + $0x8] sm:$0xff]
    %v62 = vld [vmem:[#allocation2 + $0x10] sm:$0xff]
    %v63 = vld [vmem:[#allocation2 + $0x18] sm:$0xff]
    %v64 = vld [vmem:[#allocation2 + $0x20] sm:$0xff]
    %v65 = vld [vmem:[#allocation2 + $0x28] sm:$0xff]
    %v66 = vld [vmem:[#allocation2 + $0x30] sm:$0xff]
    %v67 = vld [vmem:[#allocation2 + $0x38] sm:$0xff]
    %v68 = vld [vmem:[#allocation2 + $0x40] sm:$0xff]
    %v69 = vld [vmem:[#allocation2 + $0x48] sm:$0xff]
    %v70 = vld [vmem:[#allocation2 + $0x50] sm:$0xff]
    %v71 = vld [vmem:[#allocation2 + $0x58] sm:$0xff]
    %v72 = vld [vmem:[#allocation2 + $0x60] sm:$0xff]
    %v73 = vld [vmem:[#allocation2 + $0x68] sm:$0xff]
    %v74 = vld [vmem:[#allocation2 + $0x70] sm:$0xff]
    %v75 = vld [vmem:[#allocation2 + $0x78] sm:$0xff]
    %v76 = vld [vmem:[#allocation5] sm:$0xff]
    %v77 = vld [vmem:[#allocation5 + $0x8] sm:$0xff]
    %v78 = vld [vmem:[#allocation5 + $0x10] sm:$0xff]
    %v79 = vld [vmem:[#allocation5 + $0x18] sm:$0xff]
    %v80 = vld [vmem:[#allocation5 + $0x20] sm:$0xff]
    %v81 = vld [vmem:[#allocation5 + $0x28] sm:$0xff]
    %v82 = vld [vmem:[#allocation5 + $0x30] sm:$0xff]
    %v83 = vld [vmem:[#allocation5 + $0x38] sm:$0xff]
    %v84 = vld [vmem:[#allocation5 + $0x40] sm:$0xff]
    %v85 = vld [vmem:[#allocation5 + $0x48] sm:$0xff]
    %v86 = vld [vmem:[#allocation5 + $0x50] sm:$0xff]
    %v87 = vld [vmem:[#allocation5 + $0x58] sm:$0xff]
    %v88 = vld [vmem:[#allocation5 + $0x60] sm:$0xff]
    %v89 = vld [vmem:[#allocation5 + $0x68] sm:$0xff]
    %v90 = vld [vmem:[#allocation5 + $0x70] sm:$0xff]
    %v91 = vld [vmem:[#allocation5 + $0x78] sm:$0xff]
    %v92 = vld [vmem:[#allocation5 + $0x80] sm:$0xff]
    %v93 = vld [vmem:[#allocation5 + $0x88] sm:$0xff]
    %v94 = vld [vmem:[#allocation5 + $0x90] sm:$0xff]
    %v95 = vld [vmem:[#allocation5 + $0x98] sm:$0xff]
    %v96 = vld [vmem:[#allocation5 + $0xa0] sm:$0xff]
    %v97 = vld [vmem:[#allocation5 + $0xa8] sm:$0xff]
    %v98 = vld [vmem:[#allocation5 + $0xb0] sm:$0xff]
    %v99 = vld [vmem:[#allocation5 + $0xb8] sm:$0xff]
    %v100 = vld [vmem:[#allocation5 + $0xc0] sm:$0xff]
    %v101 = vld [vmem:[#allocation5 + $0xc8] sm:$0xff]
    %v102 = vld [vmem:[#allocation5 + $0xd0] sm:$0xff]
    %v103 = vld [vmem:[#allocation5 + $0xd8] sm:$0xff]
    %v104 = vld [vmem:[#allocation5 + $0xe0] sm:$0xff]
    %v105 = vld [vmem:[#allocation5 + $0xe8] sm:$0xff]
    %v106 = vld [vmem:[#allocation5 + $0xf0] sm:$0xff]
    %v107 = vld [vmem:[#allocation5 + $0xf8] sm:$0xff]
    %v108 = vld [vmem:[#allocation5 + $0x100] sm:$0xff]
    %v109 = vld [vmem:[#allocation5 + $0x108] sm:$0xff]
    %v110 = vld [vmem:[#allocation5 + $0x110] sm:$0xff]
    %v111 = vld [vmem:[#allocation5 + $0x118] sm:$0xff]
    %v112 = vld [vmem:[#allocation5 + $0x120] sm:$0xff]
    %v113 = vld [vmem:[#allocation5 + $0x128] sm:$0xff]
    %v114 = vld [vmem:[#allocation5 + $0x130] sm:$0xff]
    %v115 = vld [vmem:[#allocation5 + $0x138] sm:$0xff]
    %v116 = vld [vmem:[#allocation5 + $0x140] sm:$0xff]
    %v117 = vld [vmem:[#allocation5 + $0x148] sm:$0xff]
    %v118 = vld [vmem:[#allocation5 + $0x150] sm:$0xff]
    %v119 = vld [vmem:[#allocation5 + $0x158] sm:$0xff]
    %v120 = vld [vmem:[#allocation5 + $0x160] sm:$0xff]
    %v121 = vld [vmem:[#allocation5 + $0x168] sm:$0xff]
    %v122 = vld [vmem:[#allocation5 + $0x170] sm:$0xff]
    %v123 = vld [vmem:[#allocation5 + $0x178] sm:$0xff]
    %v124 = vld [vmem:[#allocation5 + $0x180] sm:$0xff]
    %v125 = vld [vmem:[#allocation5 + $0x188] sm:$0xff]
    %v126 = vld [vmem:[#allocation5 + $0x190] sm:$0xff]
    %v127 = vld [vmem:[#allocation5 + $0x198] sm:$0xff]
    %v128 = vld [vmem:[#allocation5 + $0x1a0] sm:$0xff]
    %v129 = vld [vmem:[#allocation5 + $0x1a8] sm:$0xff]
    %v130 = vld [vmem:[#allocation5 + $0x1b0] sm:$0xff]
    %v131 = vld [vmem:[#allocation5 + $0x1b8] sm:$0xff]
    %v132 = vld [vmem:[#allocation5 + $0x1c0] sm:$0xff]
    %v133 = vld [vmem:[#allocation5 + $0x1c8] sm:$0xff]
    %v134 = vld [vmem:[#allocation5 + $0x1d0] sm:$0xff]
    %v135 = vld [vmem:[#allocation5 + $0x1d8] sm:$0xff]
    %v136 = vld [vmem:[#allocation5 + $0x1e0] sm:$0xff]
    %v137 = vld [vmem:[#allocation5 + $0x1e8] sm:$0xff]
    %v138 = vld [vmem:[#allocation5 + $0x1f0] sm:$0xff]
    %v139 = vld [vmem:[#allocation5 + $0x1f8] sm:$0xff]
    %v140 = vld [vmem:[#allocation5 + $0x200] sm:$0xff]
    %v141 = vld [vmem:[#allocation5 + $0x208] sm:$0xff]
    %v142 = vld [vmem:[#allocation5 + $0x210] sm:$0xff]
    %v143 = vld [vmem:[#allocation5 + $0x218] sm:$0xff]
    %v144 = vld [vmem:[#allocation5 + $0x220] sm:$0xff]
    %v145 = vld [vmem:[#allocation5 + $0x228] sm:$0xff]
    %v146 = vld [vmem:[#allocation5 + $0x230] sm:$0xff]
    %v147 = vld [vmem:[#allocation5 + $0x238] sm:$0xff]
    %v148 = vld [vmem:[#allocation5 + $0x240] sm:$0xff]
    %v149 = vld [vmem:[#allocation5 + $0x248] sm:$0xff]
    %v150 = vld [vmem:[#allocation5 + $0x250] sm:$0xff]
    %v151 = vld [vmem:[#allocation5 + $0x258] sm:$0xff]
    %v152 = vld [vmem:[#allocation5 + $0x260] sm:$0xff]
    %v153 = vld [vmem:[#allocation5 + $0x268] sm:$0xff]
    %v154 = vld [vmem:[#allocation5 + $0x270] sm:$0xff]
    %v155 = vld [vmem:[#allocation5 + $0x278] sm:$0xff]
    %v156 = vld [vmem:[#allocation5 + $0x280] sm:$0xff]
    %v157 = vld [vmem:[#allocation5 + $0x288] sm:$0xff]
    %v158 = vld [vmem:[#allocation5 + $0x290] sm:$0xff]
    %v159 = vld [vmem:[#allocation5 + $0x298] sm:$0xff]
    %v160 = vld [vmem:[#allocation5 + $0x2a0] sm:$0xff]
    %v161 = vld [vmem:[#allocation5 + $0x2a8] sm:$0xff]
    %v162 = vld [vmem:[#allocation5 + $0x2b0] sm:$0xff]
    %v163 = vld [vmem:[#allocation5 + $0x2b8] sm:$0xff]
    %v164 = vld [vmem:[#allocation5 + $0x2c0] sm:$0xff]
    %v165 = vld [vmem:[#allocation5 + $0x2c8] sm:$0xff]
    %v166 = vld [vmem:[#allocation5 + $0x2d0] sm:$0xff]
    %v167 = vld [vmem:[#allocation5 + $0x2d8] sm:$0xff]
    %v168 = vld [vmem:[#allocation5 + $0x2e0] sm:$0xff]
    %v169 = vld [vmem:[#allocation5 + $0x2e8] sm:$0xff]
    %v170 = vld [vmem:[#allocation5 + $0x2f0] sm:$0xff]
    %v171 = vld [vmem:[#allocation5 + $0x2f8] sm:$0xff]
    %v172 = vld [vmem:[#allocation5 + $0x300] sm:$0xff]
    %v173 = vld [vmem:[#allocation5 + $0x308] sm:$0xff]
    %v174 = vld [vmem:[#allocation5 + $0x310] sm:$0xff]
    %v175 = vld [vmem:[#allocation5 + $0x318] sm:$0xff]
    %v176 = vld [vmem:[#allocation5 + $0x320] sm:$0xff]
    %v177 = vld [vmem:[#allocation5 + $0x328] sm:$0xff]
    %v178 = vld [vmem:[#allocation5 + $0x330] sm:$0xff]
    %v179 = vld [vmem:[#allocation5 + $0x338] sm:$0xff]
    %v180 = vld [vmem:[#allocation5 + $0x340] sm:$0xff]
    %v181 = vld [vmem:[#allocation5 + $0x348] sm:$0xff]
    %v182 = vld [vmem:[#allocation5 + $0x350] sm:$0xff]
    %v183 = vld [vmem:[#allocation5 + $0x358] sm:$0xff]
    %v184 = vld [vmem:[#allocation5 + $0x360] sm:$0xff]
    %v185 = vld [vmem:[#allocation5 + $0x368] sm:$0xff]
    %v186 = vld [vmem:[#allocation5 + $0x370] sm:$0xff]
    %v187 = vld [vmem:[#allocation5 + $0x378] sm:$0xff]
    %v188 = vld [vmem:[#allocation5 + $0x380] sm:$0xff]
    %v189 = vld [vmem:[#allocation5 + $0x388] sm:$0xff]
    %v190 = vld [vmem:[#allocation5 + $0x390] sm:$0xff]
    %v191 = vld [vmem:[#allocation5 + $0x398] sm:$0xff]
    %v192 = vld [vmem:[#allocation5 + $0x3a0] sm:$0xff]
    %v193 = vld [vmem:[#allocation5 + $0x3a8] sm:$0xff]
    %v194 = vld [vmem:[#allocation5 + $0x3b0] sm:$0xff]
    %v195 = vld [vmem:[#allocation5 + $0x3b8] sm:$0xff]
    %v196 = vld [vmem:[#allocation5 + $0x3c0] sm:$0xff]
    %v197 = vld [vmem:[#allocation5 + $0x3c8] sm:$0xff]
    %v198 = vld [vmem:[#allocation5 + $0x3d0] sm:$0xff]
    %v199 = vld [vmem:[#allocation5 + $0x3d8] sm:$0xff]
    %v200 = vld [vmem:[#allocation5 + $0x3e0] sm:$0xff]
    %v201 = vld [vmem:[#allocation5 + $0x3e8] sm:$0xff]
    %v202 = vld [vmem:[#allocation5 + $0x3f0] sm:$0xff]
    %v203 = vld [vmem:[#allocation5 + $0x3f8] sm:$0xff]
    %v204 = vld [vmem:[#allocation5 + $0x400] sm:$0xff]
    %v205 = vld [vmem:[#allocation5 + $0x408] sm:$0xff]
    %v206 = vld [vmem:[#allocation5 + $0x410] sm:$0xff]
    %v207 = vld [vmem:[#allocation5 + $0x418] sm:$0xff]
    %v208 = vld [vmem:[#allocation5 + $0x420] sm:$0xff]
    %v209 = vld [vmem:[#allocation5 + $0x428] sm:$0xff]
    %v210 = vld [vmem:[#allocation5 + $0x430] sm:$0xff]
    %v211 = vld [vmem:[#allocation5 + $0x438] sm:$0xff]
    %v212 = vld [vmem:[#allocation5 + $0x440] sm:$0xff]
    %v213 = vld [vmem:[#allocation5 + $0x448] sm:$0xff]
    %v214 = vld [vmem:[#allocation5 + $0x450] sm:$0xff]
    %v215 = vld [vmem:[#allocation5 + $0x458] sm:$0xff]
    %v216 = vld [vmem:[#allocation5 + $0x460] sm:$0xff]
    %v217 = vld [vmem:[#allocation5 + $0x468] sm:$0xff]
    %v218 = vld [vmem:[#allocation5 + $0x470] sm:$0xff]
    %v219 = vld [vmem:[#allocation5 + $0x478] sm:$0xff]
    %v220 = vld [vmem:[#allocation5 + $0x480] sm:$0xff]
    %v221 = vld [vmem:[#allocation5 + $0x488] sm:$0xff]
    %v222 = vld [vmem:[#allocation5 + $0x490] sm:$0xff]
    %v223 = vld [vmem:[#allocation5 + $0x498] sm:$0xff]
    %v224 = vld [vmem:[#allocation5 + $0x4a0] sm:$0xff]
    %v225 = vld [vmem:[#allocation5 + $0x4a8] sm:$0xff]
    %v226 = vld [vmem:[#allocation5 + $0x4b0] sm:$0xff]
    %v227 = vld [vmem:[#allocation5 + $0x4b8] sm:$0xff]
    %v228 = vld [vmem:[#allocation5 + $0x4c0] sm:$0xff]
    %v229 = vld [vmem:[#allocation5 + $0x4c8] sm:$0xff]
    %v230 = vld [vmem:[#allocation5 + $0x4d0] sm:$0xff]
    %v231 = vld [vmem:[#allocation5 + $0x4d8] sm:$0xff]
    %v232 = vld [vmem:[#allocation5 + $0x4e0] sm:$0xff]
    %v233 = vld [vmem:[#allocation5 + $0x4e8] sm:$0xff]
    %v234 = vld [vmem:[#allocation5 + $0x4f0] sm:$0xff]
    %v235 = vld [vmem:[#allocation5 + $0x4f8] sm:$0xff]
    %v236 = vld [vmem:[#allocation5 + $0x500] sm:$0xff]
    %v237 = vld [vmem:[#allocation5 + $0x508] sm:$0xff]
    %v238 = vld [vmem:[#allocation5 + $0x510] sm:$0xff]
    %v239 = vld [vmem:[#allocation5 + $0x518] sm:$0xff]
    %v240 = vld [vmem:[#allocation5 + $0x520] sm:$0xff]
    %v241 = vld [vmem:[#allocation5 + $0x528] sm:$0xff]
    %v242 = vld [vmem:[#allocation5 + $0x530] sm:$0xff]
    %v243 = vld [vmem:[#allocation5 + $0x538] sm:$0xff]
    %v244 = vld [vmem:[#allocation5 + $0x540] sm:$0xff]
    %v245 = vld [vmem:[#allocation5 + $0x548] sm:$0xff]
    %v246 = vld [vmem:[#allocation5 + $0x550] sm:$0xff]
    %v247 = vld [vmem:[#allocation5 + $0x558] sm:$0xff]
    %v248 = vld [vmem:[#allocation5 + $0x560] sm:$0xff]
    %v249 = vld [vmem:[#allocation5 + $0x568] sm:$0xff]
    %v250 = vld [vmem:[#allocation5 + $0x570] sm:$0xff]
    %v251 = vld [vmem:[#allocation5 + $0x578] sm:$0xff]
    %v252 = vld [vmem:[#allocation5 + $0x580] sm:$0xff]
    %v253 = vld [vmem:[#allocation5 + $0x588] sm:$0xff]
    %v254 = vld [vmem:[#allocation5 + $0x590] sm:$0xff]
    %v255 = vld [vmem:[#allocation5 + $0x598] sm:$0xff]
    %v256 = vld [vmem:[#allocation5 + $0x5a0] sm:$0xff]
    %v257 = vld [vmem:[#allocation5 + $0x5a8] sm:$0xff]
    %v258 = vld [vmem:[#allocation5 + $0x5b0] sm:$0xff]
    %v259 = vld [vmem:[#allocation5 + $0x5b8] sm:$0xff]
    %v260 = vld [vmem:[#allocation5 + $0x5c0] sm:$0xff]
    %v261 = vld [vmem:[#allocation5 + $0x5c8] sm:$0xff]
    %v262 = vld [vmem:[#allocation5 + $0x5d0] sm:$0xff]
    %v263 = vld [vmem:[#allocation5 + $0x5d8] sm:$0xff]
    %v264 = vld [vmem:[#allocation5 + $0x5e0] sm:$0xff]
    %v265 = vld [vmem:[#allocation5 + $0x5e8] sm:$0xff]
    %v266 = vld [vmem:[#allocation5 + $0x5f0] sm:$0xff]
    %v267 = vld [vmem:[#allocation5 + $0x5f8] sm:$0xff]
    %v268 = vld [vmem:[#allocation5 + $0x600] sm:$0xff]
    %v269 = vld [vmem:[#allocation5 + $0x608] sm:$0xff]
    %v270 = vld [vmem:[#allocation5 + $0x610] sm:$0xff]
    %v271 = vld [vmem:[#allocation5 + $0x618] sm:$0xff]
    %v272 = vld [vmem:[#allocation5 + $0x620] sm:$0xff]
    %v273 = vld [vmem:[#allocation5 + $0x628] sm:$0xff]
    %v274 = vld [vmem:[#allocation5 + $0x630] sm:$0xff]
    %v275 = vld [vmem:[#allocation5 + $0x638] sm:$0xff]
    %v276 = vld [vmem:[#allocation5 + $0x640] sm:$0xff]
    %v277 = vld [vmem:[#allocation5 + $0x648] sm:$0xff]
    %v278 = vld [vmem:[#allocation5 + $0x650] sm:$0xff]
    %v279 = vld [vmem:[#allocation5 + $0x658] sm:$0xff]
    %v280 = vld [vmem:[#allocation5 + $0x660] sm:$0xff]
    %v281 = vld [vmem:[#allocation5 + $0x668] sm:$0xff]
    %v282 = vld [vmem:[#allocation5 + $0x670] sm:$0xff]
    %v283 = vld [vmem:[#allocation5 + $0x678] sm:$0xff]
    %v284 = vld [vmem:[#allocation5 + $0x680] sm:$0xff]
    %v285 = vld [vmem:[#allocation5 + $0x688] sm:$0xff]
    %v286 = vld [vmem:[#allocation5 + $0x690] sm:$0xff]
    %v287 = vld [vmem:[#allocation5 + $0x698] sm:$0xff]
    %v288 = vld [vmem:[#allocation5 + $0x6a0] sm:$0xff]
    %v289 = vld [vmem:[#allocation5 + $0x6a8] sm:$0xff]
    %v290 = vld [vmem:[#allocation5 + $0x6b0] sm:$0xff]
    %v291 = vld [vmem:[#allocation5 + $0x6b8] sm:$0xff]
    %v292 = vld [vmem:[#allocation5 + $0x6c0] sm:$0xff]
    %v293 = vld [vmem:[#allocation5 + $0x6c8] sm:$0xff]
    %v294 = vld [vmem:[#allocation5 + $0x6d0] sm:$0xff]
    %v295 = vld [vmem:[#allocation5 + $0x6d8] sm:$0xff]
    %v296 = vld [vmem:[#allocation5 + $0x6e0] sm:$0xff]
    %v297 = vld [vmem:[#allocation5 + $0x6e8] sm:$0xff]
    %v298 = vld [vmem:[#allocation5 + $0x6f0] sm:$0xff]
    %v299 = vld [vmem:[#allocation5 + $0x6f8] sm:$0xff]
    %v300 = vld [vmem:[#allocation5 + $0x700] sm:$0xff]
    %v301 = vld [vmem:[#allocation5 + $0x708] sm:$0xff]
    %v302 = vld [vmem:[#allocation5 + $0x710] sm:$0xff]
    %v303 = vld [vmem:[#allocation5 + $0x718] sm:$0xff]
    %v304 = vld [vmem:[#allocation5 + $0x720] sm:$0xff]
    %v305 = vld [vmem:[#allocation5 + $0x728] sm:$0xff]
    %v306 = vld [vmem:[#allocation5 + $0x730] sm:$0xff]
    %v307 = vld [vmem:[#allocation5 + $0x738] sm:$0xff]
    %v308 = vld [vmem:[#allocation5 + $0x740] sm:$0xff]
    %v309 = vld [vmem:[#allocation5 + $0x748] sm:$0xff]
    %v310 = vld [vmem:[#allocation5 + $0x750] sm:$0xff]
    %v311 = vld [vmem:[#allocation5 + $0x758] sm:$0xff]
    %v312 = vld [vmem:[#allocation5 + $0x760] sm:$0xff]
    %v313 = vld [vmem:[#allocation5 + $0x768] sm:$0xff]
    %v314 = vld [vmem:[#allocation5 + $0x770] sm:$0xff]
    %v315 = vld [vmem:[#allocation5 + $0x778] sm:$0xff]
    %v316 = vld [vmem:[#allocation5 + $0x780] sm:$0xff]
    %v317 = vld [vmem:[#allocation5 + $0x788] sm:$0xff]
    %v318 = vld [vmem:[#allocation5 + $0x790] sm:$0xff]
    %v319 = vld [vmem:[#allocation5 + $0x798] sm:$0xff]
    %v320 = vld [vmem:[#allocation5 + $0x7a0] sm:$0xff]
    %v321 = vld [vmem:[#allocation5 + $0x7a8] sm:$0xff]
    %v322 = vld [vmem:[#allocation5 + $0x7b0] sm:$0xff]
    %v323 = vld [vmem:[#allocation5 + $0x7b8] sm:$0xff]
    %v324 = vld [vmem:[#allocation5 + $0x7c0] sm:$0xff]
    %v325 = vld [vmem:[#allocation5 + $0x7c8] sm:$0xff]
    %v326 = vld [vmem:[#allocation5 + $0x7d0] sm:$0xff]
    %v327 = vld [vmem:[#allocation5 + $0x7d8] sm:$0xff]
    %v328 = vld [vmem:[#allocation5 + $0x7e0] sm:$0xff]
    %v329 = vld [vmem:[#allocation5 + $0x7e8] sm:$0xff]
    %v330 = vld [vmem:[#allocation5 + $0x7f0] sm:$0xff]
    %v331 = vld [vmem:[#allocation5 + $0x7f8] sm:$0xff]
    %v332 = vld [vmem:[#allocation5 + $0x800] sm:$0xff]
    %v333 = vld [vmem:[#allocation5 + $0x808] sm:$0xff]
    %v334 = vld [vmem:[#allocation5 + $0x810] sm:$0xff]
    %v335 = vld [vmem:[#allocation5 + $0x818] sm:$0xff]
    %v336 = vld [vmem:[#allocation5 + $0x820] sm:$0xff]
    %v337 = vld [vmem:[#allocation5 + $0x828] sm:$0xff]
    %v338 = vld [vmem:[#allocation5 + $0x830] sm:$0xff]
    %v339 = vld [vmem:[#allocation5 + $0x838] sm:$0xff]
    %v340 = vld [vmem:[#allocation5 + $0x840] sm:$0xff]
    %v341 = vld [vmem:[#allocation5 + $0x848] sm:$0xff]
    %v342 = vld [vmem:[#allocation5 + $0x850] sm:$0xff]
    %v343 = vld [vmem:[#allocation5 + $0x858] sm:$0xff]
    %v344 = vld [vmem:[#allocation5 + $0x860] sm:$0xff]
    %v345 = vld [vmem:[#allocation5 + $0x868] sm:$0xff]
    %v346 = vld [vmem:[#allocation5 + $0x870] sm:$0xff]
    %v347 = vld [vmem:[#allocation5 + $0x878] sm:$0xff]
    %v348 = vld [vmem:[#allocation5 + $0x880] sm:$0xff]
    %v349 = vld [vmem:[#allocation5 + $0x888] sm:$0xff]
    %v350 = vld [vmem:[#allocation5 + $0x890] sm:$0xff]
    %v351 = vld [vmem:[#allocation5 + $0x898] sm:$0xff]
    %v352 = vld [vmem:[#allocation5 + $0x8a0] sm:$0xff]
    %v353 = vld [vmem:[#allocation5 + $0x8a8] sm:$0xff]
    %v354 = vld [vmem:[#allocation5 + $0x8b0] sm:$0xff]
    %v355 = vld [vmem:[#allocation5 + $0x8b8] sm:$0xff]
    %v356 = vld [vmem:[#allocation5 + $0x8c0] sm:$0xff]
    %v357 = vld [vmem:[#allocation5 + $0x8c8] sm:$0xff]
    %v358 = vld [vmem:[#allocation5 + $0x8d0] sm:$0xff]
    %v359 = vld [vmem:[#allocation5 + $0x8d8] sm:$0xff]
    %v360 = vld [vmem:[#allocation5 + $0x8e0] sm:$0xff]
    %v361 = vld [vmem:[#allocation5 + $0x8e8] sm:$0xff]
    %v362 = vld [vmem:[#allocation5 + $0x8f0] sm:$0xff]
    %v363 = vld [vmem:[#allocation5 + $0x8f8] sm:$0xff]
    %v364 = vld [vmem:[#allocation5 + $0x900] sm:$0xff]
    %v365 = vld [vmem:[#allocation5 + $0x908] sm:$0xff]
    %v366 = vld [vmem:[#allocation5 + $0x910] sm:$0xff]
    %v367 = vld [vmem:[#allocation5 + $0x918] sm:$0xff]
    %v368 = vld [vmem:[#allocation5 + $0x920] sm:$0xff]
    %v369 = vld [vmem:[#allocation5 + $0x928] sm:$0xff]
    %v370 = vld [vmem:[#allocation5 + $0x930] sm:$0xff]
    %v371 = vld [vmem:[#allocation5 + $0x938] sm:$0xff]
    %v372 = vld [vmem:[#allocation5 + $0x940] sm:$0xff]
    %v373 = vld [vmem:[#allocation5 + $0x948] sm:$0xff]
    %v374 = vld [vmem:[#allocation5 + $0x950] sm:$0xff]
    %v375 = vld [vmem:[#allocation5 + $0x958] sm:$0xff]
    %v376 = vld [vmem:[#allocation5 + $0x960] sm:$0xff]
    %v377 = vld [vmem:[#allocation5 + $0x968] sm:$0xff]
    %v378 = vld [vmem:[#allocation5 + $0x970] sm:$0xff]
    %v379 = vld [vmem:[#allocation5 + $0x978] sm:$0xff]
    %v380 = vld [vmem:[#allocation5 + $0x980] sm:$0xff]
    %v381 = vld [vmem:[#allocation5 + $0x988] sm:$0xff]
    %v382 = vld [vmem:[#allocation5 + $0x990] sm:$0xff]
    %v383 = vld [vmem:[#allocation5 + $0x998] sm:$0xff]
    %v384 = vld [vmem:[#allocation5 + $0x9a0] sm:$0xff]
    %v385 = vld [vmem:[#allocation5 + $0x9a8] sm:$0xff]
    %v386 = vld [vmem:[#allocation5 + $0x9b0] sm:$0xff]
    %v387 = vld [vmem:[#allocation5 + $0x9b8] sm:$0xff]
    %v388 = vld [vmem:[#allocation5 + $0x9c0] sm:$0xff]
    %v389 = vld [vmem:[#allocation5 + $0x9c8] sm:$0xff]
    %v390 = vld [vmem:[#allocation5 + $0x9d0] sm:$0xff]
    %v391 = vld [vmem:[#allocation5 + $0x9d8] sm:$0xff]
    %v392 = vld [vmem:[#allocation5 + $0x9e0] sm:$0xff]
    %v393 = vld [vmem:[#allocation5 + $0x9e8] sm:$0xff]
    %v394 = vld [vmem:[#allocation5 + $0x9f0] sm:$0xff]
    %v395 = vld [vmem:[#allocation5 + $0x9f8] sm:$0xff]
    %v396 = vld [vmem:[#allocation5 + $0xa00] sm:$0xff]
    %v397 = vld [vmem:[#allocation5 + $0xa08] sm:$0xff]
    %v398 = vld [vmem:[#allocation5 + $0xa10] sm:$0xff]
    %v399 = vld [vmem:[#allocation5 + $0xa18] sm:$0xff]
    %v400 = vld [vmem:[#allocation5 + $0xa20] sm:$0xff]
    %v401 = vld [vmem:[#allocation5 + $0xa28] sm:$0xff]
    %v402 = vld [vmem:[#allocation5 + $0xa30] sm:$0xff]
    %v403 = vld [vmem:[#allocation5 + $0xa38] sm:$0xff]
    %v404 = vld [vmem:[#allocation5 + $0xa40] sm:$0xff]
    %v405 = vld [vmem:[#allocation5 + $0xa48] sm:$0xff]
    %v406 = vld [vmem:[#allocation5 + $0xa50] sm:$0xff]
    %v407 = vld [vmem:[#allocation5 + $0xa58] sm:$0xff]
    %v408 = vld [vmem:[#allocation5 + $0xa60] sm:$0xff]
    %v409 = vld [vmem:[#allocation5 + $0xa68] sm:$0xff]
    %v410 = vld [vmem:[#allocation5 + $0xa70] sm:$0xff]
    %v411 = vld [vmem:[#allocation5 + $0xa78] sm:$0xff]
    %v412 = vld [vmem:[#allocation5 + $0xa80] sm:$0xff]
    %v413 = vld [vmem:[#allocation5 + $0xa88] sm:$0xff]
    %v414 = vld [vmem:[#allocation5 + $0xa90] sm:$0xff]
    %v415 = vld [vmem:[#allocation5 + $0xa98] sm:$0xff]
    %v416 = vld [vmem:[#allocation5 + $0xaa0] sm:$0xff]
    %v417 = vld [vmem:[#allocation5 + $0xaa8] sm:$0xff]
    %v418 = vld [vmem:[#allocation5 + $0xab0] sm:$0xff]
    %v419 = vld [vmem:[#allocation5 + $0xab8] sm:$0xff]
    %v420 = vld [vmem:[#allocation5 + $0xac0] sm:$0xff]
    %v421 = vld [vmem:[#allocation5 + $0xac8] sm:$0xff]
    %v422 = vld [vmem:[#allocation5 + $0xad0] sm:$0xff]
    %v423 = vld [vmem:[#allocation5 + $0xad8] sm:$0xff]
    %v424 = vld [vmem:[#allocation5 + $0xae0] sm:$0xff]
    %v425 = vld [vmem:[#allocation5 + $0xae8] sm:$0xff]
    %v426 = vld [vmem:[#allocation5 + $0xaf0] sm:$0xff]
    %v427 = vld [vmem:[#allocation5 + $0xaf8] sm:$0xff]
    %v428 = vld [vmem:[#allocation5 + $0xb00] sm:$0xff]
    %v429 = vld [vmem:[#allocation5 + $0xb08] sm:$0xff]
    %v430 = vld [vmem:[#allocation5 + $0xb10] sm:$0xff]
    %v431 = vld [vmem:[#allocation5 + $0xb18] sm:$0xff]
    %v432 = vld [vmem:[#allocation5 + $0xb20] sm:$0xff]
    %v433 = vld [vmem:[#allocation5 + $0xb28] sm:$0xff]
    %v434 = vld [vmem:[#allocation5 + $0xb30] sm:$0xff]
    %v435 = vld [vmem:[#allocation5 + $0xb38] sm:$0xff]
    %v436 = vld [vmem:[#allocation5 + $0xb40] sm:$0xff]
    %v437 = vld [vmem:[#allocation5 + $0xb48] sm:$0xff]
    %v438 = vld [vmem:[#allocation5 + $0xb50] sm:$0xff]
    %v439 = vld [vmem:[#allocation5 + $0xb58] sm:$0xff]
    %v440 = vld [vmem:[#allocation5 + $0xb60] sm:$0xff]
    %v441 = vld [vmem:[#allocation5 + $0xb68] sm:$0xff]
    %v442 = vld [vmem:[#allocation5 + $0xb70] sm:$0xff]
    %v443 = vld [vmem:[#allocation5 + $0xb78] sm:$0xff]
    %v444 = vld [vmem:[#allocation5 + $0xb80] sm:$0xff]
    %v445 = vld [vmem:[#allocation5 + $0xb88] sm:$0xff]
    %v446 = vld [vmem:[#allocation5 + $0xb90] sm:$0xff]
    %v447 = vld [vmem:[#allocation5 + $0xb98] sm:$0xff]
    %v448 = vld [vmem:[#allocation5 + $0xba0] sm:$0xff]
    %v449 = vld [vmem:[#allocation5 + $0xba8] sm:$0xff]
    %v450 = vld [vmem:[#allocation5 + $0xbb0] sm:$0xff]
    %v451 = vld [vmem:[#allocation5 + $0xbb8] sm:$0xff]
    %v452 = vld [vmem:[#allocation5 + $0xbc0] sm:$0xff]
    %v453 = vld [vmem:[#allocation5 + $0xbc8] sm:$0xff]
    %v454 = vld [vmem:[#allocation5 + $0xbd0] sm:$0xff]
    %v455 = vld [vmem:[#allocation5 + $0xbd8] sm:$0xff]
    %v456 = vld [vmem:[#allocation5 + $0xbe0] sm:$0xff]
    %v457 = vld [vmem:[#allocation5 + $0xbe8] sm:$0xff]
    %v458 = vld [vmem:[#allocation5 + $0xbf0] sm:$0xff]
    %v459 = vld [vmem:[#allocation5 + $0xbf8] sm:$0xff]
    %v460 = vld [vmem:[#allocation5 + $0xc00] sm:$0xff]
    %v461 = vld [vmem:[#allocation5 + $0xc08] sm:$0xff]
    %v462 = vld [vmem:[#allocation5 + $0xc10] sm:$0xff]
    %v463 = vld [vmem:[#allocation5 + $0xc18] sm:$0xff]
    %v464 = vld [vmem:[#allocation5 + $0xc20] sm:$0xff]
    %v465 = vld [vmem:[#allocation5 + $0xc28] sm:$0xff]
    %v466 = vld [vmem:[#allocation5 + $0xc30] sm:$0xff]
    %v467 = vld [vmem:[#allocation5 + $0xc38] sm:$0xff]
    %v468 = vld [vmem:[#allocation5 + $0xc40] sm:$0xff]
    %v469 = vld [vmem:[#allocation5 + $0xc48] sm:$0xff]
    %v470 = vld [vmem:[#allocation5 + $0xc50] sm:$0xff]
    %v471 = vld [vmem:[#allocation5 + $0xc58] sm:$0xff]
    %v472 = vld [vmem:[#allocation5 + $0xc60] sm:$0xff]
    %v473 = vld [vmem:[#allocation5 + $0xc68] sm:$0xff]
    %v474 = vld [vmem:[#allocation5 + $0xc70] sm:$0xff]
    %v475 = vld [vmem:[#allocation5 + $0xc78] sm:$0xff]
    %v476 = vld [vmem:[#allocation5 + $0xc80] sm:$0xff]
    %v477 = vld [vmem:[#allocation5 + $0xc88] sm:$0xff]
    %v478 = vld [vmem:[#allocation5 + $0xc90] sm:$0xff]
    %v479 = vld [vmem:[#allocation5 + $0xc98] sm:$0xff]
    %v480 = vld [vmem:[#allocation5 + $0xca0] sm:$0xff]
    %v481 = vld [vmem:[#allocation5 + $0xca8] sm:$0xff]
    %v482 = vld [vmem:[#allocation5 + $0xcb0] sm:$0xff]
    %v483 = vld [vmem:[#allocation5 + $0xcb8] sm:$0xff]
    %v484 = vld [vmem:[#allocation5 + $0xcc0] sm:$0xff]
    %v485 = vld [vmem:[#allocation5 + $0xcc8] sm:$0xff]
    %v486 = vld [vmem:[#allocation5 + $0xcd0] sm:$0xff]
    %v487 = vld [vmem:[#allocation5 + $0xcd8] sm:$0xff]
    %v488 = vld [vmem:[#allocation5 + $0xce0] sm:$0xff]
    %v489 = vld [vmem:[#allocation5 + $0xce8] sm:$0xff]
    %v490 = vld [vmem:[#allocation5 + $0xcf0] sm:$0xff]
    %v491 = vld [vmem:[#allocation5 + $0xcf8] sm:$0xff]
    %v492 = vld [vmem:[#allocation5 + $0xd00] sm:$0xff]
    %v493 = vld [vmem:[#allocation5 + $0xd08] sm:$0xff]
    %v494 = vld [vmem:[#allocation5 + $0xd10] sm:$0xff]
    %v495 = vld [vmem:[#allocation5 + $0xd18] sm:$0xff]
    %v496 = vld [vmem:[#allocation5 + $0xd20] sm:$0xff]
    %v497 = vld [vmem:[#allocation5 + $0xd28] sm:$0xff]
    %v498 = vld [vmem:[#allocation5 + $0xd30] sm:$0xff]
    %v499 = vld [vmem:[#allocation5 + $0xd38] sm:$0xff]
    %v500 = vld [vmem:[#allocation5 + $0xd40] sm:$0xff]
    %v501 = vld [vmem:[#allocation5 + $0xd48] sm:$0xff]
    %v502 = vld [vmem:[#allocation5 + $0xd50] sm:$0xff]
    %v503 = vld [vmem:[#allocation5 + $0xd58] sm:$0xff]
    %v504 = vld [vmem:[#allocation5 + $0xd60] sm:$0xff]
    %v505 = vld [vmem:[#allocation5 + $0xd68] sm:$0xff]
    %v506 = vld [vmem:[#allocation5 + $0xd70] sm:$0xff]
    %v507 = vld [vmem:[#allocation5 + $0xd78] sm:$0xff]
    %v508 = vld [vmem:[#allocation5 + $0xd80] sm:$0xff]
    %v509 = vld [vmem:[#allocation5 + $0xd88] sm:$0xff]
    %v510 = vld [vmem:[#allocation5 + $0xd90] sm:$0xff]
    %v511 = vld [vmem:[#allocation5 + $0xd98] sm:$0xff]
    %v512 = vld [vmem:[#allocation5 + $0xda0] sm:$0xff]
    %v513 = vld [vmem:[#allocation5 + $0xda8] sm:$0xff]
    %v514 = vld [vmem:[#allocation5 + $0xdb0] sm:$0xff]
    %v515 = vld [vmem:[#allocation5 + $0xdb8] sm:$0xff]
    %v516 = vld [vmem:[#allocation5 + $0xdc0] sm:$0xff]
    %v517 = vld [vmem:[#allocation5 + $0xdc8] sm:$0xff]
    %v518 = vld [vmem:[#allocation5 + $0xdd0] sm:$0xff]
    %v519 = vld [vmem:[#allocation5 + $0xdd8] sm:$0xff]
    %v520 = vld [vmem:[#allocation5 + $0xde0] sm:$0xff]
    %v521 = vld [vmem:[#allocation5 + $0xde8] sm:$0xff]
    %v522 = vld [vmem:[#allocation5 + $0xdf0] sm:$0xff]
    %v523 = vld [vmem:[#allocation5 + $0xdf8] sm:$0xff]
    %v524 = vld [vmem:[#allocation5 + $0xe00] sm:$0xff]
    %v525 = vld [vmem:[#allocation5 + $0xe08] sm:$0xff]
    %v526 = vld [vmem:[#allocation5 + $0xe10] sm:$0xff]
    %v527 = vld [vmem:[#allocation5 + $0xe18] sm:$0xff]
    %v528 = vld [vmem:[#allocation5 + $0xe20] sm:$0xff]
    %v529 = vld [vmem:[#allocation5 + $0xe28] sm:$0xff]
    %v530 = vld [vmem:[#allocation5 + $0xe30] sm:$0xff]
    %v531 = vld [vmem:[#allocation5 + $0xe38] sm:$0xff]
    %v532 = vld [vmem:[#allocation5 + $0xe40] sm:$0xff]
    %v533 = vld [vmem:[#allocation5 + $0xe48] sm:$0xff]
    %v534 = vld [vmem:[#allocation5 + $0xe50] sm:$0xff]
    %v535 = vld [vmem:[#allocation5 + $0xe58] sm:$0xff]
    %v536 = vld [vmem:[#allocation5 + $0xe60] sm:$0xff]
    %v537 = vld [vmem:[#allocation5 + $0xe68] sm:$0xff]
    %v538 = vld [vmem:[#allocation5 + $0xe70] sm:$0xff]
    %v539 = vld [vmem:[#allocation5 + $0xe78] sm:$0xff]
    %v540 = vld [vmem:[#allocation5 + $0xe80] sm:$0xff]
    %v541 = vld [vmem:[#allocation5 + $0xe88] sm:$0xff]
    %v542 = vld [vmem:[#allocation5 + $0xe90] sm:$0xff]
    %v543 = vld [vmem:[#allocation5 + $0xe98] sm:$0xff]
    %v544 = vld [vmem:[#allocation5 + $0xea0] sm:$0xff]
    %v545 = vld [vmem:[#allocation5 + $0xea8] sm:$0xff]
    %v546 = vld [vmem:[#allocation5 + $0xeb0] sm:$0xff]
    %v547 = vld [vmem:[#allocation5 + $0xeb8] sm:$0xff]
    %v548 = vld [vmem:[#allocation5 + $0xec0] sm:$0xff]
    %v549 = vld [vmem:[#allocation5 + $0xec8] sm:$0xff]
    %v550 = vld [vmem:[#allocation5 + $0xed0] sm:$0xff]
    %v551 = vld [vmem:[#allocation5 + $0xed8] sm:$0xff]
    %v552 = vld [vmem:[#allocation5 + $0xee0] sm:$0xff]
    %v553 = vld [vmem:[#allocation5 + $0xee8] sm:$0xff]
    %v554 = vld [vmem:[#allocation5 + $0xef0] sm:$0xff]
    %v555 = vld [vmem:[#allocation5 + $0xef8] sm:$0xff]
    %v556 = vld [vmem:[#allocation5 + $0xf00] sm:$0xff]
    %v557 = vld [vmem:[#allocation5 + $0xf08] sm:$0xff]
    %v558 = vld [vmem:[#allocation5 + $0xf10] sm:$0xff]
    %v559 = vld [vmem:[#allocation5 + $0xf18] sm:$0xff]
    %v560 = vld [vmem:[#allocation5 + $0xf20] sm:$0xff]
    %v561 = vld [vmem:[#allocation5 + $0xf28] sm:$0xff]
    %v562 = vld [vmem:[#allocation5 + $0xf30] sm:$0xff]
    %v563 = vld [vmem:[#allocation5 + $0xf38] sm:$0xff]
    %v564 = vld [vmem:[#allocation5 + $0xf40] sm:$0xff]
    %v565 = vld [vmem:[#allocation5 + $0xf48] sm:$0xff]
    %v566 = vld [vmem:[#allocation5 + $0xf50] sm:$0xff]
    %v567 = vld [vmem:[#allocation5 + $0xf58] sm:$0xff]
    %v568 = vld [vmem:[#allocation5 + $0xf60] sm:$0xff]
    %v569 = vld [vmem:[#allocation5 + $0xf68] sm:$0xff]
    %v570 = vld [vmem:[#allocation5 + $0xf70] sm:$0xff]
    %v571 = vld [vmem:[#allocation5 + $0xf78] sm:$0xff]
    %v572 = vld [vmem:[#allocation5 + $0xf80] sm:$0xff]
    %v573 = vld [vmem:[#allocation5 + $0xf88] sm:$0xff]
    %v574 = vld [vmem:[#allocation5 + $0xf90] sm:$0xff]
    %v575 = vld [vmem:[#allocation5 + $0xf98] sm:$0xff]
    %v576 = vld [vmem:[#allocation5 + $0xfa0] sm:$0xff]
    %v577 = vld [vmem:[#allocation5 + $0xfa8] sm:$0xff]
    %v578 = vld [vmem:[#allocation5 + $0xfb0] sm:$0xff]
    %v579 = vld [vmem:[#allocation5 + $0xfb8] sm:$0xff]
    %v580 = vld [vmem:[#allocation5 + $0xfc0] sm:$0xff]
    %v581 = vld [vmem:[#allocation5 + $0xfc8] sm:$0xff]
    %v582 = vld [vmem:[#allocation5 + $0xfd0] sm:$0xff]
    %v583 = vld [vmem:[#allocation5 + $0xfd8] sm:$0xff]
    %v584 = vld [vmem:[#allocation5 + $0xfe0] sm:$0xff]
    %v585 = vld [vmem:[#allocation5 + $0xfe8] sm:$0xff]
    %v586 = vld [vmem:[#allocation5 + $0xff0] sm:$0xff]
    %v587 = vld [vmem:[#allocation5 + $0xff8] sm:$0xff]
    %v588 = vld [vmem:[#allocation5 + $0x1000] sm:$0xff]
    %v589 = vld [vmem:[#allocation5 + $0x1008] sm:$0xff]
    %v590 = vld [vmem:[#allocation5 + $0x1010] sm:$0xff]
    %v591 = vld [vmem:[#allocation5 + $0x1018] sm:$0xff]
    %v592 = vld [vmem:[#allocation5 + $0x1020] sm:$0xff]
    %v593 = vld [vmem:[#allocation5 + $0x1028] sm:$0xff]
    %v594 = vld [vmem:[#allocation5 + $0x1030] sm:$0xff]
    %v595 = vld [vmem:[#allocation5 + $0x1038] sm:$0xff]
    %v596 = vld [vmem:[#allocation5 + $0x1040] sm:$0xff]
    %v597 = vld [vmem:[#allocation5 + $0x1048] sm:$0xff]
    %v598 = vld [vmem:[#allocation5 + $0x1050] sm:$0xff]
    %v599 = vld [vmem:[#allocation5 + $0x1058] sm:$0xff]
    %v600 = vld [vmem:[#allocation5 + $0x1060] sm:$0xff]
    %v601 = vld [vmem:[#allocation5 + $0x1068] sm:$0xff]
    %v602 = vld [vmem:[#allocation5 + $0x1070] sm:$0xff]
    %v603 = vld [vmem:[#allocation5 + $0x1078] sm:$0xff]
    %v604 = vld [vmem:[#allocation5 + $0x1080] sm:$0xff]
    %v605 = vld [vmem:[#allocation5 + $0x1088] sm:$0xff]
    %v606 = vld [vmem:[#allocation5 + $0x1090] sm:$0xff]
    %v607 = vld [vmem:[#allocation5 + $0x1098] sm:$0xff]
    %v608 = vld [vmem:[#allocation5 + $0x10a0] sm:$0xff]
    %v609 = vld [vmem:[#allocation5 + $0x10a8] sm:$0xff]
    %v610 = vld [vmem:[#allocation5 + $0x10b0] sm:$0xff]
    %v611 = vld [vmem:[#allocation5 + $0x10b8] sm:$0xff]
    %v612 = vld [vmem:[#allocation5 + $0x10c0] sm:$0xff]
    %v613 = vld [vmem:[#allocation5 + $0x10c8] sm:$0xff]
    %v614 = vld [vmem:[#allocation5 + $0x10d0] sm:$0xff]
    %v615 = vld [vmem:[#allocation5 + $0x10d8] sm:$0xff]
    %v616 = vld [vmem:[#allocation5 + $0x10e0] sm:$0xff]
    %v617 = vld [vmem:[#allocation5 + $0x10e8] sm:$0xff]
    %v618 = vld [vmem:[#allocation5 + $0x10f0] sm:$0xff]
    %v619 = vld [vmem:[#allocation5 + $0x10f8] sm:$0xff]
    %v620 = vld [vmem:[#allocation5 + $0x1100] sm:$0xff]
    %v621 = vld [vmem:[#allocation5 + $0x1108] sm:$0xff]
    %v622 = vld [vmem:[#allocation5 + $0x1110] sm:$0xff]
    %v623 = vld [vmem:[#allocation5 + $0x1118] sm:$0xff]
    %v624 = vld [vmem:[#allocation5 + $0x1120] sm:$0xff]
    %v625 = vld [vmem:[#allocation5 + $0x1128] sm:$0xff]
    %v626 = vld [vmem:[#allocation5 + $0x1130] sm:$0xff]
    %v627 = vld [vmem:[#allocation5 + $0x1138] sm:$0xff]
    %v628 = vld [vmem:[#allocation5 + $0x1140] sm:$0xff]
    %v629 = vld [vmem:[#allocation5 + $0x1148] sm:$0xff]
    %v630 = vld [vmem:[#allocation5 + $0x1150] sm:$0xff]
    %v631 = vld [vmem:[#allocation5 + $0x1158] sm:$0xff]
    %v632 = vld [vmem:[#allocation5 + $0x1160] sm:$0xff]
    %v633 = vld [vmem:[#allocation5 + $0x1168] sm:$0xff]
    %v634 = vld [vmem:[#allocation5 + $0x1170] sm:$0xff]
    %v635 = vld [vmem:[#allocation5 + $0x1178] sm:$0xff]
    %v636 = vld [vmem:[#allocation5 + $0x1180] sm:$0xff]
    %v637 = vld [vmem:[#allocation5 + $0x1188] sm:$0xff]
    %v638 = vld [vmem:[#allocation5 + $0x1190] sm:$0xff]
    %v639 = vld [vmem:[#allocation5 + $0x1198] sm:$0xff]
    %v640 = vld [vmem:[#allocation5 + $0x11a0] sm:$0xff]
    %v641 = vld [vmem:[#allocation5 + $0x11a8] sm:$0xff]
    %v642 = vld [vmem:[#allocation5 + $0x11b0] sm:$0xff]
    %v643 = vld [vmem:[#allocation5 + $0x11b8] sm:$0xff]
    %v644 = vld [vmem:[#allocation5 + $0x11c0] sm:$0xff]
    %v645 = vld [vmem:[#allocation5 + $0x11c8] sm:$0xff]
    %v646 = vld [vmem:[#allocation5 + $0x11d0] sm:$0xff]
    %v647 = vld [vmem:[#allocation5 + $0x11d8] sm:$0xff]
    %v648 = vld [vmem:[#allocation5 + $0x11e0] sm:$0xff]
    %v649 = vld [vmem:[#allocation5 + $0x11e8] sm:$0xff]
    %v650 = vld [vmem:[#allocation5 + $0x11f0] sm:$0xff]
    %v651 = vld [vmem:[#allocation5 + $0x11f8] sm:$0xff]
    %v652 = vld [vmem:[#allocation5 + $0x1200] sm:$0xff]
    %v653 = vld [vmem:[#allocation5 + $0x1208] sm:$0xff]
    %v654 = vld [vmem:[#allocation5 + $0x1210] sm:$0xff]
    %v655 = vld [vmem:[#allocation5 + $0x1218] sm:$0xff]
    %v656 = vld [vmem:[#allocation5 + $0x1220] sm:$0xff]
    %v657 = vld [vmem:[#allocation5 + $0x1228] sm:$0xff]
    %v658 = vld [vmem:[#allocation5 + $0x1230] sm:$0xff]
    %v659 = vld [vmem:[#allocation5 + $0x1238] sm:$0xff]
    %v660 = vld [vmem:[#allocation5 + $0x1240] sm:$0xff]
    %v661 = vld [vmem:[#allocation5 + $0x1248] sm:$0xff]
    %v662 = vld [vmem:[#allocation5 + $0x1250] sm:$0xff]
    %v663 = vld [vmem:[#allocation5 + $0x1258] sm:$0xff]
    %v664 = vld [vmem:[#allocation5 + $0x1260] sm:$0xff]
    %v665 = vld [vmem:[#allocation5 + $0x1268] sm:$0xff]
    %v666 = vld [vmem:[#allocation5 + $0x1270] sm:$0xff]
    %v667 = vld [vmem:[#allocation5 + $0x1278] sm:$0xff]
    %v668 = vld [vmem:[#allocation5 + $0x1280] sm:$0xff]
    %v669 = vld [vmem:[#allocation5 + $0x1288] sm:$0xff]
    %v670 = vld [vmem:[#allocation5 + $0x1290] sm:$0xff]
    %v671 = vld [vmem:[#allocation5 + $0x1298] sm:$0xff]
    %v672 = vld [vmem:[#allocation5 + $0x12a0] sm:$0xff]
    %v673 = vld [vmem:[#allocation5 + $0x12a8] sm:$0xff]
    %v674 = vld [vmem:[#allocation5 + $0x12b0] sm:$0xff]
    %v675 = vld [vmem:[#allocation5 + $0x12b8] sm:$0xff]
    %v676 = vld [vmem:[#allocation5 + $0x12c0] sm:$0xff]
    %v677 = vld [vmem:[#allocation5 + $0x12c8] sm:$0xff]
    %v678 = vld [vmem:[#allocation5 + $0x12d0] sm:$0xff]
    %v679 = vld [vmem:[#allocation5 + $0x12d8] sm:$0xff]
    %v680 = vld [vmem:[#allocation5 + $0x12e0] sm:$0xff]
    %v681 = vld [vmem:[#allocation5 + $0x12e8] sm:$0xff]
    %v682 = vld [vmem:[#allocation5 + $0x12f0] sm:$0xff]
    %v683 = vld [vmem:[#allocation5 + $0x12f8] sm:$0xff]
    %v684 = vld [vmem:[#allocation5 + $0x1300] sm:$0xff]
    %v685 = vld [vmem:[#allocation5 + $0x1308] sm:$0xff]
    %v686 = vld [vmem:[#allocation5 + $0x1310] sm:$0xff]
    %v687 = vld [vmem:[#allocation5 + $0x1318] sm:$0xff]
    %v688 = vld [vmem:[#allocation5 + $0x1320] sm:$0xff]
    %v689 = vld [vmem:[#allocation5 + $0x1328] sm:$0xff]
    %v690 = vld [vmem:[#allocation5 + $0x1330] sm:$0xff]
    %v691 = vld [vmem:[#allocation5 + $0x1338] sm:$0xff]
    %v692 = vld [vmem:[#allocation5 + $0x1340] sm:$0xff]
    %v693 = vld [vmem:[#allocation5 + $0x1348] sm:$0xff]
    %v694 = vld [vmem:[#allocation5 + $0x1350] sm:$0xff]
    %v695 = vld [vmem:[#allocation5 + $0x1358] sm:$0xff]
    %v696 = vld [vmem:[#allocation5 + $0x1360] sm:$0xff]
    %v697 = vld [vmem:[#allocation5 + $0x1368] sm:$0xff]
    %v698 = vld [vmem:[#allocation5 + $0x1370] sm:$0xff]
    %v699 = vld [vmem:[#allocation5 + $0x1378] sm:$0xff]
    %v700 = vld [vmem:[#allocation5 + $0x1380] sm:$0xff]
    %v701 = vld [vmem:[#allocation5 + $0x1388] sm:$0xff]
    %v702 = vld [vmem:[#allocation5 + $0x1390] sm:$0xff]
    %v703 = vld [vmem:[#allocation5 + $0x1398] sm:$0xff]
    %v704 = vld [vmem:[#allocation5 + $0x13a0] sm:$0xff]
    %v705 = vld [vmem:[#allocation5 + $0x13a8] sm:$0xff]
    %v706 = vld [vmem:[#allocation5 + $0x13b0] sm:$0xff]
    %v707 = vld [vmem:[#allocation5 + $0x13b8] sm:$0xff]
    %v708 = vld [vmem:[#allocation5 + $0x13c0] sm:$0xff]
    %v709 = vld [vmem:[#allocation5 + $0x13c8] sm:$0xff]
    %v710 = vld [vmem:[#allocation5 + $0x13d0] sm:$0xff]
    %v711 = vld [vmem:[#allocation5 + $0x13d8] sm:$0xff]
    %v712 = vld [vmem:[#allocation5 + $0x13e0] sm:$0xff]
    %v713 = vld [vmem:[#allocation5 + $0x13e8] sm:$0xff]
    %v714 = vld [vmem:[#allocation5 + $0x13f0] sm:$0xff]
    %v715 = vld [vmem:[#allocation5 + $0x13f8] sm:$0xff]
    %v716 = vld [vmem:[#allocation5 + $0x1400] sm:$0xff]
    %v717 = vld [vmem:[#allocation5 + $0x1408] sm:$0xff]
    %v718 = vld [vmem:[#allocation5 + $0x1410] sm:$0xff]
    %v719 = vld [vmem:[#allocation5 + $0x1418] sm:$0xff]
    %v720 = vld [vmem:[#allocation5 + $0x1420] sm:$0xff]
    %v721 = vld [vmem:[#allocation5 + $0x1428] sm:$0xff]
    %v722 = vld [vmem:[#allocation5 + $0x1430] sm:$0xff]
    %v723 = vld [vmem:[#allocation5 + $0x1438] sm:$0xff]
    %v724 = vld [vmem:[#allocation5 + $0x1440] sm:$0xff]
    %v725 = vld [vmem:[#allocation5 + $0x1448] sm:$0xff]
    %v726 = vld [vmem:[#allocation5 + $0x1450] sm:$0xff]
    %v727 = vld [vmem:[#allocation5 + $0x1458] sm:$0xff]
    %v728 = vld [vmem:[#allocation5 + $0x1460] sm:$0xff]
    %v729 = vld [vmem:[#allocation5 + $0x1468] sm:$0xff]
    %v730 = vld [vmem:[#allocation5 + $0x1470] sm:$0xff]
    %v731 = vld [vmem:[#allocation5 + $0x1478] sm:$0xff]
    %v732 = vld [vmem:[#allocation5 + $0x1480] sm:$0xff]
    %v733 = vld [vmem:[#allocation5 + $0x1488] sm:$0xff]
    %v734 = vld [vmem:[#allocation5 + $0x1490] sm:$0xff]
    %v735 = vld [vmem:[#allocation5 + $0x1498] sm:$0xff]
    %v736 = vld [vmem:[#allocation5 + $0x14a0] sm:$0xff]
    %v737 = vld [vmem:[#allocation5 + $0x14a8] sm:$0xff]
    %v738 = vld [vmem:[#allocation5 + $0x14b0] sm:$0xff]
    %v739 = vld [vmem:[#allocation5 + $0x14b8] sm:$0xff]
    %v740 = vld [vmem:[#allocation5 + $0x14c0] sm:$0xff]
    %v741 = vld [vmem:[#allocation5 + $0x14c8] sm:$0xff]
    %v742 = vld [vmem:[#allocation5 + $0x14d0] sm:$0xff]
    %v743 = vld [vmem:[#allocation5 + $0x14d8] sm:$0xff]
    %v744 = vld [vmem:[#allocation5 + $0x14e0] sm:$0xff]
    %v745 = vld [vmem:[#allocation5 + $0x14e8] sm:$0xff]
    %v746 = vld [vmem:[#allocation5 + $0x14f0] sm:$0xff]
    %v747 = vld [vmem:[#allocation5 + $0x14f8] sm:$0xff]
    %v748 = vld [vmem:[#allocation5 + $0x1500] sm:$0xff]
    %v749 = vld [vmem:[#allocation5 + $0x1508] sm:$0xff]
    %v750 = vld [vmem:[#allocation5 + $0x1510] sm:$0xff]
    %v751 = vld [vmem:[#allocation5 + $0x1518] sm:$0xff]
    %v752 = vld [vmem:[#allocation5 + $0x1520] sm:$0xff]
    %v753 = vld [vmem:[#allocation5 + $0x1528] sm:$0xff]
    %v754 = vld [vmem:[#allocation5 + $0x1530] sm:$0xff]
    %v755 = vld [vmem:[#allocation5 + $0x1538] sm:$0xff]
    %v756 = vld [vmem:[#allocation5 + $0x1540] sm:$0xff]
    %v757 = vld [vmem:[#allocation5 + $0x1548] sm:$0xff]
    %v758 = vld [vmem:[#allocation5 + $0x1550] sm:$0xff]
    %v759 = vld [vmem:[#allocation5 + $0x1558] sm:$0xff]
    %v760 = vld [vmem:[#allocation5 + $0x1560] sm:$0xff]
    %v761 = vld [vmem:[#allocation5 + $0x1568] sm:$0xff]
    %v762 = vld [vmem:[#allocation5 + $0x1570] sm:$0xff]
    %v763 = vld [vmem:[#allocation5 + $0x1578] sm:$0xff]
    %v764 = vld [vmem:[#allocation5 + $0x1580] sm:$0xff]
    %v765 = vld [vmem:[#allocation5 + $0x1588] sm:$0xff]
    %v766 = vld [vmem:[#allocation5 + $0x1590] sm:$0xff]
    %v767 = vld [vmem:[#allocation5 + $0x1598] sm:$0xff]
    %v768 = vld [vmem:[#allocation5 + $0x15a0] sm:$0xff]
    %v769 = vld [vmem:[#allocation5 + $0x15a8] sm:$0xff]
    %v770 = vld [vmem:[#allocation5 + $0x15b0] sm:$0xff]
    %v771 = vld [vmem:[#allocation5 + $0x15b8] sm:$0xff]
    %v772 = vld [vmem:[#allocation5 + $0x15c0] sm:$0xff]
    %v773 = vld [vmem:[#allocation5 + $0x15c8] sm:$0xff]
    %v774 = vld [vmem:[#allocation5 + $0x15d0] sm:$0xff]
    %v775 = vld [vmem:[#allocation5 + $0x15d8] sm:$0xff]
    %v776 = vld [vmem:[#allocation5 + $0x15e0] sm:$0xff]
    %v777 = vld [vmem:[#allocation5 + $0x15e8] sm:$0xff]
    %v778 = vld [vmem:[#allocation5 + $0x15f0] sm:$0xff]
    %v779 = vld [vmem:[#allocation5 + $0x15f8] sm:$0xff]
    %v780 = vld [vmem:[#allocation5 + $0x1600] sm:$0xff]
    %v781 = vld [vmem:[#allocation5 + $0x1608] sm:$0xff]
    %v782 = vld [vmem:[#allocation5 + $0x1610] sm:$0xff]
    %v783 = vld [vmem:[#allocation5 + $0x1618] sm:$0xff]
    %v784 = vld [vmem:[#allocation5 + $0x1620] sm:$0xff]
    %v785 = vld [vmem:[#allocation5 + $0x1628] sm:$0xff]
    %v786 = vld [vmem:[#allocation5 + $0x1630] sm:$0xff]
    %v787 = vld [vmem:[#allocation5 + $0x1638] sm:$0xff]
    %v788 = vld [vmem:[#allocation5 + $0x1640] sm:$0xff]
    %v789 = vld [vmem:[#allocation5 + $0x1648] sm:$0xff]
    %v790 = vld [vmem:[#allocation5 + $0x1650] sm:$0xff]
    %v791 = vld [vmem:[#allocation5 + $0x1658] sm:$0xff]
    %v792 = vld [vmem:[#allocation5 + $0x1660] sm:$0xff]
    %v793 = vld [vmem:[#allocation5 + $0x1668] sm:$0xff]
    %v794 = vld [vmem:[#allocation5 + $0x1670] sm:$0xff]
    %v795 = vld [vmem:[#allocation5 + $0x1678] sm:$0xff]
    %v796 = vld [vmem:[#allocation5 + $0x1680] sm:$0xff]
    %v797 = vld [vmem:[#allocation5 + $0x1688] sm:$0xff]
    %v798 = vld [vmem:[#allocation5 + $0x1690] sm:$0xff]
    %v799 = vld [vmem:[#allocation5 + $0x1698] sm:$0xff]
    %v800 = vld [vmem:[#allocation5 + $0x16a0] sm:$0xff]
    %v801 = vld [vmem:[#allocation5 + $0x16a8] sm:$0xff]
    %v802 = vld [vmem:[#allocation5 + $0x16b0] sm:$0xff]
    %v803 = vld [vmem:[#allocation5 + $0x16b8] sm:$0xff]
    %v804 = vld [vmem:[#allocation5 + $0x16c0] sm:$0xff]
    %v805 = vld [vmem:[#allocation5 + $0x16c8] sm:$0xff]
    %v806 = vld [vmem:[#allocation5 + $0x16d0] sm:$0xff]
    %v807 = vld [vmem:[#allocation5 + $0x16d8] sm:$0xff]
    %v808 = vld [vmem:[#allocation5 + $0x16e0] sm:$0xff]
    %v809 = vld [vmem:[#allocation5 + $0x16e8] sm:$0xff]
    %v810 = vld [vmem:[#allocation5 + $0x16f0] sm:$0xff]
    %v811 = vld [vmem:[#allocation5 + $0x16f8] sm:$0xff]
    %v812 = vld [vmem:[#allocation5 + $0x1700] sm:$0xff]
    %v813 = vld [vmem:[#allocation5 + $0x1708] sm:$0xff]
    %v814 = vld [vmem:[#allocation5 + $0x1710] sm:$0xff]
    %v815 = vld [vmem:[#allocation5 + $0x1718] sm:$0xff]
    %v816 = vld [vmem:[#allocation5 + $0x1720] sm:$0xff]
    %v817 = vld [vmem:[#allocation5 + $0x1728] sm:$0xff]
    %v818 = vld [vmem:[#allocation5 + $0x1730] sm:$0xff]
    %v819 = vld [vmem:[#allocation5 + $0x1738] sm:$0xff]
    %v820 = vld [vmem:[#allocation5 + $0x1740] sm:$0xff]
    %v821 = vld [vmem:[#allocation5 + $0x1748] sm:$0xff]
    %v822 = vld [vmem:[#allocation5 + $0x1750] sm:$0xff]
    %v823 = vld [vmem:[#allocation5 + $0x1758] sm:$0xff]
    %v824 = vld [vmem:[#allocation5 + $0x1760] sm:$0xff]
    %v825 = vld [vmem:[#allocation5 + $0x1768] sm:$0xff]
    %v826 = vld [vmem:[#allocation5 + $0x1770] sm:$0xff]
    %v827 = vld [vmem:[#allocation5 + $0x1778] sm:$0xff]
    %v828 = vld [vmem:[#allocation5 + $0x1780] sm:$0xff]
    %v829 = vld [vmem:[#allocation5 + $0x1788] sm:$0xff]
    %v830 = vld [vmem:[#allocation5 + $0x1790] sm:$0xff]
    %v831 = vld [vmem:[#allocation5 + $0x1798] sm:$0xff]
    %v832 = vld [vmem:[#allocation5 + $0x17a0] sm:$0xff]
    %v833 = vld [vmem:[#allocation5 + $0x17a8] sm:$0xff]
    %v834 = vld [vmem:[#allocation5 + $0x17b0] sm:$0xff]
    %v835 = vld [vmem:[#allocation5 + $0x17b8] sm:$0xff]
    %v836 = vld [vmem:[#allocation5 + $0x17c0] sm:$0xff]
    %v837 = vld [vmem:[#allocation5 + $0x17c8] sm:$0xff]
    %v838 = vld [vmem:[#allocation5 + $0x17d0] sm:$0xff]
    %v839 = vld [vmem:[#allocation5 + $0x17d8] sm:$0xff]
    %v840 = vld [vmem:[#allocation5 + $0x17e0] sm:$0xff]
    %v841 = vld [vmem:[#allocation5 + $0x17e8] sm:$0xff]
    %v842 = vld [vmem:[#allocation5 + $0x17f0] sm:$0xff]
    %v843 = vld [vmem:[#allocation5 + $0x17f8] sm:$0xff]
    %v844 = vld [vmem:[#allocation5 + $0x1800] sm:$0xff]
    %v845 = vld [vmem:[#allocation5 + $0x1808] sm:$0xff]
    %v846 = vld [vmem:[#allocation5 + $0x1810] sm:$0xff]
    %v847 = vld [vmem:[#allocation5 + $0x1818] sm:$0xff]
    %v848 = vld [vmem:[#allocation5 + $0x1820] sm:$0xff]
    %v849 = vld [vmem:[#allocation5 + $0x1828] sm:$0xff]
    %v850 = vld [vmem:[#allocation5 + $0x1830] sm:$0xff]
    %v851 = vld [vmem:[#allocation5 + $0x1838] sm:$0xff]
    %v852 = vld [vmem:[#allocation5 + $0x1840] sm:$0xff]
    %v853 = vld [vmem:[#allocation5 + $0x1848] sm:$0xff]
    %v854 = vld [vmem:[#allocation5 + $0x1850] sm:$0xff]
    %v855 = vld [vmem:[#allocation5 + $0x1858] sm:$0xff]
    %v856 = vld [vmem:[#allocation5 + $0x1860] sm:$0xff]
    %v857 = vld [vmem:[#allocation5 + $0x1868] sm:$0xff]
    %v858 = vld [vmem:[#allocation5 + $0x1870] sm:$0xff]
    %v859 = vld [vmem:[#allocation5 + $0x1878] sm:$0xff]
    %v860 = vld [vmem:[#allocation5 + $0x1880] sm:$0xff]
    %v861 = vld [vmem:[#allocation5 + $0x1888] sm:$0xff]
    %v862 = vld [vmem:[#allocation5 + $0x1890] sm:$0xff]
    %v863 = vld [vmem:[#allocation5 + $0x1898] sm:$0xff]
    %v864 = vld [vmem:[#allocation5 + $0x18a0] sm:$0xff]
    %v865 = vld [vmem:[#allocation5 + $0x18a8] sm:$0xff]
    %v866 = vld [vmem:[#allocation5 + $0x18b0] sm:$0xff]
    %v867 = vld [vmem:[#allocation5 + $0x18b8] sm:$0xff]
    %v868 = vld [vmem:[#allocation5 + $0x18c0] sm:$0xff]
    %v869 = vld [vmem:[#allocation5 + $0x18c8] sm:$0xff]
    %v870 = vld [vmem:[#allocation5 + $0x18d0] sm:$0xff]
    %v871 = vld [vmem:[#allocation5 + $0x18d8] sm:$0xff]
    %v872 = vld [vmem:[#allocation5 + $0x18e0] sm:$0xff]
    %v873 = vld [vmem:[#allocation5 + $0x18e8] sm:$0xff]
    %v874 = vld [vmem:[#allocation5 + $0x18f0] sm:$0xff]
    %v875 = vld [vmem:[#allocation5 + $0x18f8] sm:$0xff]
    %v876 = vld [vmem:[#allocation5 + $0x1900] sm:$0xff]
    %v877 = vld [vmem:[#allocation5 + $0x1908] sm:$0xff]
    %v878 = vld [vmem:[#allocation5 + $0x1910] sm:$0xff]
    %v879 = vld [vmem:[#allocation5 + $0x1918] sm:$0xff]
    %v880 = vld [vmem:[#allocation5 + $0x1920] sm:$0xff]
    %v881 = vld [vmem:[#allocation5 + $0x1928] sm:$0xff]
    %v882 = vld [vmem:[#allocation5 + $0x1930] sm:$0xff]
    %v883 = vld [vmem:[#allocation5 + $0x1938] sm:$0xff]
    %v884 = vld [vmem:[#allocation5 + $0x1940] sm:$0xff]
    %v885 = vld [vmem:[#allocation5 + $0x1948] sm:$0xff]
    %v886 = vld [vmem:[#allocation5 + $0x1950] sm:$0xff]
    %v887 = vld [vmem:[#allocation5 + $0x1958] sm:$0xff]
    %v888 = vld [vmem:[#allocation5 + $0x1960] sm:$0xff]
    %v889 = vld [vmem:[#allocation5 + $0x1968] sm:$0xff]
    %v890 = vld [vmem:[#allocation5 + $0x1970] sm:$0xff]
    %v891 = vld [vmem:[#allocation5 + $0x1978] sm:$0xff]
    %v892 = vld [vmem:[#allocation5 + $0x1980] sm:$0xff]
    %v893 = vld [vmem:[#allocation5 + $0x1988] sm:$0xff]
    %v894 = vld [vmem:[#allocation5 + $0x1990] sm:$0xff]
    %v895 = vld [vmem:[#allocation5 + $0x1998] sm:$0xff]
    %v896 = vld [vmem:[#allocation5 + $0x19a0] sm:$0xff]
    %v897 = vld [vmem:[#allocation5 + $0x19a8] sm:$0xff]
    %v898 = vld [vmem:[#allocation5 + $0x19b0] sm:$0xff]
    %v899 = vld [vmem:[#allocation5 + $0x19b8] sm:$0xff]
    %v900 = vld [vmem:[#allocation5 + $0x19c0] sm:$0xff]
    %v901 = vld [vmem:[#allocation5 + $0x19c8] sm:$0xff]
    %v902 = vld [vmem:[#allocation5 + $0x19d0] sm:$0xff]
    %v903 = vld [vmem:[#allocation5 + $0x19d8] sm:$0xff]
    %v904 = vld [vmem:[#allocation5 + $0x19e0] sm:$0xff]
    %v905 = vld [vmem:[#allocation5 + $0x19e8] sm:$0xff]
    %v906 = vld [vmem:[#allocation5 + $0x19f0] sm:$0xff]
    %v907 = vld [vmem:[#allocation5 + $0x19f8] sm:$0xff]
    %v908 = vld [vmem:[#allocation5 + $0x1a00] sm:$0xff]
    %v909 = vld [vmem:[#allocation5 + $0x1a08] sm:$0xff]
    %v910 = vld [vmem:[#allocation5 + $0x1a10] sm:$0xff]
    %v911 = vld [vmem:[#allocation5 + $0x1a18] sm:$0xff]
    %v912 = vld [vmem:[#allocation5 + $0x1a20] sm:$0xff]
    %v913 = vld [vmem:[#allocation5 + $0x1a28] sm:$0xff]
    %v914 = vld [vmem:[#allocation5 + $0x1a30] sm:$0xff]
    %v915 = vld [vmem:[#allocation5 + $0x1a38] sm:$0xff]
    %v916 = vld [vmem:[#allocation5 + $0x1a40] sm:$0xff]
    %v917 = vld [vmem:[#allocation5 + $0x1a48] sm:$0xff]
    %v918 = vld [vmem:[#allocation5 + $0x1a50] sm:$0xff]
    %v919 = vld [vmem:[#allocation5 + $0x1a58] sm:$0xff]
    %v920 = vld [vmem:[#allocation5 + $0x1a60] sm:$0xff]
    %v921 = vld [vmem:[#allocation5 + $0x1a68] sm:$0xff]
    %v922 = vld [vmem:[#allocation5 + $0x1a70] sm:$0xff]
    %v923 = vld [vmem:[#allocation5 + $0x1a78] sm:$0xff]
    %v924 = vld [vmem:[#allocation5 + $0x1a80] sm:$0xff]
    %v925 = vld [vmem:[#allocation5 + $0x1a88] sm:$0xff]
    %v926 = vld [vmem:[#allocation5 + $0x1a90] sm:$0xff]
    %v927 = vld [vmem:[#allocation5 + $0x1a98] sm:$0xff]
    %v928 = vld [vmem:[#allocation5 + $0x1aa0] sm:$0xff]
    %v929 = vld [vmem:[#allocation5 + $0x1aa8] sm:$0xff]
    %v930 = vld [vmem:[#allocation5 + $0x1ab0] sm:$0xff]
    %v931 = vld [vmem:[#allocation5 + $0x1ab8] sm:$0xff]
    %v932 = vld [vmem:[#allocation5 + $0x1ac0] sm:$0xff]
    %v933 = vld [vmem:[#allocation5 + $0x1ac8] sm:$0xff]
    %v934 = vld [vmem:[#allocation5 + $0x1ad0] sm:$0xff]
    %v935 = vld [vmem:[#allocation5 + $0x1ad8] sm:$0xff]
    %v936 = vld [vmem:[#allocation5 + $0x1ae0] sm:$0xff]
    %v937 = vld [vmem:[#allocation5 + $0x1ae8] sm:$0xff]
    %v938 = vld [vmem:[#allocation5 + $0x1af0] sm:$0xff]
    %v939 = vld [vmem:[#allocation5 + $0x1af8] sm:$0xff]
    %v940 = vld [vmem:[#allocation5 + $0x1b00] sm:$0xff]
    %v941 = vld [vmem:[#allocation5 + $0x1b08] sm:$0xff]
    %v942 = vld [vmem:[#allocation5 + $0x1b10] sm:$0xff]
    %v943 = vld [vmem:[#allocation5 + $0x1b18] sm:$0xff]
    %v944 = vld [vmem:[#allocation5 + $0x1b20] sm:$0xff]
    %v945 = vld [vmem:[#allocation5 + $0x1b28] sm:$0xff]
    %v946 = vld [vmem:[#allocation5 + $0x1b30] sm:$0xff]
    %v947 = vld [vmem:[#allocation5 + $0x1b38] sm:$0xff]
    %v948 = vld [vmem:[#allocation5 + $0x1b40] sm:$0xff]
    %v949 = vld [vmem:[#allocation5 + $0x1b48] sm:$0xff]
    %v950 = vld [vmem:[#allocation5 + $0x1b50] sm:$0xff]
    %v951 = vld [vmem:[#allocation5 + $0x1b58] sm:$0xff]
    %v952 = vld [vmem:[#allocation5 + $0x1b60] sm:$0xff]
    %v953 = vld [vmem:[#allocation5 + $0x1b68] sm:$0xff]
    %v954 = vld [vmem:[#allocation5 + $0x1b70] sm:$0xff]
    %v955 = vld [vmem:[#allocation5 + $0x1b78] sm:$0xff]
    %v956 = vld [vmem:[#allocation5 + $0x1b80] sm:$0xff]
    %v957 = vld [vmem:[#allocation5 + $0x1b88] sm:$0xff]
    %v958 = vld [vmem:[#allocation5 + $0x1b90] sm:$0xff]
    %v959 = vld [vmem:[#allocation5 + $0x1b98] sm:$0xff]
    %v960 = vld [vmem:[#allocation5 + $0x1ba0] sm:$0xff]
    %v961 = vld [vmem:[#allocation5 + $0x1ba8] sm:$0xff]
    %v962 = vld [vmem:[#allocation5 + $0x1bb0] sm:$0xff]
    %v963 = vld [vmem:[#allocation5 + $0x1bb8] sm:$0xff]
    %v964 = vld [vmem:[#allocation5 + $0x1bc0] sm:$0xff]
    %v965 = vld [vmem:[#allocation5 + $0x1bc8] sm:$0xff]
    %v966 = vld [vmem:[#allocation5 + $0x1bd0] sm:$0xff]
    %v967 = vld [vmem:[#allocation5 + $0x1bd8] sm:$0xff]
    %v968 = vld [vmem:[#allocation5 + $0x1be0] sm:$0xff]
    %v969 = vld [vmem:[#allocation5 + $0x1be8] sm:$0xff]
    %v970 = vld [vmem:[#allocation5 + $0x1bf0] sm:$0xff]
    %v971 = vld [vmem:[#allocation5 + $0x1bf8] sm:$0xff]
    %v972 = vld [vmem:[#allocation5 + $0x1c00] sm:$0xff]
    %v973 = vld [vmem:[#allocation5 + $0x1c08] sm:$0xff]
    %v974 = vld [vmem:[#allocation5 + $0x1c10] sm:$0xff]
    %v975 = vld [vmem:[#allocation5 + $0x1c18] sm:$0xff]
    %v976 = vld [vmem:[#allocation5 + $0x1c20] sm:$0xff]
    %v977 = vld [vmem:[#allocation5 + $0x1c28] sm:$0xff]
    %v978 = vld [vmem:[#allocation5 + $0x1c30] sm:$0xff]
    %v979 = vld [vmem:[#allocation5 + $0x1c38] sm:$0xff]
    %v980 = vld [vmem:[#allocation5 + $0x1c40] sm:$0xff]
    %v981 = vld [vmem:[#allocation5 + $0x1c48] sm:$0xff]
    %v982 = vld [vmem:[#allocation5 + $0x1c50] sm:$0xff]
    %v983 = vld [vmem:[#allocation5 + $0x1c58] sm:$0xff]
    %v984 = vld [vmem:[#allocation5 + $0x1c60] sm:$0xff]
    %v985 = vld [vmem:[#allocation5 + $0x1c68] sm:$0xff]
    %v986 = vld [vmem:[#allocation5 + $0x1c70] sm:$0xff]
    %v987 = vld [vmem:[#allocation5 + $0x1c78] sm:$0xff]
    %v988 = vld [vmem:[#allocation5 + $0x1c80] sm:$0xff]
    %v989 = vld [vmem:[#allocation5 + $0x1c88] sm:$0xff]
    %v990 = vld [vmem:[#allocation5 + $0x1c90] sm:$0xff]
    %v991 = vld [vmem:[#allocation5 + $0x1c98] sm:$0xff]
    %v992 = vld [vmem:[#allocation5 + $0x1ca0] sm:$0xff]
    %v993 = vld [vmem:[#allocation5 + $0x1ca8] sm:$0xff]
    %v994 = vld [vmem:[#allocation5 + $0x1cb0] sm:$0xff]
    %v995 = vld [vmem:[#allocation5 + $0x1cb8] sm:$0xff]
    %v996 = vld [vmem:[#allocation5 + $0x1cc0] sm:$0xff]
    %v997 = vld [vmem:[#allocation5 + $0x1cc8] sm:$0xff]
    %v998 = vld [vmem:[#allocation5 + $0x1cd0] sm:$0xff]
    %v999 = vld [vmem:[#allocation5 + $0x1cd8] sm:$0xff]
    %v1000 = vld [vmem:[#allocation5 + $0x1ce0] sm:$0xff]
    %v1001 = vld [vmem:[#allocation5 + $0x1ce8] sm:$0xff]
    %v1002 = vld [vmem:[#allocation5 + $0x1cf0] sm:$0xff]
    %v1003 = vld [vmem:[#allocation5 + $0x1cf8] sm:$0xff]
    %v1004 = vld [vmem:[#allocation5 + $0x1d00] sm:$0xff]
    %v1005 = vld [vmem:[#allocation5 + $0x1d08] sm:$0xff]
    %v1006 = vld [vmem:[#allocation5 + $0x1d10] sm:$0xff]
    %v1007 = vld [vmem:[#allocation5 + $0x1d18] sm:$0xff]
    %v1008 = vld [vmem:[#allocation5 + $0x1d20] sm:$0xff]
    %v1009 = vld [vmem:[#allocation5 + $0x1d28] sm:$0xff]
    %v1010 = vld [vmem:[#allocation5 + $0x1d30] sm:$0xff]
    %v1011 = vld [vmem:[#allocation5 + $0x1d38] sm:$0xff]
    %v1012 = vld [vmem:[#allocation5 + $0x1d40] sm:$0xff]
    %v1013 = vld [vmem:[#allocation5 + $0x1d48] sm:$0xff]
    %v1014 = vld [vmem:[#allocation5 + $0x1d50] sm:$0xff]
    %v1015 = vld [vmem:[#allocation5 + $0x1d58] sm:$0xff]
    %v1016 = vld [vmem:[#allocation5 + $0x1d60] sm:$0xff]
    %v1017 = vld [vmem:[#allocation5 + $0x1d68] sm:$0xff]
    %v1018 = vld [vmem:[#allocation5 + $0x1d70] sm:$0xff]
    %v1019 = vld [vmem:[#allocation5 + $0x1d78] sm:$0xff]
    %v1020 = vld [vmem:[#allocation5 + $0x1d80] sm:$0xff]
    %v1021 = vld [vmem:[#allocation5 + $0x1d88] sm:$0xff]
    %v1022 = vld [vmem:[#allocation5 + $0x1d90] sm:$0xff]
    %v1023 = vld [vmem:[#allocation5 + $0x1d98] sm:$0xff]
    %v1024 = vld [vmem:[#allocation5 + $0x1da0] sm:$0xff]
    %v1025 = vld [vmem:[#allocation5 + $0x1da8] sm:$0xff]
    %v1026 = vld [vmem:[#allocation5 + $0x1db0] sm:$0xff]
    %v1027 = vld [vmem:[#allocation5 + $0x1db8] sm:$0xff]
    %v1028 = vld [vmem:[#allocation5 + $0x1dc0] sm:$0xff]
    %v1029 = vld [vmem:[#allocation5 + $0x1dc8] sm:$0xff]
    %v1030 = vld [vmem:[#allocation5 + $0x1dd0] sm:$0xff]
    %v1031 = vld [vmem:[#allocation5 + $0x1dd8] sm:$0xff]
    %v1032 = vld [vmem:[#allocation5 + $0x1de0] sm:$0xff]
    %v1033 = vld [vmem:[#allocation5 + $0x1de8] sm:$0xff]
    %v1034 = vld [vmem:[#allocation5 + $0x1df0] sm:$0xff]
    %v1035 = vld [vmem:[#allocation5 + $0x1df8] sm:$0xff]
    %v1036 = vld [vmem:[#allocation5 + $0x1e00] sm:$0xff]
    %v1037 = vld [vmem:[#allocation5 + $0x1e08] sm:$0xff]
    %v1038 = vld [vmem:[#allocation5 + $0x1e10] sm:$0xff]
    %v1039 = vld [vmem:[#allocation5 + $0x1e18] sm:$0xff]
    %v1040 = vld [vmem:[#allocation5 + $0x1e20] sm:$0xff]
    %v1041 = vld [vmem:[#allocation5 + $0x1e28] sm:$0xff]
    %v1042 = vld [vmem:[#allocation5 + $0x1e30] sm:$0xff]
    %v1043 = vld [vmem:[#allocation5 + $0x1e38] sm:$0xff]
    %v1044 = vld [vmem:[#allocation5 + $0x1e40] sm:$0xff]
    %v1045 = vld [vmem:[#allocation5 + $0x1e48] sm:$0xff]
    %v1046 = vld [vmem:[#allocation5 + $0x1e50] sm:$0xff]
    %v1047 = vld [vmem:[#allocation5 + $0x1e58] sm:$0xff]
    %v1048 = vld [vmem:[#allocation5 + $0x1e60] sm:$0xff]
    %v1049 = vld [vmem:[#allocation5 + $0x1e68] sm:$0xff]
    %v1050 = vld [vmem:[#allocation5 + $0x1e70] sm:$0xff]
    %v1051 = vld [vmem:[#allocation5 + $0x1e78] sm:$0xff]
    %v1052 = vld [vmem:[#allocation5 + $0x1e80] sm:$0xff]
    %v1053 = vld [vmem:[#allocation5 + $0x1e88] sm:$0xff]
    %v1054 = vld [vmem:[#allocation5 + $0x1e90] sm:$0xff]
    %v1055 = vld [vmem:[#allocation5 + $0x1e98] sm:$0xff]
    %v1056 = vld [vmem:[#allocation5 + $0x1ea0] sm:$0xff]
    %v1057 = vld [vmem:[#allocation5 + $0x1ea8] sm:$0xff]
    %v1058 = vld [vmem:[#allocation5 + $0x1eb0] sm:$0xff]
    %v1059 = vld [vmem:[#allocation5 + $0x1eb8] sm:$0xff]
    %v1060 = vld [vmem:[#allocation5 + $0x1ec0] sm:$0xff]
    %v1061 = vld [vmem:[#allocation5 + $0x1ec8] sm:$0xff]
    %v1062 = vld [vmem:[#allocation5 + $0x1ed0] sm:$0xff]
    %v1063 = vld [vmem:[#allocation5 + $0x1ed8] sm:$0xff]
    %v1064 = vld [vmem:[#allocation5 + $0x1ee0] sm:$0xff]
    %v1065 = vld [vmem:[#allocation5 + $0x1ee8] sm:$0xff]
    %v1066 = vld [vmem:[#allocation5 + $0x1ef0] sm:$0xff]
    %v1067 = vld [vmem:[#allocation5 + $0x1ef8] sm:$0xff]
    %v1068 = vld [vmem:[#allocation5 + $0x1f00] sm:$0xff]
    %v1069 = vld [vmem:[#allocation5 + $0x1f08] sm:$0xff]
    %v1070 = vld [vmem:[#allocation5 + $0x1f10] sm:$0xff]
    %v1071 = vld [vmem:[#allocation5 + $0x1f18] sm:$0xff]
    %v1072 = vld [vmem:[#allocation5 + $0x1f20] sm:$0xff]
    %v1073 = vld [vmem:[#allocation5 + $0x1f28] sm:$0xff]
    %v1074 = vld [vmem:[#allocation5 + $0x1f30] sm:$0xff]
    %v1075 = vld [vmem:[#allocation5 + $0x1f38] sm:$0xff]
    %v1076 = vld [vmem:[#allocation5 + $0x1f40] sm:$0xff]
    %v1077 = vld [vmem:[#allocation5 + $0x1f48] sm:$0xff]
    %v1078 = vld [vmem:[#allocation5 + $0x1f50] sm:$0xff]
    %v1079 = vld [vmem:[#allocation5 + $0x1f58] sm:$0xff]
    %v1080 = vld [vmem:[#allocation5 + $0x1f60] sm:$0xff]
    %v1081 = vld [vmem:[#allocation5 + $0x1f68] sm:$0xff]
    %v1082 = vld [vmem:[#allocation5 + $0x1f70] sm:$0xff]
    %v1083 = vld [vmem:[#allocation5 + $0x1f78] sm:$0xff]
    %v1084 = vld [vmem:[#allocation5 + $0x1f80] sm:$0xff]
    %v1085 = vld [vmem:[#allocation5 + $0x1f88] sm:$0xff]
    %v1086 = vld [vmem:[#allocation5 + $0x1f90] sm:$0xff]
    %v1087 = vld [vmem:[#allocation5 + $0x1f98] sm:$0xff]
    %v1088 = vld [vmem:[#allocation5 + $0x1fa0] sm:$0xff]
    %v1089 = vld [vmem:[#allocation5 + $0x1fa8] sm:$0xff]
    %v1090 = vld [vmem:[#allocation5 + $0x1fb0] sm:$0xff]
    %v1091 = vld [vmem:[#allocation5 + $0x1fb8] sm:$0xff]
    %v1092 = vld [vmem:[#allocation5 + $0x1fc0] sm:$0xff]
    %v1093 = vld [vmem:[#allocation5 + $0x1fc8] sm:$0xff]
    %v1094 = vld [vmem:[#allocation5 + $0x1fd0] sm:$0xff]
    %v1095 = vld [vmem:[#allocation5 + $0x1fd8] sm:$0xff]
    %v1096 = vld [vmem:[#allocation5 + $0x1fe0] sm:$0xff]
    %v1097 = vld [vmem:[#allocation5 + $0x1fe8] sm:$0xff]
    %v1098 = vld [vmem:[#allocation5 + $0x1ff0] sm:$0xff]
    %v1099 = vld [vmem:[#allocation5 + $0x1ff8] sm:$0xff]
    %v1100 = vld [vmem:[#allocation7] sm:$0xff]
    %v1102 = vperm.slane %v1100, 0
    %v1103 = vperm.slane %v1100, 1
    %v1104 = vperm.slane %v1100, 2
    %v1105 = vperm.slane %v1100, 3
    %v1106 = vperm.slane %v1100, 4
    %v1107 = vperm.slane %v1100, 5
    %v1108 = vperm.slane %v1100, 6
    %v1109 = vperm.slane %v1100, 7
    %v1134 = vunpack.c.l.b16 %v60
    %v1135 = vunpack.c.h.b16 %v60
    %v1136 = vunpack.c.l.b16 %v61
    %v1137 = vunpack.c.h.b16 %v61
    %v1138 = vunpack.c.l.b16 %v62
    %v1139 = vunpack.c.h.b16 %v62
    %v1140 = vunpack.c.l.b16 %v63
    %v1141 = vunpack.c.h.b16 %v63
    %v1142 = vunpack.c.l.b16 %v64
    %v1143 = vunpack.c.h.b16 %v64
    %v1144 = vunpack.c.l.b16 %v65
    %v1145 = vunpack.c.h.b16 %v65
    %v1146 = vunpack.c.l.b16 %v66
    %v1147 = vunpack.c.h.b16 %v66
    %v1148 = vunpack.c.l.b16 %v67
    %v1149 = vunpack.c.h.b16 %v67
    %v1150 = vunpack.c.l.b16 %v68
    %v1151 = vunpack.c.h.b16 %v68
    %v1152 = vunpack.c.l.b16 %v69
    %v1153 = vunpack.c.h.b16 %v69
    %v1154 = vunpack.c.l.b16 %v70
    %v1155 = vunpack.c.h.b16 %v70
    %v1156 = vunpack.c.l.b16 %v71
    %v1157 = vunpack.c.h.b16 %v71
    %v1158 = vunpack.c.l.b16 %v72
    %v1159 = vunpack.c.h.b16 %v72
    %v1160 = vunpack.c.l.b16 %v73
    %v1161 = vunpack.c.h.b16 %v73
    %v1162 = vunpack.c.l.b16 %v74
    %v1163 = vunpack.c.h.b16 %v74
    %v1164 = vunpack.c.l.b16 %v75
    %v1165 = vunpack.c.h.b16 %v75
    %v1166 = vpack.c.b16 %v1150, %v1134
    %v1167 = vpack.c.b16 %v1151, %v1135
    %v1168 = vpack.c.b16 %v1152, %v1136
    %v1169 = vpack.c.b16 %v1153, %v1137
    %v1170 = vpack.c.b16 %v1154, %v1138
    %v1171 = vpack.c.b16 %v1155, %v1139
    %v1172 = vpack.c.b16 %v1156, %v1140
    %v1173 = vpack.c.b16 %v1157, %v1141
    %v1174 = vpack.c.b16 %v1158, %v1142
    %v1175 = vpack.c.b16 %v1159, %v1143
    %v1176 = vpack.c.b16 %v1160, %v1144
    %v1177 = vpack.c.b16 %v1161, %v1145
    %v1178 = vpack.c.b16 %v1162, %v1146
    %v1179 = vpack.c.b16 %v1163, %v1147
    %v1180 = vpack.c.b16 %v1164, %v1148
    %v1181 = vpack.c.b16 %v1165, %v1149
    %v2222 = vunpack.c.l.b16 %v76
    %v2223 = vunpack.c.h.b16 %v76
    %v2224 = vunpack.c.l.b16 %v77
    %v2225 = vunpack.c.h.b16 %v77
    %v2226 = vunpack.c.l.b16 %v78
    %v2227 = vunpack.c.h.b16 %v78
    %v2228 = vunpack.c.l.b16 %v79
    %v2229 = vunpack.c.h.b16 %v79
    %v2230 = vunpack.c.l.b16 %v80
    %v2231 = vunpack.c.h.b16 %v80
    %v2232 = vunpack.c.l.b16 %v81
    %v2233 = vunpack.c.h.b16 %v81
    %v2234 = vunpack.c.l.b16 %v82
    %v2235 = vunpack.c.h.b16 %v82
    %v2236 = vunpack.c.l.b16 %v83
    %v2237 = vunpack.c.h.b16 %v83
    %v2238 = vunpack.c.l.b16 %v84
    %v2239 = vunpack.c.h.b16 %v84
    %v2240 = vunpack.c.l.b16 %v85
    %v2241 = vunpack.c.h.b16 %v85
    %v2242 = vunpack.c.l.b16 %v86
    %v2243 = vunpack.c.h.b16 %v86
    %v2244 = vunpack.c.l.b16 %v87
    %v2245 = vunpack.c.h.b16 %v87
    %v2246 = vunpack.c.l.b16 %v88
    %v2247 = vunpack.c.h.b16 %v88
    %v2248 = vunpack.c.l.b16 %v89
    %v2249 = vunpack.c.h.b16 %v89
    %v2250 = vunpack.c.l.b16 %v90
    %v2251 = vunpack.c.h.b16 %v90
    %v2252 = vunpack.c.l.b16 %v91
    %v2253 = vunpack.c.h.b16 %v91
    %v2254 = vunpack.c.l.b16 %v92
    %v2255 = vunpack.c.h.b16 %v92
    %v2256 = vunpack.c.l.b16 %v93
    %v2257 = vunpack.c.h.b16 %v93
    %v2258 = vunpack.c.l.b16 %v94
    %v2259 = vunpack.c.h.b16 %v94
    %v2260 = vunpack.c.l.b16 %v95
    %v2261 = vunpack.c.h.b16 %v95
    %v2262 = vunpack.c.l.b16 %v96
    %v2263 = vunpack.c.h.b16 %v96
    %v2264 = vunpack.c.l.b16 %v97
    %v2265 = vunpack.c.h.b16 %v97
    %v2266 = vunpack.c.l.b16 %v98
    %v2267 = vunpack.c.h.b16 %v98
    %v2268 = vunpack.c.l.b16 %v99
    %v2269 = vunpack.c.h.b16 %v99
    %v2270 = vunpack.c.l.b16 %v100
    %v2271 = vunpack.c.h.b16 %v100
    %v2272 = vunpack.c.l.b16 %v101
    %v2273 = vunpack.c.h.b16 %v101
    %v2274 = vunpack.c.l.b16 %v102
    %v2275 = vunpack.c.h.b16 %v102
    %v2276 = vunpack.c.l.b16 %v103
    %v2277 = vunpack.c.h.b16 %v103
    %v2278 = vunpack.c.l.b16 %v104
    %v2279 = vunpack.c.h.b16 %v104
    %v2280 = vunpack.c.l.b16 %v105
    %v2281 = vunpack.c.h.b16 %v105
    %v2282 = vunpack.c.l.b16 %v106
    %v2283 = vunpack.c.h.b16 %v106
    %v2284 = vunpack.c.l.b16 %v107
    %v2285 = vunpack.c.h.b16 %v107
    %v2286 = vunpack.c.l.b16 %v108
    %v2287 = vunpack.c.h.b16 %v108
    %v2288 = vunpack.c.l.b16 %v109
    %v2289 = vunpack.c.h.b16 %v109
    %v2290 = vunpack.c.l.b16 %v110
    %v2291 = vunpack.c.h.b16 %v110
    %v2292 = vunpack.c.l.b16 %v111
    %v2293 = vunpack.c.h.b16 %v111
    %v2294 = vunpack.c.l.b16 %v112
    %v2295 = vunpack.c.h.b16 %v112
    %v2296 = vunpack.c.l.b16 %v113
    %v2297 = vunpack.c.h.b16 %v113
    %v2298 = vunpack.c.l.b16 %v114
    %v2299 = vunpack.c.h.b16 %v114
    %v2300 = vunpack.c.l.b16 %v115
    %v2301 = vunpack.c.h.b16 %v115
    %v2302 = vunpack.c.l.b16 %v116
    %v2303 = vunpack.c.h.b16 %v116
    %v2304 = vunpack.c.l.b16 %v117
    %v2305 = vunpack.c.h.b16 %v117
    %v2306 = vunpack.c.l.b16 %v118
    %v2307 = vunpack.c.h.b16 %v118
    %v2308 = vunpack.c.l.b16 %v119
    %v2309 = vunpack.c.h.b16 %v119
    %v2310 = vunpack.c.l.b16 %v120
    %v2311 = vunpack.c.h.b16 %v120
    %v2312 = vunpack.c.l.b16 %v121
    %v2313 = vunpack.c.h.b16 %v121
    %v2314 = vunpack.c.l.b16 %v122
    %v2315 = vunpack.c.h.b16 %v122
    %v2316 = vunpack.c.l.b16 %v123
    %v2317 = vunpack.c.h.b16 %v123
    %v2318 = vunpack.c.l.b16 %v124
    %v2319 = vunpack.c.h.b16 %v124
    %v2320 = vunpack.c.l.b16 %v125
    %v2321 = vunpack.c.h.b16 %v125
    %v2322 = vunpack.c.l.b16 %v126
    %v2323 = vunpack.c.h.b16 %v126
    %v2324 = vunpack.c.l.b16 %v127
    %v2325 = vunpack.c.h.b16 %v127
    %v2326 = vunpack.c.l.b16 %v128
    %v2327 = vunpack.c.h.b16 %v128
    %v2328 = vunpack.c.l.b16 %v129
    %v2329 = vunpack.c.h.b16 %v129
    %v2330 = vunpack.c.l.b16 %v130
    %v2331 = vunpack.c.h.b16 %v130
    %v2332 = vunpack.c.l.b16 %v131
    %v2333 = vunpack.c.h.b16 %v131
    %v2334 = vunpack.c.l.b16 %v132
    %v2335 = vunpack.c.h.b16 %v132
    %v2336 = vunpack.c.l.b16 %v133
    %v2337 = vunpack.c.h.b16 %v133
    %v2338 = vunpack.c.l.b16 %v134
    %v2339 = vunpack.c.h.b16 %v134
    %v2340 = vunpack.c.l.b16 %v135
    %v2341 = vunpack.c.h.b16 %v135
    %v2342 = vunpack.c.l.b16 %v136
    %v2343 = vunpack.c.h.b16 %v136
    %v2344 = vunpack.c.l.b16 %v137
    %v2345 = vunpack.c.h.b16 %v137
    %v2346 = vunpack.c.l.b16 %v138
    %v2347 = vunpack.c.h.b16 %v138
    %v2348 = vunpack.c.l.b16 %v139
    %v2349 = vunpack.c.h.b16 %v139
    %v2350 = vunpack.c.l.b16 %v140
    %v2351 = vunpack.c.h.b16 %v140
    %v2352 = vunpack.c.l.b16 %v141
    %v2353 = vunpack.c.h.b16 %v141
    %v2354 = vunpack.c.l.b16 %v142
    %v2355 = vunpack.c.h.b16 %v142
    %v2356 = vunpack.c.l.b16 %v143
    %v2357 = vunpack.c.h.b16 %v143
    %v2358 = vunpack.c.l.b16 %v144
    %v2359 = vunpack.c.h.b16 %v144
    %v2360 = vunpack.c.l.b16 %v145
    %v2361 = vunpack.c.h.b16 %v145
    %v2362 = vunpack.c.l.b16 %v146
    %v2363 = vunpack.c.h.b16 %v146
    %v2364 = vunpack.c.l.b16 %v147
    %v2365 = vunpack.c.h.b16 %v147
    %v2366 = vunpack.c.l.b16 %v148
    %v2367 = vunpack.c.h.b16 %v148
    %v2368 = vunpack.c.l.b16 %v149
    %v2369 = vunpack.c.h.b16 %v149
    %v2370 = vunpack.c.l.b16 %v150
    %v2371 = vunpack.c.h.b16 %v150
    %v2372 = vunpack.c.l.b16 %v151
    %v2373 = vunpack.c.h.b16 %v151
    %v2374 = vunpack.c.l.b16 %v152
    %v2375 = vunpack.c.h.b16 %v152
    %v2376 = vunpack.c.l.b16 %v153
    %v2377 = vunpack.c.h.b16 %v153
    %v2378 = vunpack.c.l.b16 %v154
    %v2379 = vunpack.c.h.b16 %v154
    %v2380 = vunpack.c.l.b16 %v155
    %v2381 = vunpack.c.h.b16 %v155
    %v2382 = vunpack.c.l.b16 %v156
    %v2383 = vunpack.c.h.b16 %v156
    %v2384 = vunpack.c.l.b16 %v157
    %v2385 = vunpack.c.h.b16 %v157
    %v2386 = vunpack.c.l.b16 %v158
    %v2387 = vunpack.c.h.b16 %v158
    %v2388 = vunpack.c.l.b16 %v159
    %v2389 = vunpack.c.h.b16 %v159
    %v2390 = vunpack.c.l.b16 %v160
    %v2391 = vunpack.c.h.b16 %v160
    %v2392 = vunpack.c.l.b16 %v161
    %v2393 = vunpack.c.h.b16 %v161
    %v2394 = vunpack.c.l.b16 %v162
    %v2395 = vunpack.c.h.b16 %v162
    %v2396 = vunpack.c.l.b16 %v163
    %v2397 = vunpack.c.h.b16 %v163
    %v2398 = vunpack.c.l.b16 %v164
    %v2399 = vunpack.c.h.b16 %v164
    %v2400 = vunpack.c.l.b16 %v165
    %v2401 = vunpack.c.h.b16 %v165
    %v2402 = vunpack.c.l.b16 %v166
    %v2403 = vunpack.c.h.b16 %v166
    %v2404 = vunpack.c.l.b16 %v167
    %v2405 = vunpack.c.h.b16 %v167
    %v2406 = vunpack.c.l.b16 %v168
    %v2407 = vunpack.c.h.b16 %v168
    %v2408 = vunpack.c.l.b16 %v169
    %v2409 = vunpack.c.h.b16 %v169
    %v2410 = vunpack.c.l.b16 %v170
    %v2411 = vunpack.c.h.b16 %v170
    %v2412 = vunpack.c.l.b16 %v171
    %v2413 = vunpack.c.h.b16 %v171
    %v2414 = vunpack.c.l.b16 %v172
    %v2415 = vunpack.c.h.b16 %v172
    %v2416 = vunpack.c.l.b16 %v173
    %v2417 = vunpack.c.h.b16 %v173
    %v2418 = vunpack.c.l.b16 %v174
    %v2419 = vunpack.c.h.b16 %v174
    %v2420 = vunpack.c.l.b16 %v175
    %v2421 = vunpack.c.h.b16 %v175
    %v2422 = vunpack.c.l.b16 %v176
    %v2423 = vunpack.c.h.b16 %v176
    %v2424 = vunpack.c.l.b16 %v177
    %v2425 = vunpack.c.h.b16 %v177
    %v2426 = vunpack.c.l.b16 %v178
    %v2427 = vunpack.c.h.b16 %v178
    %v2428 = vunpack.c.l.b16 %v179
    %v2429 = vunpack.c.h.b16 %v179
    %v2430 = vunpack.c.l.b16 %v180
    %v2431 = vunpack.c.h.b16 %v180
    %v2432 = vunpack.c.l.b16 %v181
    %v2433 = vunpack.c.h.b16 %v181
    %v2434 = vunpack.c.l.b16 %v182
    %v2435 = vunpack.c.h.b16 %v182
    %v2436 = vunpack.c.l.b16 %v183
    %v2437 = vunpack.c.h.b16 %v183
    %v2438 = vunpack.c.l.b16 %v184
    %v2439 = vunpack.c.h.b16 %v184
    %v2440 = vunpack.c.l.b16 %v185
    %v2441 = vunpack.c.h.b16 %v185
    %v2442 = vunpack.c.l.b16 %v186
    %v2443 = vunpack.c.h.b16 %v186
    %v2444 = vunpack.c.l.b16 %v187
    %v2445 = vunpack.c.h.b16 %v187
    %v2446 = vunpack.c.l.b16 %v188
    %v2447 = vunpack.c.h.b16 %v188
    %v2448 = vunpack.c.l.b16 %v189
    %v2449 = vunpack.c.h.b16 %v189
    %v2450 = vunpack.c.l.b16 %v190
    %v2451 = vunpack.c.h.b16 %v190
    %v2452 = vunpack.c.l.b16 %v191
    %v2453 = vunpack.c.h.b16 %v191
    %v2454 = vunpack.c.l.b16 %v192
    %v2455 = vunpack.c.h.b16 %v192
    %v2456 = vunpack.c.l.b16 %v193
    %v2457 = vunpack.c.h.b16 %v193
    %v2458 = vunpack.c.l.b16 %v194
    %v2459 = vunpack.c.h.b16 %v194
    %v2460 = vunpack.c.l.b16 %v195
    %v2461 = vunpack.c.h.b16 %v195
    %v2462 = vunpack.c.l.b16 %v196
    %v2463 = vunpack.c.h.b16 %v196
    %v2464 = vunpack.c.l.b16 %v197
    %v2465 = vunpack.c.h.b16 %v197
    %v2466 = vunpack.c.l.b16 %v198
    %v2467 = vunpack.c.h.b16 %v198
    %v2468 = vunpack.c.l.b16 %v199
    %v2469 = vunpack.c.h.b16 %v199
    %v2470 = vunpack.c.l.b16 %v200
    %v2471 = vunpack.c.h.b16 %v200
    %v2472 = vunpack.c.l.b16 %v201
    %v2473 = vunpack.c.h.b16 %v201
    %v2474 = vunpack.c.l.b16 %v202
    %v2475 = vunpack.c.h.b16 %v202
    %v2476 = vunpack.c.l.b16 %v203
    %v2477 = vunpack.c.h.b16 %v203
    %v2478 = vunpack.c.l.b16 %v204
    %v2479 = vunpack.c.h.b16 %v204
    %v2480 = vunpack.c.l.b16 %v205
    %v2481 = vunpack.c.h.b16 %v205
    %v2482 = vunpack.c.l.b16 %v206
    %v2483 = vunpack.c.h.b16 %v206
    %v2484 = vunpack.c.l.b16 %v207
    %v2485 = vunpack.c.h.b16 %v207
    %v2486 = vunpack.c.l.b16 %v208
    %v2487 = vunpack.c.h.b16 %v208
    %v2488 = vunpack.c.l.b16 %v209
    %v2489 = vunpack.c.h.b16 %v209
    %v2490 = vunpack.c.l.b16 %v210
    %v2491 = vunpack.c.h.b16 %v210
    %v2492 = vunpack.c.l.b16 %v211
    %v2493 = vunpack.c.h.b16 %v211
    %v2494 = vunpack.c.l.b16 %v212
    %v2495 = vunpack.c.h.b16 %v212
    %v2496 = vunpack.c.l.b16 %v213
    %v2497 = vunpack.c.h.b16 %v213
    %v2498 = vunpack.c.l.b16 %v214
    %v2499 = vunpack.c.h.b16 %v214
    %v2500 = vunpack.c.l.b16 %v215
    %v2501 = vunpack.c.h.b16 %v215
    %v2502 = vunpack.c.l.b16 %v216
    %v2503 = vunpack.c.h.b16 %v216
    %v2504 = vunpack.c.l.b16 %v217
    %v2505 = vunpack.c.h.b16 %v217
    %v2506 = vunpack.c.l.b16 %v218
    %v2507 = vunpack.c.h.b16 %v218
    %v2508 = vunpack.c.l.b16 %v219
    %v2509 = vunpack.c.h.b16 %v219
    %v2510 = vunpack.c.l.b16 %v220
    %v2511 = vunpack.c.h.b16 %v220
    %v2512 = vunpack.c.l.b16 %v221
    %v2513 = vunpack.c.h.b16 %v221
    %v2514 = vunpack.c.l.b16 %v222
    %v2515 = vunpack.c.h.b16 %v222
    %v2516 = vunpack.c.l.b16 %v223
    %v2517 = vunpack.c.h.b16 %v223
    %v2518 = vunpack.c.l.b16 %v224
    %v2519 = vunpack.c.h.b16 %v224
    %v2520 = vunpack.c.l.b16 %v225
    %v2521 = vunpack.c.h.b16 %v225
    %v2522 = vunpack.c.l.b16 %v226
    %v2523 = vunpack.c.h.b16 %v226
    %v2524 = vunpack.c.l.b16 %v227
    %v2525 = vunpack.c.h.b16 %v227
    %v2526 = vunpack.c.l.b16 %v228
    %v2527 = vunpack.c.h.b16 %v228
    %v2528 = vunpack.c.l.b16 %v229
    %v2529 = vunpack.c.h.b16 %v229
    %v2530 = vunpack.c.l.b16 %v230
    %v2531 = vunpack.c.h.b16 %v230
    %v2532 = vunpack.c.l.b16 %v231
    %v2533 = vunpack.c.h.b16 %v231
    %v2534 = vunpack.c.l.b16 %v232
    %v2535 = vunpack.c.h.b16 %v232
    %v2536 = vunpack.c.l.b16 %v233
    %v2537 = vunpack.c.h.b16 %v233
    %v2538 = vunpack.c.l.b16 %v234
    %v2539 = vunpack.c.h.b16 %v234
    %v2540 = vunpack.c.l.b16 %v235
    %v2541 = vunpack.c.h.b16 %v235
    %v2542 = vunpack.c.l.b16 %v236
    %v2543 = vunpack.c.h.b16 %v236
    %v2544 = vunpack.c.l.b16 %v237
    %v2545 = vunpack.c.h.b16 %v237
    %v2546 = vunpack.c.l.b16 %v238
    %v2547 = vunpack.c.h.b16 %v238
    %v2548 = vunpack.c.l.b16 %v239
    %v2549 = vunpack.c.h.b16 %v239
    %v2550 = vunpack.c.l.b16 %v240
    %v2551 = vunpack.c.h.b16 %v240
    %v2552 = vunpack.c.l.b16 %v241
    %v2553 = vunpack.c.h.b16 %v241
    %v2554 = vunpack.c.l.b16 %v242
    %v2555 = vunpack.c.h.b16 %v242
    %v2556 = vunpack.c.l.b16 %v243
    %v2557 = vunpack.c.h.b16 %v243
    %v2558 = vunpack.c.l.b16 %v244
    %v2559 = vunpack.c.h.b16 %v244
    %v2560 = vunpack.c.l.b16 %v245
    %v2561 = vunpack.c.h.b16 %v245
    %v2562 = vunpack.c.l.b16 %v246
    %v2563 = vunpack.c.h.b16 %v246
    %v2564 = vunpack.c.l.b16 %v247
    %v2565 = vunpack.c.h.b16 %v247
    %v2566 = vunpack.c.l.b16 %v248
    %v2567 = vunpack.c.h.b16 %v248
    %v2568 = vunpack.c.l.b16 %v249
    %v2569 = vunpack.c.h.b16 %v249
    %v2570 = vunpack.c.l.b16 %v250
    %v2571 = vunpack.c.h.b16 %v250
    %v2572 = vunpack.c.l.b16 %v251
    %v2573 = vunpack.c.h.b16 %v251
    %v2574 = vunpack.c.l.b16 %v252
    %v2575 = vunpack.c.h.b16 %v252
    %v2576 = vunpack.c.l.b16 %v253
    %v2577 = vunpack.c.h.b16 %v253
    %v2578 = vunpack.c.l.b16 %v254
    %v2579 = vunpack.c.h.b16 %v254
    %v2580 = vunpack.c.l.b16 %v255
    %v2581 = vunpack.c.h.b16 %v255
    %v2582 = vunpack.c.l.b16 %v256
    %v2583 = vunpack.c.h.b16 %v256
    %v2584 = vunpack.c.l.b16 %v257
    %v2585 = vunpack.c.h.b16 %v257
    %v2586 = vunpack.c.l.b16 %v258
    %v2587 = vunpack.c.h.b16 %v258
    %v2588 = vunpack.c.l.b16 %v259
    %v2589 = vunpack.c.h.b16 %v259
    %v2590 = vunpack.c.l.b16 %v260
    %v2591 = vunpack.c.h.b16 %v260
    %v2592 = vunpack.c.l.b16 %v261
    %v2593 = vunpack.c.h.b16 %v261
    %v2594 = vunpack.c.l.b16 %v262
    %v2595 = vunpack.c.h.b16 %v262
    %v2596 = vunpack.c.l.b16 %v263
    %v2597 = vunpack.c.h.b16 %v263
    %v2598 = vunpack.c.l.b16 %v264
    %v2599 = vunpack.c.h.b16 %v264
    %v2600 = vunpack.c.l.b16 %v265
    %v2601 = vunpack.c.h.b16 %v265
    %v2602 = vunpack.c.l.b16 %v266
    %v2603 = vunpack.c.h.b16 %v266
    %v2604 = vunpack.c.l.b16 %v267
    %v2605 = vunpack.c.h.b16 %v267
    %v2606 = vunpack.c.l.b16 %v268
    %v2607 = vunpack.c.h.b16 %v268
    %v2608 = vunpack.c.l.b16 %v269
    %v2609 = vunpack.c.h.b16 %v269
    %v2610 = vunpack.c.l.b16 %v270
    %v2611 = vunpack.c.h.b16 %v270
    %v2612 = vunpack.c.l.b16 %v271
    %v2613 = vunpack.c.h.b16 %v271
    %v2614 = vunpack.c.l.b16 %v272
    %v2615 = vunpack.c.h.b16 %v272
    %v2616 = vunpack.c.l.b16 %v273
    %v2617 = vunpack.c.h.b16 %v273
    %v2618 = vunpack.c.l.b16 %v274
    %v2619 = vunpack.c.h.b16 %v274
    %v2620 = vunpack.c.l.b16 %v275
    %v2621 = vunpack.c.h.b16 %v275
    %v2622 = vunpack.c.l.b16 %v276
    %v2623 = vunpack.c.h.b16 %v276
    %v2624 = vunpack.c.l.b16 %v277
    %v2625 = vunpack.c.h.b16 %v277
    %v2626 = vunpack.c.l.b16 %v278
    %v2627 = vunpack.c.h.b16 %v278
    %v2628 = vunpack.c.l.b16 %v279
    %v2629 = vunpack.c.h.b16 %v279
    %v2630 = vunpack.c.l.b16 %v280
    %v2631 = vunpack.c.h.b16 %v280
    %v2632 = vunpack.c.l.b16 %v281
    %v2633 = vunpack.c.h.b16 %v281
    %v2634 = vunpack.c.l.b16 %v282
    %v2635 = vunpack.c.h.b16 %v282
    %v2636 = vunpack.c.l.b16 %v283
    %v2637 = vunpack.c.h.b16 %v283
    %v2638 = vunpack.c.l.b16 %v284
    %v2639 = vunpack.c.h.b16 %v284
    %v2640 = vunpack.c.l.b16 %v285
    %v2641 = vunpack.c.h.b16 %v285
    %v2642 = vunpack.c.l.b16 %v286
    %v2643 = vunpack.c.h.b16 %v286
    %v2644 = vunpack.c.l.b16 %v287
    %v2645 = vunpack.c.h.b16 %v287
    %v2646 = vunpack.c.l.b16 %v288
    %v2647 = vunpack.c.h.b16 %v288
    %v2648 = vunpack.c.l.b16 %v289
    %v2649 = vunpack.c.h.b16 %v289
    %v2650 = vunpack.c.l.b16 %v290
    %v2651 = vunpack.c.h.b16 %v290
    %v2652 = vunpack.c.l.b16 %v291
    %v2653 = vunpack.c.h.b16 %v291
    %v2654 = vunpack.c.l.b16 %v292
    %v2655 = vunpack.c.h.b16 %v292
    %v2656 = vunpack.c.l.b16 %v293
    %v2657 = vunpack.c.h.b16 %v293
    %v2658 = vunpack.c.l.b16 %v294
    %v2659 = vunpack.c.h.b16 %v294
    %v2660 = vunpack.c.l.b16 %v295
    %v2661 = vunpack.c.h.b16 %v295
    %v2662 = vunpack.c.l.b16 %v296
    %v2663 = vunpack.c.h.b16 %v296
    %v2664 = vunpack.c.l.b16 %v297
    %v2665 = vunpack.c.h.b16 %v297
    %v2666 = vunpack.c.l.b16 %v298
    %v2667 = vunpack.c.h.b16 %v298
    %v2668 = vunpack.c.l.b16 %v299
    %v2669 = vunpack.c.h.b16 %v299
    %v2670 = vunpack.c.l.b16 %v300
    %v2671 = vunpack.c.h.b16 %v300
    %v2672 = vunpack.c.l.b16 %v301
    %v2673 = vunpack.c.h.b16 %v301
    %v2674 = vunpack.c.l.b16 %v302
    %v2675 = vunpack.c.h.b16 %v302
    %v2676 = vunpack.c.l.b16 %v303
    %v2677 = vunpack.c.h.b16 %v303
    %v2678 = vunpack.c.l.b16 %v304
    %v2679 = vunpack.c.h.b16 %v304
    %v2680 = vunpack.c.l.b16 %v305
    %v2681 = vunpack.c.h.b16 %v305
    %v2682 = vunpack.c.l.b16 %v306
    %v2683 = vunpack.c.h.b16 %v306
    %v2684 = vunpack.c.l.b16 %v307
    %v2685 = vunpack.c.h.b16 %v307
    %v2686 = vunpack.c.l.b16 %v308
    %v2687 = vunpack.c.h.b16 %v308
    %v2688 = vunpack.c.l.b16 %v309
    %v2689 = vunpack.c.h.b16 %v309
    %v2690 = vunpack.c.l.b16 %v310
    %v2691 = vunpack.c.h.b16 %v310
    %v2692 = vunpack.c.l.b16 %v311
    %v2693 = vunpack.c.h.b16 %v311
    %v2694 = vunpack.c.l.b16 %v312
    %v2695 = vunpack.c.h.b16 %v312
    %v2696 = vunpack.c.l.b16 %v313
    %v2697 = vunpack.c.h.b16 %v313
    %v2698 = vunpack.c.l.b16 %v314
    %v2699 = vunpack.c.h.b16 %v314
    %v2700 = vunpack.c.l.b16 %v315
    %v2701 = vunpack.c.h.b16 %v315
    %v2702 = vunpack.c.l.b16 %v316
    %v2703 = vunpack.c.h.b16 %v316
    %v2704 = vunpack.c.l.b16 %v317
    %v2705 = vunpack.c.h.b16 %v317
    %v2706 = vunpack.c.l.b16 %v318
    %v2707 = vunpack.c.h.b16 %v318
    %v2708 = vunpack.c.l.b16 %v319
    %v2709 = vunpack.c.h.b16 %v319
    %v2710 = vunpack.c.l.b16 %v320
    %v2711 = vunpack.c.h.b16 %v320
    %v2712 = vunpack.c.l.b16 %v321
    %v2713 = vunpack.c.h.b16 %v321
    %v2714 = vunpack.c.l.b16 %v322
    %v2715 = vunpack.c.h.b16 %v322
    %v2716 = vunpack.c.l.b16 %v323
    %v2717 = vunpack.c.h.b16 %v323
    %v2718 = vunpack.c.l.b16 %v324
    %v2719 = vunpack.c.h.b16 %v324
    %v2720 = vunpack.c.l.b16 %v325
    %v2721 = vunpack.c.h.b16 %v325
    %v2722 = vunpack.c.l.b16 %v326
    %v2723 = vunpack.c.h.b16 %v326
    %v2724 = vunpack.c.l.b16 %v327
    %v2725 = vunpack.c.h.b16 %v327
    %v2726 = vunpack.c.l.b16 %v328
    %v2727 = vunpack.c.h.b16 %v328
    %v2728 = vunpack.c.l.b16 %v329
    %v2729 = vunpack.c.h.b16 %v329
    %v2730 = vunpack.c.l.b16 %v330
    %v2731 = vunpack.c.h.b16 %v330
    %v2732 = vunpack.c.l.b16 %v331
    %v2733 = vunpack.c.h.b16 %v331
    %v2734 = vunpack.c.l.b16 %v332
    %v2735 = vunpack.c.h.b16 %v332
    %v2736 = vunpack.c.l.b16 %v333
    %v2737 = vunpack.c.h.b16 %v333
    %v2738 = vunpack.c.l.b16 %v334
    %v2739 = vunpack.c.h.b16 %v334
    %v2740 = vunpack.c.l.b16 %v335
    %v2741 = vunpack.c.h.b16 %v335
    %v2742 = vunpack.c.l.b16 %v336
    %v2743 = vunpack.c.h.b16 %v336
    %v2744 = vunpack.c.l.b16 %v337
    %v2745 = vunpack.c.h.b16 %v337
    %v2746 = vunpack.c.l.b16 %v338
    %v2747 = vunpack.c.h.b16 %v338
    %v2748 = vunpack.c.l.b16 %v339
    %v2749 = vunpack.c.h.b16 %v339
    %v2750 = vunpack.c.l.b16 %v340
    %v2751 = vunpack.c.h.b16 %v340
    %v2752 = vunpack.c.l.b16 %v341
    %v2753 = vunpack.c.h.b16 %v341
    %v2754 = vunpack.c.l.b16 %v342
    %v2755 = vunpack.c.h.b16 %v342
    %v2756 = vunpack.c.l.b16 %v343
    %v2757 = vunpack.c.h.b16 %v343
    %v2758 = vunpack.c.l.b16 %v344
    %v2759 = vunpack.c.h.b16 %v344
    %v2760 = vunpack.c.l.b16 %v345
    %v2761 = vunpack.c.h.b16 %v345
    %v2762 = vunpack.c.l.b16 %v346
    %v2763 = vunpack.c.h.b16 %v346
    %v2764 = vunpack.c.l.b16 %v347
    %v2765 = vunpack.c.h.b16 %v347
    %v2766 = vunpack.c.l.b16 %v348
    %v2767 = vunpack.c.h.b16 %v348
    %v2768 = vunpack.c.l.b16 %v349
    %v2769 = vunpack.c.h.b16 %v349
    %v2770 = vunpack.c.l.b16 %v350
    %v2771 = vunpack.c.h.b16 %v350
    %v2772 = vunpack.c.l.b16 %v351
    %v2773 = vunpack.c.h.b16 %v351
    %v2774 = vunpack.c.l.b16 %v352
    %v2775 = vunpack.c.h.b16 %v352
    %v2776 = vunpack.c.l.b16 %v353
    %v2777 = vunpack.c.h.b16 %v353
    %v2778 = vunpack.c.l.b16 %v354
    %v2779 = vunpack.c.h.b16 %v354
    %v2780 = vunpack.c.l.b16 %v355
    %v2781 = vunpack.c.h.b16 %v355
    %v2782 = vunpack.c.l.b16 %v356
    %v2783 = vunpack.c.h.b16 %v356
    %v2784 = vunpack.c.l.b16 %v357
    %v2785 = vunpack.c.h.b16 %v357
    %v2786 = vunpack.c.l.b16 %v358
    %v2787 = vunpack.c.h.b16 %v358
    %v2788 = vunpack.c.l.b16 %v359
    %v2789 = vunpack.c.h.b16 %v359
    %v2790 = vunpack.c.l.b16 %v360
    %v2791 = vunpack.c.h.b16 %v360
    %v2792 = vunpack.c.l.b16 %v361
    %v2793 = vunpack.c.h.b16 %v361
    %v2794 = vunpack.c.l.b16 %v362
    %v2795 = vunpack.c.h.b16 %v362
    %v2796 = vunpack.c.l.b16 %v363
    %v2797 = vunpack.c.h.b16 %v363
    %v2798 = vunpack.c.l.b16 %v364
    %v2799 = vunpack.c.h.b16 %v364
    %v2800 = vunpack.c.l.b16 %v365
    %v2801 = vunpack.c.h.b16 %v365
    %v2802 = vunpack.c.l.b16 %v366
    %v2803 = vunpack.c.h.b16 %v366
    %v2804 = vunpack.c.l.b16 %v367
    %v2805 = vunpack.c.h.b16 %v367
    %v2806 = vunpack.c.l.b16 %v368
    %v2807 = vunpack.c.h.b16 %v368
    %v2808 = vunpack.c.l.b16 %v369
    %v2809 = vunpack.c.h.b16 %v369
    %v2810 = vunpack.c.l.b16 %v370
    %v2811 = vunpack.c.h.b16 %v370
    %v2812 = vunpack.c.l.b16 %v371
    %v2813 = vunpack.c.h.b16 %v371
    %v2814 = vunpack.c.l.b16 %v372
    %v2815 = vunpack.c.h.b16 %v372
    %v2816 = vunpack.c.l.b16 %v373
    %v2817 = vunpack.c.h.b16 %v373
    %v2818 = vunpack.c.l.b16 %v374
    %v2819 = vunpack.c.h.b16 %v374
    %v2820 = vunpack.c.l.b16 %v375
    %v2821 = vunpack.c.h.b16 %v375
    %v2822 = vunpack.c.l.b16 %v376
    %v2823 = vunpack.c.h.b16 %v376
    %v2824 = vunpack.c.l.b16 %v377
    %v2825 = vunpack.c.h.b16 %v377
    %v2826 = vunpack.c.l.b16 %v378
    %v2827 = vunpack.c.h.b16 %v378
    %v2828 = vunpack.c.l.b16 %v379
    %v2829 = vunpack.c.h.b16 %v379
    %v2830 = vunpack.c.l.b16 %v380
    %v2831 = vunpack.c.h.b16 %v380
    %v2832 = vunpack.c.l.b16 %v381
    %v2833 = vunpack.c.h.b16 %v381
    %v2834 = vunpack.c.l.b16 %v382
    %v2835 = vunpack.c.h.b16 %v382
    %v2836 = vunpack.c.l.b16 %v383
    %v2837 = vunpack.c.h.b16 %v383
    %v2838 = vunpack.c.l.b16 %v384
    %v2839 = vunpack.c.h.b16 %v384
    %v2840 = vunpack.c.l.b16 %v385
    %v2841 = vunpack.c.h.b16 %v385
    %v2842 = vunpack.c.l.b16 %v386
    %v2843 = vunpack.c.h.b16 %v386
    %v2844 = vunpack.c.l.b16 %v387
    %v2845 = vunpack.c.h.b16 %v387
    %v2846 = vunpack.c.l.b16 %v388
    %v2847 = vunpack.c.h.b16 %v388
    %v2848 = vunpack.c.l.b16 %v389
    %v2849 = vunpack.c.h.b16 %v389
    %v2850 = vunpack.c.l.b16 %v390
    %v2851 = vunpack.c.h.b16 %v390
    %v2852 = vunpack.c.l.b16 %v391
    %v2853 = vunpack.c.h.b16 %v391
    %v2854 = vunpack.c.l.b16 %v392
    %v2855 = vunpack.c.h.b16 %v392
    %v2856 = vunpack.c.l.b16 %v393
    %v2857 = vunpack.c.h.b16 %v393
    %v2858 = vunpack.c.l.b16 %v394
    %v2859 = vunpack.c.h.b16 %v394
    %v2860 = vunpack.c.l.b16 %v395
    %v2861 = vunpack.c.h.b16 %v395
    %v2862 = vunpack.c.l.b16 %v396
    %v2863 = vunpack.c.h.b16 %v396
    %v2864 = vunpack.c.l.b16 %v397
    %v2865 = vunpack.c.h.b16 %v397
    %v2866 = vunpack.c.l.b16 %v398
    %v2867 = vunpack.c.h.b16 %v398
    %v2868 = vunpack.c.l.b16 %v399
    %v2869 = vunpack.c.h.b16 %v399
    %v2870 = vunpack.c.l.b16 %v400
    %v2871 = vunpack.c.h.b16 %v400
    %v2872 = vunpack.c.l.b16 %v401
    %v2873 = vunpack.c.h.b16 %v401
    %v2874 = vunpack.c.l.b16 %v402
    %v2875 = vunpack.c.h.b16 %v402
    %v2876 = vunpack.c.l.b16 %v403
    %v2877 = vunpack.c.h.b16 %v403
    %v2878 = vunpack.c.l.b16 %v404
    %v2879 = vunpack.c.h.b16 %v404
    %v2880 = vunpack.c.l.b16 %v405
    %v2881 = vunpack.c.h.b16 %v405
    %v2882 = vunpack.c.l.b16 %v406
    %v2883 = vunpack.c.h.b16 %v406
    %v2884 = vunpack.c.l.b16 %v407
    %v2885 = vunpack.c.h.b16 %v407
    %v2886 = vunpack.c.l.b16 %v408
    %v2887 = vunpack.c.h.b16 %v408
    %v2888 = vunpack.c.l.b16 %v409
    %v2889 = vunpack.c.h.b16 %v409
    %v2890 = vunpack.c.l.b16 %v410
    %v2891 = vunpack.c.h.b16 %v410
    %v2892 = vunpack.c.l.b16 %v411
    %v2893 = vunpack.c.h.b16 %v411
    %v2894 = vunpack.c.l.b16 %v412
    %v2895 = vunpack.c.h.b16 %v412
    %v2896 = vunpack.c.l.b16 %v413
    %v2897 = vunpack.c.h.b16 %v413
    %v2898 = vunpack.c.l.b16 %v414
    %v2899 = vunpack.c.h.b16 %v414
    %v2900 = vunpack.c.l.b16 %v415
    %v2901 = vunpack.c.h.b16 %v415
    %v2902 = vunpack.c.l.b16 %v416
    %v2903 = vunpack.c.h.b16 %v416
    %v2904 = vunpack.c.l.b16 %v417
    %v2905 = vunpack.c.h.b16 %v417
    %v2906 = vunpack.c.l.b16 %v418
    %v2907 = vunpack.c.h.b16 %v418
    %v2908 = vunpack.c.l.b16 %v419
    %v2909 = vunpack.c.h.b16 %v419
    %v2910 = vunpack.c.l.b16 %v420
    %v2911 = vunpack.c.h.b16 %v420
    %v2912 = vunpack.c.l.b16 %v421
    %v2913 = vunpack.c.h.b16 %v421
    %v2914 = vunpack.c.l.b16 %v422
    %v2915 = vunpack.c.h.b16 %v422
    %v2916 = vunpack.c.l.b16 %v423
    %v2917 = vunpack.c.h.b16 %v423
    %v2918 = vunpack.c.l.b16 %v424
    %v2919 = vunpack.c.h.b16 %v424
    %v2920 = vunpack.c.l.b16 %v425
    %v2921 = vunpack.c.h.b16 %v425
    %v2922 = vunpack.c.l.b16 %v426
    %v2923 = vunpack.c.h.b16 %v426
    %v2924 = vunpack.c.l.b16 %v427
    %v2925 = vunpack.c.h.b16 %v427
    %v2926 = vunpack.c.l.b16 %v428
    %v2927 = vunpack.c.h.b16 %v428
    %v2928 = vunpack.c.l.b16 %v429
    %v2929 = vunpack.c.h.b16 %v429
    %v2930 = vunpack.c.l.b16 %v430
    %v2931 = vunpack.c.h.b16 %v430
    %v2932 = vunpack.c.l.b16 %v431
    %v2933 = vunpack.c.h.b16 %v431
    %v2934 = vunpack.c.l.b16 %v432
    %v2935 = vunpack.c.h.b16 %v432
    %v2936 = vunpack.c.l.b16 %v433
    %v2937 = vunpack.c.h.b16 %v433
    %v2938 = vunpack.c.l.b16 %v434
    %v2939 = vunpack.c.h.b16 %v434
    %v2940 = vunpack.c.l.b16 %v435
    %v2941 = vunpack.c.h.b16 %v435
    %v2942 = vunpack.c.l.b16 %v436
    %v2943 = vunpack.c.h.b16 %v436
    %v2944 = vunpack.c.l.b16 %v437
    %v2945 = vunpack.c.h.b16 %v437
    %v2946 = vunpack.c.l.b16 %v438
    %v2947 = vunpack.c.h.b16 %v438
    %v2948 = vunpack.c.l.b16 %v439
    %v2949 = vunpack.c.h.b16 %v439
    %v2950 = vunpack.c.l.b16 %v440
    %v2951 = vunpack.c.h.b16 %v440
    %v2952 = vunpack.c.l.b16 %v441
    %v2953 = vunpack.c.h.b16 %v441
    %v2954 = vunpack.c.l.b16 %v442
    %v2955 = vunpack.c.h.b16 %v442
    %v2956 = vunpack.c.l.b16 %v443
    %v2957 = vunpack.c.h.b16 %v443
    %v2958 = vunpack.c.l.b16 %v444
    %v2959 = vunpack.c.h.b16 %v444
    %v2960 = vunpack.c.l.b16 %v445
    %v2961 = vunpack.c.h.b16 %v445
    %v2962 = vunpack.c.l.b16 %v446
    %v2963 = vunpack.c.h.b16 %v446
    %v2964 = vunpack.c.l.b16 %v447
    %v2965 = vunpack.c.h.b16 %v447
    %v2966 = vunpack.c.l.b16 %v448
    %v2967 = vunpack.c.h.b16 %v448
    %v2968 = vunpack.c.l.b16 %v449
    %v2969 = vunpack.c.h.b16 %v449
    %v2970 = vunpack.c.l.b16 %v450
    %v2971 = vunpack.c.h.b16 %v450
    %v2972 = vunpack.c.l.b16 %v451
    %v2973 = vunpack.c.h.b16 %v451
    %v2974 = vunpack.c.l.b16 %v452
    %v2975 = vunpack.c.h.b16 %v452
    %v2976 = vunpack.c.l.b16 %v453
    %v2977 = vunpack.c.h.b16 %v453
    %v2978 = vunpack.c.l.b16 %v454
    %v2979 = vunpack.c.h.b16 %v454
    %v2980 = vunpack.c.l.b16 %v455
    %v2981 = vunpack.c.h.b16 %v455
    %v2982 = vunpack.c.l.b16 %v456
    %v2983 = vunpack.c.h.b16 %v456
    %v2984 = vunpack.c.l.b16 %v457
    %v2985 = vunpack.c.h.b16 %v457
    %v2986 = vunpack.c.l.b16 %v458
    %v2987 = vunpack.c.h.b16 %v458
    %v2988 = vunpack.c.l.b16 %v459
    %v2989 = vunpack.c.h.b16 %v459
    %v2990 = vunpack.c.l.b16 %v460
    %v2991 = vunpack.c.h.b16 %v460
    %v2992 = vunpack.c.l.b16 %v461
    %v2993 = vunpack.c.h.b16 %v461
    %v2994 = vunpack.c.l.b16 %v462
    %v2995 = vunpack.c.h.b16 %v462
    %v2996 = vunpack.c.l.b16 %v463
    %v2997 = vunpack.c.h.b16 %v463
    %v2998 = vunpack.c.l.b16 %v464
    %v2999 = vunpack.c.h.b16 %v464
    %v3000 = vunpack.c.l.b16 %v465
    %v3001 = vunpack.c.h.b16 %v465
    %v3002 = vunpack.c.l.b16 %v466
    %v3003 = vunpack.c.h.b16 %v466
    %v3004 = vunpack.c.l.b16 %v467
    %v3005 = vunpack.c.h.b16 %v467
    %v3006 = vunpack.c.l.b16 %v468
    %v3007 = vunpack.c.h.b16 %v468
    %v3008 = vunpack.c.l.b16 %v469
    %v3009 = vunpack.c.h.b16 %v469
    %v3010 = vunpack.c.l.b16 %v470
    %v3011 = vunpack.c.h.b16 %v470
    %v3012 = vunpack.c.l.b16 %v471
    %v3013 = vunpack.c.h.b16 %v471
    %v3014 = vunpack.c.l.b16 %v472
    %v3015 = vunpack.c.h.b16 %v472
    %v3016 = vunpack.c.l.b16 %v473
    %v3017 = vunpack.c.h.b16 %v473
    %v3018 = vunpack.c.l.b16 %v474
    %v3019 = vunpack.c.h.b16 %v474
    %v3020 = vunpack.c.l.b16 %v475
    %v3021 = vunpack.c.h.b16 %v475
    %v3022 = vunpack.c.l.b16 %v476
    %v3023 = vunpack.c.h.b16 %v476
    %v3024 = vunpack.c.l.b16 %v477
    %v3025 = vunpack.c.h.b16 %v477
    %v3026 = vunpack.c.l.b16 %v478
    %v3027 = vunpack.c.h.b16 %v478
    %v3028 = vunpack.c.l.b16 %v479
    %v3029 = vunpack.c.h.b16 %v479
    %v3030 = vunpack.c.l.b16 %v480
    %v3031 = vunpack.c.h.b16 %v480
    %v3032 = vunpack.c.l.b16 %v481
    %v3033 = vunpack.c.h.b16 %v481
    %v3034 = vunpack.c.l.b16 %v482
    %v3035 = vunpack.c.h.b16 %v482
    %v3036 = vunpack.c.l.b16 %v483
    %v3037 = vunpack.c.h.b16 %v483
    %v3038 = vunpack.c.l.b16 %v484
    %v3039 = vunpack.c.h.b16 %v484
    %v3040 = vunpack.c.l.b16 %v485
    %v3041 = vunpack.c.h.b16 %v485
    %v3042 = vunpack.c.l.b16 %v486
    %v3043 = vunpack.c.h.b16 %v486
    %v3044 = vunpack.c.l.b16 %v487
    %v3045 = vunpack.c.h.b16 %v487
    %v3046 = vunpack.c.l.b16 %v488
    %v3047 = vunpack.c.h.b16 %v488
    %v3048 = vunpack.c.l.b16 %v489
    %v3049 = vunpack.c.h.b16 %v489
    %v3050 = vunpack.c.l.b16 %v490
    %v3051 = vunpack.c.h.b16 %v490
    %v3052 = vunpack.c.l.b16 %v491
    %v3053 = vunpack.c.h.b16 %v491
    %v3054 = vunpack.c.l.b16 %v492
    %v3055 = vunpack.c.h.b16 %v492
    %v3056 = vunpack.c.l.b16 %v493
    %v3057 = vunpack.c.h.b16 %v493
    %v3058 = vunpack.c.l.b16 %v494
    %v3059 = vunpack.c.h.b16 %v494
    %v3060 = vunpack.c.l.b16 %v495
    %v3061 = vunpack.c.h.b16 %v495
    %v3062 = vunpack.c.l.b16 %v496
    %v3063 = vunpack.c.h.b16 %v496
    %v3064 = vunpack.c.l.b16 %v497
    %v3065 = vunpack.c.h.b16 %v497
    %v3066 = vunpack.c.l.b16 %v498
    %v3067 = vunpack.c.h.b16 %v498
    %v3068 = vunpack.c.l.b16 %v499
    %v3069 = vunpack.c.h.b16 %v499
    %v3070 = vunpack.c.l.b16 %v500
    %v3071 = vunpack.c.h.b16 %v500
    %v3072 = vunpack.c.l.b16 %v501
    %v3073 = vunpack.c.h.b16 %v501
    %v3074 = vunpack.c.l.b16 %v502
    %v3075 = vunpack.c.h.b16 %v502
    %v3076 = vunpack.c.l.b16 %v503
    %v3077 = vunpack.c.h.b16 %v503
    %v3078 = vunpack.c.l.b16 %v504
    %v3079 = vunpack.c.h.b16 %v504
    %v3080 = vunpack.c.l.b16 %v505
    %v3081 = vunpack.c.h.b16 %v505
    %v3082 = vunpack.c.l.b16 %v506
    %v3083 = vunpack.c.h.b16 %v506
    %v3084 = vunpack.c.l.b16 %v507
    %v3085 = vunpack.c.h.b16 %v507
    %v3086 = vunpack.c.l.b16 %v508
    %v3087 = vunpack.c.h.b16 %v508
    %v3088 = vunpack.c.l.b16 %v509
    %v3089 = vunpack.c.h.b16 %v509
    %v3090 = vunpack.c.l.b16 %v510
    %v3091 = vunpack.c.h.b16 %v510
    %v3092 = vunpack.c.l.b16 %v511
    %v3093 = vunpack.c.h.b16 %v511
    %v3094 = vunpack.c.l.b16 %v512
    %v3095 = vunpack.c.h.b16 %v512
    %v3096 = vunpack.c.l.b16 %v513
    %v3097 = vunpack.c.h.b16 %v513
    %v3098 = vunpack.c.l.b16 %v514
    %v3099 = vunpack.c.h.b16 %v514
    %v3100 = vunpack.c.l.b16 %v515
    %v3101 = vunpack.c.h.b16 %v515
    %v3102 = vunpack.c.l.b16 %v516
    %v3103 = vunpack.c.h.b16 %v516
    %v3104 = vunpack.c.l.b16 %v517
    %v3105 = vunpack.c.h.b16 %v517
    %v3106 = vunpack.c.l.b16 %v518
    %v3107 = vunpack.c.h.b16 %v518
    %v3108 = vunpack.c.l.b16 %v519
    %v3109 = vunpack.c.h.b16 %v519
    %v3110 = vunpack.c.l.b16 %v520
    %v3111 = vunpack.c.h.b16 %v520
    %v3112 = vunpack.c.l.b16 %v521
    %v3113 = vunpack.c.h.b16 %v521
    %v3114 = vunpack.c.l.b16 %v522
    %v3115 = vunpack.c.h.b16 %v522
    %v3116 = vunpack.c.l.b16 %v523
    %v3117 = vunpack.c.h.b16 %v523
    %v3118 = vunpack.c.l.b16 %v524
    %v3119 = vunpack.c.h.b16 %v524
    %v3120 = vunpack.c.l.b16 %v525
    %v3121 = vunpack.c.h.b16 %v525
    %v3122 = vunpack.c.l.b16 %v526
    %v3123 = vunpack.c.h.b16 %v526
    %v3124 = vunpack.c.l.b16 %v527
    %v3125 = vunpack.c.h.b16 %v527
    %v3126 = vunpack.c.l.b16 %v528
    %v3127 = vunpack.c.h.b16 %v528
    %v3128 = vunpack.c.l.b16 %v529
    %v3129 = vunpack.c.h.b16 %v529
    %v3130 = vunpack.c.l.b16 %v530
    %v3131 = vunpack.c.h.b16 %v530
    %v3132 = vunpack.c.l.b16 %v531
    %v3133 = vunpack.c.h.b16 %v531
    %v3134 = vunpack.c.l.b16 %v532
    %v3135 = vunpack.c.h.b16 %v532
    %v3136 = vunpack.c.l.b16 %v533
    %v3137 = vunpack.c.h.b16 %v533
    %v3138 = vunpack.c.l.b16 %v534
    %v3139 = vunpack.c.h.b16 %v534
    %v3140 = vunpack.c.l.b16 %v535
    %v3141 = vunpack.c.h.b16 %v535
    %v3142 = vunpack.c.l.b16 %v536
    %v3143 = vunpack.c.h.b16 %v536
    %v3144 = vunpack.c.l.b16 %v537
    %v3145 = vunpack.c.h.b16 %v537
    %v3146 = vunpack.c.l.b16 %v538
    %v3147 = vunpack.c.h.b16 %v538
    %v3148 = vunpack.c.l.b16 %v539
    %v3149 = vunpack.c.h.b16 %v539
    %v3150 = vunpack.c.l.b16 %v540
    %v3151 = vunpack.c.h.b16 %v540
    %v3152 = vunpack.c.l.b16 %v541
    %v3153 = vunpack.c.h.b16 %v541
    %v3154 = vunpack.c.l.b16 %v542
    %v3155 = vunpack.c.h.b16 %v542
    %v3156 = vunpack.c.l.b16 %v543
    %v3157 = vunpack.c.h.b16 %v543
    %v3158 = vunpack.c.l.b16 %v544
    %v3159 = vunpack.c.h.b16 %v544
    %v3160 = vunpack.c.l.b16 %v545
    %v3161 = vunpack.c.h.b16 %v545
    %v3162 = vunpack.c.l.b16 %v546
    %v3163 = vunpack.c.h.b16 %v546
    %v3164 = vunpack.c.l.b16 %v547
    %v3165 = vunpack.c.h.b16 %v547
    %v3166 = vunpack.c.l.b16 %v548
    %v3167 = vunpack.c.h.b16 %v548
    %v3168 = vunpack.c.l.b16 %v549
    %v3169 = vunpack.c.h.b16 %v549
    %v3170 = vunpack.c.l.b16 %v550
    %v3171 = vunpack.c.h.b16 %v550
    %v3172 = vunpack.c.l.b16 %v551
    %v3173 = vunpack.c.h.b16 %v551
    %v3174 = vunpack.c.l.b16 %v552
    %v3175 = vunpack.c.h.b16 %v552
    %v3176 = vunpack.c.l.b16 %v553
    %v3177 = vunpack.c.h.b16 %v553
    %v3178 = vunpack.c.l.b16 %v554
    %v3179 = vunpack.c.h.b16 %v554
    %v3180 = vunpack.c.l.b16 %v555
    %v3181 = vunpack.c.h.b16 %v555
    %v3182 = vunpack.c.l.b16 %v556
    %v3183 = vunpack.c.h.b16 %v556
    %v3184 = vunpack.c.l.b16 %v557
    %v3185 = vunpack.c.h.b16 %v557
    %v3186 = vunpack.c.l.b16 %v558
    %v3187 = vunpack.c.h.b16 %v558
    %v3188 = vunpack.c.l.b16 %v559
    %v3189 = vunpack.c.h.b16 %v559
    %v3190 = vunpack.c.l.b16 %v560
    %v3191 = vunpack.c.h.b16 %v560
    %v3192 = vunpack.c.l.b16 %v561
    %v3193 = vunpack.c.h.b16 %v561
    %v3194 = vunpack.c.l.b16 %v562
    %v3195 = vunpack.c.h.b16 %v562
    %v3196 = vunpack.c.l.b16 %v563
    %v3197 = vunpack.c.h.b16 %v563
    %v3198 = vunpack.c.l.b16 %v564
    %v3199 = vunpack.c.h.b16 %v564
    %v3200 = vunpack.c.l.b16 %v565
    %v3201 = vunpack.c.h.b16 %v565
    %v3202 = vunpack.c.l.b16 %v566
    %v3203 = vunpack.c.h.b16 %v566
    %v3204 = vunpack.c.l.b16 %v567
    %v3205 = vunpack.c.h.b16 %v567
    %v3206 = vunpack.c.l.b16 %v568
    %v3207 = vunpack.c.h.b16 %v568
    %v3208 = vunpack.c.l.b16 %v569
    %v3209 = vunpack.c.h.b16 %v569
    %v3210 = vunpack.c.l.b16 %v570
    %v3211 = vunpack.c.h.b16 %v570
    %v3212 = vunpack.c.l.b16 %v571
    %v3213 = vunpack.c.h.b16 %v571
    %v3214 = vunpack.c.l.b16 %v572
    %v3215 = vunpack.c.h.b16 %v572
    %v3216 = vunpack.c.l.b16 %v573
    %v3217 = vunpack.c.h.b16 %v573
    %v3218 = vunpack.c.l.b16 %v574
    %v3219 = vunpack.c.h.b16 %v574
    %v3220 = vunpack.c.l.b16 %v575
    %v3221 = vunpack.c.h.b16 %v575
    %v3222 = vunpack.c.l.b16 %v576
    %v3223 = vunpack.c.h.b16 %v576
    %v3224 = vunpack.c.l.b16 %v577
    %v3225 = vunpack.c.h.b16 %v577
    %v3226 = vunpack.c.l.b16 %v578
    %v3227 = vunpack.c.h.b16 %v578
    %v3228 = vunpack.c.l.b16 %v579
    %v3229 = vunpack.c.h.b16 %v579
    %v3230 = vunpack.c.l.b16 %v580
    %v3231 = vunpack.c.h.b16 %v580
    %v3232 = vunpack.c.l.b16 %v581
    %v3233 = vunpack.c.h.b16 %v581
    %v3234 = vunpack.c.l.b16 %v582
    %v3235 = vunpack.c.h.b16 %v582
    %v3236 = vunpack.c.l.b16 %v583
    %v3237 = vunpack.c.h.b16 %v583
    %v3238 = vunpack.c.l.b16 %v584
    %v3239 = vunpack.c.h.b16 %v584
    %v3240 = vunpack.c.l.b16 %v585
    %v3241 = vunpack.c.h.b16 %v585
    %v3242 = vunpack.c.l.b16 %v586
    %v3243 = vunpack.c.h.b16 %v586
    %v3244 = vunpack.c.l.b16 %v587
    %v3245 = vunpack.c.h.b16 %v587
    %v3246 = vunpack.c.l.b16 %v588
    %v3247 = vunpack.c.h.b16 %v588
    %v3248 = vunpack.c.l.b16 %v589
    %v3249 = vunpack.c.h.b16 %v589
    %v3250 = vunpack.c.l.b16 %v590
    %v3251 = vunpack.c.h.b16 %v590
    %v3252 = vunpack.c.l.b16 %v591
    %v3253 = vunpack.c.h.b16 %v591
    %v3254 = vunpack.c.l.b16 %v592
    %v3255 = vunpack.c.h.b16 %v592
    %v3256 = vunpack.c.l.b16 %v593
    %v3257 = vunpack.c.h.b16 %v593
    %v3258 = vunpack.c.l.b16 %v594
    %v3259 = vunpack.c.h.b16 %v594
    %v3260 = vunpack.c.l.b16 %v595
    %v3261 = vunpack.c.h.b16 %v595
    %v3262 = vunpack.c.l.b16 %v596
    %v3263 = vunpack.c.h.b16 %v596
    %v3264 = vunpack.c.l.b16 %v597
    %v3265 = vunpack.c.h.b16 %v597
    %v3266 = vunpack.c.l.b16 %v598
    %v3267 = vunpack.c.h.b16 %v598
    %v3268 = vunpack.c.l.b16 %v599
    %v3269 = vunpack.c.h.b16 %v599
    %v3270 = vunpack.c.l.b16 %v600
    %v3271 = vunpack.c.h.b16 %v600
    %v3272 = vunpack.c.l.b16 %v601
    %v3273 = vunpack.c.h.b16 %v601
    %v3274 = vunpack.c.l.b16 %v602
    %v3275 = vunpack.c.h.b16 %v602
    %v3276 = vunpack.c.l.b16 %v603
    %v3277 = vunpack.c.h.b16 %v603
    %v3278 = vunpack.c.l.b16 %v604
    %v3279 = vunpack.c.h.b16 %v604
    %v3280 = vunpack.c.l.b16 %v605
    %v3281 = vunpack.c.h.b16 %v605
    %v3282 = vunpack.c.l.b16 %v606
    %v3283 = vunpack.c.h.b16 %v606
    %v3284 = vunpack.c.l.b16 %v607
    %v3285 = vunpack.c.h.b16 %v607
    %v3286 = vunpack.c.l.b16 %v608
    %v3287 = vunpack.c.h.b16 %v608
    %v3288 = vunpack.c.l.b16 %v609
    %v3289 = vunpack.c.h.b16 %v609
    %v3290 = vunpack.c.l.b16 %v610
    %v3291 = vunpack.c.h.b16 %v610
    %v3292 = vunpack.c.l.b16 %v611
    %v3293 = vunpack.c.h.b16 %v611
    %v3294 = vunpack.c.l.b16 %v612
    %v3295 = vunpack.c.h.b16 %v612
    %v3296 = vunpack.c.l.b16 %v613
    %v3297 = vunpack.c.h.b16 %v613
    %v3298 = vunpack.c.l.b16 %v614
    %v3299 = vunpack.c.h.b16 %v614
    %v3300 = vunpack.c.l.b16 %v615
    %v3301 = vunpack.c.h.b16 %v615
    %v3302 = vunpack.c.l.b16 %v616
    %v3303 = vunpack.c.h.b16 %v616
    %v3304 = vunpack.c.l.b16 %v617
    %v3305 = vunpack.c.h.b16 %v617
    %v3306 = vunpack.c.l.b16 %v618
    %v3307 = vunpack.c.h.b16 %v618
    %v3308 = vunpack.c.l.b16 %v619
    %v3309 = vunpack.c.h.b16 %v619
    %v3310 = vunpack.c.l.b16 %v620
    %v3311 = vunpack.c.h.b16 %v620
    %v3312 = vunpack.c.l.b16 %v621
    %v3313 = vunpack.c.h.b16 %v621
    %v3314 = vunpack.c.l.b16 %v622
    %v3315 = vunpack.c.h.b16 %v622
    %v3316 = vunpack.c.l.b16 %v623
    %v3317 = vunpack.c.h.b16 %v623
    %v3318 = vunpack.c.l.b16 %v624
    %v3319 = vunpack.c.h.b16 %v624
    %v3320 = vunpack.c.l.b16 %v625
    %v3321 = vunpack.c.h.b16 %v625
    %v3322 = vunpack.c.l.b16 %v626
    %v3323 = vunpack.c.h.b16 %v626
    %v3324 = vunpack.c.l.b16 %v627
    %v3325 = vunpack.c.h.b16 %v627
    %v3326 = vunpack.c.l.b16 %v628
    %v3327 = vunpack.c.h.b16 %v628
    %v3328 = vunpack.c.l.b16 %v629
    %v3329 = vunpack.c.h.b16 %v629
    %v3330 = vunpack.c.l.b16 %v630
    %v3331 = vunpack.c.h.b16 %v630
    %v3332 = vunpack.c.l.b16 %v631
    %v3333 = vunpack.c.h.b16 %v631
    %v3334 = vunpack.c.l.b16 %v632
    %v3335 = vunpack.c.h.b16 %v632
    %v3336 = vunpack.c.l.b16 %v633
    %v3337 = vunpack.c.h.b16 %v633
    %v3338 = vunpack.c.l.b16 %v634
    %v3339 = vunpack.c.h.b16 %v634
    %v3340 = vunpack.c.l.b16 %v635
    %v3341 = vunpack.c.h.b16 %v635
    %v3342 = vunpack.c.l.b16 %v636
    %v3343 = vunpack.c.h.b16 %v636
    %v3344 = vunpack.c.l.b16 %v637
    %v3345 = vunpack.c.h.b16 %v637
    %v3346 = vunpack.c.l.b16 %v638
    %v3347 = vunpack.c.h.b16 %v638
    %v3348 = vunpack.c.l.b16 %v639
    %v3349 = vunpack.c.h.b16 %v639
    %v3350 = vunpack.c.l.b16 %v640
    %v3351 = vunpack.c.h.b16 %v640
    %v3352 = vunpack.c.l.b16 %v641
    %v3353 = vunpack.c.h.b16 %v641
    %v3354 = vunpack.c.l.b16 %v642
    %v3355 = vunpack.c.h.b16 %v642
    %v3356 = vunpack.c.l.b16 %v643
    %v3357 = vunpack.c.h.b16 %v643
    %v3358 = vunpack.c.l.b16 %v644
    %v3359 = vunpack.c.h.b16 %v644
    %v3360 = vunpack.c.l.b16 %v645
    %v3361 = vunpack.c.h.b16 %v645
    %v3362 = vunpack.c.l.b16 %v646
    %v3363 = vunpack.c.h.b16 %v646
    %v3364 = vunpack.c.l.b16 %v647
    %v3365 = vunpack.c.h.b16 %v647
    %v3366 = vunpack.c.l.b16 %v648
    %v3367 = vunpack.c.h.b16 %v648
    %v3368 = vunpack.c.l.b16 %v649
    %v3369 = vunpack.c.h.b16 %v649
    %v3370 = vunpack.c.l.b16 %v650
    %v3371 = vunpack.c.h.b16 %v650
    %v3372 = vunpack.c.l.b16 %v651
    %v3373 = vunpack.c.h.b16 %v651
    %v3374 = vunpack.c.l.b16 %v652
    %v3375 = vunpack.c.h.b16 %v652
    %v3376 = vunpack.c.l.b16 %v653
    %v3377 = vunpack.c.h.b16 %v653
    %v3378 = vunpack.c.l.b16 %v654
    %v3379 = vunpack.c.h.b16 %v654
    %v3380 = vunpack.c.l.b16 %v655
    %v3381 = vunpack.c.h.b16 %v655
    %v3382 = vunpack.c.l.b16 %v656
    %v3383 = vunpack.c.h.b16 %v656
    %v3384 = vunpack.c.l.b16 %v657
    %v3385 = vunpack.c.h.b16 %v657
    %v3386 = vunpack.c.l.b16 %v658
    %v3387 = vunpack.c.h.b16 %v658
    %v3388 = vunpack.c.l.b16 %v659
    %v3389 = vunpack.c.h.b16 %v659
    %v3390 = vunpack.c.l.b16 %v660
    %v3391 = vunpack.c.h.b16 %v660
    %v3392 = vunpack.c.l.b16 %v661
    %v3393 = vunpack.c.h.b16 %v661
    %v3394 = vunpack.c.l.b16 %v662
    %v3395 = vunpack.c.h.b16 %v662
    %v3396 = vunpack.c.l.b16 %v663
    %v3397 = vunpack.c.h.b16 %v663
    %v3398 = vunpack.c.l.b16 %v664
    %v3399 = vunpack.c.h.b16 %v664
    %v3400 = vunpack.c.l.b16 %v665
    %v3401 = vunpack.c.h.b16 %v665
    %v3402 = vunpack.c.l.b16 %v666
    %v3403 = vunpack.c.h.b16 %v666
    %v3404 = vunpack.c.l.b16 %v667
    %v3405 = vunpack.c.h.b16 %v667
    %v3406 = vunpack.c.l.b16 %v668
    %v3407 = vunpack.c.h.b16 %v668
    %v3408 = vunpack.c.l.b16 %v669
    %v3409 = vunpack.c.h.b16 %v669
    %v3410 = vunpack.c.l.b16 %v670
    %v3411 = vunpack.c.h.b16 %v670
    %v3412 = vunpack.c.l.b16 %v671
    %v3413 = vunpack.c.h.b16 %v671
    %v3414 = vunpack.c.l.b16 %v672
    %v3415 = vunpack.c.h.b16 %v672
    %v3416 = vunpack.c.l.b16 %v673
    %v3417 = vunpack.c.h.b16 %v673
    %v3418 = vunpack.c.l.b16 %v674
    %v3419 = vunpack.c.h.b16 %v674
    %v3420 = vunpack.c.l.b16 %v675
    %v3421 = vunpack.c.h.b16 %v675
    %v3422 = vunpack.c.l.b16 %v676
    %v3423 = vunpack.c.h.b16 %v676
    %v3424 = vunpack.c.l.b16 %v677
    %v3425 = vunpack.c.h.b16 %v677
    %v3426 = vunpack.c.l.b16 %v678
    %v3427 = vunpack.c.h.b16 %v678
    %v3428 = vunpack.c.l.b16 %v679
    %v3429 = vunpack.c.h.b16 %v679
    %v3430 = vunpack.c.l.b16 %v680
    %v3431 = vunpack.c.h.b16 %v680
    %v3432 = vunpack.c.l.b16 %v681
    %v3433 = vunpack.c.h.b16 %v681
    %v3434 = vunpack.c.l.b16 %v682
    %v3435 = vunpack.c.h.b16 %v682
    %v3436 = vunpack.c.l.b16 %v683
    %v3437 = vunpack.c.h.b16 %v683
    %v3438 = vunpack.c.l.b16 %v684
    %v3439 = vunpack.c.h.b16 %v684
    %v3440 = vunpack.c.l.b16 %v685
    %v3441 = vunpack.c.h.b16 %v685
    %v3442 = vunpack.c.l.b16 %v686
    %v3443 = vunpack.c.h.b16 %v686
    %v3444 = vunpack.c.l.b16 %v687
    %v3445 = vunpack.c.h.b16 %v687
    %v3446 = vunpack.c.l.b16 %v688
    %v3447 = vunpack.c.h.b16 %v688
    %v3448 = vunpack.c.l.b16 %v689
    %v3449 = vunpack.c.h.b16 %v689
    %v3450 = vunpack.c.l.b16 %v690
    %v3451 = vunpack.c.h.b16 %v690
    %v3452 = vunpack.c.l.b16 %v691
    %v3453 = vunpack.c.h.b16 %v691
    %v3454 = vunpack.c.l.b16 %v692
    %v3455 = vunpack.c.h.b16 %v692
    %v3456 = vunpack.c.l.b16 %v693
    %v3457 = vunpack.c.h.b16 %v693
    %v3458 = vunpack.c.l.b16 %v694
    %v3459 = vunpack.c.h.b16 %v694
    %v3460 = vunpack.c.l.b16 %v695
    %v3461 = vunpack.c.h.b16 %v695
    %v3462 = vunpack.c.l.b16 %v696
    %v3463 = vunpack.c.h.b16 %v696
    %v3464 = vunpack.c.l.b16 %v697
    %v3465 = vunpack.c.h.b16 %v697
    %v3466 = vunpack.c.l.b16 %v698
    %v3467 = vunpack.c.h.b16 %v698
    %v3468 = vunpack.c.l.b16 %v699
    %v3469 = vunpack.c.h.b16 %v699
    %v3470 = vunpack.c.l.b16 %v700
    %v3471 = vunpack.c.h.b16 %v700
    %v3472 = vunpack.c.l.b16 %v701
    %v3473 = vunpack.c.h.b16 %v701
    %v3474 = vunpack.c.l.b16 %v702
    %v3475 = vunpack.c.h.b16 %v702
    %v3476 = vunpack.c.l.b16 %v703
    %v3477 = vunpack.c.h.b16 %v703
    %v3478 = vunpack.c.l.b16 %v704
    %v3479 = vunpack.c.h.b16 %v704
    %v3480 = vunpack.c.l.b16 %v705
    %v3481 = vunpack.c.h.b16 %v705
    %v3482 = vunpack.c.l.b16 %v706
    %v3483 = vunpack.c.h.b16 %v706
    %v3484 = vunpack.c.l.b16 %v707
    %v3485 = vunpack.c.h.b16 %v707
    %v3486 = vunpack.c.l.b16 %v708
    %v3487 = vunpack.c.h.b16 %v708
    %v3488 = vunpack.c.l.b16 %v709
    %v3489 = vunpack.c.h.b16 %v709
    %v3490 = vunpack.c.l.b16 %v710
    %v3491 = vunpack.c.h.b16 %v710
    %v3492 = vunpack.c.l.b16 %v711
    %v3493 = vunpack.c.h.b16 %v711
    %v3494 = vunpack.c.l.b16 %v712
    %v3495 = vunpack.c.h.b16 %v712
    %v3496 = vunpack.c.l.b16 %v713
    %v3497 = vunpack.c.h.b16 %v713
    %v3498 = vunpack.c.l.b16 %v714
    %v3499 = vunpack.c.h.b16 %v714
    %v3500 = vunpack.c.l.b16 %v715
    %v3501 = vunpack.c.h.b16 %v715
    %v3502 = vunpack.c.l.b16 %v716
    %v3503 = vunpack.c.h.b16 %v716
    %v3504 = vunpack.c.l.b16 %v717
    %v3505 = vunpack.c.h.b16 %v717
    %v3506 = vunpack.c.l.b16 %v718
    %v3507 = vunpack.c.h.b16 %v718
    %v3508 = vunpack.c.l.b16 %v719
    %v3509 = vunpack.c.h.b16 %v719
    %v3510 = vunpack.c.l.b16 %v720
    %v3511 = vunpack.c.h.b16 %v720
    %v3512 = vunpack.c.l.b16 %v721
    %v3513 = vunpack.c.h.b16 %v721
    %v3514 = vunpack.c.l.b16 %v722
    %v3515 = vunpack.c.h.b16 %v722
    %v3516 = vunpack.c.l.b16 %v723
    %v3517 = vunpack.c.h.b16 %v723
    %v3518 = vunpack.c.l.b16 %v724
    %v3519 = vunpack.c.h.b16 %v724
    %v3520 = vunpack.c.l.b16 %v725
    %v3521 = vunpack.c.h.b16 %v725
    %v3522 = vunpack.c.l.b16 %v726
    %v3523 = vunpack.c.h.b16 %v726
    %v3524 = vunpack.c.l.b16 %v727
    %v3525 = vunpack.c.h.b16 %v727
    %v3526 = vunpack.c.l.b16 %v728
    %v3527 = vunpack.c.h.b16 %v728
    %v3528 = vunpack.c.l.b16 %v729
    %v3529 = vunpack.c.h.b16 %v729
    %v3530 = vunpack.c.l.b16 %v730
    %v3531 = vunpack.c.h.b16 %v730
    %v3532 = vunpack.c.l.b16 %v731
    %v3533 = vunpack.c.h.b16 %v731
    %v3534 = vunpack.c.l.b16 %v732
    %v3535 = vunpack.c.h.b16 %v732
    %v3536 = vunpack.c.l.b16 %v733
    %v3537 = vunpack.c.h.b16 %v733
    %v3538 = vunpack.c.l.b16 %v734
    %v3539 = vunpack.c.h.b16 %v734
    %v3540 = vunpack.c.l.b16 %v735
    %v3541 = vunpack.c.h.b16 %v735
    %v3542 = vunpack.c.l.b16 %v736
    %v3543 = vunpack.c.h.b16 %v736
    %v3544 = vunpack.c.l.b16 %v737
    %v3545 = vunpack.c.h.b16 %v737
    %v3546 = vunpack.c.l.b16 %v738
    %v3547 = vunpack.c.h.b16 %v738
    %v3548 = vunpack.c.l.b16 %v739
    %v3549 = vunpack.c.h.b16 %v739
    %v3550 = vunpack.c.l.b16 %v740
    %v3551 = vunpack.c.h.b16 %v740
    %v3552 = vunpack.c.l.b16 %v741
    %v3553 = vunpack.c.h.b16 %v741
    %v3554 = vunpack.c.l.b16 %v742
    %v3555 = vunpack.c.h.b16 %v742
    %v3556 = vunpack.c.l.b16 %v743
    %v3557 = vunpack.c.h.b16 %v743
    %v3558 = vunpack.c.l.b16 %v744
    %v3559 = vunpack.c.h.b16 %v744
    %v3560 = vunpack.c.l.b16 %v745
    %v3561 = vunpack.c.h.b16 %v745
    %v3562 = vunpack.c.l.b16 %v746
    %v3563 = vunpack.c.h.b16 %v746
    %v3564 = vunpack.c.l.b16 %v747
    %v3565 = vunpack.c.h.b16 %v747
    %v3566 = vunpack.c.l.b16 %v748
    %v3567 = vunpack.c.h.b16 %v748
    %v3568 = vunpack.c.l.b16 %v749
    %v3569 = vunpack.c.h.b16 %v749
    %v3570 = vunpack.c.l.b16 %v750
    %v3571 = vunpack.c.h.b16 %v750
    %v3572 = vunpack.c.l.b16 %v751
    %v3573 = vunpack.c.h.b16 %v751
    %v3574 = vunpack.c.l.b16 %v752
    %v3575 = vunpack.c.h.b16 %v752
    %v3576 = vunpack.c.l.b16 %v753
    %v3577 = vunpack.c.h.b16 %v753
    %v3578 = vunpack.c.l.b16 %v754
    %v3579 = vunpack.c.h.b16 %v754
    %v3580 = vunpack.c.l.b16 %v755
    %v3581 = vunpack.c.h.b16 %v755
    %v3582 = vunpack.c.l.b16 %v756
    %v3583 = vunpack.c.h.b16 %v756
    %v3584 = vunpack.c.l.b16 %v757
    %v3585 = vunpack.c.h.b16 %v757
    %v3586 = vunpack.c.l.b16 %v758
    %v3587 = vunpack.c.h.b16 %v758
    %v3588 = vunpack.c.l.b16 %v759
    %v3589 = vunpack.c.h.b16 %v759
    %v3590 = vunpack.c.l.b16 %v760
    %v3591 = vunpack.c.h.b16 %v760
    %v3592 = vunpack.c.l.b16 %v761
    %v3593 = vunpack.c.h.b16 %v761
    %v3594 = vunpack.c.l.b16 %v762
    %v3595 = vunpack.c.h.b16 %v762
    %v3596 = vunpack.c.l.b16 %v763
    %v3597 = vunpack.c.h.b16 %v763
    %v3598 = vunpack.c.l.b16 %v764
    %v3599 = vunpack.c.h.b16 %v764
    %v3600 = vunpack.c.l.b16 %v765
    %v3601 = vunpack.c.h.b16 %v765
    %v3602 = vunpack.c.l.b16 %v766
    %v3603 = vunpack.c.h.b16 %v766
    %v3604 = vunpack.c.l.b16 %v767
    %v3605 = vunpack.c.h.b16 %v767
    %v3606 = vunpack.c.l.b16 %v768
    %v3607 = vunpack.c.h.b16 %v768
    %v3608 = vunpack.c.l.b16 %v769
    %v3609 = vunpack.c.h.b16 %v769
    %v3610 = vunpack.c.l.b16 %v770
    %v3611 = vunpack.c.h.b16 %v770
    %v3612 = vunpack.c.l.b16 %v771
    %v3613 = vunpack.c.h.b16 %v771
    %v3614 = vunpack.c.l.b16 %v772
    %v3615 = vunpack.c.h.b16 %v772
    %v3616 = vunpack.c.l.b16 %v773
    %v3617 = vunpack.c.h.b16 %v773
    %v3618 = vunpack.c.l.b16 %v774
    %v3619 = vunpack.c.h.b16 %v774
    %v3620 = vunpack.c.l.b16 %v775
    %v3621 = vunpack.c.h.b16 %v775
    %v3622 = vunpack.c.l.b16 %v776
    %v3623 = vunpack.c.h.b16 %v776
    %v3624 = vunpack.c.l.b16 %v777
    %v3625 = vunpack.c.h.b16 %v777
    %v3626 = vunpack.c.l.b16 %v778
    %v3627 = vunpack.c.h.b16 %v778
    %v3628 = vunpack.c.l.b16 %v779
    %v3629 = vunpack.c.h.b16 %v779
    %v3630 = vunpack.c.l.b16 %v780
    %v3631 = vunpack.c.h.b16 %v780
    %v3632 = vunpack.c.l.b16 %v781
    %v3633 = vunpack.c.h.b16 %v781
    %v3634 = vunpack.c.l.b16 %v782
    %v3635 = vunpack.c.h.b16 %v782
    %v3636 = vunpack.c.l.b16 %v783
    %v3637 = vunpack.c.h.b16 %v783
    %v3638 = vunpack.c.l.b16 %v784
    %v3639 = vunpack.c.h.b16 %v784
    %v3640 = vunpack.c.l.b16 %v785
    %v3641 = vunpack.c.h.b16 %v785
    %v3642 = vunpack.c.l.b16 %v786
    %v3643 = vunpack.c.h.b16 %v786
    %v3644 = vunpack.c.l.b16 %v787
    %v3645 = vunpack.c.h.b16 %v787
    %v3646 = vunpack.c.l.b16 %v788
    %v3647 = vunpack.c.h.b16 %v788
    %v3648 = vunpack.c.l.b16 %v789
    %v3649 = vunpack.c.h.b16 %v789
    %v3650 = vunpack.c.l.b16 %v790
    %v3651 = vunpack.c.h.b16 %v790
    %v3652 = vunpack.c.l.b16 %v791
    %v3653 = vunpack.c.h.b16 %v791
    %v3654 = vunpack.c.l.b16 %v792
    %v3655 = vunpack.c.h.b16 %v792
    %v3656 = vunpack.c.l.b16 %v793
    %v3657 = vunpack.c.h.b16 %v793
    %v3658 = vunpack.c.l.b16 %v794
    %v3659 = vunpack.c.h.b16 %v794
    %v3660 = vunpack.c.l.b16 %v795
    %v3661 = vunpack.c.h.b16 %v795
    %v3662 = vunpack.c.l.b16 %v796
    %v3663 = vunpack.c.h.b16 %v796
    %v3664 = vunpack.c.l.b16 %v797
    %v3665 = vunpack.c.h.b16 %v797
    %v3666 = vunpack.c.l.b16 %v798
    %v3667 = vunpack.c.h.b16 %v798
    %v3668 = vunpack.c.l.b16 %v799
    %v3669 = vunpack.c.h.b16 %v799
    %v3670 = vunpack.c.l.b16 %v800
    %v3671 = vunpack.c.h.b16 %v800
    %v3672 = vunpack.c.l.b16 %v801
    %v3673 = vunpack.c.h.b16 %v801
    %v3674 = vunpack.c.l.b16 %v802
    %v3675 = vunpack.c.h.b16 %v802
    %v3676 = vunpack.c.l.b16 %v803
    %v3677 = vunpack.c.h.b16 %v803
    %v3678 = vunpack.c.l.b16 %v804
    %v3679 = vunpack.c.h.b16 %v804
    %v3680 = vunpack.c.l.b16 %v805
    %v3681 = vunpack.c.h.b16 %v805
    %v3682 = vunpack.c.l.b16 %v806
    %v3683 = vunpack.c.h.b16 %v806
    %v3684 = vunpack.c.l.b16 %v807
    %v3685 = vunpack.c.h.b16 %v807
    %v3686 = vunpack.c.l.b16 %v808
    %v3687 = vunpack.c.h.b16 %v808
    %v3688 = vunpack.c.l.b16 %v809
    %v3689 = vunpack.c.h.b16 %v809
    %v3690 = vunpack.c.l.b16 %v810
    %v3691 = vunpack.c.h.b16 %v810
    %v3692 = vunpack.c.l.b16 %v811
    %v3693 = vunpack.c.h.b16 %v811
    %v3694 = vunpack.c.l.b16 %v812
    %v3695 = vunpack.c.h.b16 %v812
    %v3696 = vunpack.c.l.b16 %v813
    %v3697 = vunpack.c.h.b16 %v813
    %v3698 = vunpack.c.l.b16 %v814
    %v3699 = vunpack.c.h.b16 %v814
    %v3700 = vunpack.c.l.b16 %v815
    %v3701 = vunpack.c.h.b16 %v815
    %v3702 = vunpack.c.l.b16 %v816
    %v3703 = vunpack.c.h.b16 %v816
    %v3704 = vunpack.c.l.b16 %v817
    %v3705 = vunpack.c.h.b16 %v817
    %v3706 = vunpack.c.l.b16 %v818
    %v3707 = vunpack.c.h.b16 %v818
    %v3708 = vunpack.c.l.b16 %v819
    %v3709 = vunpack.c.h.b16 %v819
    %v3710 = vunpack.c.l.b16 %v820
    %v3711 = vunpack.c.h.b16 %v820
    %v3712 = vunpack.c.l.b16 %v821
    %v3713 = vunpack.c.h.b16 %v821
    %v3714 = vunpack.c.l.b16 %v822
    %v3715 = vunpack.c.h.b16 %v822
    %v3716 = vunpack.c.l.b16 %v823
    %v3717 = vunpack.c.h.b16 %v823
    %v3718 = vunpack.c.l.b16 %v824
    %v3719 = vunpack.c.h.b16 %v824
    %v3720 = vunpack.c.l.b16 %v825
    %v3721 = vunpack.c.h.b16 %v825
    %v3722 = vunpack.c.l.b16 %v826
    %v3723 = vunpack.c.h.b16 %v826
    %v3724 = vunpack.c.l.b16 %v827
    %v3725 = vunpack.c.h.b16 %v827
    %v3726 = vunpack.c.l.b16 %v828
    %v3727 = vunpack.c.h.b16 %v828
    %v3728 = vunpack.c.l.b16 %v829
    %v3729 = vunpack.c.h.b16 %v829
    %v3730 = vunpack.c.l.b16 %v830
    %v3731 = vunpack.c.h.b16 %v830
    %v3732 = vunpack.c.l.b16 %v831
    %v3733 = vunpack.c.h.b16 %v831
    %v3734 = vunpack.c.l.b16 %v832
    %v3735 = vunpack.c.h.b16 %v832
    %v3736 = vunpack.c.l.b16 %v833
    %v3737 = vunpack.c.h.b16 %v833
    %v3738 = vunpack.c.l.b16 %v834
    %v3739 = vunpack.c.h.b16 %v834
    %v3740 = vunpack.c.l.b16 %v835
    %v3741 = vunpack.c.h.b16 %v835
    %v3742 = vunpack.c.l.b16 %v836
    %v3743 = vunpack.c.h.b16 %v836
    %v3744 = vunpack.c.l.b16 %v837
    %v3745 = vunpack.c.h.b16 %v837
    %v3746 = vunpack.c.l.b16 %v838
    %v3747 = vunpack.c.h.b16 %v838
    %v3748 = vunpack.c.l.b16 %v839
    %v3749 = vunpack.c.h.b16 %v839
    %v3750 = vunpack.c.l.b16 %v840
    %v3751 = vunpack.c.h.b16 %v840
    %v3752 = vunpack.c.l.b16 %v841
    %v3753 = vunpack.c.h.b16 %v841
    %v3754 = vunpack.c.l.b16 %v842
    %v3755 = vunpack.c.h.b16 %v842
    %v3756 = vunpack.c.l.b16 %v843
    %v3757 = vunpack.c.h.b16 %v843
    %v3758 = vunpack.c.l.b16 %v844
    %v3759 = vunpack.c.h.b16 %v844
    %v3760 = vunpack.c.l.b16 %v845
    %v3761 = vunpack.c.h.b16 %v845
    %v3762 = vunpack.c.l.b16 %v846
    %v3763 = vunpack.c.h.b16 %v846
    %v3764 = vunpack.c.l.b16 %v847
    %v3765 = vunpack.c.h.b16 %v847
    %v3766 = vunpack.c.l.b16 %v848
    %v3767 = vunpack.c.h.b16 %v848
    %v3768 = vunpack.c.l.b16 %v849
    %v3769 = vunpack.c.h.b16 %v849
    %v3770 = vunpack.c.l.b16 %v850
    %v3771 = vunpack.c.h.b16 %v850
    %v3772 = vunpack.c.l.b16 %v851
    %v3773 = vunpack.c.h.b16 %v851
    %v3774 = vunpack.c.l.b16 %v852
    %v3775 = vunpack.c.h.b16 %v852
    %v3776 = vunpack.c.l.b16 %v853
    %v3777 = vunpack.c.h.b16 %v853
    %v3778 = vunpack.c.l.b16 %v854
    %v3779 = vunpack.c.h.b16 %v854
    %v3780 = vunpack.c.l.b16 %v855
    %v3781 = vunpack.c.h.b16 %v855
    %v3782 = vunpack.c.l.b16 %v856
    %v3783 = vunpack.c.h.b16 %v856
    %v3784 = vunpack.c.l.b16 %v857
    %v3785 = vunpack.c.h.b16 %v857
    %v3786 = vunpack.c.l.b16 %v858
    %v3787 = vunpack.c.h.b16 %v858
    %v3788 = vunpack.c.l.b16 %v859
    %v3789 = vunpack.c.h.b16 %v859
    %v3790 = vunpack.c.l.b16 %v860
    %v3791 = vunpack.c.h.b16 %v860
    %v3792 = vunpack.c.l.b16 %v861
    %v3793 = vunpack.c.h.b16 %v861
    %v3794 = vunpack.c.l.b16 %v862
    %v3795 = vunpack.c.h.b16 %v862
    %v3796 = vunpack.c.l.b16 %v863
    %v3797 = vunpack.c.h.b16 %v863
    %v3798 = vunpack.c.l.b16 %v864
    %v3799 = vunpack.c.h.b16 %v864
    %v3800 = vunpack.c.l.b16 %v865
    %v3801 = vunpack.c.h.b16 %v865
    %v3802 = vunpack.c.l.b16 %v866
    %v3803 = vunpack.c.h.b16 %v866
    %v3804 = vunpack.c.l.b16 %v867
    %v3805 = vunpack.c.h.b16 %v867
    %v3806 = vunpack.c.l.b16 %v868
    %v3807 = vunpack.c.h.b16 %v868
    %v3808 = vunpack.c.l.b16 %v869
    %v3809 = vunpack.c.h.b16 %v869
    %v3810 = vunpack.c.l.b16 %v870
    %v3811 = vunpack.c.h.b16 %v870
    %v3812 = vunpack.c.l.b16 %v871
    %v3813 = vunpack.c.h.b16 %v871
    %v3814 = vunpack.c.l.b16 %v872
    %v3815 = vunpack.c.h.b16 %v872
    %v3816 = vunpack.c.l.b16 %v873
    %v3817 = vunpack.c.h.b16 %v873
    %v3818 = vunpack.c.l.b16 %v874
    %v3819 = vunpack.c.h.b16 %v874
    %v3820 = vunpack.c.l.b16 %v875
    %v3821 = vunpack.c.h.b16 %v875
    %v3822 = vunpack.c.l.b16 %v876
    %v3823 = vunpack.c.h.b16 %v876
    %v3824 = vunpack.c.l.b16 %v877
    %v3825 = vunpack.c.h.b16 %v877
    %v3826 = vunpack.c.l.b16 %v878
    %v3827 = vunpack.c.h.b16 %v878
    %v3828 = vunpack.c.l.b16 %v879
    %v3829 = vunpack.c.h.b16 %v879
    %v3830 = vunpack.c.l.b16 %v880
    %v3831 = vunpack.c.h.b16 %v880
    %v3832 = vunpack.c.l.b16 %v881
    %v3833 = vunpack.c.h.b16 %v881
    %v3834 = vunpack.c.l.b16 %v882
    %v3835 = vunpack.c.h.b16 %v882
    %v3836 = vunpack.c.l.b16 %v883
    %v3837 = vunpack.c.h.b16 %v883
    %v3838 = vunpack.c.l.b16 %v884
    %v3839 = vunpack.c.h.b16 %v884
    %v3840 = vunpack.c.l.b16 %v885
    %v3841 = vunpack.c.h.b16 %v885
    %v3842 = vunpack.c.l.b16 %v886
    %v3843 = vunpack.c.h.b16 %v886
    %v3844 = vunpack.c.l.b16 %v887
    %v3845 = vunpack.c.h.b16 %v887
    %v3846 = vunpack.c.l.b16 %v888
    %v3847 = vunpack.c.h.b16 %v888
    %v3848 = vunpack.c.l.b16 %v889
    %v3849 = vunpack.c.h.b16 %v889
    %v3850 = vunpack.c.l.b16 %v890
    %v3851 = vunpack.c.h.b16 %v890
    %v3852 = vunpack.c.l.b16 %v891
    %v3853 = vunpack.c.h.b16 %v891
    %v3854 = vunpack.c.l.b16 %v892
    %v3855 = vunpack.c.h.b16 %v892
    %v3856 = vunpack.c.l.b16 %v893
    %v3857 = vunpack.c.h.b16 %v893
    %v3858 = vunpack.c.l.b16 %v894
    %v3859 = vunpack.c.h.b16 %v894
    %v3860 = vunpack.c.l.b16 %v895
    %v3861 = vunpack.c.h.b16 %v895
    %v3862 = vunpack.c.l.b16 %v896
    %v3863 = vunpack.c.h.b16 %v896
    %v3864 = vunpack.c.l.b16 %v897
    %v3865 = vunpack.c.h.b16 %v897
    %v3866 = vunpack.c.l.b16 %v898
    %v3867 = vunpack.c.h.b16 %v898
    %v3868 = vunpack.c.l.b16 %v899
    %v3869 = vunpack.c.h.b16 %v899
    %v3870 = vunpack.c.l.b16 %v900
    %v3871 = vunpack.c.h.b16 %v900
    %v3872 = vunpack.c.l.b16 %v901
    %v3873 = vunpack.c.h.b16 %v901
    %v3874 = vunpack.c.l.b16 %v902
    %v3875 = vunpack.c.h.b16 %v902
    %v3876 = vunpack.c.l.b16 %v903
    %v3877 = vunpack.c.h.b16 %v903
    %v3878 = vunpack.c.l.b16 %v904
    %v3879 = vunpack.c.h.b16 %v904
    %v3880 = vunpack.c.l.b16 %v905
    %v3881 = vunpack.c.h.b16 %v905
    %v3882 = vunpack.c.l.b16 %v906
    %v3883 = vunpack.c.h.b16 %v906
    %v3884 = vunpack.c.l.b16 %v907
    %v3885 = vunpack.c.h.b16 %v907
    %v3886 = vunpack.c.l.b16 %v908
    %v3887 = vunpack.c.h.b16 %v908
    %v3888 = vunpack.c.l.b16 %v909
    %v3889 = vunpack.c.h.b16 %v909
    %v3890 = vunpack.c.l.b16 %v910
    %v3891 = vunpack.c.h.b16 %v910
    %v3892 = vunpack.c.l.b16 %v911
    %v3893 = vunpack.c.h.b16 %v911
    %v3894 = vunpack.c.l.b16 %v912
    %v3895 = vunpack.c.h.b16 %v912
    %v3896 = vunpack.c.l.b16 %v913
    %v3897 = vunpack.c.h.b16 %v913
    %v3898 = vunpack.c.l.b16 %v914
    %v3899 = vunpack.c.h.b16 %v914
    %v3900 = vunpack.c.l.b16 %v915
    %v3901 = vunpack.c.h.b16 %v915
    %v3902 = vunpack.c.l.b16 %v916
    %v3903 = vunpack.c.h.b16 %v916
    %v3904 = vunpack.c.l.b16 %v917
    %v3905 = vunpack.c.h.b16 %v917
    %v3906 = vunpack.c.l.b16 %v918
    %v3907 = vunpack.c.h.b16 %v918
    %v3908 = vunpack.c.l.b16 %v919
    %v3909 = vunpack.c.h.b16 %v919
    %v3910 = vunpack.c.l.b16 %v920
    %v3911 = vunpack.c.h.b16 %v920
    %v3912 = vunpack.c.l.b16 %v921
    %v3913 = vunpack.c.h.b16 %v921
    %v3914 = vunpack.c.l.b16 %v922
    %v3915 = vunpack.c.h.b16 %v922
    %v3916 = vunpack.c.l.b16 %v923
    %v3917 = vunpack.c.h.b16 %v923
    %v3918 = vunpack.c.l.b16 %v924
    %v3919 = vunpack.c.h.b16 %v924
    %v3920 = vunpack.c.l.b16 %v925
    %v3921 = vunpack.c.h.b16 %v925
    %v3922 = vunpack.c.l.b16 %v926
    %v3923 = vunpack.c.h.b16 %v926
    %v3924 = vunpack.c.l.b16 %v927
    %v3925 = vunpack.c.h.b16 %v927
    %v3926 = vunpack.c.l.b16 %v928
    %v3927 = vunpack.c.h.b16 %v928
    %v3928 = vunpack.c.l.b16 %v929
    %v3929 = vunpack.c.h.b16 %v929
    %v3930 = vunpack.c.l.b16 %v930
    %v3931 = vunpack.c.h.b16 %v930
    %v3932 = vunpack.c.l.b16 %v931
    %v3933 = vunpack.c.h.b16 %v931
    %v3934 = vunpack.c.l.b16 %v932
    %v3935 = vunpack.c.h.b16 %v932
    %v3936 = vunpack.c.l.b16 %v933
    %v3937 = vunpack.c.h.b16 %v933
    %v3938 = vunpack.c.l.b16 %v934
    %v3939 = vunpack.c.h.b16 %v934
    %v3940 = vunpack.c.l.b16 %v935
    %v3941 = vunpack.c.h.b16 %v935
    %v3942 = vunpack.c.l.b16 %v936
    %v3943 = vunpack.c.h.b16 %v936
    %v3944 = vunpack.c.l.b16 %v937
    %v3945 = vunpack.c.h.b16 %v937
    %v3946 = vunpack.c.l.b16 %v938
    %v3947 = vunpack.c.h.b16 %v938
    %v3948 = vunpack.c.l.b16 %v939
    %v3949 = vunpack.c.h.b16 %v939
    %v3950 = vunpack.c.l.b16 %v940
    %v3951 = vunpack.c.h.b16 %v940
    %v3952 = vunpack.c.l.b16 %v941
    %v3953 = vunpack.c.h.b16 %v941
    %v3954 = vunpack.c.l.b16 %v942
    %v3955 = vunpack.c.h.b16 %v942
    %v3956 = vunpack.c.l.b16 %v943
    %v3957 = vunpack.c.h.b16 %v943
    %v3958 = vunpack.c.l.b16 %v944
    %v3959 = vunpack.c.h.b16 %v944
    %v3960 = vunpack.c.l.b16 %v945
    %v3961 = vunpack.c.h.b16 %v945
    %v3962 = vunpack.c.l.b16 %v946
    %v3963 = vunpack.c.h.b16 %v946
    %v3964 = vunpack.c.l.b16 %v947
    %v3965 = vunpack.c.h.b16 %v947
    %v3966 = vunpack.c.l.b16 %v948
    %v3967 = vunpack.c.h.b16 %v948
    %v3968 = vunpack.c.l.b16 %v949
    %v3969 = vunpack.c.h.b16 %v949
    %v3970 = vunpack.c.l.b16 %v950
    %v3971 = vunpack.c.h.b16 %v950
    %v3972 = vunpack.c.l.b16 %v951
    %v3973 = vunpack.c.h.b16 %v951
    %v3974 = vunpack.c.l.b16 %v952
    %v3975 = vunpack.c.h.b16 %v952
    %v3976 = vunpack.c.l.b16 %v953
    %v3977 = vunpack.c.h.b16 %v953
    %v3978 = vunpack.c.l.b16 %v954
    %v3979 = vunpack.c.h.b16 %v954
    %v3980 = vunpack.c.l.b16 %v955
    %v3981 = vunpack.c.h.b16 %v955
    %v3982 = vunpack.c.l.b16 %v956
    %v3983 = vunpack.c.h.b16 %v956
    %v3984 = vunpack.c.l.b16 %v957
    %v3985 = vunpack.c.h.b16 %v957
    %v3986 = vunpack.c.l.b16 %v958
    %v3987 = vunpack.c.h.b16 %v958
    %v3988 = vunpack.c.l.b16 %v959
    %v3989 = vunpack.c.h.b16 %v959
    %v3990 = vunpack.c.l.b16 %v960
    %v3991 = vunpack.c.h.b16 %v960
    %v3992 = vunpack.c.l.b16 %v961
    %v3993 = vunpack.c.h.b16 %v961
    %v3994 = vunpack.c.l.b16 %v962
    %v3995 = vunpack.c.h.b16 %v962
    %v3996 = vunpack.c.l.b16 %v963
    %v3997 = vunpack.c.h.b16 %v963
    %v3998 = vunpack.c.l.b16 %v964
    %v3999 = vunpack.c.h.b16 %v964
    %v4000 = vunpack.c.l.b16 %v965
    %v4001 = vunpack.c.h.b16 %v965
    %v4002 = vunpack.c.l.b16 %v966
    %v4003 = vunpack.c.h.b16 %v966
    %v4004 = vunpack.c.l.b16 %v967
    %v4005 = vunpack.c.h.b16 %v967
    %v4006 = vunpack.c.l.b16 %v968
    %v4007 = vunpack.c.h.b16 %v968
    %v4008 = vunpack.c.l.b16 %v969
    %v4009 = vunpack.c.h.b16 %v969
    %v4010 = vunpack.c.l.b16 %v970
    %v4011 = vunpack.c.h.b16 %v970
    %v4012 = vunpack.c.l.b16 %v971
    %v4013 = vunpack.c.h.b16 %v971
    %v4014 = vunpack.c.l.b16 %v972
    %v4015 = vunpack.c.h.b16 %v972
    %v4016 = vunpack.c.l.b16 %v973
    %v4017 = vunpack.c.h.b16 %v973
    %v4018 = vunpack.c.l.b16 %v974
    %v4019 = vunpack.c.h.b16 %v974
    %v4020 = vunpack.c.l.b16 %v975
    %v4021 = vunpack.c.h.b16 %v975
    %v4022 = vunpack.c.l.b16 %v976
    %v4023 = vunpack.c.h.b16 %v976
    %v4024 = vunpack.c.l.b16 %v977
    %v4025 = vunpack.c.h.b16 %v977
    %v4026 = vunpack.c.l.b16 %v978
    %v4027 = vunpack.c.h.b16 %v978
    %v4028 = vunpack.c.l.b16 %v979
    %v4029 = vunpack.c.h.b16 %v979
    %v4030 = vunpack.c.l.b16 %v980
    %v4031 = vunpack.c.h.b16 %v980
    %v4032 = vunpack.c.l.b16 %v981
    %v4033 = vunpack.c.h.b16 %v981
    %v4034 = vunpack.c.l.b16 %v982
    %v4035 = vunpack.c.h.b16 %v982
    %v4036 = vunpack.c.l.b16 %v983
    %v4037 = vunpack.c.h.b16 %v983
    %v4038 = vunpack.c.l.b16 %v984
    %v4039 = vunpack.c.h.b16 %v984
    %v4040 = vunpack.c.l.b16 %v985
    %v4041 = vunpack.c.h.b16 %v985
    %v4042 = vunpack.c.l.b16 %v986
    %v4043 = vunpack.c.h.b16 %v986
    %v4044 = vunpack.c.l.b16 %v987
    %v4045 = vunpack.c.h.b16 %v987
    %v4046 = vunpack.c.l.b16 %v988
    %v4047 = vunpack.c.h.b16 %v988
    %v4048 = vunpack.c.l.b16 %v989
    %v4049 = vunpack.c.h.b16 %v989
    %v4050 = vunpack.c.l.b16 %v990
    %v4051 = vunpack.c.h.b16 %v990
    %v4052 = vunpack.c.l.b16 %v991
    %v4053 = vunpack.c.h.b16 %v991
    %v4054 = vunpack.c.l.b16 %v992
    %v4055 = vunpack.c.h.b16 %v992
    %v4056 = vunpack.c.l.b16 %v993
    %v4057 = vunpack.c.h.b16 %v993
    %v4058 = vunpack.c.l.b16 %v994
    %v4059 = vunpack.c.h.b16 %v994
    %v4060 = vunpack.c.l.b16 %v995
    %v4061 = vunpack.c.h.b16 %v995
    %v4062 = vunpack.c.l.b16 %v996
    %v4063 = vunpack.c.h.b16 %v996
    %v4064 = vunpack.c.l.b16 %v997
    %v4065 = vunpack.c.h.b16 %v997
    %v4066 = vunpack.c.l.b16 %v998
    %v4067 = vunpack.c.h.b16 %v998
    %v4068 = vunpack.c.l.b16 %v999
    %v4069 = vunpack.c.h.b16 %v999
    %v4070 = vunpack.c.l.b16 %v1000
    %v4071 = vunpack.c.h.b16 %v1000
    %v4072 = vunpack.c.l.b16 %v1001
    %v4073 = vunpack.c.h.b16 %v1001
    %v4074 = vunpack.c.l.b16 %v1002
    %v4075 = vunpack.c.h.b16 %v1002
    %v4076 = vunpack.c.l.b16 %v1003
    %v4077 = vunpack.c.h.b16 %v1003
    %v4078 = vunpack.c.l.b16 %v1004
    %v4079 = vunpack.c.h.b16 %v1004
    %v4080 = vunpack.c.l.b16 %v1005
    %v4081 = vunpack.c.h.b16 %v1005
    %v4082 = vunpack.c.l.b16 %v1006
    %v4083 = vunpack.c.h.b16 %v1006
    %v4084 = vunpack.c.l.b16 %v1007
    %v4085 = vunpack.c.h.b16 %v1007
    %v4086 = vunpack.c.l.b16 %v1008
    %v4087 = vunpack.c.h.b16 %v1008
    %v4088 = vunpack.c.l.b16 %v1009
    %v4089 = vunpack.c.h.b16 %v1009
    %v4090 = vunpack.c.l.b16 %v1010
    %v4091 = vunpack.c.h.b16 %v1010
    %v4092 = vunpack.c.l.b16 %v1011
    %v4093 = vunpack.c.h.b16 %v1011
    %v4094 = vunpack.c.l.b16 %v1012
    %v4095 = vunpack.c.h.b16 %v1012
    %v4096 = vunpack.c.l.b16 %v1013
    %v4097 = vunpack.c.h.b16 %v1013
    %v4098 = vunpack.c.l.b16 %v1014
    %v4099 = vunpack.c.h.b16 %v1014
    %v4100 = vunpack.c.l.b16 %v1015
    %v4101 = vunpack.c.h.b16 %v1015
    %v4102 = vunpack.c.l.b16 %v1016
    %v4103 = vunpack.c.h.b16 %v1016
    %v4104 = vunpack.c.l.b16 %v1017
    %v4105 = vunpack.c.h.b16 %v1017
    %v4106 = vunpack.c.l.b16 %v1018
    %v4107 = vunpack.c.h.b16 %v1018
    %v4108 = vunpack.c.l.b16 %v1019
    %v4109 = vunpack.c.h.b16 %v1019
    %v4110 = vunpack.c.l.b16 %v1020
    %v4111 = vunpack.c.h.b16 %v1020
    %v4112 = vunpack.c.l.b16 %v1021
    %v4113 = vunpack.c.h.b16 %v1021
    %v4114 = vunpack.c.l.b16 %v1022
    %v4115 = vunpack.c.h.b16 %v1022
    %v4116 = vunpack.c.l.b16 %v1023
    %v4117 = vunpack.c.h.b16 %v1023
    %v4118 = vunpack.c.l.b16 %v1024
    %v4119 = vunpack.c.h.b16 %v1024
    %v4120 = vunpack.c.l.b16 %v1025
    %v4121 = vunpack.c.h.b16 %v1025
    %v4122 = vunpack.c.l.b16 %v1026
    %v4123 = vunpack.c.h.b16 %v1026
    %v4124 = vunpack.c.l.b16 %v1027
    %v4125 = vunpack.c.h.b16 %v1027
    %v4126 = vunpack.c.l.b16 %v1028
    %v4127 = vunpack.c.h.b16 %v1028
    %v4128 = vunpack.c.l.b16 %v1029
    %v4129 = vunpack.c.h.b16 %v1029
    %v4130 = vunpack.c.l.b16 %v1030
    %v4131 = vunpack.c.h.b16 %v1030
    %v4132 = vunpack.c.l.b16 %v1031
    %v4133 = vunpack.c.h.b16 %v1031
    %v4134 = vunpack.c.l.b16 %v1032
    %v4135 = vunpack.c.h.b16 %v1032
    %v4136 = vunpack.c.l.b16 %v1033
    %v4137 = vunpack.c.h.b16 %v1033
    %v4138 = vunpack.c.l.b16 %v1034
    %v4139 = vunpack.c.h.b16 %v1034
    %v4140 = vunpack.c.l.b16 %v1035
    %v4141 = vunpack.c.h.b16 %v1035
    %v4142 = vunpack.c.l.b16 %v1036
    %v4143 = vunpack.c.h.b16 %v1036
    %v4144 = vunpack.c.l.b16 %v1037
    %v4145 = vunpack.c.h.b16 %v1037
    %v4146 = vunpack.c.l.b16 %v1038
    %v4147 = vunpack.c.h.b16 %v1038
    %v4148 = vunpack.c.l.b16 %v1039
    %v4149 = vunpack.c.h.b16 %v1039
    %v4150 = vunpack.c.l.b16 %v1040
    %v4151 = vunpack.c.h.b16 %v1040
    %v4152 = vunpack.c.l.b16 %v1041
    %v4153 = vunpack.c.h.b16 %v1041
    %v4154 = vunpack.c.l.b16 %v1042
    %v4155 = vunpack.c.h.b16 %v1042
    %v4156 = vunpack.c.l.b16 %v1043
    %v4157 = vunpack.c.h.b16 %v1043
    %v4158 = vunpack.c.l.b16 %v1044
    %v4159 = vunpack.c.h.b16 %v1044
    %v4160 = vunpack.c.l.b16 %v1045
    %v4161 = vunpack.c.h.b16 %v1045
    %v4162 = vunpack.c.l.b16 %v1046
    %v4163 = vunpack.c.h.b16 %v1046
    %v4164 = vunpack.c.l.b16 %v1047
    %v4165 = vunpack.c.h.b16 %v1047
    %v4166 = vunpack.c.l.b16 %v1048
    %v4167 = vunpack.c.h.b16 %v1048
    %v4168 = vunpack.c.l.b16 %v1049
    %v4169 = vunpack.c.h.b16 %v1049
    %v4170 = vunpack.c.l.b16 %v1050
    %v4171 = vunpack.c.h.b16 %v1050
    %v4172 = vunpack.c.l.b16 %v1051
    %v4173 = vunpack.c.h.b16 %v1051
    %v4174 = vunpack.c.l.b16 %v1052
    %v4175 = vunpack.c.h.b16 %v1052
    %v4176 = vunpack.c.l.b16 %v1053
    %v4177 = vunpack.c.h.b16 %v1053
    %v4178 = vunpack.c.l.b16 %v1054
    %v4179 = vunpack.c.h.b16 %v1054
    %v4180 = vunpack.c.l.b16 %v1055
    %v4181 = vunpack.c.h.b16 %v1055
    %v4182 = vunpack.c.l.b16 %v1056
    %v4183 = vunpack.c.h.b16 %v1056
    %v4184 = vunpack.c.l.b16 %v1057
    %v4185 = vunpack.c.h.b16 %v1057
    %v4186 = vunpack.c.l.b16 %v1058
    %v4187 = vunpack.c.h.b16 %v1058
    %v4188 = vunpack.c.l.b16 %v1059
    %v4189 = vunpack.c.h.b16 %v1059
    %v4190 = vunpack.c.l.b16 %v1060
    %v4191 = vunpack.c.h.b16 %v1060
    %v4192 = vunpack.c.l.b16 %v1061
    %v4193 = vunpack.c.h.b16 %v1061
    %v4194 = vunpack.c.l.b16 %v1062
    %v4195 = vunpack.c.h.b16 %v1062
    %v4196 = vunpack.c.l.b16 %v1063
    %v4197 = vunpack.c.h.b16 %v1063
    %v4198 = vunpack.c.l.b16 %v1064
    %v4199 = vunpack.c.h.b16 %v1064
    %v4200 = vunpack.c.l.b16 %v1065
    %v4201 = vunpack.c.h.b16 %v1065
    %v4202 = vunpack.c.l.b16 %v1066
    %v4203 = vunpack.c.h.b16 %v1066
    %v4204 = vunpack.c.l.b16 %v1067
    %v4205 = vunpack.c.h.b16 %v1067
    %v4206 = vunpack.c.l.b16 %v1068
    %v4207 = vunpack.c.h.b16 %v1068
    %v4208 = vunpack.c.l.b16 %v1069
    %v4209 = vunpack.c.h.b16 %v1069
    %v4210 = vunpack.c.l.b16 %v1070
    %v4211 = vunpack.c.h.b16 %v1070
    %v4212 = vunpack.c.l.b16 %v1071
    %v4213 = vunpack.c.h.b16 %v1071
    %v4214 = vunpack.c.l.b16 %v1072
    %v4215 = vunpack.c.h.b16 %v1072
    %v4216 = vunpack.c.l.b16 %v1073
    %v4217 = vunpack.c.h.b16 %v1073
    %v4218 = vunpack.c.l.b16 %v1074
    %v4219 = vunpack.c.h.b16 %v1074
    %v4220 = vunpack.c.l.b16 %v1075
    %v4221 = vunpack.c.h.b16 %v1075
    %v4222 = vunpack.c.l.b16 %v1076
    %v4223 = vunpack.c.h.b16 %v1076
    %v4224 = vunpack.c.l.b16 %v1077
    %v4225 = vunpack.c.h.b16 %v1077
    %v4226 = vunpack.c.l.b16 %v1078
    %v4227 = vunpack.c.h.b16 %v1078
    %v4228 = vunpack.c.l.b16 %v1079
    %v4229 = vunpack.c.h.b16 %v1079
    %v4230 = vunpack.c.l.b16 %v1080
    %v4231 = vunpack.c.h.b16 %v1080
    %v4232 = vunpack.c.l.b16 %v1081
    %v4233 = vunpack.c.h.b16 %v1081
    %v4234 = vunpack.c.l.b16 %v1082
    %v4235 = vunpack.c.h.b16 %v1082
    %v4236 = vunpack.c.l.b16 %v1083
    %v4237 = vunpack.c.h.b16 %v1083
    %v4238 = vunpack.c.l.b16 %v1084
    %v4239 = vunpack.c.h.b16 %v1084
    %v4240 = vunpack.c.l.b16 %v1085
    %v4241 = vunpack.c.h.b16 %v1085
    %v4242 = vunpack.c.l.b16 %v1086
    %v4243 = vunpack.c.h.b16 %v1086
    %v4244 = vunpack.c.l.b16 %v1087
    %v4245 = vunpack.c.h.b16 %v1087
    %v4246 = vunpack.c.l.b16 %v1088
    %v4247 = vunpack.c.h.b16 %v1088
    %v4248 = vunpack.c.l.b16 %v1089
    %v4249 = vunpack.c.h.b16 %v1089
    %v4250 = vunpack.c.l.b16 %v1090
    %v4251 = vunpack.c.h.b16 %v1090
    %v4252 = vunpack.c.l.b16 %v1091
    %v4253 = vunpack.c.h.b16 %v1091
    %v4254 = vunpack.c.l.b16 %v1092
    %v4255 = vunpack.c.h.b16 %v1092
    %v4256 = vunpack.c.l.b16 %v1093
    %v4257 = vunpack.c.h.b16 %v1093
    %v4258 = vunpack.c.l.b16 %v1094
    %v4259 = vunpack.c.h.b16 %v1094
    %v4260 = vunpack.c.l.b16 %v1095
    %v4261 = vunpack.c.h.b16 %v1095
    %v4262 = vunpack.c.l.b16 %v1096
    %v4263 = vunpack.c.h.b16 %v1096
    %v4264 = vunpack.c.l.b16 %v1097
    %v4265 = vunpack.c.h.b16 %v1097
    %v4266 = vunpack.c.l.b16 %v1098
    %v4267 = vunpack.c.h.b16 %v1098
    %v4268 = vunpack.c.l.b16 %v1099
    %v4269 = vunpack.c.h.b16 %v1099
    %v4270 = vpack.c.b16 %v2238, %v2222
    %v4271 = vpack.c.b16 %v2239, %v2223
    %v4272 = vpack.c.b16 %v2240, %v2224
    %v4273 = vpack.c.b16 %v2241, %v2225
    %v4274 = vpack.c.b16 %v2242, %v2226
    %v4275 = vpack.c.b16 %v2243, %v2227
    %v4276 = vpack.c.b16 %v2244, %v2228
    %v4277 = vpack.c.b16 %v2245, %v2229
    %v4278 = vpack.c.b16 %v2246, %v2230
    %v4279 = vpack.c.b16 %v2247, %v2231
    %v4280 = vpack.c.b16 %v2248, %v2232
    %v4281 = vpack.c.b16 %v2249, %v2233
    %v4282 = vpack.c.b16 %v2250, %v2234
    %v4283 = vpack.c.b16 %v2251, %v2235
    %v4284 = vpack.c.b16 %v2252, %v2236
    %v4285 = vpack.c.b16 %v2253, %v2237
    %v4286 = vpack.c.b16 %v2270, %v2254
    %v4287 = vpack.c.b16 %v2271, %v2255
    %v4288 = vpack.c.b16 %v2272, %v2256
    %v4289 = vpack.c.b16 %v2273, %v2257
    %v4290 = vpack.c.b16 %v2274, %v2258
    %v4291 = vpack.c.b16 %v2275, %v2259
    %v4292 = vpack.c.b16 %v2276, %v2260
    %v4293 = vpack.c.b16 %v2277, %v2261
    %v4294 = vpack.c.b16 %v2278, %v2262
    %v4295 = vpack.c.b16 %v2279, %v2263
    %v4296 = vpack.c.b16 %v2280, %v2264
    %v4297 = vpack.c.b16 %v2281, %v2265
    %v4298 = vpack.c.b16 %v2282, %v2266
    %v4299 = vpack.c.b16 %v2283, %v2267
    %v4300 = vpack.c.b16 %v2284, %v2268
    %v4301 = vpack.c.b16 %v2285, %v2269
    %v4302 = vpack.c.b16 %v2302, %v2286
    %v4303 = vpack.c.b16 %v2303, %v2287
    %v4304 = vpack.c.b16 %v2304, %v2288
    %v4305 = vpack.c.b16 %v2305, %v2289
    %v4306 = vpack.c.b16 %v2306, %v2290
    %v4307 = vpack.c.b16 %v2307, %v2291
    %v4308 = vpack.c.b16 %v2308, %v2292
    %v4309 = vpack.c.b16 %v2309, %v2293
    %v4310 = vpack.c.b16 %v2310, %v2294
    %v4311 = vpack.c.b16 %v2311, %v2295
    %v4312 = vpack.c.b16 %v2312, %v2296
    %v4313 = vpack.c.b16 %v2313, %v2297
    %v4314 = vpack.c.b16 %v2314, %v2298
    %v4315 = vpack.c.b16 %v2315, %v2299
    %v4316 = vpack.c.b16 %v2316, %v2300
    %v4317 = vpack.c.b16 %v2317, %v2301
    %v4318 = vpack.c.b16 %v2334, %v2318
    %v4319 = vpack.c.b16 %v2335, %v2319
    %v4320 = vpack.c.b16 %v2336, %v2320
    %v4321 = vpack.c.b16 %v2337, %v2321
    %v4322 = vpack.c.b16 %v2338, %v2322
    %v4323 = vpack.c.b16 %v2339, %v2323
    %v4324 = vpack.c.b16 %v2340, %v2324
    %v4325 = vpack.c.b16 %v2341, %v2325
    %v4326 = vpack.c.b16 %v2342, %v2326
    %v4327 = vpack.c.b16 %v2343, %v2327
    %v4328 = vpack.c.b16 %v2344, %v2328
    %v4329 = vpack.c.b16 %v2345, %v2329
    %v4330 = vpack.c.b16 %v2346, %v2330
    %v4331 = vpack.c.b16 %v2347, %v2331
    %v4332 = vpack.c.b16 %v2348, %v2332
    %v4333 = vpack.c.b16 %v2349, %v2333
    %v4334 = vpack.c.b16 %v2366, %v2350
    %v4335 = vpack.c.b16 %v2367, %v2351
    %v4336 = vpack.c.b16 %v2368, %v2352
    %v4337 = vpack.c.b16 %v2369, %v2353
    %v4338 = vpack.c.b16 %v2370, %v2354
    %v4339 = vpack.c.b16 %v2371, %v2355
    %v4340 = vpack.c.b16 %v2372, %v2356
    %v4341 = vpack.c.b16 %v2373, %v2357
    %v4342 = vpack.c.b16 %v2374, %v2358
    %v4343 = vpack.c.b16 %v2375, %v2359
    %v4344 = vpack.c.b16 %v2376, %v2360
    %v4345 = vpack.c.b16 %v2377, %v2361
    %v4346 = vpack.c.b16 %v2378, %v2362
    %v4347 = vpack.c.b16 %v2379, %v2363
    %v4348 = vpack.c.b16 %v2380, %v2364
    %v4349 = vpack.c.b16 %v2381, %v2365
    %v4350 = vpack.c.b16 %v2398, %v2382
    %v4351 = vpack.c.b16 %v2399, %v2383
    %v4352 = vpack.c.b16 %v2400, %v2384
    %v4353 = vpack.c.b16 %v2401, %v2385
    %v4354 = vpack.c.b16 %v2402, %v2386
    %v4355 = vpack.c.b16 %v2403, %v2387
    %v4356 = vpack.c.b16 %v2404, %v2388
    %v4357 = vpack.c.b16 %v2405, %v2389
    %v4358 = vpack.c.b16 %v2406, %v2390
    %v4359 = vpack.c.b16 %v2407, %v2391
    %v4360 = vpack.c.b16 %v2408, %v2392
    %v4361 = vpack.c.b16 %v2409, %v2393
    %v4362 = vpack.c.b16 %v2410, %v2394
    %v4363 = vpack.c.b16 %v2411, %v2395
    %v4364 = vpack.c.b16 %v2412, %v2396
    %v4365 = vpack.c.b16 %v2413, %v2397
    %v4366 = vpack.c.b16 %v2430, %v2414
    %v4367 = vpack.c.b16 %v2431, %v2415
    %v4368 = vpack.c.b16 %v2432, %v2416
    %v4369 = vpack.c.b16 %v2433, %v2417
    %v4370 = vpack.c.b16 %v2434, %v2418
    %v4371 = vpack.c.b16 %v2435, %v2419
    %v4372 = vpack.c.b16 %v2436, %v2420
    %v4373 = vpack.c.b16 %v2437, %v2421
    %v4374 = vpack.c.b16 %v2438, %v2422
    %v4375 = vpack.c.b16 %v2439, %v2423
    %v4376 = vpack.c.b16 %v2440, %v2424
    %v4377 = vpack.c.b16 %v2441, %v2425
    %v4378 = vpack.c.b16 %v2442, %v2426
    %v4379 = vpack.c.b16 %v2443, %v2427
    %v4380 = vpack.c.b16 %v2444, %v2428
    %v4381 = vpack.c.b16 %v2445, %v2429
    %v4382 = vpack.c.b16 %v2462, %v2446
    %v4383 = vpack.c.b16 %v2463, %v2447
    %v4384 = vpack.c.b16 %v2464, %v2448
    %v4385 = vpack.c.b16 %v2465, %v2449
    %v4386 = vpack.c.b16 %v2466, %v2450
    %v4387 = vpack.c.b16 %v2467, %v2451
    %v4388 = vpack.c.b16 %v2468, %v2452
    %v4389 = vpack.c.b16 %v2469, %v2453
    %v4390 = vpack.c.b16 %v2470, %v2454
    %v4391 = vpack.c.b16 %v2471, %v2455
    %v4392 = vpack.c.b16 %v2472, %v2456
    %v4393 = vpack.c.b16 %v2473, %v2457
    %v4394 = vpack.c.b16 %v2474, %v2458
    %v4395 = vpack.c.b16 %v2475, %v2459
    %v4396 = vpack.c.b16 %v2476, %v2460
    %v4397 = vpack.c.b16 %v2477, %v2461
    %v4398 = vpack.c.b16 %v2494, %v2478
    %v4399 = vpack.c.b16 %v2495, %v2479
    %v4400 = vpack.c.b16 %v2496, %v2480
    %v4401 = vpack.c.b16 %v2497, %v2481
    %v4402 = vpack.c.b16 %v2498, %v2482
    %v4403 = vpack.c.b16 %v2499, %v2483
    %v4404 = vpack.c.b16 %v2500, %v2484
    %v4405 = vpack.c.b16 %v2501, %v2485
    %v4406 = vpack.c.b16 %v2502, %v2486
    %v4407 = vpack.c.b16 %v2503, %v2487
    %v4408 = vpack.c.b16 %v2504, %v2488
    %v4409 = vpack.c.b16 %v2505, %v2489
    %v4410 = vpack.c.b16 %v2506, %v2490
    %v4411 = vpack.c.b16 %v2507, %v2491
    %v4412 = vpack.c.b16 %v2508, %v2492
    %v4413 = vpack.c.b16 %v2509, %v2493
    %v4414 = vpack.c.b16 %v2526, %v2510
    %v4415 = vpack.c.b16 %v2527, %v2511
    %v4416 = vpack.c.b16 %v2528, %v2512
    %v4417 = vpack.c.b16 %v2529, %v2513
    %v4418 = vpack.c.b16 %v2530, %v2514
    %v4419 = vpack.c.b16 %v2531, %v2515
    %v4420 = vpack.c.b16 %v2532, %v2516
    %v4421 = vpack.c.b16 %v2533, %v2517
    %v4422 = vpack.c.b16 %v2534, %v2518
    %v4423 = vpack.c.b16 %v2535, %v2519
    %v4424 = vpack.c.b16 %v2536, %v2520
    %v4425 = vpack.c.b16 %v2537, %v2521
    %v4426 = vpack.c.b16 %v2538, %v2522
    %v4427 = vpack.c.b16 %v2539, %v2523
    %v4428 = vpack.c.b16 %v2540, %v2524
    %v4429 = vpack.c.b16 %v2541, %v2525
    %v4430 = vpack.c.b16 %v2558, %v2542
    %v4431 = vpack.c.b16 %v2559, %v2543
    %v4432 = vpack.c.b16 %v2560, %v2544
    %v4433 = vpack.c.b16 %v2561, %v2545
    %v4434 = vpack.c.b16 %v2562, %v2546
    %v4435 = vpack.c.b16 %v2563, %v2547
    %v4436 = vpack.c.b16 %v2564, %v2548
    %v4437 = vpack.c.b16 %v2565, %v2549
    %v4438 = vpack.c.b16 %v2566, %v2550
    %v4439 = vpack.c.b16 %v2567, %v2551
    %v4440 = vpack.c.b16 %v2568, %v2552
    %v4441 = vpack.c.b16 %v2569, %v2553
    %v4442 = vpack.c.b16 %v2570, %v2554
    %v4443 = vpack.c.b16 %v2571, %v2555
    %v4444 = vpack.c.b16 %v2572, %v2556
    %v4445 = vpack.c.b16 %v2573, %v2557
    %v4446 = vpack.c.b16 %v2590, %v2574
    %v4447 = vpack.c.b16 %v2591, %v2575
    %v4448 = vpack.c.b16 %v2592, %v2576
    %v4449 = vpack.c.b16 %v2593, %v2577
    %v4450 = vpack.c.b16 %v2594, %v2578
    %v4451 = vpack.c.b16 %v2595, %v2579
    %v4452 = vpack.c.b16 %v2596, %v2580
    %v4453 = vpack.c.b16 %v2597, %v2581
    %v4454 = vpack.c.b16 %v2598, %v2582
    %v4455 = vpack.c.b16 %v2599, %v2583
    %v4456 = vpack.c.b16 %v2600, %v2584
    %v4457 = vpack.c.b16 %v2601, %v2585
    %v4458 = vpack.c.b16 %v2602, %v2586
    %v4459 = vpack.c.b16 %v2603, %v2587
    %v4460 = vpack.c.b16 %v2604, %v2588
    %v4461 = vpack.c.b16 %v2605, %v2589
    %v4462 = vpack.c.b16 %v2622, %v2606
    %v4463 = vpack.c.b16 %v2623, %v2607
    %v4464 = vpack.c.b16 %v2624, %v2608
    %v4465 = vpack.c.b16 %v2625, %v2609
    %v4466 = vpack.c.b16 %v2626, %v2610
    %v4467 = vpack.c.b16 %v2627, %v2611
    %v4468 = vpack.c.b16 %v2628, %v2612
    %v4469 = vpack.c.b16 %v2629, %v2613
    %v4470 = vpack.c.b16 %v2630, %v2614
    %v4471 = vpack.c.b16 %v2631, %v2615
    %v4472 = vpack.c.b16 %v2632, %v2616
    %v4473 = vpack.c.b16 %v2633, %v2617
    %v4474 = vpack.c.b16 %v2634, %v2618
    %v4475 = vpack.c.b16 %v2635, %v2619
    %v4476 = vpack.c.b16 %v2636, %v2620
    %v4477 = vpack.c.b16 %v2637, %v2621
    %v4478 = vpack.c.b16 %v2654, %v2638
    %v4479 = vpack.c.b16 %v2655, %v2639
    %v4480 = vpack.c.b16 %v2656, %v2640
    %v4481 = vpack.c.b16 %v2657, %v2641
    %v4482 = vpack.c.b16 %v2658, %v2642
    %v4483 = vpack.c.b16 %v2659, %v2643
    %v4484 = vpack.c.b16 %v2660, %v2644
    %v4485 = vpack.c.b16 %v2661, %v2645
    %v4486 = vpack.c.b16 %v2662, %v2646
    %v4487 = vpack.c.b16 %v2663, %v2647
    %v4488 = vpack.c.b16 %v2664, %v2648
    %v4489 = vpack.c.b16 %v2665, %v2649
    %v4490 = vpack.c.b16 %v2666, %v2650
    %v4491 = vpack.c.b16 %v2667, %v2651
    %v4492 = vpack.c.b16 %v2668, %v2652
    %v4493 = vpack.c.b16 %v2669, %v2653
    %v4494 = vpack.c.b16 %v2686, %v2670
    %v4495 = vpack.c.b16 %v2687, %v2671
    %v4496 = vpack.c.b16 %v2688, %v2672
    %v4497 = vpack.c.b16 %v2689, %v2673
    %v4498 = vpack.c.b16 %v2690, %v2674
    %v4499 = vpack.c.b16 %v2691, %v2675
    %v4500 = vpack.c.b16 %v2692, %v2676
    %v4501 = vpack.c.b16 %v2693, %v2677
    %v4502 = vpack.c.b16 %v2694, %v2678
    %v4503 = vpack.c.b16 %v2695, %v2679
    %v4504 = vpack.c.b16 %v2696, %v2680
    %v4505 = vpack.c.b16 %v2697, %v2681
    %v4506 = vpack.c.b16 %v2698, %v2682
    %v4507 = vpack.c.b16 %v2699, %v2683
    %v4508 = vpack.c.b16 %v2700, %v2684
    %v4509 = vpack.c.b16 %v2701, %v2685
    %v4510 = vpack.c.b16 %v2718, %v2702
    %v4511 = vpack.c.b16 %v2719, %v2703
    %v4512 = vpack.c.b16 %v2720, %v2704
    %v4513 = vpack.c.b16 %v2721, %v2705
    %v4514 = vpack.c.b16 %v2722, %v2706
    %v4515 = vpack.c.b16 %v2723, %v2707
    %v4516 = vpack.c.b16 %v2724, %v2708
    %v4517 = vpack.c.b16 %v2725, %v2709
    %v4518 = vpack.c.b16 %v2726, %v2710
    %v4519 = vpack.c.b16 %v2727, %v2711
    %v4520 = vpack.c.b16 %v2728, %v2712
    %v4521 = vpack.c.b16 %v2729, %v2713
    %v4522 = vpack.c.b16 %v2730, %v2714
    %v4523 = vpack.c.b16 %v2731, %v2715
    %v4524 = vpack.c.b16 %v2732, %v2716
    %v4525 = vpack.c.b16 %v2733, %v2717
    %v4526 = vpack.c.b16 %v2750, %v2734
    %v4527 = vpack.c.b16 %v2751, %v2735
    %v4528 = vpack.c.b16 %v2752, %v2736
    %v4529 = vpack.c.b16 %v2753, %v2737
    %v4530 = vpack.c.b16 %v2754, %v2738
    %v4531 = vpack.c.b16 %v2755, %v2739
    %v4532 = vpack.c.b16 %v2756, %v2740
    %v4533 = vpack.c.b16 %v2757, %v2741
    %v4534 = vpack.c.b16 %v2758, %v2742
    %v4535 = vpack.c.b16 %v2759, %v2743
    %v4536 = vpack.c.b16 %v2760, %v2744
    %v4537 = vpack.c.b16 %v2761, %v2745
    %v4538 = vpack.c.b16 %v2762, %v2746
    %v4539 = vpack.c.b16 %v2763, %v2747
    %v4540 = vpack.c.b16 %v2764, %v2748
    %v4541 = vpack.c.b16 %v2765, %v2749
    %v4542 = vpack.c.b16 %v2782, %v2766
    %v4543 = vpack.c.b16 %v2783, %v2767
    %v4544 = vpack.c.b16 %v2784, %v2768
    %v4545 = vpack.c.b16 %v2785, %v2769
    %v4546 = vpack.c.b16 %v2786, %v2770
    %v4547 = vpack.c.b16 %v2787, %v2771
    %v4548 = vpack.c.b16 %v2788, %v2772
    %v4549 = vpack.c.b16 %v2789, %v2773
    %v4550 = vpack.c.b16 %v2790, %v2774
    %v4551 = vpack.c.b16 %v2791, %v2775
    %v4552 = vpack.c.b16 %v2792, %v2776
    %v4553 = vpack.c.b16 %v2793, %v2777
    %v4554 = vpack.c.b16 %v2794, %v2778
    %v4555 = vpack.c.b16 %v2795, %v2779
    %v4556 = vpack.c.b16 %v2796, %v2780
    %v4557 = vpack.c.b16 %v2797, %v2781
    %v4558 = vpack.c.b16 %v2814, %v2798
    %v4559 = vpack.c.b16 %v2815, %v2799
    %v4560 = vpack.c.b16 %v2816, %v2800
    %v4561 = vpack.c.b16 %v2817, %v2801
    %v4562 = vpack.c.b16 %v2818, %v2802
    %v4563 = vpack.c.b16 %v2819, %v2803
    %v4564 = vpack.c.b16 %v2820, %v2804
    %v4565 = vpack.c.b16 %v2821, %v2805
    %v4566 = vpack.c.b16 %v2822, %v2806
    %v4567 = vpack.c.b16 %v2823, %v2807
    %v4568 = vpack.c.b16 %v2824, %v2808
    %v4569 = vpack.c.b16 %v2825, %v2809
    %v4570 = vpack.c.b16 %v2826, %v2810
    %v4571 = vpack.c.b16 %v2827, %v2811
    %v4572 = vpack.c.b16 %v2828, %v2812
    %v4573 = vpack.c.b16 %v2829, %v2813
    %v4574 = vpack.c.b16 %v2846, %v2830
    %v4575 = vpack.c.b16 %v2847, %v2831
    %v4576 = vpack.c.b16 %v2848, %v2832
    %v4577 = vpack.c.b16 %v2849, %v2833
    %v4578 = vpack.c.b16 %v2850, %v2834
    %v4579 = vpack.c.b16 %v2851, %v2835
    %v4580 = vpack.c.b16 %v2852, %v2836
    %v4581 = vpack.c.b16 %v2853, %v2837
    %v4582 = vpack.c.b16 %v2854, %v2838
    %v4583 = vpack.c.b16 %v2855, %v2839
    %v4584 = vpack.c.b16 %v2856, %v2840
    %v4585 = vpack.c.b16 %v2857, %v2841
    %v4586 = vpack.c.b16 %v2858, %v2842
    %v4587 = vpack.c.b16 %v2859, %v2843
    %v4588 = vpack.c.b16 %v2860, %v2844
    %v4589 = vpack.c.b16 %v2861, %v2845
    %v4590 = vpack.c.b16 %v2878, %v2862
    %v4591 = vpack.c.b16 %v2879, %v2863
    %v4592 = vpack.c.b16 %v2880, %v2864
    %v4593 = vpack.c.b16 %v2881, %v2865
    %v4594 = vpack.c.b16 %v2882, %v2866
    %v4595 = vpack.c.b16 %v2883, %v2867
    %v4596 = vpack.c.b16 %v2884, %v2868
    %v4597 = vpack.c.b16 %v2885, %v2869
    %v4598 = vpack.c.b16 %v2886, %v2870
    %v4599 = vpack.c.b16 %v2887, %v2871
    %v4600 = vpack.c.b16 %v2888, %v2872
    %v4601 = vpack.c.b16 %v2889, %v2873
    %v4602 = vpack.c.b16 %v2890, %v2874
    %v4603 = vpack.c.b16 %v2891, %v2875
    %v4604 = vpack.c.b16 %v2892, %v2876
    %v4605 = vpack.c.b16 %v2893, %v2877
    %v4606 = vpack.c.b16 %v2910, %v2894
    %v4607 = vpack.c.b16 %v2911, %v2895
    %v4608 = vpack.c.b16 %v2912, %v2896
    %v4609 = vpack.c.b16 %v2913, %v2897
    %v4610 = vpack.c.b16 %v2914, %v2898
    %v4611 = vpack.c.b16 %v2915, %v2899
    %v4612 = vpack.c.b16 %v2916, %v2900
    %v4613 = vpack.c.b16 %v2917, %v2901
    %v4614 = vpack.c.b16 %v2918, %v2902
    %v4615 = vpack.c.b16 %v2919, %v2903
    %v4616 = vpack.c.b16 %v2920, %v2904
    %v4617 = vpack.c.b16 %v2921, %v2905
    %v4618 = vpack.c.b16 %v2922, %v2906
    %v4619 = vpack.c.b16 %v2923, %v2907
    %v4620 = vpack.c.b16 %v2924, %v2908
    %v4621 = vpack.c.b16 %v2925, %v2909
    %v4622 = vpack.c.b16 %v2942, %v2926
    %v4623 = vpack.c.b16 %v2943, %v2927
    %v4624 = vpack.c.b16 %v2944, %v2928
    %v4625 = vpack.c.b16 %v2945, %v2929
    %v4626 = vpack.c.b16 %v2946, %v2930
    %v4627 = vpack.c.b16 %v2947, %v2931
    %v4628 = vpack.c.b16 %v2948, %v2932
    %v4629 = vpack.c.b16 %v2949, %v2933
    %v4630 = vpack.c.b16 %v2950, %v2934
    %v4631 = vpack.c.b16 %v2951, %v2935
    %v4632 = vpack.c.b16 %v2952, %v2936
    %v4633 = vpack.c.b16 %v2953, %v2937
    %v4634 = vpack.c.b16 %v2954, %v2938
    %v4635 = vpack.c.b16 %v2955, %v2939
    %v4636 = vpack.c.b16 %v2956, %v2940
    %v4637 = vpack.c.b16 %v2957, %v2941
    %v4638 = vpack.c.b16 %v2974, %v2958
    %v4639 = vpack.c.b16 %v2975, %v2959
    %v4640 = vpack.c.b16 %v2976, %v2960
    %v4641 = vpack.c.b16 %v2977, %v2961
    %v4642 = vpack.c.b16 %v2978, %v2962
    %v4643 = vpack.c.b16 %v2979, %v2963
    %v4644 = vpack.c.b16 %v2980, %v2964
    %v4645 = vpack.c.b16 %v2981, %v2965
    %v4646 = vpack.c.b16 %v2982, %v2966
    %v4647 = vpack.c.b16 %v2983, %v2967
    %v4648 = vpack.c.b16 %v2984, %v2968
    %v4649 = vpack.c.b16 %v2985, %v2969
    %v4650 = vpack.c.b16 %v2986, %v2970
    %v4651 = vpack.c.b16 %v2987, %v2971
    %v4652 = vpack.c.b16 %v2988, %v2972
    %v4653 = vpack.c.b16 %v2989, %v2973
    %v4654 = vpack.c.b16 %v3006, %v2990
    %v4655 = vpack.c.b16 %v3007, %v2991
    %v4656 = vpack.c.b16 %v3008, %v2992
    %v4657 = vpack.c.b16 %v3009, %v2993
    %v4658 = vpack.c.b16 %v3010, %v2994
    %v4659 = vpack.c.b16 %v3011, %v2995
    %v4660 = vpack.c.b16 %v3012, %v2996
    %v4661 = vpack.c.b16 %v3013, %v2997
    %v4662 = vpack.c.b16 %v3014, %v2998
    %v4663 = vpack.c.b16 %v3015, %v2999
    %v4664 = vpack.c.b16 %v3016, %v3000
    %v4665 = vpack.c.b16 %v3017, %v3001
    %v4666 = vpack.c.b16 %v3018, %v3002
    %v4667 = vpack.c.b16 %v3019, %v3003
    %v4668 = vpack.c.b16 %v3020, %v3004
    %v4669 = vpack.c.b16 %v3021, %v3005
    %v4670 = vpack.c.b16 %v3038, %v3022
    %v4671 = vpack.c.b16 %v3039, %v3023
    %v4672 = vpack.c.b16 %v3040, %v3024
    %v4673 = vpack.c.b16 %v3041, %v3025
    %v4674 = vpack.c.b16 %v3042, %v3026
    %v4675 = vpack.c.b16 %v3043, %v3027
    %v4676 = vpack.c.b16 %v3044, %v3028
    %v4677 = vpack.c.b16 %v3045, %v3029
    %v4678 = vpack.c.b16 %v3046, %v3030
    %v4679 = vpack.c.b16 %v3047, %v3031
    %v4680 = vpack.c.b16 %v3048, %v3032
    %v4681 = vpack.c.b16 %v3049, %v3033
    %v4682 = vpack.c.b16 %v3050, %v3034
    %v4683 = vpack.c.b16 %v3051, %v3035
    %v4684 = vpack.c.b16 %v3052, %v3036
    %v4685 = vpack.c.b16 %v3053, %v3037
    %v4686 = vpack.c.b16 %v3070, %v3054
    %v4687 = vpack.c.b16 %v3071, %v3055
    %v4688 = vpack.c.b16 %v3072, %v3056
    %v4689 = vpack.c.b16 %v3073, %v3057
    %v4690 = vpack.c.b16 %v3074, %v3058
    %v4691 = vpack.c.b16 %v3075, %v3059
    %v4692 = vpack.c.b16 %v3076, %v3060
    %v4693 = vpack.c.b16 %v3077, %v3061
    %v4694 = vpack.c.b16 %v3078, %v3062
    %v4695 = vpack.c.b16 %v3079, %v3063
    %v4696 = vpack.c.b16 %v3080, %v3064
    %v4697 = vpack.c.b16 %v3081, %v3065
    %v4698 = vpack.c.b16 %v3082, %v3066
    %v4699 = vpack.c.b16 %v3083, %v3067
    %v4700 = vpack.c.b16 %v3084, %v3068
    %v4701 = vpack.c.b16 %v3085, %v3069
    %v4702 = vpack.c.b16 %v3102, %v3086
    %v4703 = vpack.c.b16 %v3103, %v3087
    %v4704 = vpack.c.b16 %v3104, %v3088
    %v4705 = vpack.c.b16 %v3105, %v3089
    %v4706 = vpack.c.b16 %v3106, %v3090
    %v4707 = vpack.c.b16 %v3107, %v3091
    %v4708 = vpack.c.b16 %v3108, %v3092
    %v4709 = vpack.c.b16 %v3109, %v3093
    %v4710 = vpack.c.b16 %v3110, %v3094
    %v4711 = vpack.c.b16 %v3111, %v3095
    %v4712 = vpack.c.b16 %v3112, %v3096
    %v4713 = vpack.c.b16 %v3113, %v3097
    %v4714 = vpack.c.b16 %v3114, %v3098
    %v4715 = vpack.c.b16 %v3115, %v3099
    %v4716 = vpack.c.b16 %v3116, %v3100
    %v4717 = vpack.c.b16 %v3117, %v3101
    %v4718 = vpack.c.b16 %v3134, %v3118
    %v4719 = vpack.c.b16 %v3135, %v3119
    %v4720 = vpack.c.b16 %v3136, %v3120
    %v4721 = vpack.c.b16 %v3137, %v3121
    %v4722 = vpack.c.b16 %v3138, %v3122
    %v4723 = vpack.c.b16 %v3139, %v3123
    %v4724 = vpack.c.b16 %v3140, %v3124
    %v4725 = vpack.c.b16 %v3141, %v3125
    %v4726 = vpack.c.b16 %v3142, %v3126
    %v4727 = vpack.c.b16 %v3143, %v3127
    %v4728 = vpack.c.b16 %v3144, %v3128
    %v4729 = vpack.c.b16 %v3145, %v3129
    %v4730 = vpack.c.b16 %v3146, %v3130
    %v4731 = vpack.c.b16 %v3147, %v3131
    %v4732 = vpack.c.b16 %v3148, %v3132
    %v4733 = vpack.c.b16 %v3149, %v3133
    %v4734 = vpack.c.b16 %v3166, %v3150
    %v4735 = vpack.c.b16 %v3167, %v3151
    %v4736 = vpack.c.b16 %v3168, %v3152
    %v4737 = vpack.c.b16 %v3169, %v3153
    %v4738 = vpack.c.b16 %v3170, %v3154
    %v4739 = vpack.c.b16 %v3171, %v3155
    %v4740 = vpack.c.b16 %v3172, %v3156
    %v4741 = vpack.c.b16 %v3173, %v3157
    %v4742 = vpack.c.b16 %v3174, %v3158
    %v4743 = vpack.c.b16 %v3175, %v3159
    %v4744 = vpack.c.b16 %v3176, %v3160
    %v4745 = vpack.c.b16 %v3177, %v3161
    %v4746 = vpack.c.b16 %v3178, %v3162
    %v4747 = vpack.c.b16 %v3179, %v3163
    %v4748 = vpack.c.b16 %v3180, %v3164
    %v4749 = vpack.c.b16 %v3181, %v3165
    %v4750 = vpack.c.b16 %v3198, %v3182
    %v4751 = vpack.c.b16 %v3199, %v3183
    %v4752 = vpack.c.b16 %v3200, %v3184
    %v4753 = vpack.c.b16 %v3201, %v3185
    %v4754 = vpack.c.b16 %v3202, %v3186
    %v4755 = vpack.c.b16 %v3203, %v3187
    %v4756 = vpack.c.b16 %v3204, %v3188
    %v4757 = vpack.c.b16 %v3205, %v3189
    %v4758 = vpack.c.b16 %v3206, %v3190
    %v4759 = vpack.c.b16 %v3207, %v3191
    %v4760 = vpack.c.b16 %v3208, %v3192
    %v4761 = vpack.c.b16 %v3209, %v3193
    %v4762 = vpack.c.b16 %v3210, %v3194
    %v4763 = vpack.c.b16 %v3211, %v3195
    %v4764 = vpack.c.b16 %v3212, %v3196
    %v4765 = vpack.c.b16 %v3213, %v3197
    %v4766 = vpack.c.b16 %v3230, %v3214
    %v4767 = vpack.c.b16 %v3231, %v3215
    %v4768 = vpack.c.b16 %v3232, %v3216
    %v4769 = vpack.c.b16 %v3233, %v3217
    %v4770 = vpack.c.b16 %v3234, %v3218
    %v4771 = vpack.c.b16 %v3235, %v3219
    %v4772 = vpack.c.b16 %v3236, %v3220
    %v4773 = vpack.c.b16 %v3237, %v3221
    %v4774 = vpack.c.b16 %v3238, %v3222
    %v4775 = vpack.c.b16 %v3239, %v3223
    %v4776 = vpack.c.b16 %v3240, %v3224
    %v4777 = vpack.c.b16 %v3241, %v3225
    %v4778 = vpack.c.b16 %v3242, %v3226
    %v4779 = vpack.c.b16 %v3243, %v3227
    %v4780 = vpack.c.b16 %v3244, %v3228
    %v4781 = vpack.c.b16 %v3245, %v3229
    %v4782 = vpack.c.b16 %v3262, %v3246
    %v4783 = vpack.c.b16 %v3263, %v3247
    %v4784 = vpack.c.b16 %v3264, %v3248
    %v4785 = vpack.c.b16 %v3265, %v3249
    %v4786 = vpack.c.b16 %v3266, %v3250
    %v4787 = vpack.c.b16 %v3267, %v3251
    %v4788 = vpack.c.b16 %v3268, %v3252
    %v4789 = vpack.c.b16 %v3269, %v3253
    %v4790 = vpack.c.b16 %v3270, %v3254
    %v4791 = vpack.c.b16 %v3271, %v3255
    %v4792 = vpack.c.b16 %v3272, %v3256
    %v4793 = vpack.c.b16 %v3273, %v3257
    %v4794 = vpack.c.b16 %v3274, %v3258
    %v4795 = vpack.c.b16 %v3275, %v3259
    %v4796 = vpack.c.b16 %v3276, %v3260
    %v4797 = vpack.c.b16 %v3277, %v3261
    %v4798 = vpack.c.b16 %v3294, %v3278
    %v4799 = vpack.c.b16 %v3295, %v3279
    %v4800 = vpack.c.b16 %v3296, %v3280
    %v4801 = vpack.c.b16 %v3297, %v3281
    %v4802 = vpack.c.b16 %v3298, %v3282
    %v4803 = vpack.c.b16 %v3299, %v3283
    %v4804 = vpack.c.b16 %v3300, %v3284
    %v4805 = vpack.c.b16 %v3301, %v3285
    %v4806 = vpack.c.b16 %v3302, %v3286
    %v4807 = vpack.c.b16 %v3303, %v3287
    %v4808 = vpack.c.b16 %v3304, %v3288
    %v4809 = vpack.c.b16 %v3305, %v3289
    %v4810 = vpack.c.b16 %v3306, %v3290
    %v4811 = vpack.c.b16 %v3307, %v3291
    %v4812 = vpack.c.b16 %v3308, %v3292
    %v4813 = vpack.c.b16 %v3309, %v3293
    %v4814 = vpack.c.b16 %v3326, %v3310
    %v4815 = vpack.c.b16 %v3327, %v3311
    %v4816 = vpack.c.b16 %v3328, %v3312
    %v4817 = vpack.c.b16 %v3329, %v3313
    %v4818 = vpack.c.b16 %v3330, %v3314
    %v4819 = vpack.c.b16 %v3331, %v3315
    %v4820 = vpack.c.b16 %v3332, %v3316
    %v4821 = vpack.c.b16 %v3333, %v3317
    %v4822 = vpack.c.b16 %v3334, %v3318
    %v4823 = vpack.c.b16 %v3335, %v3319
    %v4824 = vpack.c.b16 %v3336, %v3320
    %v4825 = vpack.c.b16 %v3337, %v3321
    %v4826 = vpack.c.b16 %v3338, %v3322
    %v4827 = vpack.c.b16 %v3339, %v3323
    %v4828 = vpack.c.b16 %v3340, %v3324
    %v4829 = vpack.c.b16 %v3341, %v3325
    %v4830 = vpack.c.b16 %v3358, %v3342
    %v4831 = vpack.c.b16 %v3359, %v3343
    %v4832 = vpack.c.b16 %v3360, %v3344
    %v4833 = vpack.c.b16 %v3361, %v3345
    %v4834 = vpack.c.b16 %v3362, %v3346
    %v4835 = vpack.c.b16 %v3363, %v3347
    %v4836 = vpack.c.b16 %v3364, %v3348
    %v4837 = vpack.c.b16 %v3365, %v3349
    %v4838 = vpack.c.b16 %v3366, %v3350
    %v4839 = vpack.c.b16 %v3367, %v3351
    %v4840 = vpack.c.b16 %v3368, %v3352
    %v4841 = vpack.c.b16 %v3369, %v3353
    %v4842 = vpack.c.b16 %v3370, %v3354
    %v4843 = vpack.c.b16 %v3371, %v3355
    %v4844 = vpack.c.b16 %v3372, %v3356
    %v4845 = vpack.c.b16 %v3373, %v3357
    %v4846 = vpack.c.b16 %v3390, %v3374
    %v4847 = vpack.c.b16 %v3391, %v3375
    %v4848 = vpack.c.b16 %v3392, %v3376
    %v4849 = vpack.c.b16 %v3393, %v3377
    %v4850 = vpack.c.b16 %v3394, %v3378
    %v4851 = vpack.c.b16 %v3395, %v3379
    %v4852 = vpack.c.b16 %v3396, %v3380
    %v4853 = vpack.c.b16 %v3397, %v3381
    %v4854 = vpack.c.b16 %v3398, %v3382
    %v4855 = vpack.c.b16 %v3399, %v3383
    %v4856 = vpack.c.b16 %v3400, %v3384
    %v4857 = vpack.c.b16 %v3401, %v3385
    %v4858 = vpack.c.b16 %v3402, %v3386
    %v4859 = vpack.c.b16 %v3403, %v3387
    %v4860 = vpack.c.b16 %v3404, %v3388
    %v4861 = vpack.c.b16 %v3405, %v3389
    %v4862 = vpack.c.b16 %v3422, %v3406
    %v4863 = vpack.c.b16 %v3423, %v3407
    %v4864 = vpack.c.b16 %v3424, %v3408
    %v4865 = vpack.c.b16 %v3425, %v3409
    %v4866 = vpack.c.b16 %v3426, %v3410
    %v4867 = vpack.c.b16 %v3427, %v3411
    %v4868 = vpack.c.b16 %v3428, %v3412
    %v4869 = vpack.c.b16 %v3429, %v3413
    %v4870 = vpack.c.b16 %v3430, %v3414
    %v4871 = vpack.c.b16 %v3431, %v3415
    %v4872 = vpack.c.b16 %v3432, %v3416
    %v4873 = vpack.c.b16 %v3433, %v3417
    %v4874 = vpack.c.b16 %v3434, %v3418
    %v4875 = vpack.c.b16 %v3435, %v3419
    %v4876 = vpack.c.b16 %v3436, %v3420
    %v4877 = vpack.c.b16 %v3437, %v3421
    %v4878 = vpack.c.b16 %v3454, %v3438
    %v4879 = vpack.c.b16 %v3455, %v3439
    %v4880 = vpack.c.b16 %v3456, %v3440
    %v4881 = vpack.c.b16 %v3457, %v3441
    %v4882 = vpack.c.b16 %v3458, %v3442
    %v4883 = vpack.c.b16 %v3459, %v3443
    %v4884 = vpack.c.b16 %v3460, %v3444
    %v4885 = vpack.c.b16 %v3461, %v3445
    %v4886 = vpack.c.b16 %v3462, %v3446
    %v4887 = vpack.c.b16 %v3463, %v3447
    %v4888 = vpack.c.b16 %v3464, %v3448
    %v4889 = vpack.c.b16 %v3465, %v3449
    %v4890 = vpack.c.b16 %v3466, %v3450
    %v4891 = vpack.c.b16 %v3467, %v3451
    %v4892 = vpack.c.b16 %v3468, %v3452
    %v4893 = vpack.c.b16 %v3469, %v3453
    %v4894 = vpack.c.b16 %v3486, %v3470
    %v4895 = vpack.c.b16 %v3487, %v3471
    %v4896 = vpack.c.b16 %v3488, %v3472
    %v4897 = vpack.c.b16 %v3489, %v3473
    %v4898 = vpack.c.b16 %v3490, %v3474
    %v4899 = vpack.c.b16 %v3491, %v3475
    %v4900 = vpack.c.b16 %v3492, %v3476
    %v4901 = vpack.c.b16 %v3493, %v3477
    %v4902 = vpack.c.b16 %v3494, %v3478
    %v4903 = vpack.c.b16 %v3495, %v3479
    %v4904 = vpack.c.b16 %v3496, %v3480
    %v4905 = vpack.c.b16 %v3497, %v3481
    %v4906 = vpack.c.b16 %v3498, %v3482
    %v4907 = vpack.c.b16 %v3499, %v3483
    %v4908 = vpack.c.b16 %v3500, %v3484
    %v4909 = vpack.c.b16 %v3501, %v3485
    %v4910 = vpack.c.b16 %v3518, %v3502
    %v4911 = vpack.c.b16 %v3519, %v3503
    %v4912 = vpack.c.b16 %v3520, %v3504
    %v4913 = vpack.c.b16 %v3521, %v3505
    %v4914 = vpack.c.b16 %v3522, %v3506
    %v4915 = vpack.c.b16 %v3523, %v3507
    %v4916 = vpack.c.b16 %v3524, %v3508
    %v4917 = vpack.c.b16 %v3525, %v3509
    %v4918 = vpack.c.b16 %v3526, %v3510
    %v4919 = vpack.c.b16 %v3527, %v3511
    %v4920 = vpack.c.b16 %v3528, %v3512
    %v4921 = vpack.c.b16 %v3529, %v3513
    %v4922 = vpack.c.b16 %v3530, %v3514
    %v4923 = vpack.c.b16 %v3531, %v3515
    %v4924 = vpack.c.b16 %v3532, %v3516
    %v4925 = vpack.c.b16 %v3533, %v3517
    %v4926 = vpack.c.b16 %v3550, %v3534
    %v4927 = vpack.c.b16 %v3551, %v3535
    %v4928 = vpack.c.b16 %v3552, %v3536
    %v4929 = vpack.c.b16 %v3553, %v3537
    %v4930 = vpack.c.b16 %v3554, %v3538
    %v4931 = vpack.c.b16 %v3555, %v3539
    %v4932 = vpack.c.b16 %v3556, %v3540
    %v4933 = vpack.c.b16 %v3557, %v3541
    %v4934 = vpack.c.b16 %v3558, %v3542
    %v4935 = vpack.c.b16 %v3559, %v3543
    %v4936 = vpack.c.b16 %v3560, %v3544
    %v4937 = vpack.c.b16 %v3561, %v3545
    %v4938 = vpack.c.b16 %v3562, %v3546
    %v4939 = vpack.c.b16 %v3563, %v3547
    %v4940 = vpack.c.b16 %v3564, %v3548
    %v4941 = vpack.c.b16 %v3565, %v3549
    %v4942 = vpack.c.b16 %v3582, %v3566
    %v4943 = vpack.c.b16 %v3583, %v3567
    %v4944 = vpack.c.b16 %v3584, %v3568
    %v4945 = vpack.c.b16 %v3585, %v3569
    %v4946 = vpack.c.b16 %v3586, %v3570
    %v4947 = vpack.c.b16 %v3587, %v3571
    %v4948 = vpack.c.b16 %v3588, %v3572
    %v4949 = vpack.c.b16 %v3589, %v3573
    %v4950 = vpack.c.b16 %v3590, %v3574
    %v4951 = vpack.c.b16 %v3591, %v3575
    %v4952 = vpack.c.b16 %v3592, %v3576
    %v4953 = vpack.c.b16 %v3593, %v3577
    %v4954 = vpack.c.b16 %v3594, %v3578
    %v4955 = vpack.c.b16 %v3595, %v3579
    %v4956 = vpack.c.b16 %v3596, %v3580
    %v4957 = vpack.c.b16 %v3597, %v3581
    %v4958 = vpack.c.b16 %v3614, %v3598
    %v4959 = vpack.c.b16 %v3615, %v3599
    %v4960 = vpack.c.b16 %v3616, %v3600
    %v4961 = vpack.c.b16 %v3617, %v3601
    %v4962 = vpack.c.b16 %v3618, %v3602
    %v4963 = vpack.c.b16 %v3619, %v3603
    %v4964 = vpack.c.b16 %v3620, %v3604
    %v4965 = vpack.c.b16 %v3621, %v3605
    %v4966 = vpack.c.b16 %v3622, %v3606
    %v4967 = vpack.c.b16 %v3623, %v3607
    %v4968 = vpack.c.b16 %v3624, %v3608
    %v4969 = vpack.c.b16 %v3625, %v3609
    %v4970 = vpack.c.b16 %v3626, %v3610
    %v4971 = vpack.c.b16 %v3627, %v3611
    %v4972 = vpack.c.b16 %v3628, %v3612
    %v4973 = vpack.c.b16 %v3629, %v3613
    %v4974 = vpack.c.b16 %v3646, %v3630
    %v4975 = vpack.c.b16 %v3647, %v3631
    %v4976 = vpack.c.b16 %v3648, %v3632
    %v4977 = vpack.c.b16 %v3649, %v3633
    %v4978 = vpack.c.b16 %v3650, %v3634
    %v4979 = vpack.c.b16 %v3651, %v3635
    %v4980 = vpack.c.b16 %v3652, %v3636
    %v4981 = vpack.c.b16 %v3653, %v3637
    %v4982 = vpack.c.b16 %v3654, %v3638
    %v4983 = vpack.c.b16 %v3655, %v3639
    %v4984 = vpack.c.b16 %v3656, %v3640
    %v4985 = vpack.c.b16 %v3657, %v3641
    %v4986 = vpack.c.b16 %v3658, %v3642
    %v4987 = vpack.c.b16 %v3659, %v3643
    %v4988 = vpack.c.b16 %v3660, %v3644
    %v4989 = vpack.c.b16 %v3661, %v3645
    %v4990 = vpack.c.b16 %v3678, %v3662
    %v4991 = vpack.c.b16 %v3679, %v3663
    %v4992 = vpack.c.b16 %v3680, %v3664
    %v4993 = vpack.c.b16 %v3681, %v3665
    %v4994 = vpack.c.b16 %v3682, %v3666
    %v4995 = vpack.c.b16 %v3683, %v3667
    %v4996 = vpack.c.b16 %v3684, %v3668
    %v4997 = vpack.c.b16 %v3685, %v3669
    %v4998 = vpack.c.b16 %v3686, %v3670
    %v4999 = vpack.c.b16 %v3687, %v3671
    %v5000 = vpack.c.b16 %v3688, %v3672
    %v5001 = vpack.c.b16 %v3689, %v3673
    %v5002 = vpack.c.b16 %v3690, %v3674
    %v5003 = vpack.c.b16 %v3691, %v3675
    %v5004 = vpack.c.b16 %v3692, %v3676
    %v5005 = vpack.c.b16 %v3693, %v3677
    %v5006 = vpack.c.b16 %v3710, %v3694
    %v5007 = vpack.c.b16 %v3711, %v3695
    %v5008 = vpack.c.b16 %v3712, %v3696
    %v5009 = vpack.c.b16 %v3713, %v3697
    %v5010 = vpack.c.b16 %v3714, %v3698
    %v5011 = vpack.c.b16 %v3715, %v3699
    %v5012 = vpack.c.b16 %v3716, %v3700
    %v5013 = vpack.c.b16 %v3717, %v3701
    %v5014 = vpack.c.b16 %v3718, %v3702
    %v5015 = vpack.c.b16 %v3719, %v3703
    %v5016 = vpack.c.b16 %v3720, %v3704
    %v5017 = vpack.c.b16 %v3721, %v3705
    %v5018 = vpack.c.b16 %v3722, %v3706
    %v5019 = vpack.c.b16 %v3723, %v3707
    %v5020 = vpack.c.b16 %v3724, %v3708
    %v5021 = vpack.c.b16 %v3725, %v3709
    %v5022 = vpack.c.b16 %v3742, %v3726
    %v5023 = vpack.c.b16 %v3743, %v3727
    %v5024 = vpack.c.b16 %v3744, %v3728
    %v5025 = vpack.c.b16 %v3745, %v3729
    %v5026 = vpack.c.b16 %v3746, %v3730
    %v5027 = vpack.c.b16 %v3747, %v3731
    %v5028 = vpack.c.b16 %v3748, %v3732
    %v5029 = vpack.c.b16 %v3749, %v3733
    %v5030 = vpack.c.b16 %v3750, %v3734
    %v5031 = vpack.c.b16 %v3751, %v3735
    %v5032 = vpack.c.b16 %v3752, %v3736
    %v5033 = vpack.c.b16 %v3753, %v3737
    %v5034 = vpack.c.b16 %v3754, %v3738
    %v5035 = vpack.c.b16 %v3755, %v3739
    %v5036 = vpack.c.b16 %v3756, %v3740
    %v5037 = vpack.c.b16 %v3757, %v3741
    %v5038 = vpack.c.b16 %v3774, %v3758
    %v5039 = vpack.c.b16 %v3775, %v3759
    %v5040 = vpack.c.b16 %v3776, %v3760
    %v5041 = vpack.c.b16 %v3777, %v3761
    %v5042 = vpack.c.b16 %v3778, %v3762
    %v5043 = vpack.c.b16 %v3779, %v3763
    %v5044 = vpack.c.b16 %v3780, %v3764
    %v5045 = vpack.c.b16 %v3781, %v3765
    %v5046 = vpack.c.b16 %v3782, %v3766
    %v5047 = vpack.c.b16 %v3783, %v3767
    %v5048 = vpack.c.b16 %v3784, %v3768
    %v5049 = vpack.c.b16 %v3785, %v3769
    %v5050 = vpack.c.b16 %v3786, %v3770
    %v5051 = vpack.c.b16 %v3787, %v3771
    %v5052 = vpack.c.b16 %v3788, %v3772
    %v5053 = vpack.c.b16 %v3789, %v3773
    %v5054 = vpack.c.b16 %v3806, %v3790
    %v5055 = vpack.c.b16 %v3807, %v3791
    %v5056 = vpack.c.b16 %v3808, %v3792
    %v5057 = vpack.c.b16 %v3809, %v3793
    %v5058 = vpack.c.b16 %v3810, %v3794
    %v5059 = vpack.c.b16 %v3811, %v3795
    %v5060 = vpack.c.b16 %v3812, %v3796
    %v5061 = vpack.c.b16 %v3813, %v3797
    %v5062 = vpack.c.b16 %v3814, %v3798
    %v5063 = vpack.c.b16 %v3815, %v3799
    %v5064 = vpack.c.b16 %v3816, %v3800
    %v5065 = vpack.c.b16 %v3817, %v3801
    %v5066 = vpack.c.b16 %v3818, %v3802
    %v5067 = vpack.c.b16 %v3819, %v3803
    %v5068 = vpack.c.b16 %v3820, %v3804
    %v5069 = vpack.c.b16 %v3821, %v3805
    %v5070 = vpack.c.b16 %v3838, %v3822
    %v5071 = vpack.c.b16 %v3839, %v3823
    %v5072 = vpack.c.b16 %v3840, %v3824
    %v5073 = vpack.c.b16 %v3841, %v3825
    %v5074 = vpack.c.b16 %v3842, %v3826
    %v5075 = vpack.c.b16 %v3843, %v3827
    %v5076 = vpack.c.b16 %v3844, %v3828
    %v5077 = vpack.c.b16 %v3845, %v3829
    %v5078 = vpack.c.b16 %v3846, %v3830
    %v5079 = vpack.c.b16 %v3847, %v3831
    %v5080 = vpack.c.b16 %v3848, %v3832
    %v5081 = vpack.c.b16 %v3849, %v3833
    %v5082 = vpack.c.b16 %v3850, %v3834
    %v5083 = vpack.c.b16 %v3851, %v3835
    %v5084 = vpack.c.b16 %v3852, %v3836
    %v5085 = vpack.c.b16 %v3853, %v3837
    %v5086 = vpack.c.b16 %v3870, %v3854
    %v5087 = vpack.c.b16 %v3871, %v3855
    %v5088 = vpack.c.b16 %v3872, %v3856
    %v5089 = vpack.c.b16 %v3873, %v3857
    %v5090 = vpack.c.b16 %v3874, %v3858
    %v5091 = vpack.c.b16 %v3875, %v3859
    %v5092 = vpack.c.b16 %v3876, %v3860
    %v5093 = vpack.c.b16 %v3877, %v3861
    %v5094 = vpack.c.b16 %v3878, %v3862
    %v5095 = vpack.c.b16 %v3879, %v3863
    %v5096 = vpack.c.b16 %v3880, %v3864
    %v5097 = vpack.c.b16 %v3881, %v3865
    %v5098 = vpack.c.b16 %v3882, %v3866
    %v5099 = vpack.c.b16 %v3883, %v3867
    %v5100 = vpack.c.b16 %v3884, %v3868
    %v5101 = vpack.c.b16 %v3885, %v3869
    %v5102 = vpack.c.b16 %v3902, %v3886
    %v5103 = vpack.c.b16 %v3903, %v3887
    %v5104 = vpack.c.b16 %v3904, %v3888
    %v5105 = vpack.c.b16 %v3905, %v3889
    %v5106 = vpack.c.b16 %v3906, %v3890
    %v5107 = vpack.c.b16 %v3907, %v3891
    %v5108 = vpack.c.b16 %v3908, %v3892
    %v5109 = vpack.c.b16 %v3909, %v3893
    %v5110 = vpack.c.b16 %v3910, %v3894
    %v5111 = vpack.c.b16 %v3911, %v3895
    %v5112 = vpack.c.b16 %v3912, %v3896
    %v5113 = vpack.c.b16 %v3913, %v3897
    %v5114 = vpack.c.b16 %v3914, %v3898
    %v5115 = vpack.c.b16 %v3915, %v3899
    %v5116 = vpack.c.b16 %v3916, %v3900
    %v5117 = vpack.c.b16 %v3917, %v3901
    %v5118 = vpack.c.b16 %v3934, %v3918
    %v5119 = vpack.c.b16 %v3935, %v3919
    %v5120 = vpack.c.b16 %v3936, %v3920
    %v5121 = vpack.c.b16 %v3937, %v3921
    %v5122 = vpack.c.b16 %v3938, %v3922
    %v5123 = vpack.c.b16 %v3939, %v3923
    %v5124 = vpack.c.b16 %v3940, %v3924
    %v5125 = vpack.c.b16 %v3941, %v3925
    %v5126 = vpack.c.b16 %v3942, %v3926
    %v5127 = vpack.c.b16 %v3943, %v3927
    %v5128 = vpack.c.b16 %v3944, %v3928
    %v5129 = vpack.c.b16 %v3945, %v3929
    %v5130 = vpack.c.b16 %v3946, %v3930
    %v5131 = vpack.c.b16 %v3947, %v3931
    %v5132 = vpack.c.b16 %v3948, %v3932
    %v5133 = vpack.c.b16 %v3949, %v3933
    %v5134 = vpack.c.b16 %v3966, %v3950
    %v5135 = vpack.c.b16 %v3967, %v3951
    %v5136 = vpack.c.b16 %v3968, %v3952
    %v5137 = vpack.c.b16 %v3969, %v3953
    %v5138 = vpack.c.b16 %v3970, %v3954
    %v5139 = vpack.c.b16 %v3971, %v3955
    %v5140 = vpack.c.b16 %v3972, %v3956
    %v5141 = vpack.c.b16 %v3973, %v3957
    %v5142 = vpack.c.b16 %v3974, %v3958
    %v5143 = vpack.c.b16 %v3975, %v3959
    %v5144 = vpack.c.b16 %v3976, %v3960
    %v5145 = vpack.c.b16 %v3977, %v3961
    %v5146 = vpack.c.b16 %v3978, %v3962
    %v5147 = vpack.c.b16 %v3979, %v3963
    %v5148 = vpack.c.b16 %v3980, %v3964
    %v5149 = vpack.c.b16 %v3981, %v3965
    %v5150 = vpack.c.b16 %v3998, %v3982
    %v5151 = vpack.c.b16 %v3999, %v3983
    %v5152 = vpack.c.b16 %v4000, %v3984
    %v5153 = vpack.c.b16 %v4001, %v3985
    %v5154 = vpack.c.b16 %v4002, %v3986
    %v5155 = vpack.c.b16 %v4003, %v3987
    %v5156 = vpack.c.b16 %v4004, %v3988
    %v5157 = vpack.c.b16 %v4005, %v3989
    %v5158 = vpack.c.b16 %v4006, %v3990
    %v5159 = vpack.c.b16 %v4007, %v3991
    %v5160 = vpack.c.b16 %v4008, %v3992
    %v5161 = vpack.c.b16 %v4009, %v3993
    %v5162 = vpack.c.b16 %v4010, %v3994
    %v5163 = vpack.c.b16 %v4011, %v3995
    %v5164 = vpack.c.b16 %v4012, %v3996
    %v5165 = vpack.c.b16 %v4013, %v3997
    %v5166 = vpack.c.b16 %v4030, %v4014
    %v5167 = vpack.c.b16 %v4031, %v4015
    %v5168 = vpack.c.b16 %v4032, %v4016
    %v5169 = vpack.c.b16 %v4033, %v4017
    %v5170 = vpack.c.b16 %v4034, %v4018
    %v5171 = vpack.c.b16 %v4035, %v4019
    %v5172 = vpack.c.b16 %v4036, %v4020
    %v5173 = vpack.c.b16 %v4037, %v4021
    %v5174 = vpack.c.b16 %v4038, %v4022
    %v5175 = vpack.c.b16 %v4039, %v4023
    %v5176 = vpack.c.b16 %v4040, %v4024
    %v5177 = vpack.c.b16 %v4041, %v4025
    %v5178 = vpack.c.b16 %v4042, %v4026
    %v5179 = vpack.c.b16 %v4043, %v4027
    %v5180 = vpack.c.b16 %v4044, %v4028
    %v5181 = vpack.c.b16 %v4045, %v4029
    %v5182 = vpack.c.b16 %v4062, %v4046
    %v5183 = vpack.c.b16 %v4063, %v4047
    %v5184 = vpack.c.b16 %v4064, %v4048
    %v5185 = vpack.c.b16 %v4065, %v4049
    %v5186 = vpack.c.b16 %v4066, %v4050
    %v5187 = vpack.c.b16 %v4067, %v4051
    %v5188 = vpack.c.b16 %v4068, %v4052
    %v5189 = vpack.c.b16 %v4069, %v4053
    %v5190 = vpack.c.b16 %v4070, %v4054
    %v5191 = vpack.c.b16 %v4071, %v4055
    %v5192 = vpack.c.b16 %v4072, %v4056
    %v5193 = vpack.c.b16 %v4073, %v4057
    %v5194 = vpack.c.b16 %v4074, %v4058
    %v5195 = vpack.c.b16 %v4075, %v4059
    %v5196 = vpack.c.b16 %v4076, %v4060
    %v5197 = vpack.c.b16 %v4077, %v4061
    %v5198 = vpack.c.b16 %v4094, %v4078
    %v5199 = vpack.c.b16 %v4095, %v4079
    %v5200 = vpack.c.b16 %v4096, %v4080
    %v5201 = vpack.c.b16 %v4097, %v4081
    %v5202 = vpack.c.b16 %v4098, %v4082
    %v5203 = vpack.c.b16 %v4099, %v4083
    %v5204 = vpack.c.b16 %v4100, %v4084
    %v5205 = vpack.c.b16 %v4101, %v4085
    %v5206 = vpack.c.b16 %v4102, %v4086
    %v5207 = vpack.c.b16 %v4103, %v4087
    %v5208 = vpack.c.b16 %v4104, %v4088
    %v5209 = vpack.c.b16 %v4105, %v4089
    %v5210 = vpack.c.b16 %v4106, %v4090
    %v5211 = vpack.c.b16 %v4107, %v4091
    %v5212 = vpack.c.b16 %v4108, %v4092
    %v5213 = vpack.c.b16 %v4109, %v4093
    %v5214 = vpack.c.b16 %v4126, %v4110
    %v5215 = vpack.c.b16 %v4127, %v4111
    %v5216 = vpack.c.b16 %v4128, %v4112
    %v5217 = vpack.c.b16 %v4129, %v4113
    %v5218 = vpack.c.b16 %v4130, %v4114
    %v5219 = vpack.c.b16 %v4131, %v4115
    %v5220 = vpack.c.b16 %v4132, %v4116
    %v5221 = vpack.c.b16 %v4133, %v4117
    %v5222 = vpack.c.b16 %v4134, %v4118
    %v5223 = vpack.c.b16 %v4135, %v4119
    %v5224 = vpack.c.b16 %v4136, %v4120
    %v5225 = vpack.c.b16 %v4137, %v4121
    %v5226 = vpack.c.b16 %v4138, %v4122
    %v5227 = vpack.c.b16 %v4139, %v4123
    %v5228 = vpack.c.b16 %v4140, %v4124
    %v5229 = vpack.c.b16 %v4141, %v4125
    %v5230 = vpack.c.b16 %v4158, %v4142
    %v5231 = vpack.c.b16 %v4159, %v4143
    %v5232 = vpack.c.b16 %v4160, %v4144
    %v5233 = vpack.c.b16 %v4161, %v4145
    %v5234 = vpack.c.b16 %v4162, %v4146
    %v5235 = vpack.c.b16 %v4163, %v4147
    %v5236 = vpack.c.b16 %v4164, %v4148
    %v5237 = vpack.c.b16 %v4165, %v4149
    %v5238 = vpack.c.b16 %v4166, %v4150
    %v5239 = vpack.c.b16 %v4167, %v4151
    %v5240 = vpack.c.b16 %v4168, %v4152
    %v5241 = vpack.c.b16 %v4169, %v4153
    %v5242 = vpack.c.b16 %v4170, %v4154
    %v5243 = vpack.c.b16 %v4171, %v4155
    %v5244 = vpack.c.b16 %v4172, %v4156
    %v5245 = vpack.c.b16 %v4173, %v4157
    %v5246 = vpack.c.b16 %v4190, %v4174
    %v5247 = vpack.c.b16 %v4191, %v4175
    %v5248 = vpack.c.b16 %v4192, %v4176
    %v5249 = vpack.c.b16 %v4193, %v4177
    %v5250 = vpack.c.b16 %v4194, %v4178
    %v5251 = vpack.c.b16 %v4195, %v4179
    %v5252 = vpack.c.b16 %v4196, %v4180
    %v5253 = vpack.c.b16 %v4197, %v4181
    %v5254 = vpack.c.b16 %v4198, %v4182
    %v5255 = vpack.c.b16 %v4199, %v4183
    %v5256 = vpack.c.b16 %v4200, %v4184
    %v5257 = vpack.c.b16 %v4201, %v4185
    %v5258 = vpack.c.b16 %v4202, %v4186
    %v5259 = vpack.c.b16 %v4203, %v4187
    %v5260 = vpack.c.b16 %v4204, %v4188
    %v5261 = vpack.c.b16 %v4205, %v4189
    %v5262 = vpack.c.b16 %v4222, %v4206
    %v5263 = vpack.c.b16 %v4223, %v4207
    %v5264 = vpack.c.b16 %v4224, %v4208
    %v5265 = vpack.c.b16 %v4225, %v4209
    %v5266 = vpack.c.b16 %v4226, %v4210
    %v5267 = vpack.c.b16 %v4227, %v4211
    %v5268 = vpack.c.b16 %v4228, %v4212
    %v5269 = vpack.c.b16 %v4229, %v4213
    %v5270 = vpack.c.b16 %v4230, %v4214
    %v5271 = vpack.c.b16 %v4231, %v4215
    %v5272 = vpack.c.b16 %v4232, %v4216
    %v5273 = vpack.c.b16 %v4233, %v4217
    %v5274 = vpack.c.b16 %v4234, %v4218
    %v5275 = vpack.c.b16 %v4235, %v4219
    %v5276 = vpack.c.b16 %v4236, %v4220
    %v5277 = vpack.c.b16 %v4237, %v4221
    %v5278 = vpack.c.b16 %v4254, %v4238
    %v5279 = vpack.c.b16 %v4255, %v4239
    %v5280 = vpack.c.b16 %v4256, %v4240
    %v5281 = vpack.c.b16 %v4257, %v4241
    %v5282 = vpack.c.b16 %v4258, %v4242
    %v5283 = vpack.c.b16 %v4259, %v4243
    %v5284 = vpack.c.b16 %v4260, %v4244
    %v5285 = vpack.c.b16 %v4261, %v4245
    %v5286 = vpack.c.b16 %v4262, %v4246
    %v5287 = vpack.c.b16 %v4263, %v4247
    %v5288 = vpack.c.b16 %v4264, %v4248
    %v5289 = vpack.c.b16 %v4265, %v4249
    %v5290 = vpack.c.b16 %v4266, %v4250
    %v5291 = vpack.c.b16 %v4267, %v4251
    %v5292 = vpack.c.b16 %v4268, %v4252
    %v5293 = vpack.c.b16 %v4269, %v4253
    %6318 = vmatpush.bf16.xpose.msra.mxu0 %v4382
    %6319 = vmatpush.bf16.xpose.msra.mxu0 %v4366
    %6320 = vmatpush.bf16.xpose.msra.mxu0 %v4350
    %6321 = vmatpush.bf16.xpose.msra.mxu0 %v4334
    %6322 = vmatpush.bf16.xpose.msra.mxu0 %v4318
    %6323 = vmatpush.bf16.xpose.msra.mxu0 %v4302
    %6324 = vmatpush.bf16.xpose.msra.mxu0 %v4286
    %6325 = vmatpush.bf16.xpose.msra.mxu0 %v4270
    %6326 = vmatmul.bf16.gmra.mxu0 %v1166
    %v6327 = vpop.f32.mrf.mxu0
    %v6328 = vadd.f32 %v1102, %v6327
    %v6329 = vpop.f32.mrf.mxu0
    %v6330 = vadd.f32 %v1102, %v6329
    %6331 = vdwg.mxu0
    %6332 = vmatpush.bf16.xpose.msra.mxu0 %v4383
    %6333 = vmatpush.bf16.xpose.msra.mxu0 %v4367
    %6334 = vmatpush.bf16.xpose.msra.mxu0 %v4351
    %6335 = vmatpush.bf16.xpose.msra.mxu0 %v4335
    %6336 = vmatpush.bf16.xpose.msra.mxu0 %v4319
    %6337 = vmatpush.bf16.xpose.msra.mxu0 %v4303
    %6338 = vmatpush.bf16.xpose.msra.mxu0 %v4287
    %6339 = vmatpush.bf16.xpose.msra.mxu0 %v4271
    %6340 = vmatmul.bf16.gmra.mxu0 %v1167
    %v6341 = vpop.f32.mrf.mxu0
    %v6342 = vadd.f32 %v6328, %v6341
    %v6343 = vpop.f32.mrf.mxu0
    %v6344 = vadd.f32 %v6330, %v6343
    %6345 = vdwg.mxu0
    %6346 = vmatpush.bf16.xpose.msra.mxu0 %v4384
    %6347 = vmatpush.bf16.xpose.msra.mxu0 %v4368
    %6348 = vmatpush.bf16.xpose.msra.mxu0 %v4352
    %6349 = vmatpush.bf16.xpose.msra.mxu0 %v4336
    %6350 = vmatpush.bf16.xpose.msra.mxu0 %v4320
    %6351 = vmatpush.bf16.xpose.msra.mxu0 %v4304
    %6352 = vmatpush.bf16.xpose.msra.mxu0 %v4288
    %6353 = vmatpush.bf16.xpose.msra.mxu0 %v4272
    %6354 = vmatmul.bf16.gmra.mxu0 %v1168
    %v6355 = vpop.f32.mrf.mxu0
    %v6356 = vadd.f32 %v6342, %v6355
    %v6357 = vpop.f32.mrf.mxu0
    %v6358 = vadd.f32 %v6344, %v6357
    %6359 = vdwg.mxu0
    %6360 = vmatpush.bf16.xpose.msra.mxu0 %v4385
    %6361 = vmatpush.bf16.xpose.msra.mxu0 %v4369
    %6362 = vmatpush.bf16.xpose.msra.mxu0 %v4353
    %6363 = vmatpush.bf16.xpose.msra.mxu0 %v4337
    %6364 = vmatpush.bf16.xpose.msra.mxu0 %v4321
    %6365 = vmatpush.bf16.xpose.msra.mxu0 %v4305
    %6366 = vmatpush.bf16.xpose.msra.mxu0 %v4289
    %6367 = vmatpush.bf16.xpose.msra.mxu0 %v4273
    %6368 = vmatmul.bf16.gmra.mxu0 %v1169
    %v6369 = vpop.f32.mrf.mxu0
    %v6370 = vadd.f32 %v6356, %v6369
    %v6371 = vpop.f32.mrf.mxu0
    %v6372 = vadd.f32 %v6358, %v6371
    %6373 = vdwg.mxu0
    %6374 = vmatpush.bf16.xpose.msra.mxu0 %v4386
    %6375 = vmatpush.bf16.xpose.msra.mxu0 %v4370
    %6376 = vmatpush.bf16.xpose.msra.mxu0 %v4354
    %6377 = vmatpush.bf16.xpose.msra.mxu0 %v4338
    %6378 = vmatpush.bf16.xpose.msra.mxu0 %v4322
    %6379 = vmatpush.bf16.xpose.msra.mxu0 %v4306
    %6380 = vmatpush.bf16.xpose.msra.mxu0 %v4290
    %6381 = vmatpush.bf16.xpose.msra.mxu0 %v4274
    %6382 = vmatmul.bf16.gmra.mxu0 %v1170
    %v6383 = vpop.f32.mrf.mxu0
    %v6384 = vadd.f32 %v6370, %v6383
    %v6385 = vpop.f32.mrf.mxu0
    %v6386 = vadd.f32 %v6372, %v6385
    %6387 = vdwg.mxu0
    %6388 = vmatpush.bf16.xpose.msra.mxu0 %v4387
    %6389 = vmatpush.bf16.xpose.msra.mxu0 %v4371
    %6390 = vmatpush.bf16.xpose.msra.mxu0 %v4355
    %6391 = vmatpush.bf16.xpose.msra.mxu0 %v4339
    %6392 = vmatpush.bf16.xpose.msra.mxu0 %v4323
    %6393 = vmatpush.bf16.xpose.msra.mxu0 %v4307
    %6394 = vmatpush.bf16.xpose.msra.mxu0 %v4291
    %6395 = vmatpush.bf16.xpose.msra.mxu0 %v4275
    %6396 = vmatmul.bf16.gmra.mxu0 %v1171
    %v6397 = vpop.f32.mrf.mxu0
    %v6398 = vadd.f32 %v6384, %v6397
    %v6399 = vpop.f32.mrf.mxu0
    %v6400 = vadd.f32 %v6386, %v6399
    %6401 = vdwg.mxu0
    %6402 = vmatpush.bf16.xpose.msra.mxu0 %v4388
    %6403 = vmatpush.bf16.xpose.msra.mxu0 %v4372
    %6404 = vmatpush.bf16.xpose.msra.mxu0 %v4356
    %6405 = vmatpush.bf16.xpose.msra.mxu0 %v4340
    %6406 = vmatpush.bf16.xpose.msra.mxu0 %v4324
    %6407 = vmatpush.bf16.xpose.msra.mxu0 %v4308
    %6408 = vmatpush.bf16.xpose.msra.mxu0 %v4292
    %6409 = vmatpush.bf16.xpose.msra.mxu0 %v4276
    %6410 = vmatmul.bf16.gmra.mxu0 %v1172
    %v6411 = vpop.f32.mrf.mxu0
    %v6412 = vadd.f32 %v6398, %v6411
    %v6413 = vpop.f32.mrf.mxu0
    %v6414 = vadd.f32 %v6400, %v6413
    %6415 = vdwg.mxu0
    %6416 = vmatpush.bf16.xpose.msra.mxu0 %v4389
    %6417 = vmatpush.bf16.xpose.msra.mxu0 %v4373
    %6418 = vmatpush.bf16.xpose.msra.mxu0 %v4357
    %6419 = vmatpush.bf16.xpose.msra.mxu0 %v4341
    %6420 = vmatpush.bf16.xpose.msra.mxu0 %v4325
    %6421 = vmatpush.bf16.xpose.msra.mxu0 %v4309
    %6422 = vmatpush.bf16.xpose.msra.mxu0 %v4293
    %6423 = vmatpush.bf16.xpose.msra.mxu0 %v4277
    %6424 = vmatmul.bf16.gmra.mxu0 %v1173
    %v6425 = vpop.f32.mrf.mxu0
    %v6426 = vadd.f32 %v6412, %v6425
    %v6427 = vpop.f32.mrf.mxu0
    %v6428 = vadd.f32 %v6414, %v6427
    %6429 = vdwg.mxu0
    %6430 = vmatpush.bf16.xpose.msra.mxu0 %v4390
    %6431 = vmatpush.bf16.xpose.msra.mxu0 %v4374
    %6432 = vmatpush.bf16.xpose.msra.mxu0 %v4358
    %6433 = vmatpush.bf16.xpose.msra.mxu0 %v4342
    %6434 = vmatpush.bf16.xpose.msra.mxu0 %v4326
    %6435 = vmatpush.bf16.xpose.msra.mxu0 %v4310
    %6436 = vmatpush.bf16.xpose.msra.mxu0 %v4294
    %6437 = vmatpush.bf16.xpose.msra.mxu0 %v4278
    %6438 = vmatmul.bf16.gmra.mxu0 %v1174
    %v6439 = vpop.f32.mrf.mxu0
    %v6440 = vadd.f32 %v6426, %v6439
    %v6441 = vpop.f32.mrf.mxu0
    %v6442 = vadd.f32 %v6428, %v6441
    %6443 = vdwg.mxu0
    %6444 = vmatpush.bf16.xpose.msra.mxu0 %v4391
    %6445 = vmatpush.bf16.xpose.msra.mxu0 %v4375
    %6446 = vmatpush.bf16.xpose.msra.mxu0 %v4359
    %6447 = vmatpush.bf16.xpose.msra.mxu0 %v4343
    %6448 = vmatpush.bf16.xpose.msra.mxu0 %v4327
    %6449 = vmatpush.bf16.xpose.msra.mxu0 %v4311
    %6450 = vmatpush.bf16.xpose.msra.mxu0 %v4295
    %6451 = vmatpush.bf16.xpose.msra.mxu0 %v4279
    %6452 = vmatmul.bf16.gmra.mxu0 %v1175
    %v6453 = vpop.f32.mrf.mxu0
    %v6454 = vadd.f32 %v6440, %v6453
    %v6455 = vpop.f32.mrf.mxu0
    %v6456 = vadd.f32 %v6442, %v6455
    %6457 = vdwg.mxu0
    %6458 = vmatpush.bf16.xpose.msra.mxu0 %v4392
    %6459 = vmatpush.bf16.xpose.msra.mxu0 %v4376
    %6460 = vmatpush.bf16.xpose.msra.mxu0 %v4360
    %6461 = vmatpush.bf16.xpose.msra.mxu0 %v4344
    %6462 = vmatpush.bf16.xpose.msra.mxu0 %v4328
    %6463 = vmatpush.bf16.xpose.msra.mxu0 %v4312
    %6464 = vmatpush.bf16.xpose.msra.mxu0 %v4296
    %6465 = vmatpush.bf16.xpose.msra.mxu0 %v4280
    %6466 = vmatmul.bf16.gmra.mxu0 %v1176
    %v6467 = vpop.f32.mrf.mxu0
    %v6468 = vadd.f32 %v6454, %v6467
    %v6469 = vpop.f32.mrf.mxu0
    %v6470 = vadd.f32 %v6456, %v6469
    %6471 = vdwg.mxu0
    %6472 = vmatpush.bf16.xpose.msra.mxu0 %v4393
    %6473 = vmatpush.bf16.xpose.msra.mxu0 %v4377
    %6474 = vmatpush.bf16.xpose.msra.mxu0 %v4361
    %6475 = vmatpush.bf16.xpose.msra.mxu0 %v4345
    %6476 = vmatpush.bf16.xpose.msra.mxu0 %v4329
    %6477 = vmatpush.bf16.xpose.msra.mxu0 %v4313
    %6478 = vmatpush.bf16.xpose.msra.mxu0 %v4297
    %6479 = vmatpush.bf16.xpose.msra.mxu0 %v4281
    %6480 = vmatmul.bf16.gmra.mxu0 %v1177
    %v6481 = vpop.f32.mrf.mxu0
    %v6482 = vadd.f32 %v6468, %v6481
    %v6483 = vpop.f32.mrf.mxu0
    %v6484 = vadd.f32 %v6470, %v6483
    %6485 = vdwg.mxu0
    %6486 = vmatpush.bf16.xpose.msra.mxu0 %v4394
    %6487 = vmatpush.bf16.xpose.msra.mxu0 %v4378
    %6488 = vmatpush.bf16.xpose.msra.mxu0 %v4362
    %6489 = vmatpush.bf16.xpose.msra.mxu0 %v4346
    %6490 = vmatpush.bf16.xpose.msra.mxu0 %v4330
    %6491 = vmatpush.bf16.xpose.msra.mxu0 %v4314
    %6492 = vmatpush.bf16.xpose.msra.mxu0 %v4298
    %6493 = vmatpush.bf16.xpose.msra.mxu0 %v4282
    %6494 = vmatmul.bf16.gmra.mxu0 %v1178
    %v6495 = vpop.f32.mrf.mxu0
    %v6496 = vadd.f32 %v6482, %v6495
    %v6497 = vpop.f32.mrf.mxu0
    %v6498 = vadd.f32 %v6484, %v6497
    %6499 = vdwg.mxu0
    %6500 = vmatpush.bf16.xpose.msra.mxu0 %v4395
    %6501 = vmatpush.bf16.xpose.msra.mxu0 %v4379
    %6502 = vmatpush.bf16.xpose.msra.mxu0 %v4363
    %6503 = vmatpush.bf16.xpose.msra.mxu0 %v4347
    %6504 = vmatpush.bf16.xpose.msra.mxu0 %v4331
    %6505 = vmatpush.bf16.xpose.msra.mxu0 %v4315
    %6506 = vmatpush.bf16.xpose.msra.mxu0 %v4299
    %6507 = vmatpush.bf16.xpose.msra.mxu0 %v4283
    %6508 = vmatmul.bf16.gmra.mxu0 %v1179
    %v6509 = vpop.f32.mrf.mxu0
    %v6510 = vadd.f32 %v6496, %v6509
    %v6511 = vpop.f32.mrf.mxu0
    %v6512 = vadd.f32 %v6498, %v6511
    %6513 = vdwg.mxu0
    %6514 = vmatpush.bf16.xpose.msra.mxu0 %v4396
    %6515 = vmatpush.bf16.xpose.msra.mxu0 %v4380
    %6516 = vmatpush.bf16.xpose.msra.mxu0 %v4364
    %6517 = vmatpush.bf16.xpose.msra.mxu0 %v4348
    %6518 = vmatpush.bf16.xpose.msra.mxu0 %v4332
    %6519 = vmatpush.bf16.xpose.msra.mxu0 %v4316
    %6520 = vmatpush.bf16.xpose.msra.mxu0 %v4300
    %6521 = vmatpush.bf16.xpose.msra.mxu0 %v4284
    %6522 = vmatmul.bf16.gmra.mxu0 %v1180
    %v6523 = vpop.f32.mrf.mxu0
    %v6524 = vadd.f32 %v6510, %v6523
    %v6525 = vpop.f32.mrf.mxu0
    %v6526 = vadd.f32 %v6512, %v6525
    %6527 = vdwg.mxu0
    %6528 = vmatpush.bf16.xpose.msra.mxu0 %v4397
    %6529 = vmatpush.bf16.xpose.msra.mxu0 %v4381
    %6530 = vmatpush.bf16.xpose.msra.mxu0 %v4365
    %6531 = vmatpush.bf16.xpose.msra.mxu0 %v4349
    %6532 = vmatpush.bf16.xpose.msra.mxu0 %v4333
    %6533 = vmatpush.bf16.xpose.msra.mxu0 %v4317
    %6534 = vmatpush.bf16.xpose.msra.mxu0 %v4301
    %6535 = vmatpush.bf16.xpose.msra.mxu0 %v4285
    %6536 = vmatmul.bf16.gmra.mxu0 %v1181
    %v6537 = vpop.f32.mrf.mxu0
    %v6538 = vadd.f32 %v6524, %v6537
    %v6539 = vpop.f32.mrf.mxu0
    %v6540 = vadd.f32 %v6526, %v6539
    %6541 = vdwg.mxu0
    %6542 = vmatpush.bf16.xpose.msra.mxu0 %v4510
    %6543 = vmatpush.bf16.xpose.msra.mxu0 %v4494
    %6544 = vmatpush.bf16.xpose.msra.mxu0 %v4478
    %6545 = vmatpush.bf16.xpose.msra.mxu0 %v4462
    %6546 = vmatpush.bf16.xpose.msra.mxu0 %v4446
    %6547 = vmatpush.bf16.xpose.msra.mxu0 %v4430
    %6548 = vmatpush.bf16.xpose.msra.mxu0 %v4414
    %6549 = vmatpush.bf16.xpose.msra.mxu0 %v4398
    %6550 = vmatmul.bf16.gmra.mxu0 %v1166
    %v6551 = vpop.f32.mrf.mxu0
    %v6552 = vadd.f32 %v1103, %v6551
    %v6553 = vpop.f32.mrf.mxu0
    %v6554 = vadd.f32 %v1103, %v6553
    %6555 = vdwg.mxu0
    %6556 = vmatpush.bf16.xpose.msra.mxu0 %v4511
    %6557 = vmatpush.bf16.xpose.msra.mxu0 %v4495
    %6558 = vmatpush.bf16.xpose.msra.mxu0 %v4479
    %6559 = vmatpush.bf16.xpose.msra.mxu0 %v4463
    %6560 = vmatpush.bf16.xpose.msra.mxu0 %v4447
    %6561 = vmatpush.bf16.xpose.msra.mxu0 %v4431
    %6562 = vmatpush.bf16.xpose.msra.mxu0 %v4415
    %6563 = vmatpush.bf16.xpose.msra.mxu0 %v4399
    %6564 = vmatmul.bf16.gmra.mxu0 %v1167
    %v6565 = vpop.f32.mrf.mxu0
    %v6566 = vadd.f32 %v6552, %v6565
    %v6567 = vpop.f32.mrf.mxu0
    %v6568 = vadd.f32 %v6554, %v6567
    %6569 = vdwg.mxu0
    %6570 = vmatpush.bf16.xpose.msra.mxu0 %v4512
    %6571 = vmatpush.bf16.xpose.msra.mxu0 %v4496
    %6572 = vmatpush.bf16.xpose.msra.mxu0 %v4480
    %6573 = vmatpush.bf16.xpose.msra.mxu0 %v4464
    %6574 = vmatpush.bf16.xpose.msra.mxu0 %v4448
    %6575 = vmatpush.bf16.xpose.msra.mxu0 %v4432
    %6576 = vmatpush.bf16.xpose.msra.mxu0 %v4416
    %6577 = vmatpush.bf16.xpose.msra.mxu0 %v4400
    %6578 = vmatmul.bf16.gmra.mxu0 %v1168
    %v6579 = vpop.f32.mrf.mxu0
    %v6580 = vadd.f32 %v6566, %v6579
    %v6581 = vpop.f32.mrf.mxu0
    %v6582 = vadd.f32 %v6568, %v6581
    %6583 = vdwg.mxu0
    %6584 = vmatpush.bf16.xpose.msra.mxu0 %v4513
    %6585 = vmatpush.bf16.xpose.msra.mxu0 %v4497
    %6586 = vmatpush.bf16.xpose.msra.mxu0 %v4481
    %6587 = vmatpush.bf16.xpose.msra.mxu0 %v4465
    %6588 = vmatpush.bf16.xpose.msra.mxu0 %v4449
    %6589 = vmatpush.bf16.xpose.msra.mxu0 %v4433
    %6590 = vmatpush.bf16.xpose.msra.mxu0 %v4417
    %6591 = vmatpush.bf16.xpose.msra.mxu0 %v4401
    %6592 = vmatmul.bf16.gmra.mxu0 %v1169
    %v6593 = vpop.f32.mrf.mxu0
    %v6594 = vadd.f32 %v6580, %v6593
    %v6595 = vpop.f32.mrf.mxu0
    %v6596 = vadd.f32 %v6582, %v6595
    %6597 = vdwg.mxu0
    %6598 = vmatpush.bf16.xpose.msra.mxu0 %v4514
    %6599 = vmatpush.bf16.xpose.msra.mxu0 %v4498
    %6600 = vmatpush.bf16.xpose.msra.mxu0 %v4482
    %6601 = vmatpush.bf16.xpose.msra.mxu0 %v4466
    %6602 = vmatpush.bf16.xpose.msra.mxu0 %v4450
    %6603 = vmatpush.bf16.xpose.msra.mxu0 %v4434
    %6604 = vmatpush.bf16.xpose.msra.mxu0 %v4418
    %6605 = vmatpush.bf16.xpose.msra.mxu0 %v4402
    %6606 = vmatmul.bf16.gmra.mxu0 %v1170
    %v6607 = vpop.f32.mrf.mxu0
    %v6608 = vadd.f32 %v6594, %v6607
    %v6609 = vpop.f32.mrf.mxu0
    %v6610 = vadd.f32 %v6596, %v6609
    %6611 = vdwg.mxu0
    %6612 = vmatpush.bf16.xpose.msra.mxu0 %v4515
    %6613 = vmatpush.bf16.xpose.msra.mxu0 %v4499
    %6614 = vmatpush.bf16.xpose.msra.mxu0 %v4483
    %6615 = vmatpush.bf16.xpose.msra.mxu0 %v4467
    %6616 = vmatpush.bf16.xpose.msra.mxu0 %v4451
    %6617 = vmatpush.bf16.xpose.msra.mxu0 %v4435
    %6618 = vmatpush.bf16.xpose.msra.mxu0 %v4419
    %6619 = vmatpush.bf16.xpose.msra.mxu0 %v4403
    %6620 = vmatmul.bf16.gmra.mxu0 %v1171
    %v6621 = vpop.f32.mrf.mxu0
    %v6622 = vadd.f32 %v6608, %v6621
    %v6623 = vpop.f32.mrf.mxu0
    %v6624 = vadd.f32 %v6610, %v6623
    %6625 = vdwg.mxu0
    %6626 = vmatpush.bf16.xpose.msra.mxu0 %v4516
    %6627 = vmatpush.bf16.xpose.msra.mxu0 %v4500
    %6628 = vmatpush.bf16.xpose.msra.mxu0 %v4484
    %6629 = vmatpush.bf16.xpose.msra.mxu0 %v4468
    %6630 = vmatpush.bf16.xpose.msra.mxu0 %v4452
    %6631 = vmatpush.bf16.xpose.msra.mxu0 %v4436
    %6632 = vmatpush.bf16.xpose.msra.mxu0 %v4420
    %6633 = vmatpush.bf16.xpose.msra.mxu0 %v4404
    %6634 = vmatmul.bf16.gmra.mxu0 %v1172
    %v6635 = vpop.f32.mrf.mxu0
    %v6636 = vadd.f32 %v6622, %v6635
    %v6637 = vpop.f32.mrf.mxu0
    %v6638 = vadd.f32 %v6624, %v6637
    %6639 = vdwg.mxu0
    %6640 = vmatpush.bf16.xpose.msra.mxu0 %v4517
    %6641 = vmatpush.bf16.xpose.msra.mxu0 %v4501
    %6642 = vmatpush.bf16.xpose.msra.mxu0 %v4485
    %6643 = vmatpush.bf16.xpose.msra.mxu0 %v4469
    %6644 = vmatpush.bf16.xpose.msra.mxu0 %v4453
    %6645 = vmatpush.bf16.xpose.msra.mxu0 %v4437
    %6646 = vmatpush.bf16.xpose.msra.mxu0 %v4421
    %6647 = vmatpush.bf16.xpose.msra.mxu0 %v4405
    %6648 = vmatmul.bf16.gmra.mxu0 %v1173
    %v6649 = vpop.f32.mrf.mxu0
    %v6650 = vadd.f32 %v6636, %v6649
    %v6651 = vpop.f32.mrf.mxu0
    %v6652 = vadd.f32 %v6638, %v6651
    %6653 = vdwg.mxu0
    %6654 = vmatpush.bf16.xpose.msra.mxu0 %v4518
    %6655 = vmatpush.bf16.xpose.msra.mxu0 %v4502
    %6656 = vmatpush.bf16.xpose.msra.mxu0 %v4486
    %6657 = vmatpush.bf16.xpose.msra.mxu0 %v4470
    %6658 = vmatpush.bf16.xpose.msra.mxu0 %v4454
    %6659 = vmatpush.bf16.xpose.msra.mxu0 %v4438
    %6660 = vmatpush.bf16.xpose.msra.mxu0 %v4422
    %6661 = vmatpush.bf16.xpose.msra.mxu0 %v4406
    %6662 = vmatmul.bf16.gmra.mxu0 %v1174
    %v6663 = vpop.f32.mrf.mxu0
    %v6664 = vadd.f32 %v6650, %v6663
    %v6665 = vpop.f32.mrf.mxu0
    %v6666 = vadd.f32 %v6652, %v6665
    %6667 = vdwg.mxu0
    %6668 = vmatpush.bf16.xpose.msra.mxu0 %v4519
    %6669 = vmatpush.bf16.xpose.msra.mxu0 %v4503
    %6670 = vmatpush.bf16.xpose.msra.mxu0 %v4487
    %6671 = vmatpush.bf16.xpose.msra.mxu0 %v4471
    %6672 = vmatpush.bf16.xpose.msra.mxu0 %v4455
    %6673 = vmatpush.bf16.xpose.msra.mxu0 %v4439
    %6674 = vmatpush.bf16.xpose.msra.mxu0 %v4423
    %6675 = vmatpush.bf16.xpose.msra.mxu0 %v4407
    %6676 = vmatmul.bf16.gmra.mxu0 %v1175
    %v6677 = vpop.f32.mrf.mxu0
    %v6678 = vadd.f32 %v6664, %v6677
    %v6679 = vpop.f32.mrf.mxu0
    %v6680 = vadd.f32 %v6666, %v6679
    %6681 = vdwg.mxu0
    %6682 = vmatpush.bf16.xpose.msra.mxu0 %v4520
    %6683 = vmatpush.bf16.xpose.msra.mxu0 %v4504
    %6684 = vmatpush.bf16.xpose.msra.mxu0 %v4488
    %6685 = vmatpush.bf16.xpose.msra.mxu0 %v4472
    %6686 = vmatpush.bf16.xpose.msra.mxu0 %v4456
    %6687 = vmatpush.bf16.xpose.msra.mxu0 %v4440
    %6688 = vmatpush.bf16.xpose.msra.mxu0 %v4424
    %6689 = vmatpush.bf16.xpose.msra.mxu0 %v4408
    %6690 = vmatmul.bf16.gmra.mxu0 %v1176
    %v6691 = vpop.f32.mrf.mxu0
    %v6692 = vadd.f32 %v6678, %v6691
    %v6693 = vpop.f32.mrf.mxu0
    %v6694 = vadd.f32 %v6680, %v6693
    %6695 = vdwg.mxu0
    %6696 = vmatpush.bf16.xpose.msra.mxu0 %v4521
    %6697 = vmatpush.bf16.xpose.msra.mxu0 %v4505
    %6698 = vmatpush.bf16.xpose.msra.mxu0 %v4489
    %6699 = vmatpush.bf16.xpose.msra.mxu0 %v4473
    %6700 = vmatpush.bf16.xpose.msra.mxu0 %v4457
    %6701 = vmatpush.bf16.xpose.msra.mxu0 %v4441
    %6702 = vmatpush.bf16.xpose.msra.mxu0 %v4425
    %6703 = vmatpush.bf16.xpose.msra.mxu0 %v4409
    %6704 = vmatmul.bf16.gmra.mxu0 %v1177
    %v6705 = vpop.f32.mrf.mxu0
    %v6706 = vadd.f32 %v6692, %v6705
    %v6707 = vpop.f32.mrf.mxu0
    %v6708 = vadd.f32 %v6694, %v6707
    %6709 = vdwg.mxu0
    %6710 = vmatpush.bf16.xpose.msra.mxu0 %v4522
    %6711 = vmatpush.bf16.xpose.msra.mxu0 %v4506
    %6712 = vmatpush.bf16.xpose.msra.mxu0 %v4490
    %6713 = vmatpush.bf16.xpose.msra.mxu0 %v4474
    %6714 = vmatpush.bf16.xpose.msra.mxu0 %v4458
    %6715 = vmatpush.bf16.xpose.msra.mxu0 %v4442
    %6716 = vmatpush.bf16.xpose.msra.mxu0 %v4426
    %6717 = vmatpush.bf16.xpose.msra.mxu0 %v4410
    %6718 = vmatmul.bf16.gmra.mxu0 %v1178
    %v6719 = vpop.f32.mrf.mxu0
    %v6720 = vadd.f32 %v6706, %v6719
    %v6721 = vpop.f32.mrf.mxu0
    %v6722 = vadd.f32 %v6708, %v6721
    %6723 = vdwg.mxu0
    %6724 = vmatpush.bf16.xpose.msra.mxu0 %v4523
    %6725 = vmatpush.bf16.xpose.msra.mxu0 %v4507
    %6726 = vmatpush.bf16.xpose.msra.mxu0 %v4491
    %6727 = vmatpush.bf16.xpose.msra.mxu0 %v4475
    %6728 = vmatpush.bf16.xpose.msra.mxu0 %v4459
    %6729 = vmatpush.bf16.xpose.msra.mxu0 %v4443
    %6730 = vmatpush.bf16.xpose.msra.mxu0 %v4427
    %6731 = vmatpush.bf16.xpose.msra.mxu0 %v4411
    %6732 = vmatmul.bf16.gmra.mxu0 %v1179
    %v6733 = vpop.f32.mrf.mxu0
    %v6734 = vadd.f32 %v6720, %v6733
    %v6735 = vpop.f32.mrf.mxu0
    %v6736 = vadd.f32 %v6722, %v6735
    %6737 = vdwg.mxu0
    %6738 = vmatpush.bf16.xpose.msra.mxu0 %v4524
    %6739 = vmatpush.bf16.xpose.msra.mxu0 %v4508
    %6740 = vmatpush.bf16.xpose.msra.mxu0 %v4492
    %6741 = vmatpush.bf16.xpose.msra.mxu0 %v4476
    %6742 = vmatpush.bf16.xpose.msra.mxu0 %v4460
    %6743 = vmatpush.bf16.xpose.msra.mxu0 %v4444
    %6744 = vmatpush.bf16.xpose.msra.mxu0 %v4428
    %6745 = vmatpush.bf16.xpose.msra.mxu0 %v4412
    %6746 = vmatmul.bf16.gmra.mxu0 %v1180
    %v6747 = vpop.f32.mrf.mxu0
    %v6748 = vadd.f32 %v6734, %v6747
    %v6749 = vpop.f32.mrf.mxu0
    %v6750 = vadd.f32 %v6736, %v6749
    %6751 = vdwg.mxu0
    %6752 = vmatpush.bf16.xpose.msra.mxu0 %v4525
    %6753 = vmatpush.bf16.xpose.msra.mxu0 %v4509
    %6754 = vmatpush.bf16.xpose.msra.mxu0 %v4493
    %6755 = vmatpush.bf16.xpose.msra.mxu0 %v4477
    %6756 = vmatpush.bf16.xpose.msra.mxu0 %v4461
    %6757 = vmatpush.bf16.xpose.msra.mxu0 %v4445
    %6758 = vmatpush.bf16.xpose.msra.mxu0 %v4429
    %6759 = vmatpush.bf16.xpose.msra.mxu0 %v4413
    %6760 = vmatmul.bf16.gmra.mxu0 %v1181
    %v6761 = vpop.f32.mrf.mxu0
    %v6762 = vadd.f32 %v6748, %v6761
    %v6763 = vpop.f32.mrf.mxu0
    %v6764 = vadd.f32 %v6750, %v6763
    %6765 = vdwg.mxu0
    %6766 = vmatpush.bf16.xpose.msra.mxu0 %v4638
    %6767 = vmatpush.bf16.xpose.msra.mxu0 %v4622
    %6768 = vmatpush.bf16.xpose.msra.mxu0 %v4606
    %6769 = vmatpush.bf16.xpose.msra.mxu0 %v4590
    %6770 = vmatpush.bf16.xpose.msra.mxu0 %v4574
    %6771 = vmatpush.bf16.xpose.msra.mxu0 %v4558
    %6772 = vmatpush.bf16.xpose.msra.mxu0 %v4542
    %6773 = vmatpush.bf16.xpose.msra.mxu0 %v4526
    %6774 = vmatmul.bf16.gmra.mxu0 %v1166
    %v6775 = vpop.f32.mrf.mxu0
    %v6776 = vadd.f32 %v1104, %v6775
    %v6777 = vpop.f32.mrf.mxu0
    %v6778 = vadd.f32 %v1104, %v6777
    %6779 = vdwg.mxu0
    %6780 = vmatpush.bf16.xpose.msra.mxu0 %v4639
    %6781 = vmatpush.bf16.xpose.msra.mxu0 %v4623
    %6782 = vmatpush.bf16.xpose.msra.mxu0 %v4607
    %6783 = vmatpush.bf16.xpose.msra.mxu0 %v4591
    %6784 = vmatpush.bf16.xpose.msra.mxu0 %v4575
    %6785 = vmatpush.bf16.xpose.msra.mxu0 %v4559
    %6786 = vmatpush.bf16.xpose.msra.mxu0 %v4543
    %6787 = vmatpush.bf16.xpose.msra.mxu0 %v4527
    %6788 = vmatmul.bf16.gmra.mxu0 %v1167
    %v6789 = vpop.f32.mrf.mxu0
    %v6790 = vadd.f32 %v6776, %v6789
    %v6791 = vpop.f32.mrf.mxu0
    %v6792 = vadd.f32 %v6778, %v6791
    %6793 = vdwg.mxu0
    %6794 = vmatpush.bf16.xpose.msra.mxu0 %v4640
    %6795 = vmatpush.bf16.xpose.msra.mxu0 %v4624
    %6796 = vmatpush.bf16.xpose.msra.mxu0 %v4608
    %6797 = vmatpush.bf16.xpose.msra.mxu0 %v4592
    %6798 = vmatpush.bf16.xpose.msra.mxu0 %v4576
    %6799 = vmatpush.bf16.xpose.msra.mxu0 %v4560
    %6800 = vmatpush.bf16.xpose.msra.mxu0 %v4544
    %6801 = vmatpush.bf16.xpose.msra.mxu0 %v4528
    %6802 = vmatmul.bf16.gmra.mxu0 %v1168
    %v6803 = vpop.f32.mrf.mxu0
    %v6804 = vadd.f32 %v6790, %v6803
    %v6805 = vpop.f32.mrf.mxu0
    %v6806 = vadd.f32 %v6792, %v6805
    %6807 = vdwg.mxu0
    %6808 = vmatpush.bf16.xpose.msra.mxu0 %v4641
    %6809 = vmatpush.bf16.xpose.msra.mxu0 %v4625
    %6810 = vmatpush.bf16.xpose.msra.mxu0 %v4609
    %6811 = vmatpush.bf16.xpose.msra.mxu0 %v4593
    %6812 = vmatpush.bf16.xpose.msra.mxu0 %v4577
    %6813 = vmatpush.bf16.xpose.msra.mxu0 %v4561
    %6814 = vmatpush.bf16.xpose.msra.mxu0 %v4545
    %6815 = vmatpush.bf16.xpose.msra.mxu0 %v4529
    %6816 = vmatmul.bf16.gmra.mxu0 %v1169
    %v6817 = vpop.f32.mrf.mxu0
    %v6818 = vadd.f32 %v6804, %v6817
    %v6819 = vpop.f32.mrf.mxu0
    %v6820 = vadd.f32 %v6806, %v6819
    %6821 = vdwg.mxu0
    %6822 = vmatpush.bf16.xpose.msra.mxu0 %v4642
    %6823 = vmatpush.bf16.xpose.msra.mxu0 %v4626
    %6824 = vmatpush.bf16.xpose.msra.mxu0 %v4610
    %6825 = vmatpush.bf16.xpose.msra.mxu0 %v4594
    %6826 = vmatpush.bf16.xpose.msra.mxu0 %v4578
    %6827 = vmatpush.bf16.xpose.msra.mxu0 %v4562
    %6828 = vmatpush.bf16.xpose.msra.mxu0 %v4546
    %6829 = vmatpush.bf16.xpose.msra.mxu0 %v4530
    %6830 = vmatmul.bf16.gmra.mxu0 %v1170
    %v6831 = vpop.f32.mrf.mxu0
    %v6832 = vadd.f32 %v6818, %v6831
    %v6833 = vpop.f32.mrf.mxu0
    %v6834 = vadd.f32 %v6820, %v6833
    %6835 = vdwg.mxu0
    %6836 = vmatpush.bf16.xpose.msra.mxu0 %v4643
    %6837 = vmatpush.bf16.xpose.msra.mxu0 %v4627
    %6838 = vmatpush.bf16.xpose.msra.mxu0 %v4611
    %6839 = vmatpush.bf16.xpose.msra.mxu0 %v4595
    %6840 = vmatpush.bf16.xpose.msra.mxu0 %v4579
    %6841 = vmatpush.bf16.xpose.msra.mxu0 %v4563
    %6842 = vmatpush.bf16.xpose.msra.mxu0 %v4547
    %6843 = vmatpush.bf16.xpose.msra.mxu0 %v4531
    %6844 = vmatmul.bf16.gmra.mxu0 %v1171
    %v6845 = vpop.f32.mrf.mxu0
    %v6846 = vadd.f32 %v6832, %v6845
    %v6847 = vpop.f32.mrf.mxu0
    %v6848 = vadd.f32 %v6834, %v6847
    %6849 = vdwg.mxu0
    %6850 = vmatpush.bf16.xpose.msra.mxu0 %v4644
    %6851 = vmatpush.bf16.xpose.msra.mxu0 %v4628
    %6852 = vmatpush.bf16.xpose.msra.mxu0 %v4612
    %6853 = vmatpush.bf16.xpose.msra.mxu0 %v4596
    %6854 = vmatpush.bf16.xpose.msra.mxu0 %v4580
    %6855 = vmatpush.bf16.xpose.msra.mxu0 %v4564
    %6856 = vmatpush.bf16.xpose.msra.mxu0 %v4548
    %6857 = vmatpush.bf16.xpose.msra.mxu0 %v4532
    %6858 = vmatmul.bf16.gmra.mxu0 %v1172
    %v6859 = vpop.f32.mrf.mxu0
    %v6860 = vadd.f32 %v6846, %v6859
    %v6861 = vpop.f32.mrf.mxu0
    %v6862 = vadd.f32 %v6848, %v6861
    %6863 = vdwg.mxu0
    %6864 = vmatpush.bf16.xpose.msra.mxu0 %v4645
    %6865 = vmatpush.bf16.xpose.msra.mxu0 %v4629
    %6866 = vmatpush.bf16.xpose.msra.mxu0 %v4613
    %6867 = vmatpush.bf16.xpose.msra.mxu0 %v4597
    %6868 = vmatpush.bf16.xpose.msra.mxu0 %v4581
    %6869 = vmatpush.bf16.xpose.msra.mxu0 %v4565
    %6870 = vmatpush.bf16.xpose.msra.mxu0 %v4549
    %6871 = vmatpush.bf16.xpose.msra.mxu0 %v4533
    %6872 = vmatmul.bf16.gmra.mxu0 %v1173
    %v6873 = vpop.f32.mrf.mxu0
    %v6874 = vadd.f32 %v6860, %v6873
    %v6875 = vpop.f32.mrf.mxu0
    %v6876 = vadd.f32 %v6862, %v6875
    %6877 = vdwg.mxu0
    %6878 = vmatpush.bf16.xpose.msra.mxu0 %v4646
    %6879 = vmatpush.bf16.xpose.msra.mxu0 %v4630
    %6880 = vmatpush.bf16.xpose.msra.mxu0 %v4614
    %6881 = vmatpush.bf16.xpose.msra.mxu0 %v4598
    %6882 = vmatpush.bf16.xpose.msra.mxu0 %v4582
    %6883 = vmatpush.bf16.xpose.msra.mxu0 %v4566
    %6884 = vmatpush.bf16.xpose.msra.mxu0 %v4550
    %6885 = vmatpush.bf16.xpose.msra.mxu0 %v4534
    %6886 = vmatmul.bf16.gmra.mxu0 %v1174
    %v6887 = vpop.f32.mrf.mxu0
    %v6888 = vadd.f32 %v6874, %v6887
    %v6889 = vpop.f32.mrf.mxu0
    %v6890 = vadd.f32 %v6876, %v6889
    %6891 = vdwg.mxu0
    %6892 = vmatpush.bf16.xpose.msra.mxu0 %v4647
    %6893 = vmatpush.bf16.xpose.msra.mxu0 %v4631
    %6894 = vmatpush.bf16.xpose.msra.mxu0 %v4615
    %6895 = vmatpush.bf16.xpose.msra.mxu0 %v4599
    %6896 = vmatpush.bf16.xpose.msra.mxu0 %v4583
    %6897 = vmatpush.bf16.xpose.msra.mxu0 %v4567
    %6898 = vmatpush.bf16.xpose.msra.mxu0 %v4551
    %6899 = vmatpush.bf16.xpose.msra.mxu0 %v4535
    %6900 = vmatmul.bf16.gmra.mxu0 %v1175
    %v6901 = vpop.f32.mrf.mxu0
    %v6902 = vadd.f32 %v6888, %v6901
    %v6903 = vpop.f32.mrf.mxu0
    %v6904 = vadd.f32 %v6890, %v6903
    %6905 = vdwg.mxu0
    %6906 = vmatpush.bf16.xpose.msra.mxu0 %v4648
    %6907 = vmatpush.bf16.xpose.msra.mxu0 %v4632
    %6908 = vmatpush.bf16.xpose.msra.mxu0 %v4616
    %6909 = vmatpush.bf16.xpose.msra.mxu0 %v4600
    %6910 = vmatpush.bf16.xpose.msra.mxu0 %v4584
    %6911 = vmatpush.bf16.xpose.msra.mxu0 %v4568
    %6912 = vmatpush.bf16.xpose.msra.mxu0 %v4552
    %6913 = vmatpush.bf16.xpose.msra.mxu0 %v4536
    %6914 = vmatmul.bf16.gmra.mxu0 %v1176
    %v6915 = vpop.f32.mrf.mxu0
    %v6916 = vadd.f32 %v6902, %v6915
    %v6917 = vpop.f32.mrf.mxu0
    %v6918 = vadd.f32 %v6904, %v6917
    %6919 = vdwg.mxu0
    %6920 = vmatpush.bf16.xpose.msra.mxu0 %v4649
    %6921 = vmatpush.bf16.xpose.msra.mxu0 %v4633
    %6922 = vmatpush.bf16.xpose.msra.mxu0 %v4617
    %6923 = vmatpush.bf16.xpose.msra.mxu0 %v4601
    %6924 = vmatpush.bf16.xpose.msra.mxu0 %v4585
    %6925 = vmatpush.bf16.xpose.msra.mxu0 %v4569
    %6926 = vmatpush.bf16.xpose.msra.mxu0 %v4553
    %6927 = vmatpush.bf16.xpose.msra.mxu0 %v4537
    %6928 = vmatmul.bf16.gmra.mxu0 %v1177
    %v6929 = vpop.f32.mrf.mxu0
    %v6930 = vadd.f32 %v6916, %v6929
    %v6931 = vpop.f32.mrf.mxu0
    %v6932 = vadd.f32 %v6918, %v6931
    %6933 = vdwg.mxu0
    %6934 = vmatpush.bf16.xpose.msra.mxu0 %v4650
    %6935 = vmatpush.bf16.xpose.msra.mxu0 %v4634
    %6936 = vmatpush.bf16.xpose.msra.mxu0 %v4618
    %6937 = vmatpush.bf16.xpose.msra.mxu0 %v4602
    %6938 = vmatpush.bf16.xpose.msra.mxu0 %v4586
    %6939 = vmatpush.bf16.xpose.msra.mxu0 %v4570
    %6940 = vmatpush.bf16.xpose.msra.mxu0 %v4554
    %6941 = vmatpush.bf16.xpose.msra.mxu0 %v4538
    %6942 = vmatmul.bf16.gmra.mxu0 %v1178
    %v6943 = vpop.f32.mrf.mxu0
    %v6944 = vadd.f32 %v6930, %v6943
    %v6945 = vpop.f32.mrf.mxu0
    %v6946 = vadd.f32 %v6932, %v6945
    %6947 = vdwg.mxu0
    %6948 = vmatpush.bf16.xpose.msra.mxu0 %v4651
    %6949 = vmatpush.bf16.xpose.msra.mxu0 %v4635
    %6950 = vmatpush.bf16.xpose.msra.mxu0 %v4619
    %6951 = vmatpush.bf16.xpose.msra.mxu0 %v4603
    %6952 = vmatpush.bf16.xpose.msra.mxu0 %v4587
    %6953 = vmatpush.bf16.xpose.msra.mxu0 %v4571
    %6954 = vmatpush.bf16.xpose.msra.mxu0 %v4555
    %6955 = vmatpush.bf16.xpose.msra.mxu0 %v4539
    %6956 = vmatmul.bf16.gmra.mxu0 %v1179
    %v6957 = vpop.f32.mrf.mxu0
    %v6958 = vadd.f32 %v6944, %v6957
    %v6959 = vpop.f32.mrf.mxu0
    %v6960 = vadd.f32 %v6946, %v6959
    %6961 = vdwg.mxu0
    %6962 = vmatpush.bf16.xpose.msra.mxu0 %v4652
    %6963 = vmatpush.bf16.xpose.msra.mxu0 %v4636
    %6964 = vmatpush.bf16.xpose.msra.mxu0 %v4620
    %6965 = vmatpush.bf16.xpose.msra.mxu0 %v4604
    %6966 = vmatpush.bf16.xpose.msra.mxu0 %v4588
    %6967 = vmatpush.bf16.xpose.msra.mxu0 %v4572
    %6968 = vmatpush.bf16.xpose.msra.mxu0 %v4556
    %6969 = vmatpush.bf16.xpose.msra.mxu0 %v4540
    %6970 = vmatmul.bf16.gmra.mxu0 %v1180
    %v6971 = vpop.f32.mrf.mxu0
    %v6972 = vadd.f32 %v6958, %v6971
    %v6973 = vpop.f32.mrf.mxu0
    %v6974 = vadd.f32 %v6960, %v6973
    %6975 = vdwg.mxu0
    %6976 = vmatpush.bf16.xpose.msra.mxu0 %v4653
    %6977 = vmatpush.bf16.xpose.msra.mxu0 %v4637
    %6978 = vmatpush.bf16.xpose.msra.mxu0 %v4621
    %6979 = vmatpush.bf16.xpose.msra.mxu0 %v4605
    %6980 = vmatpush.bf16.xpose.msra.mxu0 %v4589
    %6981 = vmatpush.bf16.xpose.msra.mxu0 %v4573
    %6982 = vmatpush.bf16.xpose.msra.mxu0 %v4557
    %6983 = vmatpush.bf16.xpose.msra.mxu0 %v4541
    %6984 = vmatmul.bf16.gmra.mxu0 %v1181
    %v6985 = vpop.f32.mrf.mxu0
    %v6986 = vadd.f32 %v6972, %v6985
    %v6987 = vpop.f32.mrf.mxu0
    %v6988 = vadd.f32 %v6974, %v6987
    %6989 = vdwg.mxu0
    %6990 = vmatpush.bf16.xpose.msra.mxu0 %v4766
    %6991 = vmatpush.bf16.xpose.msra.mxu0 %v4750
    %6992 = vmatpush.bf16.xpose.msra.mxu0 %v4734
    %6993 = vmatpush.bf16.xpose.msra.mxu0 %v4718
    %6994 = vmatpush.bf16.xpose.msra.mxu0 %v4702
    %6995 = vmatpush.bf16.xpose.msra.mxu0 %v4686
    %6996 = vmatpush.bf16.xpose.msra.mxu0 %v4670
    %6997 = vmatpush.bf16.xpose.msra.mxu0 %v4654
    %6998 = vmatmul.bf16.gmra.mxu0 %v1166
    %v6999 = vpop.f32.mrf.mxu0
    %v7000 = vadd.f32 %v1105, %v6999
    %v7001 = vpop.f32.mrf.mxu0
    %v7002 = vadd.f32 %v1105, %v7001
    %7003 = vdwg.mxu0
    %7004 = vmatpush.bf16.xpose.msra.mxu0 %v4767
    %7005 = vmatpush.bf16.xpose.msra.mxu0 %v4751
    %7006 = vmatpush.bf16.xpose.msra.mxu0 %v4735
    %7007 = vmatpush.bf16.xpose.msra.mxu0 %v4719
    %7008 = vmatpush.bf16.xpose.msra.mxu0 %v4703
    %7009 = vmatpush.bf16.xpose.msra.mxu0 %v4687
    %7010 = vmatpush.bf16.xpose.msra.mxu0 %v4671
    %7011 = vmatpush.bf16.xpose.msra.mxu0 %v4655
    %7012 = vmatmul.bf16.gmra.mxu0 %v1167
    %v7013 = vpop.f32.mrf.mxu0
    %v7014 = vadd.f32 %v7000, %v7013
    %v7015 = vpop.f32.mrf.mxu0
    %v7016 = vadd.f32 %v7002, %v7015
    %7017 = vdwg.mxu0
    %7018 = vmatpush.bf16.xpose.msra.mxu0 %v4768
    %7019 = vmatpush.bf16.xpose.msra.mxu0 %v4752
    %7020 = vmatpush.bf16.xpose.msra.mxu0 %v4736
    %7021 = vmatpush.bf16.xpose.msra.mxu0 %v4720
    %7022 = vmatpush.bf16.xpose.msra.mxu0 %v4704
    %7023 = vmatpush.bf16.xpose.msra.mxu0 %v4688
    %7024 = vmatpush.bf16.xpose.msra.mxu0 %v4672
    %7025 = vmatpush.bf16.xpose.msra.mxu0 %v4656
    %7026 = vmatmul.bf16.gmra.mxu0 %v1168
    %v7027 = vpop.f32.mrf.mxu0
    %v7028 = vadd.f32 %v7014, %v7027
    %v7029 = vpop.f32.mrf.mxu0
    %v7030 = vadd.f32 %v7016, %v7029
    %7031 = vdwg.mxu0
    %7032 = vmatpush.bf16.xpose.msra.mxu0 %v4769
    %7033 = vmatpush.bf16.xpose.msra.mxu0 %v4753
    %7034 = vmatpush.bf16.xpose.msra.mxu0 %v4737
    %7035 = vmatpush.bf16.xpose.msra.mxu0 %v4721
    %7036 = vmatpush.bf16.xpose.msra.mxu0 %v4705
    %7037 = vmatpush.bf16.xpose.msra.mxu0 %v4689
    %7038 = vmatpush.bf16.xpose.msra.mxu0 %v4673
    %7039 = vmatpush.bf16.xpose.msra.mxu0 %v4657
    %7040 = vmatmul.bf16.gmra.mxu0 %v1169
    %v7041 = vpop.f32.mrf.mxu0
    %v7042 = vadd.f32 %v7028, %v7041
    %v7043 = vpop.f32.mrf.mxu0
    %v7044 = vadd.f32 %v7030, %v7043
    %7045 = vdwg.mxu0
    %7046 = vmatpush.bf16.xpose.msra.mxu0 %v4770
    %7047 = vmatpush.bf16.xpose.msra.mxu0 %v4754
    %7048 = vmatpush.bf16.xpose.msra.mxu0 %v4738
    %7049 = vmatpush.bf16.xpose.msra.mxu0 %v4722
    %7050 = vmatpush.bf16.xpose.msra.mxu0 %v4706
    %7051 = vmatpush.bf16.xpose.msra.mxu0 %v4690
    %7052 = vmatpush.bf16.xpose.msra.mxu0 %v4674
    %7053 = vmatpush.bf16.xpose.msra.mxu0 %v4658
    %7054 = vmatmul.bf16.gmra.mxu0 %v1170
    %v7055 = vpop.f32.mrf.mxu0
    %v7056 = vadd.f32 %v7042, %v7055
    %v7057 = vpop.f32.mrf.mxu0
    %v7058 = vadd.f32 %v7044, %v7057
    %7059 = vdwg.mxu0
    %7060 = vmatpush.bf16.xpose.msra.mxu0 %v4771
    %7061 = vmatpush.bf16.xpose.msra.mxu0 %v4755
    %7062 = vmatpush.bf16.xpose.msra.mxu0 %v4739
    %7063 = vmatpush.bf16.xpose.msra.mxu0 %v4723
    %7064 = vmatpush.bf16.xpose.msra.mxu0 %v4707
    %7065 = vmatpush.bf16.xpose.msra.mxu0 %v4691
    %7066 = vmatpush.bf16.xpose.msra.mxu0 %v4675
    %7067 = vmatpush.bf16.xpose.msra.mxu0 %v4659
    %7068 = vmatmul.bf16.gmra.mxu0 %v1171
    %v7069 = vpop.f32.mrf.mxu0
    %v7070 = vadd.f32 %v7056, %v7069
    %v7071 = vpop.f32.mrf.mxu0
    %v7072 = vadd.f32 %v7058, %v7071
    %7073 = vdwg.mxu0
    %7074 = vmatpush.bf16.xpose.msra.mxu0 %v4772
    %7075 = vmatpush.bf16.xpose.msra.mxu0 %v4756
    %7076 = vmatpush.bf16.xpose.msra.mxu0 %v4740
    %7077 = vmatpush.bf16.xpose.msra.mxu0 %v4724
    %7078 = vmatpush.bf16.xpose.msra.mxu0 %v4708
    %7079 = vmatpush.bf16.xpose.msra.mxu0 %v4692
    %7080 = vmatpush.bf16.xpose.msra.mxu0 %v4676
    %7081 = vmatpush.bf16.xpose.msra.mxu0 %v4660
    %7082 = vmatmul.bf16.gmra.mxu0 %v1172
    %v7083 = vpop.f32.mrf.mxu0
    %v7084 = vadd.f32 %v7070, %v7083
    %v7085 = vpop.f32.mrf.mxu0
    %v7086 = vadd.f32 %v7072, %v7085
    %7087 = vdwg.mxu0
    %7088 = vmatpush.bf16.xpose.msra.mxu0 %v4773
    %7089 = vmatpush.bf16.xpose.msra.mxu0 %v4757
    %7090 = vmatpush.bf16.xpose.msra.mxu0 %v4741
    %7091 = vmatpush.bf16.xpose.msra.mxu0 %v4725
    %7092 = vmatpush.bf16.xpose.msra.mxu0 %v4709
    %7093 = vmatpush.bf16.xpose.msra.mxu0 %v4693
    %7094 = vmatpush.bf16.xpose.msra.mxu0 %v4677
    %7095 = vmatpush.bf16.xpose.msra.mxu0 %v4661
    %7096 = vmatmul.bf16.gmra.mxu0 %v1173
    %v7097 = vpop.f32.mrf.mxu0
    %v7098 = vadd.f32 %v7084, %v7097
    %v7099 = vpop.f32.mrf.mxu0
    %v7100 = vadd.f32 %v7086, %v7099
    %7101 = vdwg.mxu0
    %7102 = vmatpush.bf16.xpose.msra.mxu0 %v4774
    %7103 = vmatpush.bf16.xpose.msra.mxu0 %v4758
    %7104 = vmatpush.bf16.xpose.msra.mxu0 %v4742
    %7105 = vmatpush.bf16.xpose.msra.mxu0 %v4726
    %7106 = vmatpush.bf16.xpose.msra.mxu0 %v4710
    %7107 = vmatpush.bf16.xpose.msra.mxu0 %v4694
    %7108 = vmatpush.bf16.xpose.msra.mxu0 %v4678
    %7109 = vmatpush.bf16.xpose.msra.mxu0 %v4662
    %7110 = vmatmul.bf16.gmra.mxu0 %v1174
    %v7111 = vpop.f32.mrf.mxu0
    %v7112 = vadd.f32 %v7098, %v7111
    %v7113 = vpop.f32.mrf.mxu0
    %v7114 = vadd.f32 %v7100, %v7113
    %7115 = vdwg.mxu0
    %7116 = vmatpush.bf16.xpose.msra.mxu0 %v4775
    %7117 = vmatpush.bf16.xpose.msra.mxu0 %v4759
    %7118 = vmatpush.bf16.xpose.msra.mxu0 %v4743
    %7119 = vmatpush.bf16.xpose.msra.mxu0 %v4727
    %7120 = vmatpush.bf16.xpose.msra.mxu0 %v4711
    %7121 = vmatpush.bf16.xpose.msra.mxu0 %v4695
    %7122 = vmatpush.bf16.xpose.msra.mxu0 %v4679
    %7123 = vmatpush.bf16.xpose.msra.mxu0 %v4663
    %7124 = vmatmul.bf16.gmra.mxu0 %v1175
    %v7125 = vpop.f32.mrf.mxu0
    %v7126 = vadd.f32 %v7112, %v7125
    %v7127 = vpop.f32.mrf.mxu0
    %v7128 = vadd.f32 %v7114, %v7127
    %7129 = vdwg.mxu0
    %7130 = vmatpush.bf16.xpose.msra.mxu0 %v4776
    %7131 = vmatpush.bf16.xpose.msra.mxu0 %v4760
    %7132 = vmatpush.bf16.xpose.msra.mxu0 %v4744
    %7133 = vmatpush.bf16.xpose.msra.mxu0 %v4728
    %7134 = vmatpush.bf16.xpose.msra.mxu0 %v4712
    %7135 = vmatpush.bf16.xpose.msra.mxu0 %v4696
    %7136 = vmatpush.bf16.xpose.msra.mxu0 %v4680
    %7137 = vmatpush.bf16.xpose.msra.mxu0 %v4664
    %7138 = vmatmul.bf16.gmra.mxu0 %v1176
    %v7139 = vpop.f32.mrf.mxu0
    %v7140 = vadd.f32 %v7126, %v7139
    %v7141 = vpop.f32.mrf.mxu0
    %v7142 = vadd.f32 %v7128, %v7141
    %7143 = vdwg.mxu0
    %7144 = vmatpush.bf16.xpose.msra.mxu0 %v4777
    %7145 = vmatpush.bf16.xpose.msra.mxu0 %v4761
    %7146 = vmatpush.bf16.xpose.msra.mxu0 %v4745
    %7147 = vmatpush.bf16.xpose.msra.mxu0 %v4729
    %7148 = vmatpush.bf16.xpose.msra.mxu0 %v4713
    %7149 = vmatpush.bf16.xpose.msra.mxu0 %v4697
    %7150 = vmatpush.bf16.xpose.msra.mxu0 %v4681
    %7151 = vmatpush.bf16.xpose.msra.mxu0 %v4665
    %7152 = vmatmul.bf16.gmra.mxu0 %v1177
    %v7153 = vpop.f32.mrf.mxu0
    %v7154 = vadd.f32 %v7140, %v7153
    %v7155 = vpop.f32.mrf.mxu0
    %v7156 = vadd.f32 %v7142, %v7155
    %7157 = vdwg.mxu0
    %7158 = vmatpush.bf16.xpose.msra.mxu0 %v4778
    %7159 = vmatpush.bf16.xpose.msra.mxu0 %v4762
    %7160 = vmatpush.bf16.xpose.msra.mxu0 %v4746
    %7161 = vmatpush.bf16.xpose.msra.mxu0 %v4730
    %7162 = vmatpush.bf16.xpose.msra.mxu0 %v4714
    %7163 = vmatpush.bf16.xpose.msra.mxu0 %v4698
    %7164 = vmatpush.bf16.xpose.msra.mxu0 %v4682
    %7165 = vmatpush.bf16.xpose.msra.mxu0 %v4666
    %7166 = vmatmul.bf16.gmra.mxu0 %v1178
    %v7167 = vpop.f32.mrf.mxu0
    %v7168 = vadd.f32 %v7154, %v7167
    %v7169 = vpop.f32.mrf.mxu0
    %v7170 = vadd.f32 %v7156, %v7169
    %7171 = vdwg.mxu0
    %7172 = vmatpush.bf16.xpose.msra.mxu0 %v4779
    %7173 = vmatpush.bf16.xpose.msra.mxu0 %v4763
    %7174 = vmatpush.bf16.xpose.msra.mxu0 %v4747
    %7175 = vmatpush.bf16.xpose.msra.mxu0 %v4731
    %7176 = vmatpush.bf16.xpose.msra.mxu0 %v4715
    %7177 = vmatpush.bf16.xpose.msra.mxu0 %v4699
    %7178 = vmatpush.bf16.xpose.msra.mxu0 %v4683
    %7179 = vmatpush.bf16.xpose.msra.mxu0 %v4667
    %7180 = vmatmul.bf16.gmra.mxu0 %v1179
    %v7181 = vpop.f32.mrf.mxu0
    %v7182 = vadd.f32 %v7168, %v7181
    %v7183 = vpop.f32.mrf.mxu0
    %v7184 = vadd.f32 %v7170, %v7183
    %7185 = vdwg.mxu0
    %7186 = vmatpush.bf16.xpose.msra.mxu0 %v4780
    %7187 = vmatpush.bf16.xpose.msra.mxu0 %v4764
    %7188 = vmatpush.bf16.xpose.msra.mxu0 %v4748
    %7189 = vmatpush.bf16.xpose.msra.mxu0 %v4732
    %7190 = vmatpush.bf16.xpose.msra.mxu0 %v4716
    %7191 = vmatpush.bf16.xpose.msra.mxu0 %v4700
    %7192 = vmatpush.bf16.xpose.msra.mxu0 %v4684
    %7193 = vmatpush.bf16.xpose.msra.mxu0 %v4668
    %7194 = vmatmul.bf16.gmra.mxu0 %v1180
    %v7195 = vpop.f32.mrf.mxu0
    %v7196 = vadd.f32 %v7182, %v7195
    %v7197 = vpop.f32.mrf.mxu0
    %v7198 = vadd.f32 %v7184, %v7197
    %7199 = vdwg.mxu0
    %7200 = vmatpush.bf16.xpose.msra.mxu0 %v4781
    %7201 = vmatpush.bf16.xpose.msra.mxu0 %v4765
    %7202 = vmatpush.bf16.xpose.msra.mxu0 %v4749
    %7203 = vmatpush.bf16.xpose.msra.mxu0 %v4733
    %7204 = vmatpush.bf16.xpose.msra.mxu0 %v4717
    %7205 = vmatpush.bf16.xpose.msra.mxu0 %v4701
    %7206 = vmatpush.bf16.xpose.msra.mxu0 %v4685
    %7207 = vmatpush.bf16.xpose.msra.mxu0 %v4669
    %7208 = vmatmul.bf16.gmra.mxu0 %v1181
    %v7209 = vpop.f32.mrf.mxu0
    %v7210 = vadd.f32 %v7196, %v7209
    %v7211 = vpop.f32.mrf.mxu0
    %v7212 = vadd.f32 %v7198, %v7211
    %7213 = vdwg.mxu0
    %7214 = vmatpush.bf16.xpose.msra.mxu0 %v4894
    %7215 = vmatpush.bf16.xpose.msra.mxu0 %v4878
    %7216 = vmatpush.bf16.xpose.msra.mxu0 %v4862
    %7217 = vmatpush.bf16.xpose.msra.mxu0 %v4846
    %7218 = vmatpush.bf16.xpose.msra.mxu0 %v4830
    %7219 = vmatpush.bf16.xpose.msra.mxu0 %v4814
    %7220 = vmatpush.bf16.xpose.msra.mxu0 %v4798
    %7221 = vmatpush.bf16.xpose.msra.mxu0 %v4782
    %7222 = vmatmul.bf16.gmra.mxu0 %v1166
    %v7223 = vpop.f32.mrf.mxu0
    %v7224 = vadd.f32 %v1106, %v7223
    %v7225 = vpop.f32.mrf.mxu0
    %v7226 = vadd.f32 %v1106, %v7225
    %7227 = vdwg.mxu0
    %7228 = vmatpush.bf16.xpose.msra.mxu0 %v4895
    %7229 = vmatpush.bf16.xpose.msra.mxu0 %v4879
    %7230 = vmatpush.bf16.xpose.msra.mxu0 %v4863
    %7231 = vmatpush.bf16.xpose.msra.mxu0 %v4847
    %7232 = vmatpush.bf16.xpose.msra.mxu0 %v4831
    %7233 = vmatpush.bf16.xpose.msra.mxu0 %v4815
    %7234 = vmatpush.bf16.xpose.msra.mxu0 %v4799
    %7235 = vmatpush.bf16.xpose.msra.mxu0 %v4783
    %7236 = vmatmul.bf16.gmra.mxu0 %v1167
    %v7237 = vpop.f32.mrf.mxu0
    %v7238 = vadd.f32 %v7224, %v7237
    %v7239 = vpop.f32.mrf.mxu0
    %v7240 = vadd.f32 %v7226, %v7239
    %7241 = vdwg.mxu0
    %7242 = vmatpush.bf16.xpose.msra.mxu0 %v4896
    %7243 = vmatpush.bf16.xpose.msra.mxu0 %v4880
    %7244 = vmatpush.bf16.xpose.msra.mxu0 %v4864
    %7245 = vmatpush.bf16.xpose.msra.mxu0 %v4848
    %7246 = vmatpush.bf16.xpose.msra.mxu0 %v4832
    %7247 = vmatpush.bf16.xpose.msra.mxu0 %v4816
    %7248 = vmatpush.bf16.xpose.msra.mxu0 %v4800
    %7249 = vmatpush.bf16.xpose.msra.mxu0 %v4784
    %7250 = vmatmul.bf16.gmra.mxu0 %v1168
    %v7251 = vpop.f32.mrf.mxu0
    %v7252 = vadd.f32 %v7238, %v7251
    %v7253 = vpop.f32.mrf.mxu0
    %v7254 = vadd.f32 %v7240, %v7253
    %7255 = vdwg.mxu0
    %7256 = vmatpush.bf16.xpose.msra.mxu0 %v4897
    %7257 = vmatpush.bf16.xpose.msra.mxu0 %v4881
    %7258 = vmatpush.bf16.xpose.msra.mxu0 %v4865
    %7259 = vmatpush.bf16.xpose.msra.mxu0 %v4849
    %7260 = vmatpush.bf16.xpose.msra.mxu0 %v4833
    %7261 = vmatpush.bf16.xpose.msra.mxu0 %v4817
    %7262 = vmatpush.bf16.xpose.msra.mxu0 %v4801
    %7263 = vmatpush.bf16.xpose.msra.mxu0 %v4785
    %7264 = vmatmul.bf16.gmra.mxu0 %v1169
    %v7265 = vpop.f32.mrf.mxu0
    %v7266 = vadd.f32 %v7252, %v7265
    %v7267 = vpop.f32.mrf.mxu0
    %v7268 = vadd.f32 %v7254, %v7267
    %7269 = vdwg.mxu0
    %7270 = vmatpush.bf16.xpose.msra.mxu0 %v4898
    %7271 = vmatpush.bf16.xpose.msra.mxu0 %v4882
    %7272 = vmatpush.bf16.xpose.msra.mxu0 %v4866
    %7273 = vmatpush.bf16.xpose.msra.mxu0 %v4850
    %7274 = vmatpush.bf16.xpose.msra.mxu0 %v4834
    %7275 = vmatpush.bf16.xpose.msra.mxu0 %v4818
    %7276 = vmatpush.bf16.xpose.msra.mxu0 %v4802
    %7277 = vmatpush.bf16.xpose.msra.mxu0 %v4786
    %7278 = vmatmul.bf16.gmra.mxu0 %v1170
    %v7279 = vpop.f32.mrf.mxu0
    %v7280 = vadd.f32 %v7266, %v7279
    %v7281 = vpop.f32.mrf.mxu0
    %v7282 = vadd.f32 %v7268, %v7281
    %7283 = vdwg.mxu0
    %7284 = vmatpush.bf16.xpose.msra.mxu0 %v4899
    %7285 = vmatpush.bf16.xpose.msra.mxu0 %v4883
    %7286 = vmatpush.bf16.xpose.msra.mxu0 %v4867
    %7287 = vmatpush.bf16.xpose.msra.mxu0 %v4851
    %7288 = vmatpush.bf16.xpose.msra.mxu0 %v4835
    %7289 = vmatpush.bf16.xpose.msra.mxu0 %v4819
    %7290 = vmatpush.bf16.xpose.msra.mxu0 %v4803
    %7291 = vmatpush.bf16.xpose.msra.mxu0 %v4787
    %7292 = vmatmul.bf16.gmra.mxu0 %v1171
    %v7293 = vpop.f32.mrf.mxu0
    %v7294 = vadd.f32 %v7280, %v7293
    %v7295 = vpop.f32.mrf.mxu0
    %v7296 = vadd.f32 %v7282, %v7295
    %7297 = vdwg.mxu0
    %7298 = vmatpush.bf16.xpose.msra.mxu0 %v4900
    %7299 = vmatpush.bf16.xpose.msra.mxu0 %v4884
    %7300 = vmatpush.bf16.xpose.msra.mxu0 %v4868
    %7301 = vmatpush.bf16.xpose.msra.mxu0 %v4852
    %7302 = vmatpush.bf16.xpose.msra.mxu0 %v4836
    %7303 = vmatpush.bf16.xpose.msra.mxu0 %v4820
    %7304 = vmatpush.bf16.xpose.msra.mxu0 %v4804
    %7305 = vmatpush.bf16.xpose.msra.mxu0 %v4788
    %7306 = vmatmul.bf16.gmra.mxu0 %v1172
    %v7307 = vpop.f32.mrf.mxu0
    %v7308 = vadd.f32 %v7294, %v7307
    %v7309 = vpop.f32.mrf.mxu0
    %v7310 = vadd.f32 %v7296, %v7309
    %7311 = vdwg.mxu0
    %7312 = vmatpush.bf16.xpose.msra.mxu0 %v4901
    %7313 = vmatpush.bf16.xpose.msra.mxu0 %v4885
    %7314 = vmatpush.bf16.xpose.msra.mxu0 %v4869
    %7315 = vmatpush.bf16.xpose.msra.mxu0 %v4853
    %7316 = vmatpush.bf16.xpose.msra.mxu0 %v4837
    %7317 = vmatpush.bf16.xpose.msra.mxu0 %v4821
    %7318 = vmatpush.bf16.xpose.msra.mxu0 %v4805
    %7319 = vmatpush.bf16.xpose.msra.mxu0 %v4789
    %7320 = vmatmul.bf16.gmra.mxu0 %v1173
    %v7321 = vpop.f32.mrf.mxu0
    %v7322 = vadd.f32 %v7308, %v7321
    %v7323 = vpop.f32.mrf.mxu0
    %v7324 = vadd.f32 %v7310, %v7323
    %7325 = vdwg.mxu0
    %7326 = vmatpush.bf16.xpose.msra.mxu0 %v4902
    %7327 = vmatpush.bf16.xpose.msra.mxu0 %v4886
    %7328 = vmatpush.bf16.xpose.msra.mxu0 %v4870
    %7329 = vmatpush.bf16.xpose.msra.mxu0 %v4854
    %7330 = vmatpush.bf16.xpose.msra.mxu0 %v4838
    %7331 = vmatpush.bf16.xpose.msra.mxu0 %v4822
    %7332 = vmatpush.bf16.xpose.msra.mxu0 %v4806
    %7333 = vmatpush.bf16.xpose.msra.mxu0 %v4790
    %7334 = vmatmul.bf16.gmra.mxu0 %v1174
    %v7335 = vpop.f32.mrf.mxu0
    %v7336 = vadd.f32 %v7322, %v7335
    %v7337 = vpop.f32.mrf.mxu0
    %v7338 = vadd.f32 %v7324, %v7337
    %7339 = vdwg.mxu0
    %7340 = vmatpush.bf16.xpose.msra.mxu0 %v4903
    %7341 = vmatpush.bf16.xpose.msra.mxu0 %v4887
    %7342 = vmatpush.bf16.xpose.msra.mxu0 %v4871
    %7343 = vmatpush.bf16.xpose.msra.mxu0 %v4855
    %7344 = vmatpush.bf16.xpose.msra.mxu0 %v4839
    %7345 = vmatpush.bf16.xpose.msra.mxu0 %v4823
    %7346 = vmatpush.bf16.xpose.msra.mxu0 %v4807
    %7347 = vmatpush.bf16.xpose.msra.mxu0 %v4791
    %7348 = vmatmul.bf16.gmra.mxu0 %v1175
    %v7349 = vpop.f32.mrf.mxu0
    %v7350 = vadd.f32 %v7336, %v7349
    %v7351 = vpop.f32.mrf.mxu0
    %v7352 = vadd.f32 %v7338, %v7351
    %7353 = vdwg.mxu0
    %7354 = vmatpush.bf16.xpose.msra.mxu0 %v4904
    %7355 = vmatpush.bf16.xpose.msra.mxu0 %v4888
    %7356 = vmatpush.bf16.xpose.msra.mxu0 %v4872
    %7357 = vmatpush.bf16.xpose.msra.mxu0 %v4856
    %7358 = vmatpush.bf16.xpose.msra.mxu0 %v4840
    %7359 = vmatpush.bf16.xpose.msra.mxu0 %v4824
    %7360 = vmatpush.bf16.xpose.msra.mxu0 %v4808
    %7361 = vmatpush.bf16.xpose.msra.mxu0 %v4792
    %7362 = vmatmul.bf16.gmra.mxu0 %v1176
    %v7363 = vpop.f32.mrf.mxu0
    %v7364 = vadd.f32 %v7350, %v7363
    %v7365 = vpop.f32.mrf.mxu0
    %v7366 = vadd.f32 %v7352, %v7365
    %7367 = vdwg.mxu0
    %7368 = vmatpush.bf16.xpose.msra.mxu0 %v4905
    %7369 = vmatpush.bf16.xpose.msra.mxu0 %v4889
    %7370 = vmatpush.bf16.xpose.msra.mxu0 %v4873
    %7371 = vmatpush.bf16.xpose.msra.mxu0 %v4857
    %7372 = vmatpush.bf16.xpose.msra.mxu0 %v4841
    %7373 = vmatpush.bf16.xpose.msra.mxu0 %v4825
    %7374 = vmatpush.bf16.xpose.msra.mxu0 %v4809
    %7375 = vmatpush.bf16.xpose.msra.mxu0 %v4793
    %7376 = vmatmul.bf16.gmra.mxu0 %v1177
    %v7377 = vpop.f32.mrf.mxu0
    %v7378 = vadd.f32 %v7364, %v7377
    %v7379 = vpop.f32.mrf.mxu0
    %v7380 = vadd.f32 %v7366, %v7379
    %7381 = vdwg.mxu0
    %7382 = vmatpush.bf16.xpose.msra.mxu0 %v4906
    %7383 = vmatpush.bf16.xpose.msra.mxu0 %v4890
    %7384 = vmatpush.bf16.xpose.msra.mxu0 %v4874
    %7385 = vmatpush.bf16.xpose.msra.mxu0 %v4858
    %7386 = vmatpush.bf16.xpose.msra.mxu0 %v4842
    %7387 = vmatpush.bf16.xpose.msra.mxu0 %v4826
    %7388 = vmatpush.bf16.xpose.msra.mxu0 %v4810
    %7389 = vmatpush.bf16.xpose.msra.mxu0 %v4794
    %7390 = vmatmul.bf16.gmra.mxu0 %v1178
    %v7391 = vpop.f32.mrf.mxu0
    %v7392 = vadd.f32 %v7378, %v7391
    %v7393 = vpop.f32.mrf.mxu0
    %v7394 = vadd.f32 %v7380, %v7393
    %7395 = vdwg.mxu0
    %7396 = vmatpush.bf16.xpose.msra.mxu0 %v4907
    %7397 = vmatpush.bf16.xpose.msra.mxu0 %v4891
    %7398 = vmatpush.bf16.xpose.msra.mxu0 %v4875
    %7399 = vmatpush.bf16.xpose.msra.mxu0 %v4859
    %7400 = vmatpush.bf16.xpose.msra.mxu0 %v4843
    %7401 = vmatpush.bf16.xpose.msra.mxu0 %v4827
    %7402 = vmatpush.bf16.xpose.msra.mxu0 %v4811
    %7403 = vmatpush.bf16.xpose.msra.mxu0 %v4795
    %7404 = vmatmul.bf16.gmra.mxu0 %v1179
    %v7405 = vpop.f32.mrf.mxu0
    %v7406 = vadd.f32 %v7392, %v7405
    %v7407 = vpop.f32.mrf.mxu0
    %v7408 = vadd.f32 %v7394, %v7407
    %7409 = vdwg.mxu0
    %7410 = vmatpush.bf16.xpose.msra.mxu0 %v4908
    %7411 = vmatpush.bf16.xpose.msra.mxu0 %v4892
    %7412 = vmatpush.bf16.xpose.msra.mxu0 %v4876
    %7413 = vmatpush.bf16.xpose.msra.mxu0 %v4860
    %7414 = vmatpush.bf16.xpose.msra.mxu0 %v4844
    %7415 = vmatpush.bf16.xpose.msra.mxu0 %v4828
    %7416 = vmatpush.bf16.xpose.msra.mxu0 %v4812
    %7417 = vmatpush.bf16.xpose.msra.mxu0 %v4796
    %7418 = vmatmul.bf16.gmra.mxu0 %v1180
    %v7419 = vpop.f32.mrf.mxu0
    %v7420 = vadd.f32 %v7406, %v7419
    %v7421 = vpop.f32.mrf.mxu0
    %v7422 = vadd.f32 %v7408, %v7421
    %7423 = vdwg.mxu0
    %7424 = vmatpush.bf16.xpose.msra.mxu0 %v4909
    %7425 = vmatpush.bf16.xpose.msra.mxu0 %v4893
    %7426 = vmatpush.bf16.xpose.msra.mxu0 %v4877
    %7427 = vmatpush.bf16.xpose.msra.mxu0 %v4861
    %7428 = vmatpush.bf16.xpose.msra.mxu0 %v4845
    %7429 = vmatpush.bf16.xpose.msra.mxu0 %v4829
    %7430 = vmatpush.bf16.xpose.msra.mxu0 %v4813
    %7431 = vmatpush.bf16.xpose.msra.mxu0 %v4797
    %7432 = vmatmul.bf16.gmra.mxu0 %v1181
    %v7433 = vpop.f32.mrf.mxu0
    %v7434 = vadd.f32 %v7420, %v7433
    %v7435 = vpop.f32.mrf.mxu0
    %v7436 = vadd.f32 %v7422, %v7435
    %7437 = vdwg.mxu0
    %7438 = vmatpush.bf16.xpose.msra.mxu0 %v5022
    %7439 = vmatpush.bf16.xpose.msra.mxu0 %v5006
    %7440 = vmatpush.bf16.xpose.msra.mxu0 %v4990
    %7441 = vmatpush.bf16.xpose.msra.mxu0 %v4974
    %7442 = vmatpush.bf16.xpose.msra.mxu0 %v4958
    %7443 = vmatpush.bf16.xpose.msra.mxu0 %v4942
    %7444 = vmatpush.bf16.xpose.msra.mxu0 %v4926
    %7445 = vmatpush.bf16.xpose.msra.mxu0 %v4910
    %7446 = vmatmul.bf16.gmra.mxu0 %v1166
    %v7447 = vpop.f32.mrf.mxu0
    %v7448 = vadd.f32 %v1107, %v7447
    %v7449 = vpop.f32.mrf.mxu0
    %v7450 = vadd.f32 %v1107, %v7449
    %7451 = vdwg.mxu0
    %7452 = vmatpush.bf16.xpose.msra.mxu0 %v5023
    %7453 = vmatpush.bf16.xpose.msra.mxu0 %v5007
    %7454 = vmatpush.bf16.xpose.msra.mxu0 %v4991
    %7455 = vmatpush.bf16.xpose.msra.mxu0 %v4975
    %7456 = vmatpush.bf16.xpose.msra.mxu0 %v4959
    %7457 = vmatpush.bf16.xpose.msra.mxu0 %v4943
    %7458 = vmatpush.bf16.xpose.msra.mxu0 %v4927
    %7459 = vmatpush.bf16.xpose.msra.mxu0 %v4911
    %7460 = vmatmul.bf16.gmra.mxu0 %v1167
    %v7461 = vpop.f32.mrf.mxu0
    %v7462 = vadd.f32 %v7448, %v7461
    %v7463 = vpop.f32.mrf.mxu0
    %v7464 = vadd.f32 %v7450, %v7463
    %7465 = vdwg.mxu0
    %7466 = vmatpush.bf16.xpose.msra.mxu0 %v5024
    %7467 = vmatpush.bf16.xpose.msra.mxu0 %v5008
    %7468 = vmatpush.bf16.xpose.msra.mxu0 %v4992
    %7469 = vmatpush.bf16.xpose.msra.mxu0 %v4976
    %7470 = vmatpush.bf16.xpose.msra.mxu0 %v4960
    %7471 = vmatpush.bf16.xpose.msra.mxu0 %v4944
    %7472 = vmatpush.bf16.xpose.msra.mxu0 %v4928
    %7473 = vmatpush.bf16.xpose.msra.mxu0 %v4912
    %7474 = vmatmul.bf16.gmra.mxu0 %v1168
    %v7475 = vpop.f32.mrf.mxu0
    %v7476 = vadd.f32 %v7462, %v7475
    %v7477 = vpop.f32.mrf.mxu0
    %v7478 = vadd.f32 %v7464, %v7477
    %7479 = vdwg.mxu0
    %7480 = vmatpush.bf16.xpose.msra.mxu0 %v5025
    %7481 = vmatpush.bf16.xpose.msra.mxu0 %v5009
    %7482 = vmatpush.bf16.xpose.msra.mxu0 %v4993
    %7483 = vmatpush.bf16.xpose.msra.mxu0 %v4977
    %7484 = vmatpush.bf16.xpose.msra.mxu0 %v4961
    %7485 = vmatpush.bf16.xpose.msra.mxu0 %v4945
    %7486 = vmatpush.bf16.xpose.msra.mxu0 %v4929
    %7487 = vmatpush.bf16.xpose.msra.mxu0 %v4913
    %7488 = vmatmul.bf16.gmra.mxu0 %v1169
    %v7489 = vpop.f32.mrf.mxu0
    %v7490 = vadd.f32 %v7476, %v7489
    %v7491 = vpop.f32.mrf.mxu0
    %v7492 = vadd.f32 %v7478, %v7491
    %7493 = vdwg.mxu0
    %7494 = vmatpush.bf16.xpose.msra.mxu0 %v5026
    %7495 = vmatpush.bf16.xpose.msra.mxu0 %v5010
    %7496 = vmatpush.bf16.xpose.msra.mxu0 %v4994
    %7497 = vmatpush.bf16.xpose.msra.mxu0 %v4978
    %7498 = vmatpush.bf16.xpose.msra.mxu0 %v4962
    %7499 = vmatpush.bf16.xpose.msra.mxu0 %v4946
    %7500 = vmatpush.bf16.xpose.msra.mxu0 %v4930
    %7501 = vmatpush.bf16.xpose.msra.mxu0 %v4914
    %7502 = vmatmul.bf16.gmra.mxu0 %v1170
    %v7503 = vpop.f32.mrf.mxu0
    %v7504 = vadd.f32 %v7490, %v7503
    %v7505 = vpop.f32.mrf.mxu0
    %v7506 = vadd.f32 %v7492, %v7505
    %7507 = vdwg.mxu0
    %7508 = vmatpush.bf16.xpose.msra.mxu0 %v5027
    %7509 = vmatpush.bf16.xpose.msra.mxu0 %v5011
    %7510 = vmatpush.bf16.xpose.msra.mxu0 %v4995
    %7511 = vmatpush.bf16.xpose.msra.mxu0 %v4979
    %7512 = vmatpush.bf16.xpose.msra.mxu0 %v4963
    %7513 = vmatpush.bf16.xpose.msra.mxu0 %v4947
    %7514 = vmatpush.bf16.xpose.msra.mxu0 %v4931
    %7515 = vmatpush.bf16.xpose.msra.mxu0 %v4915
    %7516 = vmatmul.bf16.gmra.mxu0 %v1171
    %v7517 = vpop.f32.mrf.mxu0
    %v7518 = vadd.f32 %v7504, %v7517
    %v7519 = vpop.f32.mrf.mxu0
    %v7520 = vadd.f32 %v7506, %v7519
    %7521 = vdwg.mxu0
    %7522 = vmatpush.bf16.xpose.msra.mxu0 %v5028
    %7523 = vmatpush.bf16.xpose.msra.mxu0 %v5012
    %7524 = vmatpush.bf16.xpose.msra.mxu0 %v4996
    %7525 = vmatpush.bf16.xpose.msra.mxu0 %v4980
    %7526 = vmatpush.bf16.xpose.msra.mxu0 %v4964
    %7527 = vmatpush.bf16.xpose.msra.mxu0 %v4948
    %7528 = vmatpush.bf16.xpose.msra.mxu0 %v4932
    %7529 = vmatpush.bf16.xpose.msra.mxu0 %v4916
    %7530 = vmatmul.bf16.gmra.mxu0 %v1172
    %v7531 = vpop.f32.mrf.mxu0
    %v7532 = vadd.f32 %v7518, %v7531
    %v7533 = vpop.f32.mrf.mxu0
    %v7534 = vadd.f32 %v7520, %v7533
    %7535 = vdwg.mxu0
    %7536 = vmatpush.bf16.xpose.msra.mxu0 %v5029
    %7537 = vmatpush.bf16.xpose.msra.mxu0 %v5013
    %7538 = vmatpush.bf16.xpose.msra.mxu0 %v4997
    %7539 = vmatpush.bf16.xpose.msra.mxu0 %v4981
    %7540 = vmatpush.bf16.xpose.msra.mxu0 %v4965
    %7541 = vmatpush.bf16.xpose.msra.mxu0 %v4949
    %7542 = vmatpush.bf16.xpose.msra.mxu0 %v4933
    %7543 = vmatpush.bf16.xpose.msra.mxu0 %v4917
    %7544 = vmatmul.bf16.gmra.mxu0 %v1173
    %v7545 = vpop.f32.mrf.mxu0
    %v7546 = vadd.f32 %v7532, %v7545
    %v7547 = vpop.f32.mrf.mxu0
    %v7548 = vadd.f32 %v7534, %v7547
    %7549 = vdwg.mxu0
    %7550 = vmatpush.bf16.xpose.msra.mxu0 %v5030
    %7551 = vmatpush.bf16.xpose.msra.mxu0 %v5014
    %7552 = vmatpush.bf16.xpose.msra.mxu0 %v4998
    %7553 = vmatpush.bf16.xpose.msra.mxu0 %v4982
    %7554 = vmatpush.bf16.xpose.msra.mxu0 %v4966
    %7555 = vmatpush.bf16.xpose.msra.mxu0 %v4950
    %7556 = vmatpush.bf16.xpose.msra.mxu0 %v4934
    %7557 = vmatpush.bf16.xpose.msra.mxu0 %v4918
    %7558 = vmatmul.bf16.gmra.mxu0 %v1174
    %v7559 = vpop.f32.mrf.mxu0
    %v7560 = vadd.f32 %v7546, %v7559
    %v7561 = vpop.f32.mrf.mxu0
    %v7562 = vadd.f32 %v7548, %v7561
    %7563 = vdwg.mxu0
    %7564 = vmatpush.bf16.xpose.msra.mxu0 %v5031
    %7565 = vmatpush.bf16.xpose.msra.mxu0 %v5015
    %7566 = vmatpush.bf16.xpose.msra.mxu0 %v4999
    %7567 = vmatpush.bf16.xpose.msra.mxu0 %v4983
    %7568 = vmatpush.bf16.xpose.msra.mxu0 %v4967
    %7569 = vmatpush.bf16.xpose.msra.mxu0 %v4951
    %7570 = vmatpush.bf16.xpose.msra.mxu0 %v4935
    %7571 = vmatpush.bf16.xpose.msra.mxu0 %v4919
    %7572 = vmatmul.bf16.gmra.mxu0 %v1175
    %v7573 = vpop.f32.mrf.mxu0
    %v7574 = vadd.f32 %v7560, %v7573
    %v7575 = vpop.f32.mrf.mxu0
    %v7576 = vadd.f32 %v7562, %v7575
    %7577 = vdwg.mxu0
    %7578 = vmatpush.bf16.xpose.msra.mxu0 %v5032
    %7579 = vmatpush.bf16.xpose.msra.mxu0 %v5016
    %7580 = vmatpush.bf16.xpose.msra.mxu0 %v5000
    %7581 = vmatpush.bf16.xpose.msra.mxu0 %v4984
    %7582 = vmatpush.bf16.xpose.msra.mxu0 %v4968
    %7583 = vmatpush.bf16.xpose.msra.mxu0 %v4952
    %7584 = vmatpush.bf16.xpose.msra.mxu0 %v4936
    %7585 = vmatpush.bf16.xpose.msra.mxu0 %v4920
    %7586 = vmatmul.bf16.gmra.mxu0 %v1176
    %v7587 = vpop.f32.mrf.mxu0
    %v7588 = vadd.f32 %v7574, %v7587
    %v7589 = vpop.f32.mrf.mxu0
    %v7590 = vadd.f32 %v7576, %v7589
    %7591 = vdwg.mxu0
    %7592 = vmatpush.bf16.xpose.msra.mxu0 %v5033
    %7593 = vmatpush.bf16.xpose.msra.mxu0 %v5017
    %7594 = vmatpush.bf16.xpose.msra.mxu0 %v5001
    %7595 = vmatpush.bf16.xpose.msra.mxu0 %v4985
    %7596 = vmatpush.bf16.xpose.msra.mxu0 %v4969
    %7597 = vmatpush.bf16.xpose.msra.mxu0 %v4953
    %7598 = vmatpush.bf16.xpose.msra.mxu0 %v4937
    %7599 = vmatpush.bf16.xpose.msra.mxu0 %v4921
    %7600 = vmatmul.bf16.gmra.mxu0 %v1177
    %v7601 = vpop.f32.mrf.mxu0
    %v7602 = vadd.f32 %v7588, %v7601
    %v7603 = vpop.f32.mrf.mxu0
    %v7604 = vadd.f32 %v7590, %v7603
    %7605 = vdwg.mxu0
    %7606 = vmatpush.bf16.xpose.msra.mxu0 %v5034
    %7607 = vmatpush.bf16.xpose.msra.mxu0 %v5018
    %7608 = vmatpush.bf16.xpose.msra.mxu0 %v5002
    %7609 = vmatpush.bf16.xpose.msra.mxu0 %v4986
    %7610 = vmatpush.bf16.xpose.msra.mxu0 %v4970
    %7611 = vmatpush.bf16.xpose.msra.mxu0 %v4954
    %7612 = vmatpush.bf16.xpose.msra.mxu0 %v4938
    %7613 = vmatpush.bf16.xpose.msra.mxu0 %v4922
    %7614 = vmatmul.bf16.gmra.mxu0 %v1178
    %v7615 = vpop.f32.mrf.mxu0
    %v7616 = vadd.f32 %v7602, %v7615
    %v7617 = vpop.f32.mrf.mxu0
    %v7618 = vadd.f32 %v7604, %v7617
    %7619 = vdwg.mxu0
    %7620 = vmatpush.bf16.xpose.msra.mxu0 %v5035
    %7621 = vmatpush.bf16.xpose.msra.mxu0 %v5019
    %7622 = vmatpush.bf16.xpose.msra.mxu0 %v5003
    %7623 = vmatpush.bf16.xpose.msra.mxu0 %v4987
    %7624 = vmatpush.bf16.xpose.msra.mxu0 %v4971
    %7625 = vmatpush.bf16.xpose.msra.mxu0 %v4955
    %7626 = vmatpush.bf16.xpose.msra.mxu0 %v4939
    %7627 = vmatpush.bf16.xpose.msra.mxu0 %v4923
    %7628 = vmatmul.bf16.gmra.mxu0 %v1179
    %v7629 = vpop.f32.mrf.mxu0
    %v7630 = vadd.f32 %v7616, %v7629
    %v7631 = vpop.f32.mrf.mxu0
    %v7632 = vadd.f32 %v7618, %v7631
    %7633 = vdwg.mxu0
    %7634 = vmatpush.bf16.xpose.msra.mxu0 %v5036
    %7635 = vmatpush.bf16.xpose.msra.mxu0 %v5020
    %7636 = vmatpush.bf16.xpose.msra.mxu0 %v5004
    %7637 = vmatpush.bf16.xpose.msra.mxu0 %v4988
    %7638 = vmatpush.bf16.xpose.msra.mxu0 %v4972
    %7639 = vmatpush.bf16.xpose.msra.mxu0 %v4956
    %7640 = vmatpush.bf16.xpose.msra.mxu0 %v4940
    %7641 = vmatpush.bf16.xpose.msra.mxu0 %v4924
    %7642 = vmatmul.bf16.gmra.mxu0 %v1180
    %v7643 = vpop.f32.mrf.mxu0
    %v7644 = vadd.f32 %v7630, %v7643
    %v7645 = vpop.f32.mrf.mxu0
    %v7646 = vadd.f32 %v7632, %v7645
    %7647 = vdwg.mxu0
    %7648 = vmatpush.bf16.xpose.msra.mxu0 %v5037
    %7649 = vmatpush.bf16.xpose.msra.mxu0 %v5021
    %7650 = vmatpush.bf16.xpose.msra.mxu0 %v5005
    %7651 = vmatpush.bf16.xpose.msra.mxu0 %v4989
    %7652 = vmatpush.bf16.xpose.msra.mxu0 %v4973
    %7653 = vmatpush.bf16.xpose.msra.mxu0 %v4957
    %7654 = vmatpush.bf16.xpose.msra.mxu0 %v4941
    %7655 = vmatpush.bf16.xpose.msra.mxu0 %v4925
    %7656 = vmatmul.bf16.gmra.mxu0 %v1181
    %v7657 = vpop.f32.mrf.mxu0
    %v7658 = vadd.f32 %v7644, %v7657
    %v7659 = vpop.f32.mrf.mxu0
    %v7660 = vadd.f32 %v7646, %v7659
    %7661 = vdwg.mxu0
    %7662 = vmatpush.bf16.xpose.msra.mxu0 %v5150
    %7663 = vmatpush.bf16.xpose.msra.mxu0 %v5134
    %7664 = vmatpush.bf16.xpose.msra.mxu0 %v5118
    %7665 = vmatpush.bf16.xpose.msra.mxu0 %v5102
    %7666 = vmatpush.bf16.xpose.msra.mxu0 %v5086
    %7667 = vmatpush.bf16.xpose.msra.mxu0 %v5070
    %7668 = vmatpush.bf16.xpose.msra.mxu0 %v5054
    %7669 = vmatpush.bf16.xpose.msra.mxu0 %v5038
    %7670 = vmatmul.bf16.gmra.mxu0 %v1166
    %v7671 = vpop.f32.mrf.mxu0
    %v7672 = vadd.f32 %v1108, %v7671
    %v7673 = vpop.f32.mrf.mxu0
    %v7674 = vadd.f32 %v1108, %v7673
    %7675 = vdwg.mxu0
    %7676 = vmatpush.bf16.xpose.msra.mxu0 %v5151
    %7677 = vmatpush.bf16.xpose.msra.mxu0 %v5135
    %7678 = vmatpush.bf16.xpose.msra.mxu0 %v5119
    %7679 = vmatpush.bf16.xpose.msra.mxu0 %v5103
    %7680 = vmatpush.bf16.xpose.msra.mxu0 %v5087
    %7681 = vmatpush.bf16.xpose.msra.mxu0 %v5071
    %7682 = vmatpush.bf16.xpose.msra.mxu0 %v5055
    %7683 = vmatpush.bf16.xpose.msra.mxu0 %v5039
    %7684 = vmatmul.bf16.gmra.mxu0 %v1167
    %v7685 = vpop.f32.mrf.mxu0
    %v7686 = vadd.f32 %v7672, %v7685
    %v7687 = vpop.f32.mrf.mxu0
    %v7688 = vadd.f32 %v7674, %v7687
    %7689 = vdwg.mxu0
    %7690 = vmatpush.bf16.xpose.msra.mxu0 %v5152
    %7691 = vmatpush.bf16.xpose.msra.mxu0 %v5136
    %7692 = vmatpush.bf16.xpose.msra.mxu0 %v5120
    %7693 = vmatpush.bf16.xpose.msra.mxu0 %v5104
    %7694 = vmatpush.bf16.xpose.msra.mxu0 %v5088
    %7695 = vmatpush.bf16.xpose.msra.mxu0 %v5072
    %7696 = vmatpush.bf16.xpose.msra.mxu0 %v5056
    %7697 = vmatpush.bf16.xpose.msra.mxu0 %v5040
    %7698 = vmatmul.bf16.gmra.mxu0 %v1168
    %v7699 = vpop.f32.mrf.mxu0
    %v7700 = vadd.f32 %v7686, %v7699
    %v7701 = vpop.f32.mrf.mxu0
    %v7702 = vadd.f32 %v7688, %v7701
    %7703 = vdwg.mxu0
    %7704 = vmatpush.bf16.xpose.msra.mxu0 %v5153
    %7705 = vmatpush.bf16.xpose.msra.mxu0 %v5137
    %7706 = vmatpush.bf16.xpose.msra.mxu0 %v5121
    %7707 = vmatpush.bf16.xpose.msra.mxu0 %v5105
    %7708 = vmatpush.bf16.xpose.msra.mxu0 %v5089
    %7709 = vmatpush.bf16.xpose.msra.mxu0 %v5073
    %7710 = vmatpush.bf16.xpose.msra.mxu0 %v5057
    %7711 = vmatpush.bf16.xpose.msra.mxu0 %v5041
    %7712 = vmatmul.bf16.gmra.mxu0 %v1169
    %v7713 = vpop.f32.mrf.mxu0
    %v7714 = vadd.f32 %v7700, %v7713
    %v7715 = vpop.f32.mrf.mxu0
    %v7716 = vadd.f32 %v7702, %v7715
    %7717 = vdwg.mxu0
    %7718 = vmatpush.bf16.xpose.msra.mxu0 %v5154
    %7719 = vmatpush.bf16.xpose.msra.mxu0 %v5138
    %7720 = vmatpush.bf16.xpose.msra.mxu0 %v5122
    %7721 = vmatpush.bf16.xpose.msra.mxu0 %v5106
    %7722 = vmatpush.bf16.xpose.msra.mxu0 %v5090
    %7723 = vmatpush.bf16.xpose.msra.mxu0 %v5074
    %7724 = vmatpush.bf16.xpose.msra.mxu0 %v5058
    %7725 = vmatpush.bf16.xpose.msra.mxu0 %v5042
    %7726 = vmatmul.bf16.gmra.mxu0 %v1170
    %v7727 = vpop.f32.mrf.mxu0
    %v7728 = vadd.f32 %v7714, %v7727
    %v7729 = vpop.f32.mrf.mxu0
    %v7730 = vadd.f32 %v7716, %v7729
    %7731 = vdwg.mxu0
    %7732 = vmatpush.bf16.xpose.msra.mxu0 %v5155
    %7733 = vmatpush.bf16.xpose.msra.mxu0 %v5139
    %7734 = vmatpush.bf16.xpose.msra.mxu0 %v5123
    %7735 = vmatpush.bf16.xpose.msra.mxu0 %v5107
    %7736 = vmatpush.bf16.xpose.msra.mxu0 %v5091
    %7737 = vmatpush.bf16.xpose.msra.mxu0 %v5075
    %7738 = vmatpush.bf16.xpose.msra.mxu0 %v5059
    %7739 = vmatpush.bf16.xpose.msra.mxu0 %v5043
    %7740 = vmatmul.bf16.gmra.mxu0 %v1171
    %v7741 = vpop.f32.mrf.mxu0
    %v7742 = vadd.f32 %v7728, %v7741
    %v7743 = vpop.f32.mrf.mxu0
    %v7744 = vadd.f32 %v7730, %v7743
    %7745 = vdwg.mxu0
    %7746 = vmatpush.bf16.xpose.msra.mxu0 %v5156
    %7747 = vmatpush.bf16.xpose.msra.mxu0 %v5140
    %7748 = vmatpush.bf16.xpose.msra.mxu0 %v5124
    %7749 = vmatpush.bf16.xpose.msra.mxu0 %v5108
    %7750 = vmatpush.bf16.xpose.msra.mxu0 %v5092
    %7751 = vmatpush.bf16.xpose.msra.mxu0 %v5076
    %7752 = vmatpush.bf16.xpose.msra.mxu0 %v5060
    %7753 = vmatpush.bf16.xpose.msra.mxu0 %v5044
    %7754 = vmatmul.bf16.gmra.mxu0 %v1172
    %v7755 = vpop.f32.mrf.mxu0
    %v7756 = vadd.f32 %v7742, %v7755
    %v7757 = vpop.f32.mrf.mxu0
    %v7758 = vadd.f32 %v7744, %v7757
    %7759 = vdwg.mxu0
    %7760 = vmatpush.bf16.xpose.msra.mxu0 %v5157
    %7761 = vmatpush.bf16.xpose.msra.mxu0 %v5141
    %7762 = vmatpush.bf16.xpose.msra.mxu0 %v5125
    %7763 = vmatpush.bf16.xpose.msra.mxu0 %v5109
    %7764 = vmatpush.bf16.xpose.msra.mxu0 %v5093
    %7765 = vmatpush.bf16.xpose.msra.mxu0 %v5077
    %7766 = vmatpush.bf16.xpose.msra.mxu0 %v5061
    %7767 = vmatpush.bf16.xpose.msra.mxu0 %v5045
    %7768 = vmatmul.bf16.gmra.mxu0 %v1173
    %v7769 = vpop.f32.mrf.mxu0
    %v7770 = vadd.f32 %v7756, %v7769
    %v7771 = vpop.f32.mrf.mxu0
    %v7772 = vadd.f32 %v7758, %v7771
    %7773 = vdwg.mxu0
    %7774 = vmatpush.bf16.xpose.msra.mxu0 %v5158
    %7775 = vmatpush.bf16.xpose.msra.mxu0 %v5142
    %7776 = vmatpush.bf16.xpose.msra.mxu0 %v5126
    %7777 = vmatpush.bf16.xpose.msra.mxu0 %v5110
    %7778 = vmatpush.bf16.xpose.msra.mxu0 %v5094
    %7779 = vmatpush.bf16.xpose.msra.mxu0 %v5078
    %7780 = vmatpush.bf16.xpose.msra.mxu0 %v5062
    %7781 = vmatpush.bf16.xpose.msra.mxu0 %v5046
    %7782 = vmatmul.bf16.gmra.mxu0 %v1174
    %v7783 = vpop.f32.mrf.mxu0
    %v7784 = vadd.f32 %v7770, %v7783
    %v7785 = vpop.f32.mrf.mxu0
    %v7786 = vadd.f32 %v7772, %v7785
    %7787 = vdwg.mxu0
    %7788 = vmatpush.bf16.xpose.msra.mxu0 %v5159
    %7789 = vmatpush.bf16.xpose.msra.mxu0 %v5143
    %7790 = vmatpush.bf16.xpose.msra.mxu0 %v5127
    %7791 = vmatpush.bf16.xpose.msra.mxu0 %v5111
    %7792 = vmatpush.bf16.xpose.msra.mxu0 %v5095
    %7793 = vmatpush.bf16.xpose.msra.mxu0 %v5079
    %7794 = vmatpush.bf16.xpose.msra.mxu0 %v5063
    %7795 = vmatpush.bf16.xpose.msra.mxu0 %v5047
    %7796 = vmatmul.bf16.gmra.mxu0 %v1175
    %v7797 = vpop.f32.mrf.mxu0
    %v7798 = vadd.f32 %v7784, %v7797
    %v7799 = vpop.f32.mrf.mxu0
    %v7800 = vadd.f32 %v7786, %v7799
    %7801 = vdwg.mxu0
    %7802 = vmatpush.bf16.xpose.msra.mxu0 %v5160
    %7803 = vmatpush.bf16.xpose.msra.mxu0 %v5144
    %7804 = vmatpush.bf16.xpose.msra.mxu0 %v5128
    %7805 = vmatpush.bf16.xpose.msra.mxu0 %v5112
    %7806 = vmatpush.bf16.xpose.msra.mxu0 %v5096
    %7807 = vmatpush.bf16.xpose.msra.mxu0 %v5080
    %7808 = vmatpush.bf16.xpose.msra.mxu0 %v5064
    %7809 = vmatpush.bf16.xpose.msra.mxu0 %v5048
    %7810 = vmatmul.bf16.gmra.mxu0 %v1176
    %v7811 = vpop.f32.mrf.mxu0
    %v7812 = vadd.f32 %v7798, %v7811
    %v7813 = vpop.f32.mrf.mxu0
    %v7814 = vadd.f32 %v7800, %v7813
    %7815 = vdwg.mxu0
    %7816 = vmatpush.bf16.xpose.msra.mxu0 %v5161
    %7817 = vmatpush.bf16.xpose.msra.mxu0 %v5145
    %7818 = vmatpush.bf16.xpose.msra.mxu0 %v5129
    %7819 = vmatpush.bf16.xpose.msra.mxu0 %v5113
    %7820 = vmatpush.bf16.xpose.msra.mxu0 %v5097
    %7821 = vmatpush.bf16.xpose.msra.mxu0 %v5081
    %7822 = vmatpush.bf16.xpose.msra.mxu0 %v5065
    %7823 = vmatpush.bf16.xpose.msra.mxu0 %v5049
    %7824 = vmatmul.bf16.gmra.mxu0 %v1177
    %v7825 = vpop.f32.mrf.mxu0
    %v7826 = vadd.f32 %v7812, %v7825
    %v7827 = vpop.f32.mrf.mxu0
    %v7828 = vadd.f32 %v7814, %v7827
    %7829 = vdwg.mxu0
    %7830 = vmatpush.bf16.xpose.msra.mxu0 %v5162
    %7831 = vmatpush.bf16.xpose.msra.mxu0 %v5146
    %7832 = vmatpush.bf16.xpose.msra.mxu0 %v5130
    %7833 = vmatpush.bf16.xpose.msra.mxu0 %v5114
    %7834 = vmatpush.bf16.xpose.msra.mxu0 %v5098
    %7835 = vmatpush.bf16.xpose.msra.mxu0 %v5082
    %7836 = vmatpush.bf16.xpose.msra.mxu0 %v5066
    %7837 = vmatpush.bf16.xpose.msra.mxu0 %v5050
    %7838 = vmatmul.bf16.gmra.mxu0 %v1178
    %v7839 = vpop.f32.mrf.mxu0
    %v7840 = vadd.f32 %v7826, %v7839
    %v7841 = vpop.f32.mrf.mxu0
    %v7842 = vadd.f32 %v7828, %v7841
    %7843 = vdwg.mxu0
    %7844 = vmatpush.bf16.xpose.msra.mxu0 %v5163
    %7845 = vmatpush.bf16.xpose.msra.mxu0 %v5147
    %7846 = vmatpush.bf16.xpose.msra.mxu0 %v5131
    %7847 = vmatpush.bf16.xpose.msra.mxu0 %v5115
    %7848 = vmatpush.bf16.xpose.msra.mxu0 %v5099
    %7849 = vmatpush.bf16.xpose.msra.mxu0 %v5083
    %7850 = vmatpush.bf16.xpose.msra.mxu0 %v5067
    %7851 = vmatpush.bf16.xpose.msra.mxu0 %v5051
    %7852 = vmatmul.bf16.gmra.mxu0 %v1179
    %v7853 = vpop.f32.mrf.mxu0
    %v7854 = vadd.f32 %v7840, %v7853
    %v7855 = vpop.f32.mrf.mxu0
    %v7856 = vadd.f32 %v7842, %v7855
    %7857 = vdwg.mxu0
    %7858 = vmatpush.bf16.xpose.msra.mxu0 %v5164
    %7859 = vmatpush.bf16.xpose.msra.mxu0 %v5148
    %7860 = vmatpush.bf16.xpose.msra.mxu0 %v5132
    %7861 = vmatpush.bf16.xpose.msra.mxu0 %v5116
    %7862 = vmatpush.bf16.xpose.msra.mxu0 %v5100
    %7863 = vmatpush.bf16.xpose.msra.mxu0 %v5084
    %7864 = vmatpush.bf16.xpose.msra.mxu0 %v5068
    %7865 = vmatpush.bf16.xpose.msra.mxu0 %v5052
    %7866 = vmatmul.bf16.gmra.mxu0 %v1180
    %v7867 = vpop.f32.mrf.mxu0
    %v7868 = vadd.f32 %v7854, %v7867
    %v7869 = vpop.f32.mrf.mxu0
    %v7870 = vadd.f32 %v7856, %v7869
    %7871 = vdwg.mxu0
    %7872 = vmatpush.bf16.xpose.msra.mxu0 %v5165
    %7873 = vmatpush.bf16.xpose.msra.mxu0 %v5149
    %7874 = vmatpush.bf16.xpose.msra.mxu0 %v5133
    %7875 = vmatpush.bf16.xpose.msra.mxu0 %v5117
    %7876 = vmatpush.bf16.xpose.msra.mxu0 %v5101
    %7877 = vmatpush.bf16.xpose.msra.mxu0 %v5085
    %7878 = vmatpush.bf16.xpose.msra.mxu0 %v5069
    %7879 = vmatpush.bf16.xpose.msra.mxu0 %v5053
    %7880 = vmatmul.bf16.gmra.mxu0 %v1181
    %v7881 = vpop.f32.mrf.mxu0
    %v7882 = vadd.f32 %v7868, %v7881
    %v7883 = vpop.f32.mrf.mxu0
    %v7884 = vadd.f32 %v7870, %v7883
    %7885 = vdwg.mxu0
    %7886 = vmatpush.bf16.xpose.msra.mxu0 %v5278
    %7887 = vmatpush.bf16.xpose.msra.mxu0 %v5262
    %7888 = vmatpush.bf16.xpose.msra.mxu0 %v5246
    %7889 = vmatpush.bf16.xpose.msra.mxu0 %v5230
    %7890 = vmatpush.bf16.xpose.msra.mxu0 %v5214
    %7891 = vmatpush.bf16.xpose.msra.mxu0 %v5198
    %7892 = vmatpush.bf16.xpose.msra.mxu0 %v5182
    %7893 = vmatpush.bf16.xpose.msra.mxu0 %v5166
    %7894 = vmatmul.bf16.gmra.mxu0 %v1166
    %v7895 = vpop.f32.mrf.mxu0
    %v7896 = vadd.f32 %v1109, %v7895
    %v7897 = vpop.f32.mrf.mxu0
    %v7898 = vadd.f32 %v1109, %v7897
    %7899 = vdwg.mxu0
    %7900 = vmatpush.bf16.xpose.msra.mxu0 %v5279
    %7901 = vmatpush.bf16.xpose.msra.mxu0 %v5263
    %7902 = vmatpush.bf16.xpose.msra.mxu0 %v5247
    %7903 = vmatpush.bf16.xpose.msra.mxu0 %v5231
    %7904 = vmatpush.bf16.xpose.msra.mxu0 %v5215
    %7905 = vmatpush.bf16.xpose.msra.mxu0 %v5199
    %7906 = vmatpush.bf16.xpose.msra.mxu0 %v5183
    %7907 = vmatpush.bf16.xpose.msra.mxu0 %v5167
    %7908 = vmatmul.bf16.gmra.mxu0 %v1167
    %v7909 = vpop.f32.mrf.mxu0
    %v7910 = vadd.f32 %v7896, %v7909
    %v7911 = vpop.f32.mrf.mxu0
    %v7912 = vadd.f32 %v7898, %v7911
    %7913 = vdwg.mxu0
    %7914 = vmatpush.bf16.xpose.msra.mxu0 %v5280
    %7915 = vmatpush.bf16.xpose.msra.mxu0 %v5264
    %7916 = vmatpush.bf16.xpose.msra.mxu0 %v5248
    %7917 = vmatpush.bf16.xpose.msra.mxu0 %v5232
    %7918 = vmatpush.bf16.xpose.msra.mxu0 %v5216
    %7919 = vmatpush.bf16.xpose.msra.mxu0 %v5200
    %7920 = vmatpush.bf16.xpose.msra.mxu0 %v5184
    %7921 = vmatpush.bf16.xpose.msra.mxu0 %v5168
    %7922 = vmatmul.bf16.gmra.mxu0 %v1168
    %v7923 = vpop.f32.mrf.mxu0
    %v7924 = vadd.f32 %v7910, %v7923
    %v7925 = vpop.f32.mrf.mxu0
    %v7926 = vadd.f32 %v7912, %v7925
    %7927 = vdwg.mxu0
    %7928 = vmatpush.bf16.xpose.msra.mxu0 %v5281
    %7929 = vmatpush.bf16.xpose.msra.mxu0 %v5265
    %7930 = vmatpush.bf16.xpose.msra.mxu0 %v5249
    %7931 = vmatpush.bf16.xpose.msra.mxu0 %v5233
    %7932 = vmatpush.bf16.xpose.msra.mxu0 %v5217
    %7933 = vmatpush.bf16.xpose.msra.mxu0 %v5201
    %7934 = vmatpush.bf16.xpose.msra.mxu0 %v5185
    %7935 = vmatpush.bf16.xpose.msra.mxu0 %v5169
    %7936 = vmatmul.bf16.gmra.mxu0 %v1169
    %v7937 = vpop.f32.mrf.mxu0
    %v7938 = vadd.f32 %v7924, %v7937
    %v7939 = vpop.f32.mrf.mxu0
    %v7940 = vadd.f32 %v7926, %v7939
    %7941 = vdwg.mxu0
    %7942 = vmatpush.bf16.xpose.msra.mxu0 %v5282
    %7943 = vmatpush.bf16.xpose.msra.mxu0 %v5266
    %7944 = vmatpush.bf16.xpose.msra.mxu0 %v5250
    %7945 = vmatpush.bf16.xpose.msra.mxu0 %v5234
    %7946 = vmatpush.bf16.xpose.msra.mxu0 %v5218
    %7947 = vmatpush.bf16.xpose.msra.mxu0 %v5202
    %7948 = vmatpush.bf16.xpose.msra.mxu0 %v5186
    %7949 = vmatpush.bf16.xpose.msra.mxu0 %v5170
    %7950 = vmatmul.bf16.gmra.mxu0 %v1170
    %v7951 = vpop.f32.mrf.mxu0
    %v7952 = vadd.f32 %v7938, %v7951
    %v7953 = vpop.f32.mrf.mxu0
    %v7954 = vadd.f32 %v7940, %v7953
    %7955 = vdwg.mxu0
    %7956 = vmatpush.bf16.xpose.msra.mxu0 %v5283
    %7957 = vmatpush.bf16.xpose.msra.mxu0 %v5267
    %7958 = vmatpush.bf16.xpose.msra.mxu0 %v5251
    %7959 = vmatpush.bf16.xpose.msra.mxu0 %v5235
    %7960 = vmatpush.bf16.xpose.msra.mxu0 %v5219
    %7961 = vmatpush.bf16.xpose.msra.mxu0 %v5203
    %7962 = vmatpush.bf16.xpose.msra.mxu0 %v5187
    %7963 = vmatpush.bf16.xpose.msra.mxu0 %v5171
    %7964 = vmatmul.bf16.gmra.mxu0 %v1171
    %v7965 = vpop.f32.mrf.mxu0
    %v7966 = vadd.f32 %v7952, %v7965
    %v7967 = vpop.f32.mrf.mxu0
    %v7968 = vadd.f32 %v7954, %v7967
    %7969 = vdwg.mxu0
    %7970 = vmatpush.bf16.xpose.msra.mxu0 %v5284
    %7971 = vmatpush.bf16.xpose.msra.mxu0 %v5268
    %7972 = vmatpush.bf16.xpose.msra.mxu0 %v5252
    %7973 = vmatpush.bf16.xpose.msra.mxu0 %v5236
    %7974 = vmatpush.bf16.xpose.msra.mxu0 %v5220
    %7975 = vmatpush.bf16.xpose.msra.mxu0 %v5204
    %7976 = vmatpush.bf16.xpose.msra.mxu0 %v5188
    %7977 = vmatpush.bf16.xpose.msra.mxu0 %v5172
    %7978 = vmatmul.bf16.gmra.mxu0 %v1172
    %v7979 = vpop.f32.mrf.mxu0
    %v7980 = vadd.f32 %v7966, %v7979
    %v7981 = vpop.f32.mrf.mxu0
    %v7982 = vadd.f32 %v7968, %v7981
    %7983 = vdwg.mxu0
    %7984 = vmatpush.bf16.xpose.msra.mxu0 %v5285
    %7985 = vmatpush.bf16.xpose.msra.mxu0 %v5269
    %7986 = vmatpush.bf16.xpose.msra.mxu0 %v5253
    %7987 = vmatpush.bf16.xpose.msra.mxu0 %v5237
    %7988 = vmatpush.bf16.xpose.msra.mxu0 %v5221
    %7989 = vmatpush.bf16.xpose.msra.mxu0 %v5205
    %7990 = vmatpush.bf16.xpose.msra.mxu0 %v5189
    %7991 = vmatpush.bf16.xpose.msra.mxu0 %v5173
    %7992 = vmatmul.bf16.gmra.mxu0 %v1173
    %v7993 = vpop.f32.mrf.mxu0
    %v7994 = vadd.f32 %v7980, %v7993
    %v7995 = vpop.f32.mrf.mxu0
    %v7996 = vadd.f32 %v7982, %v7995
    %7997 = vdwg.mxu0
    %7998 = vmatpush.bf16.xpose.msra.mxu0 %v5286
    %7999 = vmatpush.bf16.xpose.msra.mxu0 %v5270
    %8000 = vmatpush.bf16.xpose.msra.mxu0 %v5254
    %8001 = vmatpush.bf16.xpose.msra.mxu0 %v5238
    %8002 = vmatpush.bf16.xpose.msra.mxu0 %v5222
    %8003 = vmatpush.bf16.xpose.msra.mxu0 %v5206
    %8004 = vmatpush.bf16.xpose.msra.mxu0 %v5190
    %8005 = vmatpush.bf16.xpose.msra.mxu0 %v5174
    %8006 = vmatmul.bf16.gmra.mxu0 %v1174
    %v8007 = vpop.f32.mrf.mxu0
    %v8008 = vadd.f32 %v7994, %v8007
    %v8009 = vpop.f32.mrf.mxu0
    %v8010 = vadd.f32 %v7996, %v8009
    %8011 = vdwg.mxu0
    %8012 = vmatpush.bf16.xpose.msra.mxu0 %v5287
    %8013 = vmatpush.bf16.xpose.msra.mxu0 %v5271
    %8014 = vmatpush.bf16.xpose.msra.mxu0 %v5255
    %8015 = vmatpush.bf16.xpose.msra.mxu0 %v5239
    %8016 = vmatpush.bf16.xpose.msra.mxu0 %v5223
    %8017 = vmatpush.bf16.xpose.msra.mxu0 %v5207
    %8018 = vmatpush.bf16.xpose.msra.mxu0 %v5191
    %8019 = vmatpush.bf16.xpose.msra.mxu0 %v5175
    %8020 = vmatmul.bf16.gmra.mxu0 %v1175
    %v8021 = vpop.f32.mrf.mxu0
    %v8022 = vadd.f32 %v8008, %v8021
    %v8023 = vpop.f32.mrf.mxu0
    %v8024 = vadd.f32 %v8010, %v8023
    %8025 = vdwg.mxu0
    %8026 = vmatpush.bf16.xpose.msra.mxu0 %v5288
    %8027 = vmatpush.bf16.xpose.msra.mxu0 %v5272
    %8028 = vmatpush.bf16.xpose.msra.mxu0 %v5256
    %8029 = vmatpush.bf16.xpose.msra.mxu0 %v5240
    %8030 = vmatpush.bf16.xpose.msra.mxu0 %v5224
    %8031 = vmatpush.bf16.xpose.msra.mxu0 %v5208
    %8032 = vmatpush.bf16.xpose.msra.mxu0 %v5192
    %8033 = vmatpush.bf16.xpose.msra.mxu0 %v5176
    %8034 = vmatmul.bf16.gmra.mxu0 %v1176
    %v8035 = vpop.f32.mrf.mxu0
    %v8036 = vadd.f32 %v8022, %v8035
    %v8037 = vpop.f32.mrf.mxu0
    %v8038 = vadd.f32 %v8024, %v8037
    %8039 = vdwg.mxu0
    %8040 = vmatpush.bf16.xpose.msra.mxu0 %v5289
    %8041 = vmatpush.bf16.xpose.msra.mxu0 %v5273
    %8042 = vmatpush.bf16.xpose.msra.mxu0 %v5257
    %8043 = vmatpush.bf16.xpose.msra.mxu0 %v5241
    %8044 = vmatpush.bf16.xpose.msra.mxu0 %v5225
    %8045 = vmatpush.bf16.xpose.msra.mxu0 %v5209
    %8046 = vmatpush.bf16.xpose.msra.mxu0 %v5193
    %8047 = vmatpush.bf16.xpose.msra.mxu0 %v5177
    %8048 = vmatmul.bf16.gmra.mxu0 %v1177
    %v8049 = vpop.f32.mrf.mxu0
    %v8050 = vadd.f32 %v8036, %v8049
    %v8051 = vpop.f32.mrf.mxu0
    %v8052 = vadd.f32 %v8038, %v8051
    %8053 = vdwg.mxu0
    %8054 = vmatpush.bf16.xpose.msra.mxu0 %v5290
    %8055 = vmatpush.bf16.xpose.msra.mxu0 %v5274
    %8056 = vmatpush.bf16.xpose.msra.mxu0 %v5258
    %8057 = vmatpush.bf16.xpose.msra.mxu0 %v5242
    %8058 = vmatpush.bf16.xpose.msra.mxu0 %v5226
    %8059 = vmatpush.bf16.xpose.msra.mxu0 %v5210
    %8060 = vmatpush.bf16.xpose.msra.mxu0 %v5194
    %8061 = vmatpush.bf16.xpose.msra.mxu0 %v5178
    %8062 = vmatmul.bf16.gmra.mxu0 %v1178
    %v8063 = vpop.f32.mrf.mxu0
    %v8064 = vadd.f32 %v8050, %v8063
    %v8065 = vpop.f32.mrf.mxu0
    %v8066 = vadd.f32 %v8052, %v8065
    %8067 = vdwg.mxu0
    %8068 = vmatpush.bf16.xpose.msra.mxu0 %v5291
    %8069 = vmatpush.bf16.xpose.msra.mxu0 %v5275
    %8070 = vmatpush.bf16.xpose.msra.mxu0 %v5259
    %8071 = vmatpush.bf16.xpose.msra.mxu0 %v5243
    %8072 = vmatpush.bf16.xpose.msra.mxu0 %v5227
    %8073 = vmatpush.bf16.xpose.msra.mxu0 %v5211
    %8074 = vmatpush.bf16.xpose.msra.mxu0 %v5195
    %8075 = vmatpush.bf16.xpose.msra.mxu0 %v5179
    %8076 = vmatmul.bf16.gmra.mxu0 %v1179
    %v8077 = vpop.f32.mrf.mxu0
    %v8078 = vadd.f32 %v8064, %v8077
    %v8079 = vpop.f32.mrf.mxu0
    %v8080 = vadd.f32 %v8066, %v8079
    %8081 = vdwg.mxu0
    %8082 = vmatpush.bf16.xpose.msra.mxu0 %v5292
    %8083 = vmatpush.bf16.xpose.msra.mxu0 %v5276
    %8084 = vmatpush.bf16.xpose.msra.mxu0 %v5260
    %8085 = vmatpush.bf16.xpose.msra.mxu0 %v5244
    %8086 = vmatpush.bf16.xpose.msra.mxu0 %v5228
    %8087 = vmatpush.bf16.xpose.msra.mxu0 %v5212
    %8088 = vmatpush.bf16.xpose.msra.mxu0 %v5196
    %8089 = vmatpush.bf16.xpose.msra.mxu0 %v5180
    %8090 = vmatmul.bf16.gmra.mxu0 %v1180
    %v8091 = vpop.f32.mrf.mxu0
    %v8092 = vadd.f32 %v8078, %v8091
    %v8093 = vpop.f32.mrf.mxu0
    %v8094 = vadd.f32 %v8080, %v8093
    %8095 = vdwg.mxu0
    %8096 = vmatpush.bf16.xpose.msra.mxu0 %v5293
    %8097 = vmatpush.bf16.xpose.msra.mxu0 %v5277
    %8098 = vmatpush.bf16.xpose.msra.mxu0 %v5261
    %8099 = vmatpush.bf16.xpose.msra.mxu0 %v5245
    %8100 = vmatpush.bf16.xpose.msra.mxu0 %v5229
    %8101 = vmatpush.bf16.xpose.msra.mxu0 %v5213
    %8102 = vmatpush.bf16.xpose.msra.mxu0 %v5197
    %8103 = vmatpush.bf16.xpose.msra.mxu0 %v5181
    %8104 = vmatmul.bf16.gmra.mxu0 %v1181
    %v8105 = vpop.f32.mrf.mxu0
    %v8106 = vadd.f32 %v8092, %v8105
    %v8107 = vpop.f32.mrf.mxu0
    %v8108 = vadd.f32 %v8094, %v8107
    %8109 = vdwg.mxu0
    %8110 = vst [vmem:[#allocation8] sm:$0xff] %v6538
    %8111 = vst [vmem:[#allocation8 + $0x8] sm:$0xff] %v6762
    %8112 = vst [vmem:[#allocation8 + $0x10] sm:$0xff] %v6986
    %8113 = vst [vmem:[#allocation8 + $0x18] sm:$0xff] %v7210
    %8114 = vst [vmem:[#allocation8 + $0x20] sm:$0xff] %v7434
    %8115 = vst [vmem:[#allocation8 + $0x28] sm:$0xff] %v7658
    %8116 = vst [vmem:[#allocation8 + $0x30] sm:$0xff] %v7882
    %8117 = vst [vmem:[#allocation8 + $0x38] sm:$0xff] %v8106
    %8118 = vst [vmem:[#allocation8 + $0x40] sm:$0xff] %v6540
    %8119 = vst [vmem:[#allocation8 + $0x48] sm:$0xff] %v6764
    %8120 = vst [vmem:[#allocation8 + $0x50] sm:$0xff] %v6988
    %8121 = vst [vmem:[#allocation8 + $0x58] sm:$0xff] %v7212
    %8122 = vst [vmem:[#allocation8 + $0x60] sm:$0xff] %v7436
    %8123 = vst [vmem:[#allocation8 + $0x68] sm:$0xff] %v7660
    %8124 = vst [vmem:[#allocation8 + $0x70] sm:$0xff] %v7884
    %8125 = vst [vmem:[#allocation8 + $0x78] sm:$0xff] %v8108
    // Predicated region
    $region26: #{tpu_custom_call.1} parent=1 // pred_check
      _
    $region27: #{tpu_custom_call.1} parent=1 // pred_check_branch
      %8127 = sbr.rel (0) target = $region29
    $region28: #{tpu_custom_call.1} parent=1 // pred_region
      %8129 = vsyncadd [#allocation4], 0
      %s8130 = sshll.u32 [#allocation8], 4
      %s8131 = int_to_ptr.vmem [resolvable:$true] %s8130
      %s8132 = sshll.u32 %s3, 4
      %s8133 = int_to_ptr.hbm [resolvable:$true] %s8132
      %8138 = dma.vmem_to_hbm [thread:$0]  %s8131, 2048, %s8133, [#allocation4], 1024, 1024, 64
    $region29: #{tpu_custom_call.1} parent=1 // pred_fallthru
      _
    // Predicated region
    $region30: #{tpu_custom_call.1} parent=1 // pred_check
      _
    $region31: #{tpu_custom_call.1} parent=1 // pred_check_branch
      %8140 = sbr.rel (0) target = $region33
    $region32: #{tpu_custom_call.1} parent=1 // pred_region
      %8142 = dma.done [#allocation4], 2048
    $region33: #{tpu_custom_call.1} parent=1 // pred_fallthru
      _
    %8143 = vsyncpa [#allocation3], 1
    %8144 = vsyncpa [#allocation6], 1
    %8145 = vsyncpa [#allocation4], 1

</llo_original>
